<compile_context>
chip_gen: v7x
topology: tpu7x:2x2x1
jax: 0.10.0
libtpu: 0.0.40
codegen_flags: <defaults>
</compile_context>

<pallas_src>
import functools

import jax
import jax.numpy as jnp
from jax.experimental import pallas as pl
from jax.experimental.pallas import tpu as pltpu


_HIDDEN = 1024
_ACTS = ("relu", "relu", "sigmoid", "relu", "relu", "sigmoid")


# ---------------------------------------------------------------------------
# Fused 6-layer MLP kernel with manual double-buffered weight streaming
# ---------------------------------------------------------------------------
def _fused_mlp_kernel(x_ref, *refs, acts, dims):
    """refs = (w1..w6 [HBM bf16, K x N], b1..b6 [VMEM f32, 1 x N],
              o_ref [VMEM f32, B x F], wbuf [VMEM bf16, 2 x maxK x maxN],
              sem [DMA sems, (2,)]).

    Weights are stored [K, N] (transposed vs torch Linear.weight) so y = x@W+b.
    Each layer's weight is DMA'd from HBM into one of two VMEM slots; the DMA
    for layer i+1 is issued before layer i's matmul so HBM streaming and MXU
    compute overlap.  Activations stay bf16; accumulation is f32.
    """
    n = len(acts)
    w_hbm = refs[:n]
    b_refs = refs[n:2 * n]
    o_ref = refs[2 * n]
    wbuf = refs[2 * n + 1]
    sem = refs[2 * n + 2]

    def w_copy(i, slot):
        k, m = dims[i]
        return pltpu.make_async_copy(w_hbm[i], wbuf.at[slot, :k, :m],
                                     sem.at[slot])

    # Prime the pipeline: start streaming layer 0's weights.
    w_copy(0, 0).start()

    z = x_ref[...]                       # bf16 [B, F]
    last = n - 1
    for i, act in enumerate(acts):       # unrolled at trace time (static)
        slot = i & 1
        # Prefetch next layer's weights into the other slot (overlaps this
        # layer's MXU work with the HBM DMA).
        if i < last:
            w_copy(i + 1, 1 - slot).start()
        w_copy(i, slot).wait()

        k, m = dims[i]
        y = jnp.dot(z, wbuf[slot, :k, :m],
                    preferred_element_type=jnp.float32) + b_refs[i][...]
        a = jnp.maximum(y, 0.0) if act == "relu" else jax.nn.sigmoid(y)
        if i == last:
            o_ref[...] = a.astype(o_ref.dtype)   # keep final sigmoid in f32
        else:
            z = a.astype(jnp.bfloat16)


# ---------------------------------------------------------------------------
# Wrapper
# ---------------------------------------------------------------------------
def denoise_forward(x, enc_params, dec_params):
    """x: [B, C, H, W] (or any [B, ...]); returns [B, in_features] float32."""
    B = x.shape[0]
    z = x.reshape(B, -1).astype(jnp.bfloat16)   # nn.Flatten + single entry cast
    F = z.shape[1]

    params = list(enc_params) + list(dec_params)
    ws = [w for w, _ in params]                  # bf16 [K, N]
    bs = [b.reshape(1, -1) for _, b in params]   # f32  [1, N]
    dims = tuple((int(w.shape[0]), int(w.shape[1])) for w in ws)
    max_k = max(k for k, _ in dims)
    max_n = max(m for _, m in dims)

    # Advisory cost for XLA scheduling around this small custom call.
    macs = sum(k * m for k, m in dims) * B
    weight_bytes = sum(k * m for k, m in dims) * 2          # bf16
    bias_bytes = sum(m for _, m in dims) * 4
    io_bytes = z.size * 2 + B * F * 4
    cost = pl.CostEstimate(
        flops=2 * macs,
        bytes_accessed=weight_bytes + bias_bytes + io_bytes,
        transcendentals=2 * B * F,               # two sigmoid layers
    )

    kernel = functools.partial(_fused_mlp_kernel, acts=_ACTS, dims=dims)

    return pl.pallas_call(
        kernel,
        out_shape=jax.ShapeDtypeStruct((B, F), jnp.float32),
        in_specs=(
            [pl.BlockSpec(memory_space=pltpu.MemorySpace.VMEM)]          # x
            + [pl.BlockSpec(memory_space=pl.ANY)] * len(ws)              # weights stay in HBM
            + [pl.BlockSpec(memory_space=pltpu.MemorySpace.VMEM)] * len(bs)  # biases
        ),
        out_specs=pl.BlockSpec(memory_space=pltpu.MemorySpace.VMEM),
        scratch_shapes=[
            pltpu.VMEM((2, max_k, max_n), jnp.bfloat16),   # double-buffered W
            pltpu.SemaphoreType.DMA((2,)),
        ],
        compiler_params=pltpu.CompilerParams(
            vmem_limit_bytes=24 * 1024 * 1024,
        ),
        cost_estimate=cost,
    )(z, *ws, *bs)


# ---------------------------------------------------------------------------
# Parameter construction (deterministic, synthetic)
# ---------------------------------------------------------------------------
def make_linear_params(key, fan_in, fan_out):
    """Mimics torch.nn.Linear uniform(-1/sqrt(fan_in), +1/sqrt(fan_in)).

    Weight is stored [fan_in, fan_out] (transposed vs torch Linear.weight) and
    cast to bf16; bias stays f32.
    """
    k_w, k_b = jax.random.split(key)
    bound = float(fan_in) ** -0.5
    w = jax.random.uniform(k_w, (fan_in, fan_out), jnp.float32, -bound, bound)
    b = jax.random.uniform(k_b, (fan_out,), jnp.float32, -bound, bound)
    return w.astype(jnp.bfloat16), b


def make_denoise_params(key, in_features, hidden=_HIDDEN):
    keys = jax.random.split(key, 6)
    enc = [
        make_linear_params(keys[0], in_features, hidden),
        make_linear_params(keys[1], hidden, hidden),
        make_linear_params(keys[2], hidden, in_features),
    ]
    dec = [
        make_linear_params(keys[3], in_features, hidden),
        make_linear_params(keys[4], hidden, hidden),
        make_linear_params(keys[5], hidden, in_features),
    ]
    return enc, dec


# ---------------------------------------------------------------------------
# Plain-JAX reference (same bf16-activation / f32-accumulate math)
# ---------------------------------------------------------------------------
def denoise_forward_ref(x, enc_params, dec_params):
    B = x.shape[0]
    z = x.reshape(B, -1).astype(jnp.bfloat16)
    params = list(enc_params) + list(dec_params)
    for i, ((w, b), act) in enumerate(zip(params, _ACTS)):
        y = jnp.dot(z, w, preferred_element_type=jnp.float32) + b
        a = jnp.maximum(y, 0.0) if act == "relu" else jax.nn.sigmoid(y)
        z = a if i == len(params) - 1 else a.astype(jnp.bfloat16)
    return z


# ---------------------------------------------------------------------------
if __name__ == "__main__":
    # Small input consistent with the module: [B, C, H, W] = [2, 4, 16, 8]
    # -> nn.Flatten -> in_features = 4 * 16 * 8 = 512
    B, C, H, W = 2, 4, 16, 8
    in_features = C * H * W

    key = jax.random.PRNGKey(0)
    k_x, k_p = jax.random.split(key)
    x = jax.random.normal(k_x, (B, C, H, W), jnp.float32)
    enc_params, dec_params = make_denoise_params(k_p, in_features, hidden=_HIDDEN)

    out = jax.block_until_ready(denoise_forward(x, enc_params, dec_params))

    ref = denoise_forward_ref(x, enc_params, dec_params)
    assert out.shape == (B, in_features), out.shape
    max_err = float(jnp.max(jnp.abs(out - ref)))
    assert jnp.allclose(out, ref, atol=2e-3, rtol=2e-3), max_err

    print("KERNEL_OK")
</pallas_src>

<mosaic_0001>
module attributes {stable_mosaic.version = 11 : i64} {
  func.func @_fused_mlp_kernel(%arg0: memref<2x512xbf16, #tpu.memory_space<vmem>>, %arg1: memref<512x1024xbf16, #tpu.memory_space<any>>, %arg2: memref<1024x1024xbf16, #tpu.memory_space<any>>, %arg3: memref<1024x512xbf16, #tpu.memory_space<any>>, %arg4: memref<512x1024xbf16, #tpu.memory_space<any>>, %arg5: memref<1024x1024xbf16, #tpu.memory_space<any>>, %arg6: memref<1024x512xbf16, #tpu.memory_space<any>>, %arg7: memref<1x1024xf32, #tpu.memory_space<vmem>>, %arg8: memref<1x1024xf32, #tpu.memory_space<vmem>>, %arg9: memref<1x512xf32, #tpu.memory_space<vmem>>, %arg10: memref<1x1024xf32, #tpu.memory_space<vmem>>, %arg11: memref<1x1024xf32, #tpu.memory_space<vmem>>, %arg12: memref<1x512xf32, #tpu.memory_space<vmem>>, %arg13: memref<2x512xf32, #tpu.memory_space<vmem>>, %arg14: memref<2x1024x1024xbf16, #tpu.memory_space<vmem>>, %arg15: memref<2x!tpu.dma_semaphore, #tpu.memory_space<semaphore_mem>>) attributes {dimension_semantics = [], scalar_prefetch = 0 : i64, scratch_operands = 2 : i64, tpu.core_type = #tpu.core_type<tc>} {
    %c0_i32 = arith.constant 0 : i32
    %c0_i32_0 = arith.constant 0 : i32
    %c0_i32_1 = arith.constant 0 : i32
    %c0_i32_2 = arith.constant 0 : i32
    %0 = tpu.memref_slice %arg14[%c0_i32, %c0_i32_1, %c0_i32_2] : memref<2x1024x1024xbf16, #tpu.memory_space<vmem>> -> memref<1x512x1024xbf16, #tpu.memory_space<vmem>>
    %1 = tpu.memref_squeeze %0 : memref<1x512x1024xbf16, #tpu.memory_space<vmem>> -> memref<512x1024xbf16, #tpu.memory_space<vmem>>
    %2 = tpu.memref_slice %arg15[%c0_i32_0] : memref<2x!tpu.dma_semaphore, #tpu.memory_space<semaphore_mem>> -> memref<1x!tpu.dma_semaphore, #tpu.memory_space<semaphore_mem>>
    %3 = tpu.memref_squeeze %2 : memref<1x!tpu.dma_semaphore, #tpu.memory_space<semaphore_mem>> -> memref<!tpu.dma_semaphore, #tpu.memory_space<semaphore_mem>>
    tpu.enqueue_dma source(%arg1 : memref<512x1024xbf16, #tpu.memory_space<any>>) target(%1 : memref<512x1024xbf16, #tpu.memory_space<vmem>>) target_semaphore(%3 : memref<!tpu.dma_semaphore, #tpu.memory_space<semaphore_mem>>)
    %c0 = arith.constant 0 : index
    %c0_3 = arith.constant 0 : index
    %4 = vector.load %arg0[%c0, %c0_3] : memref<2x512xbf16, #tpu.memory_space<vmem>>, vector<2x512xbf16>
    %c1_i32 = arith.constant 1 : i32
    %c1_i32_4 = arith.constant 1 : i32
    %c0_i32_5 = arith.constant 0 : i32
    %c0_i32_6 = arith.constant 0 : i32
    %5 = tpu.memref_slice %arg14[%c1_i32, %c0_i32_5, %c0_i32_6] : memref<2x1024x1024xbf16, #tpu.memory_space<vmem>> -> memref<1x1024x1024xbf16, #tpu.memory_space<vmem>>
    %6 = tpu.memref_squeeze %5 : memref<1x1024x1024xbf16, #tpu.memory_space<vmem>> -> memref<1024x1024xbf16, #tpu.memory_space<vmem>>
    %7 = tpu.memref_slice %arg15[%c1_i32_4] : memref<2x!tpu.dma_semaphore, #tpu.memory_space<semaphore_mem>> -> memref<1x!tpu.dma_semaphore, #tpu.memory_space<semaphore_mem>>
    %8 = tpu.memref_squeeze %7 : memref<1x!tpu.dma_semaphore, #tpu.memory_space<semaphore_mem>> -> memref<!tpu.dma_semaphore, #tpu.memory_space<semaphore_mem>>
    tpu.enqueue_dma source(%arg2 : memref<1024x1024xbf16, #tpu.memory_space<any>>) target(%6 : memref<1024x1024xbf16, #tpu.memory_space<vmem>>) target_semaphore(%8 : memref<!tpu.dma_semaphore, #tpu.memory_space<semaphore_mem>>)
    %c0_i32_7 = arith.constant 0 : i32
    %c0_i32_8 = arith.constant 0 : i32
    %c0_i32_9 = arith.constant 0 : i32
    %c0_i32_10 = arith.constant 0 : i32
    %9 = tpu.memref_slice %arg14[%c0_i32_7, %c0_i32_9, %c0_i32_10] : memref<2x1024x1024xbf16, #tpu.memory_space<vmem>> -> memref<1x512x1024xbf16, #tpu.memory_space<vmem>>
    %10 = tpu.memref_squeeze %9 : memref<1x512x1024xbf16, #tpu.memory_space<vmem>> -> memref<512x1024xbf16, #tpu.memory_space<vmem>>
    %11 = tpu.memref_slice %arg15[%c0_i32_8] : memref<2x!tpu.dma_semaphore, #tpu.memory_space<semaphore_mem>> -> memref<1x!tpu.dma_semaphore, #tpu.memory_space<semaphore_mem>>
    %12 = tpu.memref_squeeze %11 : memref<1x!tpu.dma_semaphore, #tpu.memory_space<semaphore_mem>> -> memref<!tpu.dma_semaphore, #tpu.memory_space<semaphore_mem>>
    tpu.wait_dma2 semaphore(%12 : memref<!tpu.dma_semaphore, #tpu.memory_space<semaphore_mem>>) src(%arg1 : memref<512x1024xbf16, #tpu.memory_space<any>>) dst(%10 : memref<512x1024xbf16, #tpu.memory_space<vmem>>)
    %c0_11 = arith.constant 0 : index
    %c0_12 = arith.constant 0 : index
    %c0_13 = arith.constant 0 : index
    %13 = vector.load %arg14[%c0_11, %c0_12, %c0_13] : memref<2x1024x1024xbf16, #tpu.memory_space<vmem>>, vector<1x512x1024xbf16>
    %14 = vector.shape_cast %13 : vector<1x512x1024xbf16> to vector<512x1024xbf16>
    %cst = arith.constant dense<0.000000e+00> : vector<2x1024xf32>
    %15 = tpu.matmul %4, %14, %cst {dimension_numbers = #tpu.dot_dimension_numbers<[1], [0], [0], [1], [0, 0, 1, 1], [], []>} : vector<2x512xbf16>, vector<512x1024xbf16>, vector<2x1024xf32> -> vector<2x1024xf32>
    %c0_14 = arith.constant 0 : index
    %c0_15 = arith.constant 0 : index
    %16 = vector.load %arg7[%c0_14, %c0_15] : memref<1x1024xf32, #tpu.memory_space<vmem>>, vector<1x1024xf32>
    %17 = vector.broadcast %16 : vector<1x1024xf32> to vector<2x1024xf32>
    %18 = arith.addf %15, %17 : vector<2x1024xf32>
    %cst_16 = arith.constant 0.000000e+00 : f32
    %19 = vector.broadcast %cst_16 : f32 to vector<2x1024xf32>
    %20 = arith.maximumf %18, %19 : vector<2x1024xf32>
    %21 = arith.truncf %20 : vector<2x1024xf32> to vector<2x1024xbf16>
    %c0_i32_17 = arith.constant 0 : i32
    %c0_i32_18 = arith.constant 0 : i32
    %c0_i32_19 = arith.constant 0 : i32
    %c0_i32_20 = arith.constant 0 : i32
    %22 = tpu.memref_slice %arg14[%c0_i32_17, %c0_i32_19, %c0_i32_20] : memref<2x1024x1024xbf16, #tpu.memory_space<vmem>> -> memref<1x1024x512xbf16, #tpu.memory_space<vmem>>
    %23 = tpu.memref_squeeze %22 : memref<1x1024x512xbf16, #tpu.memory_space<vmem>> -> memref<1024x512xbf16, #tpu.memory_space<vmem>>
    %24 = tpu.memref_slice %arg15[%c0_i32_18] : memref<2x!tpu.dma_semaphore, #tpu.memory_space<semaphore_mem>> -> memref<1x!tpu.dma_semaphore, #tpu.memory_space<semaphore_mem>>
    %25 = tpu.memref_squeeze %24 : memref<1x!tpu.dma_semaphore, #tpu.memory_space<semaphore_mem>> -> memref<!tpu.dma_semaphore, #tpu.memory_space<semaphore_mem>>
    tpu.enqueue_dma source(%arg3 : memref<1024x512xbf16, #tpu.memory_space<any>>) target(%23 : memref<1024x512xbf16, #tpu.memory_space<vmem>>) target_semaphore(%25 : memref<!tpu.dma_semaphore, #tpu.memory_space<semaphore_mem>>)
    %c1_i32_21 = arith.constant 1 : i32
    %c1_i32_22 = arith.constant 1 : i32
    %c0_i32_23 = arith.constant 0 : i32
    %c0_i32_24 = arith.constant 0 : i32
    %26 = tpu.memref_slice %arg14[%c1_i32_21, %c0_i32_23, %c0_i32_24] : memref<2x1024x1024xbf16, #tpu.memory_space<vmem>> -> memref<1x1024x1024xbf16, #tpu.memory_space<vmem>>
    %27 = tpu.memref_squeeze %26 : memref<1x1024x1024xbf16, #tpu.memory_space<vmem>> -> memref<1024x1024xbf16, #tpu.memory_space<vmem>>
    %28 = tpu.memref_slice %arg15[%c1_i32_22] : memref<2x!tpu.dma_semaphore, #tpu.memory_space<semaphore_mem>> -> memref<1x!tpu.dma_semaphore, #tpu.memory_space<semaphore_mem>>
    %29 = tpu.memref_squeeze %28 : memref<1x!tpu.dma_semaphore, #tpu.memory_space<semaphore_mem>> -> memref<!tpu.dma_semaphore, #tpu.memory_space<semaphore_mem>>
    tpu.wait_dma2 semaphore(%29 : memref<!tpu.dma_semaphore, #tpu.memory_space<semaphore_mem>>) src(%arg2 : memref<1024x1024xbf16, #tpu.memory_space<any>>) dst(%27 : memref<1024x1024xbf16, #tpu.memory_space<vmem>>)
    %c1 = arith.constant 1 : index
    %c0_25 = arith.constant 0 : index
    %c0_26 = arith.constant 0 : index
    %30 = vector.load %arg14[%c1, %c0_25, %c0_26] : memref<2x1024x1024xbf16, #tpu.memory_space<vmem>>, vector<1x1024x1024xbf16>
    %31 = vector.shape_cast %30 : vector<1x1024x1024xbf16> to vector<1024x1024xbf16>
    %cst_27 = arith.constant dense<0.000000e+00> : vector<2x1024xf32>
    %32 = tpu.matmul %21, %31, %cst_27 {dimension_numbers = #tpu.dot_dimension_numbers<[1], [0], [0], [1], [0, 0, 1, 1], [], []>} : vector<2x1024xbf16>, vector<1024x1024xbf16>, vector<2x1024xf32> -> vector<2x1024xf32>
    %c0_28 = arith.constant 0 : index
    %c0_29 = arith.constant 0 : index
    %33 = vector.load %arg8[%c0_28, %c0_29] : memref<1x1024xf32, #tpu.memory_space<vmem>>, vector<1x1024xf32>
    %34 = vector.broadcast %33 : vector<1x1024xf32> to vector<2x1024xf32>
    %35 = arith.addf %32, %34 : vector<2x1024xf32>
    %cst_30 = arith.constant 0.000000e+00 : f32
    %36 = vector.broadcast %cst_30 : f32 to vector<2x1024xf32>
    %37 = arith.maximumf %35, %36 : vector<2x1024xf32>
    %38 = arith.truncf %37 : vector<2x1024xf32> to vector<2x1024xbf16>
    %c1_i32_31 = arith.constant 1 : i32
    %c1_i32_32 = arith.constant 1 : i32
    %c0_i32_33 = arith.constant 0 : i32
    %c0_i32_34 = arith.constant 0 : i32
    %39 = tpu.memref_slice %arg14[%c1_i32_31, %c0_i32_33, %c0_i32_34] : memref<2x1024x1024xbf16, #tpu.memory_space<vmem>> -> memref<1x512x1024xbf16, #tpu.memory_space<vmem>>
    %40 = tpu.memref_squeeze %39 : memref<1x512x1024xbf16, #tpu.memory_space<vmem>> -> memref<512x1024xbf16, #tpu.memory_space<vmem>>
    %41 = tpu.memref_slice %arg15[%c1_i32_32] : memref<2x!tpu.dma_semaphore, #tpu.memory_space<semaphore_mem>> -> memref<1x!tpu.dma_semaphore, #tpu.memory_space<semaphore_mem>>
    %42 = tpu.memref_squeeze %41 : memref<1x!tpu.dma_semaphore, #tpu.memory_space<semaphore_mem>> -> memref<!tpu.dma_semaphore, #tpu.memory_space<semaphore_mem>>
    tpu.enqueue_dma source(%arg4 : memref<512x1024xbf16, #tpu.memory_space<any>>) target(%40 : memref<512x1024xbf16, #tpu.memory_space<vmem>>) target_semaphore(%42 : memref<!tpu.dma_semaphore, #tpu.memory_space<semaphore_mem>>)
    %c0_i32_35 = arith.constant 0 : i32
    %c0_i32_36 = arith.constant 0 : i32
    %c0_i32_37 = arith.constant 0 : i32
    %c0_i32_38 = arith.constant 0 : i32
    %43 = tpu.memref_slice %arg14[%c0_i32_35, %c0_i32_37, %c0_i32_38] : memref<2x1024x1024xbf16, #tpu.memory_space<vmem>> -> memref<1x1024x512xbf16, #tpu.memory_space<vmem>>
    %44 = tpu.memref_squeeze %43 : memref<1x1024x512xbf16, #tpu.memory_space<vmem>> -> memref<1024x512xbf16, #tpu.memory_space<vmem>>
    %45 = tpu.memref_slice %arg15[%c0_i32_36] : memref<2x!tpu.dma_semaphore, #tpu.memory_space<semaphore_mem>> -> memref<1x!tpu.dma_semaphore, #tpu.memory_space<semaphore_mem>>
    %46 = tpu.memref_squeeze %45 : memref<1x!tpu.dma_semaphore, #tpu.memory_space<semaphore_mem>> -> memref<!tpu.dma_semaphore, #tpu.memory_space<semaphore_mem>>
    tpu.wait_dma2 semaphore(%46 : memref<!tpu.dma_semaphore, #tpu.memory_space<semaphore_mem>>) src(%arg3 : memref<1024x512xbf16, #tpu.memory_space<any>>) dst(%44 : memref<1024x512xbf16, #tpu.memory_space<vmem>>)
    %c0_39 = arith.constant 0 : index
    %c0_40 = arith.constant 0 : index
    %c0_41 = arith.constant 0 : index
    %47 = vector.load %arg14[%c0_39, %c0_40, %c0_41] : memref<2x1024x1024xbf16, #tpu.memory_space<vmem>>, vector<1x1024x512xbf16>
    %48 = vector.shape_cast %47 : vector<1x1024x512xbf16> to vector<1024x512xbf16>
    %cst_42 = arith.constant dense<0.000000e+00> : vector<2x512xf32>
    %49 = tpu.matmul %38, %48, %cst_42 {dimension_numbers = #tpu.dot_dimension_numbers<[1], [0], [0], [1], [0, 0, 1, 1], [], []>} : vector<2x1024xbf16>, vector<1024x512xbf16>, vector<2x512xf32> -> vector<2x512xf32>
    %c0_43 = arith.constant 0 : index
    %c0_44 = arith.constant 0 : index
    %50 = vector.load %arg9[%c0_43, %c0_44] : memref<1x512xf32, #tpu.memory_space<vmem>>, vector<1x512xf32>
    %51 = vector.broadcast %50 : vector<1x512xf32> to vector<2x512xf32>
    %52 = arith.addf %49, %51 : vector<2x512xf32>
    %53 = arith.negf %52 : vector<2x512xf32>
    %54 = math.exp %53 : vector<2x512xf32>
    %cst_45 = arith.constant 1.000000e+00 : f32
    %55 = vector.broadcast %cst_45 : f32 to vector<2x512xf32>
    %56 = arith.addf %55, %54 : vector<2x512xf32>
    %57 = arith.divf %55, %56 : vector<2x512xf32>
    %58 = arith.truncf %57 : vector<2x512xf32> to vector<2x512xbf16>
    %c0_i32_46 = arith.constant 0 : i32
    %c0_i32_47 = arith.constant 0 : i32
    %c0_i32_48 = arith.constant 0 : i32
    %c0_i32_49 = arith.constant 0 : i32
    %59 = tpu.memref_slice %arg14[%c0_i32_46, %c0_i32_48, %c0_i32_49] : memref<2x1024x1024xbf16, #tpu.memory_space<vmem>> -> memref<1x1024x1024xbf16, #tpu.memory_space<vmem>>
    %60 = tpu.memref_squeeze %59 : memref<1x1024x1024xbf16, #tpu.memory_space<vmem>> -> memref<1024x1024xbf16, #tpu.memory_space<vmem>>
    %61 = tpu.memref_slice %arg15[%c0_i32_47] : memref<2x!tpu.dma_semaphore, #tpu.memory_space<semaphore_mem>> -> memref<1x!tpu.dma_semaphore, #tpu.memory_space<semaphore_mem>>
    %62 = tpu.memref_squeeze %61 : memref<1x!tpu.dma_semaphore, #tpu.memory_space<semaphore_mem>> -> memref<!tpu.dma_semaphore, #tpu.memory_space<semaphore_mem>>
    tpu.enqueue_dma source(%arg5 : memref<1024x1024xbf16, #tpu.memory_space<any>>) target(%60 : memref<1024x1024xbf16, #tpu.memory_space<vmem>>) target_semaphore(%62 : memref<!tpu.dma_semaphore, #tpu.memory_space<semaphore_mem>>)
    %c1_i32_50 = arith.constant 1 : i32
    %c1_i32_51 = arith.constant 1 : i32
    %c0_i32_52 = arith.constant 0 : i32
    %c0_i32_53 = arith.constant 0 : i32
    %63 = tpu.memref_slice %arg14[%c1_i32_50, %c0_i32_52, %c0_i32_53] : memref<2x1024x1024xbf16, #tpu.memory_space<vmem>> -> memref<1x512x1024xbf16, #tpu.memory_space<vmem>>
    %64 = tpu.memref_squeeze %63 : memref<1x512x1024xbf16, #tpu.memory_space<vmem>> -> memref<512x1024xbf16, #tpu.memory_space<vmem>>
    %65 = tpu.memref_slice %arg15[%c1_i32_51] : memref<2x!tpu.dma_semaphore, #tpu.memory_space<semaphore_mem>> -> memref<1x!tpu.dma_semaphore, #tpu.memory_space<semaphore_mem>>
    %66 = tpu.memref_squeeze %65 : memref<1x!tpu.dma_semaphore, #tpu.memory_space<semaphore_mem>> -> memref<!tpu.dma_semaphore, #tpu.memory_space<semaphore_mem>>
    tpu.wait_dma2 semaphore(%66 : memref<!tpu.dma_semaphore, #tpu.memory_space<semaphore_mem>>) src(%arg4 : memref<512x1024xbf16, #tpu.memory_space<any>>) dst(%64 : memref<512x1024xbf16, #tpu.memory_space<vmem>>)
    %c1_54 = arith.constant 1 : index
    %c0_55 = arith.constant 0 : index
    %c0_56 = arith.constant 0 : index
    %67 = vector.load %arg14[%c1_54, %c0_55, %c0_56] : memref<2x1024x1024xbf16, #tpu.memory_space<vmem>>, vector<1x512x1024xbf16>
    %68 = vector.shape_cast %67 : vector<1x512x1024xbf16> to vector<512x1024xbf16>
    %cst_57 = arith.constant dense<0.000000e+00> : vector<2x1024xf32>
    %69 = tpu.matmul %58, %68, %cst_57 {dimension_numbers = #tpu.dot_dimension_numbers<[1], [0], [0], [1], [0, 0, 1, 1], [], []>} : vector<2x512xbf16>, vector<512x1024xbf16>, vector<2x1024xf32> -> vector<2x1024xf32>
    %c0_58 = arith.constant 0 : index
    %c0_59 = arith.constant 0 : index
    %70 = vector.load %arg10[%c0_58, %c0_59] : memref<1x1024xf32, #tpu.memory_space<vmem>>, vector<1x1024xf32>
    %71 = vector.broadcast %70 : vector<1x1024xf32> to vector<2x1024xf32>
    %72 = arith.addf %69, %71 : vector<2x1024xf32>
    %cst_60 = arith.constant 0.000000e+00 : f32
    %73 = vector.broadcast %cst_60 : f32 to vector<2x1024xf32>
    %74 = arith.maximumf %72, %73 : vector<2x1024xf32>
    %75 = arith.truncf %74 : vector<2x1024xf32> to vector<2x1024xbf16>
    %c1_i32_61 = arith.constant 1 : i32
    %c1_i32_62 = arith.constant 1 : i32
    %c0_i32_63 = arith.constant 0 : i32
    %c0_i32_64 = arith.constant 0 : i32
    %76 = tpu.memref_slice %arg14[%c1_i32_61, %c0_i32_63, %c0_i32_64] : memref<2x1024x1024xbf16, #tpu.memory_space<vmem>> -> memref<1x1024x512xbf16, #tpu.memory_space<vmem>>
    %77 = tpu.memref_squeeze %76 : memref<1x1024x512xbf16, #tpu.memory_space<vmem>> -> memref<1024x512xbf16, #tpu.memory_space<vmem>>
    %78 = tpu.memref_slice %arg15[%c1_i32_62] : memref<2x!tpu.dma_semaphore, #tpu.memory_space<semaphore_mem>> -> memref<1x!tpu.dma_semaphore, #tpu.memory_space<semaphore_mem>>
    %79 = tpu.memref_squeeze %78 : memref<1x!tpu.dma_semaphore, #tpu.memory_space<semaphore_mem>> -> memref<!tpu.dma_semaphore, #tpu.memory_space<semaphore_mem>>
    tpu.enqueue_dma source(%arg6 : memref<1024x512xbf16, #tpu.memory_space<any>>) target(%77 : memref<1024x512xbf16, #tpu.memory_space<vmem>>) target_semaphore(%79 : memref<!tpu.dma_semaphore, #tpu.memory_space<semaphore_mem>>)
    %c0_i32_65 = arith.constant 0 : i32
    %c0_i32_66 = arith.constant 0 : i32
    %c0_i32_67 = arith.constant 0 : i32
    %c0_i32_68 = arith.constant 0 : i32
    %80 = tpu.memref_slice %arg14[%c0_i32_65, %c0_i32_67, %c0_i32_68] : memref<2x1024x1024xbf16, #tpu.memory_space<vmem>> -> memref<1x1024x1024xbf16, #tpu.memory_space<vmem>>
    %81 = tpu.memref_squeeze %80 : memref<1x1024x1024xbf16, #tpu.memory_space<vmem>> -> memref<1024x1024xbf16, #tpu.memory_space<vmem>>
    %82 = tpu.memref_slice %arg15[%c0_i32_66] : memref<2x!tpu.dma_semaphore, #tpu.memory_space<semaphore_mem>> -> memref<1x!tpu.dma_semaphore, #tpu.memory_space<semaphore_mem>>
    %83 = tpu.memref_squeeze %82 : memref<1x!tpu.dma_semaphore, #tpu.memory_space<semaphore_mem>> -> memref<!tpu.dma_semaphore, #tpu.memory_space<semaphore_mem>>
    tpu.wait_dma2 semaphore(%83 : memref<!tpu.dma_semaphore, #tpu.memory_space<semaphore_mem>>) src(%arg5 : memref<1024x1024xbf16, #tpu.memory_space<any>>) dst(%81 : memref<1024x1024xbf16, #tpu.memory_space<vmem>>)
    %c0_69 = arith.constant 0 : index
    %c0_70 = arith.constant 0 : index
    %c0_71 = arith.constant 0 : index
    %84 = vector.load %arg14[%c0_69, %c0_70, %c0_71] : memref<2x1024x1024xbf16, #tpu.memory_space<vmem>>, vector<1x1024x1024xbf16>
    %85 = vector.shape_cast %84 : vector<1x1024x1024xbf16> to vector<1024x1024xbf16>
    %cst_72 = arith.constant dense<0.000000e+00> : vector<2x1024xf32>
    %86 = tpu.matmul %75, %85, %cst_72 {dimension_numbers = #tpu.dot_dimension_numbers<[1], [0], [0], [1], [0, 0, 1, 1], [], []>} : vector<2x1024xbf16>, vector<1024x1024xbf16>, vector<2x1024xf32> -> vector<2x1024xf32>
    %c0_73 = arith.constant 0 : index
    %c0_74 = arith.constant 0 : index
    %87 = vector.load %arg11[%c0_73, %c0_74] : memref<1x1024xf32, #tpu.memory_space<vmem>>, vector<1x1024xf32>
    %88 = vector.broadcast %87 : vector<1x1024xf32> to vector<2x1024xf32>
    %89 = arith.addf %86, %88 : vector<2x1024xf32>
    %cst_75 = arith.constant 0.000000e+00 : f32
    %90 = vector.broadcast %cst_75 : f32 to vector<2x1024xf32>
    %91 = arith.maximumf %89, %90 : vector<2x1024xf32>
    %92 = arith.truncf %91 : vector<2x1024xf32> to vector<2x1024xbf16>
    %c1_i32_76 = arith.constant 1 : i32
    %c1_i32_77 = arith.constant 1 : i32
    %c0_i32_78 = arith.constant 0 : i32
    %c0_i32_79 = arith.constant 0 : i32
    %93 = tpu.memref_slice %arg14[%c1_i32_76, %c0_i32_78, %c0_i32_79] : memref<2x1024x1024xbf16, #tpu.memory_space<vmem>> -> memref<1x1024x512xbf16, #tpu.memory_space<vmem>>
    %94 = tpu.memref_squeeze %93 : memref<1x1024x512xbf16, #tpu.memory_space<vmem>> -> memref<1024x512xbf16, #tpu.memory_space<vmem>>
    %95 = tpu.memref_slice %arg15[%c1_i32_77] : memref<2x!tpu.dma_semaphore, #tpu.memory_space<semaphore_mem>> -> memref<1x!tpu.dma_semaphore, #tpu.memory_space<semaphore_mem>>
    %96 = tpu.memref_squeeze %95 : memref<1x!tpu.dma_semaphore, #tpu.memory_space<semaphore_mem>> -> memref<!tpu.dma_semaphore, #tpu.memory_space<semaphore_mem>>
    tpu.wait_dma2 semaphore(%96 : memref<!tpu.dma_semaphore, #tpu.memory_space<semaphore_mem>>) src(%arg6 : memref<1024x512xbf16, #tpu.memory_space<any>>) dst(%94 : memref<1024x512xbf16, #tpu.memory_space<vmem>>)
    %c1_80 = arith.constant 1 : index
    %c0_81 = arith.constant 0 : index
    %c0_82 = arith.constant 0 : index
    %97 = vector.load %arg14[%c1_80, %c0_81, %c0_82] : memref<2x1024x1024xbf16, #tpu.memory_space<vmem>>, vector<1x1024x512xbf16>
    %98 = vector.shape_cast %97 : vector<1x1024x512xbf16> to vector<1024x512xbf16>
    %cst_83 = arith.constant dense<0.000000e+00> : vector<2x512xf32>
    %99 = tpu.matmul %92, %98, %cst_83 {dimension_numbers = #tpu.dot_dimension_numbers<[1], [0], [0], [1], [0, 0, 1, 1], [], []>} : vector<2x1024xbf16>, vector<1024x512xbf16>, vector<2x512xf32> -> vector<2x512xf32>
    %c0_84 = arith.constant 0 : index
    %c0_85 = arith.constant 0 : index
    %100 = vector.load %arg12[%c0_84, %c0_85] : memref<1x512xf32, #tpu.memory_space<vmem>>, vector<1x512xf32>
    %101 = vector.broadcast %100 : vector<1x512xf32> to vector<2x512xf32>
    %102 = arith.addf %99, %101 : vector<2x512xf32>
    %103 = arith.negf %102 : vector<2x512xf32>
    %104 = math.exp %103 : vector<2x512xf32>
    %cst_86 = arith.constant 1.000000e+00 : f32
    %105 = vector.broadcast %cst_86 : f32 to vector<2x512xf32>
    %106 = arith.addf %105, %104 : vector<2x512xf32>
    %107 = arith.divf %105, %106 : vector<2x512xf32>
    %c0_87 = arith.constant 0 : index
    %c0_88 = arith.constant 0 : index
    %108 = vector.load %arg13[%c0_87, %c0_88] : memref<2x512xf32, #tpu.memory_space<vmem>>, vector<2x512xf32>
    tpu.vector_store %arg13[%c0_87, %c0_88], %107 {strides = array<i32>} : memref<2x512xf32, #tpu.memory_space<vmem>>, vector<2x512xf32>,
    return
  }
}

</mosaic_0001>

<llo_original>
// kernel: tpu_custom_call.1
$region0: #{tpu_custom_call.1}
  #allocation0 [shape = 'u32[]', space=smem, size = 0x4, offset = 0x4, fixed_abs, tag = 'smem constant byte address 0x4 - core index']
  #allocation1 [shape = 'u32[144,128]{1,0:T(1,128)}', space=vmem, size = 0x12000, scoped, tag = 'internal scratch']
  #allocation2 [shape = 'bf16[2,1024,1024]{2,1,0:T(16,128)(2,1)}', space=vmem, size = 0x400000, scoped, tag = 'scratch operand']
  #allocation3 [shape = 's32[2]{0}', space=sflag, size = 0x8, scoped, tag = 'scratch operand']
  #allocation17 [shape = 's32[]', space=sflag, size = 0x4, offset = 0, fixed_abs, tag = 'sflag constant byte address 0x0 - dummy sync flag']
  #allocation19 [shape = 's32[]', space=sflag, size = 0x4, offset = 0, fixed_abs, tag = 'sflag constant byte address 0x0 - dummy sync flag']
  #allocation21 [shape = 's32[]', space=sflag, size = 0x4, offset = 0, fixed_abs, tag = 'sflag constant byte address 0x0 - dummy sync flag']
  #allocation23 [shape = 's32[]', space=sflag, size = 0x4, offset = 0, fixed_abs, tag = 'sflag constant byte address 0x0 - dummy sync flag']
  #allocation25 [shape = 's32[]', space=sflag, size = 0x4, offset = 0, fixed_abs, tag = 'sflag constant byte address 0x0 - dummy sync flag']
  #allocation27 [shape = 's32[]', space=sflag, size = 0x4, offset = 0, fixed_abs, tag = 'sflag constant byte address 0x0 - dummy sync flag']
  %s0 = inlined_call_operand.hbm [shape: bf16[2,512], index: 0, kind: input, shape index: {}]
  %s1 = inlined_call_operand.hbm [shape: bf16[512,1024], index: 1, kind: input, shape index: {}]
  %s2 = inlined_call_operand.hbm [shape: bf16[1024,1024], index: 2, kind: input, shape index: {}]
  %s3 = inlined_call_operand.hbm [shape: bf16[1024,512], index: 3, kind: input, shape index: {}]
  %s4 = inlined_call_operand.hbm [shape: bf16[512,1024], index: 4, kind: input, shape index: {}]
  %s5 = inlined_call_operand.hbm [shape: bf16[1024,1024], index: 5, kind: input, shape index: {}]
  %s6 = inlined_call_operand.hbm [shape: bf16[1024,512], index: 6, kind: input, shape index: {}]
  %s7 = inlined_call_operand.hbm [shape: f32[1,1024], index: 7, kind: input, shape index: {}]
  %s8 = inlined_call_operand.hbm [shape: f32[1,1024], index: 8, kind: input, shape index: {}]
  %s9 = inlined_call_operand.hbm [shape: f32[1,512], index: 9, kind: input, shape index: {}]
  %s10 = inlined_call_operand.hbm [shape: f32[1,1024], index: 10, kind: input, shape index: {}]
  %s11 = inlined_call_operand.hbm [shape: f32[1,1024], index: 11, kind: input, shape index: {}]
  %s12 = inlined_call_operand.hbm [shape: f32[1,512], index: 12, kind: input, shape index: {}]
  %s13 = inlined_call_operand.hbm [shape: f32[2,512], index: 13, kind: output, shape index: {}]
  %s14 = sld [smem:[#allocation0]]
  $region66: #{tpu_custom_call.1} parent=0
    _
  %s16 = ssub.s32 1, %s14
  %s17 = scalar_select 0, %s16, %s14
  $region1: #{tpu_custom_call.1} parent=0
    #allocation4 [shape = 'u8[2048]{0}', space=vmem, size = 0x800, scoped, tag = 'input window, operand 0, single buffered']
    #allocation5 [shape = 's32[1]{0}', space=sflag, size = 0x4, scoped, tag = 'scoped memory for tpu_custom_call.1']
    #allocation6 [shape = 's32[1]{0}', space=sflag, size = 0x4, scoped, tag = 'scoped memory for tpu_custom_call.1']
    #allocation7 [shape = 'u8[4096]{0}', space=vmem, size = 0x1000, scoped, tag = 'input window, operand 7, single buffered']
    #allocation8 [shape = 's32[1]{0}', space=sflag, size = 0x4, scoped, tag = 'scoped memory for tpu_custom_call.1']
    #allocation9 [shape = 'u8[4096]{0}', space=vmem, size = 0x1000, scoped, tag = 'input window, operand 8, single buffered']
    #allocation10 [shape = 'u8[2048]{0}', space=vmem, size = 0x800, scoped, tag = 'input window, operand 9, single buffered']
    #allocation11 [shape = 's32[1]{0}', space=sflag, size = 0x4, scoped, tag = 'scoped memory for tpu_custom_call.1']
    #allocation12 [shape = 'u8[4096]{0}', space=vmem, size = 0x1000, scoped, tag = 'input window, operand 10, single buffered']
    #allocation13 [shape = 'u8[4096]{0}', space=vmem, size = 0x1000, scoped, tag = 'input window, operand 11, single buffered']
    #allocation14 [shape = 's32[1]{0}', space=sflag, size = 0x4, scoped, tag = 'scoped memory for tpu_custom_call.1']
    #allocation15 [shape = 'u8[2048]{0}', space=vmem, size = 0x800, scoped, tag = 'input window, operand 12, single buffered']
    #allocation16 [shape = 'u8[4096]{0}', space=vmem, size = 0x1000, scoped, tag = 'output window, operand 0, single buffered']
    #allocation18 [shape = 'u32[9]{0}', space=smem, size = 0x24, scoped, tag = 'DMA stride descriptor']
    #allocation20 [shape = 'u32[9]{0}', space=smem, size = 0x24, scoped, tag = 'DMA stride descriptor']
    #allocation22 [shape = 'u32[9]{0}', space=smem, size = 0x24, scoped, tag = 'DMA stride descriptor']
    #allocation24 [shape = 'u32[9]{0}', space=smem, size = 0x24, scoped, tag = 'DMA stride descriptor']
    #allocation26 [shape = 'u32[9]{0}', space=smem, size = 0x24, scoped, tag = 'DMA stride descriptor']
    #allocation28 [shape = 'u32[9]{0}', space=smem, size = 0x24, scoped, tag = 'DMA stride descriptor']
    %18 = vsyncpa [#allocation5], 0
    %19 = vsyncpa [#allocation8], 0
    %20 = vsyncpa [#allocation11], 0
    %21 = vsyncpa [#allocation14], 0
    %22 = vsyncpa [#allocation6], 0
    // Predicated region
    $region2: #{tpu_custom_call.1} parent=1 // pred_check
      _
    $region3: #{tpu_custom_call.1} parent=1 // pred_check_branch
      %24 = sbr.rel (0) target = $region5
    $region4: #{tpu_custom_call.1} parent=1 // pred_region
      %s26 = ssub.s32 64, 64
      %27 = vsyncadd [#allocation5], %s26
      %s29 = sshll.u32 [#allocation4], 4
      %s30 = int_to_ptr.vmem [resolvable:$true] %s29
      %32 = dma.hbm_to_vmem [thread:$0]  %s0, 64, %s30, [#allocation5]
    $region5: #{tpu_custom_call.1} parent=1 // pred_fallthru
      _
    // Predicated region
    $region6: #{tpu_custom_call.1} parent=1 // pred_check
      _
    $region7: #{tpu_custom_call.1} parent=1 // pred_check_branch
      %34 = sbr.rel (0) target = $region9
    $region8: #{tpu_custom_call.1} parent=1 // pred_region
      %s36 = ssub.s32 128, 128
      %37 = vsyncadd [#allocation8], %s36
      %s39 = sshll.u32 [#allocation7], 4
      %s40 = int_to_ptr.vmem [resolvable:$true] %s39
      %42 = dma.hbm_to_vmem [thread:$0]  %s7, 128, %s40, [#allocation8]
    $region9: #{tpu_custom_call.1} parent=1 // pred_fallthru
      _
    // Predicated region
    $region10: #{tpu_custom_call.1} parent=1 // pred_check
      _
    $region11: #{tpu_custom_call.1} parent=1 // pred_check_branch
      %44 = sbr.rel (0) target = $region13
    $region12: #{tpu_custom_call.1} parent=1 // pred_region
      %s46 = ssub.s32 128, 128
      %47 = vsyncadd [#allocation8], %s46
      %s49 = sshll.u32 [#allocation9], 4
      %s50 = int_to_ptr.vmem [resolvable:$true] %s49
      %52 = dma.hbm_to_vmem [thread:$0]  %s8, 128, %s50, [#allocation8]
    $region13: #{tpu_custom_call.1} parent=1 // pred_fallthru
      _
    // Predicated region
    $region14: #{tpu_custom_call.1} parent=1 // pred_check
      _
    $region15: #{tpu_custom_call.1} parent=1 // pred_check_branch
      %54 = sbr.rel (0) target = $region17
    $region16: #{tpu_custom_call.1} parent=1 // pred_region
      %s56 = ssub.s32 64, 64
      %57 = vsyncadd [#allocation11], %s56
      %s59 = sshll.u32 [#allocation10], 4
      %s60 = int_to_ptr.vmem [resolvable:$true] %s59
      %62 = dma.hbm_to_vmem [thread:$0]  %s9, 64, %s60, [#allocation11]
    $region17: #{tpu_custom_call.1} parent=1 // pred_fallthru
      _
    // Predicated region
    $region18: #{tpu_custom_call.1} parent=1 // pred_check
      _
    $region19: #{tpu_custom_call.1} parent=1 // pred_check_branch
      %64 = sbr.rel (0) target = $region21
    $region20: #{tpu_custom_call.1} parent=1 // pred_region
      %s66 = ssub.s32 128, 128
      %67 = vsyncadd [#allocation11], %s66
      %s69 = sshll.u32 [#allocation12], 4
      %s70 = int_to_ptr.vmem [resolvable:$true] %s69
      %72 = dma.hbm_to_vmem [thread:$0]  %s10, 128, %s70, [#allocation11]
    $region21: #{tpu_custom_call.1} parent=1 // pred_fallthru
      _
    // Predicated region
    $region22: #{tpu_custom_call.1} parent=1 // pred_check
      _
    $region23: #{tpu_custom_call.1} parent=1 // pred_check_branch
      %74 = sbr.rel (0) target = $region25
    $region24: #{tpu_custom_call.1} parent=1 // pred_region
      %s76 = ssub.s32 128, 128
      %77 = vsyncadd [#allocation14], %s76
      %s79 = sshll.u32 [#allocation13], 4
      %s80 = int_to_ptr.vmem [resolvable:$true] %s79
      %82 = dma.hbm_to_vmem [thread:$0]  %s11, 128, %s80, [#allocation14]
    $region25: #{tpu_custom_call.1} parent=1 // pred_fallthru
      _
    // Predicated region
    $region26: #{tpu_custom_call.1} parent=1 // pred_check
      _
    $region27: #{tpu_custom_call.1} parent=1 // pred_check_branch
      %84 = sbr.rel (0) target = $region29
    $region28: #{tpu_custom_call.1} parent=1 // pred_region
      %s86 = ssub.s32 64, 64
      %87 = vsyncadd [#allocation14], %s86
      %s89 = sshll.u32 [#allocation15], 4
      %s90 = int_to_ptr.vmem [resolvable:$true] %s89
      %92 = dma.hbm_to_vmem [thread:$0]  %s12, 64, %s90, [#allocation14]
    $region29: #{tpu_custom_call.1} parent=1 // pred_fallthru
      _
    // Predicated region
    $region30: #{tpu_custom_call.1} parent=1 // pred_check
      _
    $region31: #{tpu_custom_call.1} parent=1 // pred_check_branch
      %94 = sbr.rel (0) target = $region33
    $region32: #{tpu_custom_call.1} parent=1 // pred_region
      %95 = dma.done [#allocation5], 64
    $region33: #{tpu_custom_call.1} parent=1 // pred_fallthru
      _
    // Predicated region
    $region34: #{tpu_custom_call.1} parent=1 // pred_check
      _
    $region35: #{tpu_custom_call.1} parent=1 // pred_check_branch
      %97 = sbr.rel (0) target = $region37
    $region36: #{tpu_custom_call.1} parent=1 // pred_region
      %98 = dma.done [#allocation8], 128
    $region37: #{tpu_custom_call.1} parent=1 // pred_fallthru
      _
    // Predicated region
    $region38: #{tpu_custom_call.1} parent=1 // pred_check
      _
    $region39: #{tpu_custom_call.1} parent=1 // pred_check_branch
      %100 = sbr.rel (0) target = $region41
    $region40: #{tpu_custom_call.1} parent=1 // pred_region
      %101 = dma.done [#allocation8], 128
    $region41: #{tpu_custom_call.1} parent=1 // pred_fallthru
      _
    // Predicated region
    $region42: #{tpu_custom_call.1} parent=1 // pred_check
      _
    $region43: #{tpu_custom_call.1} parent=1 // pred_check_branch
      %103 = sbr.rel (0) target = $region45
    $region44: #{tpu_custom_call.1} parent=1 // pred_region
      %104 = dma.done [#allocation11], 64
    $region45: #{tpu_custom_call.1} parent=1 // pred_fallthru
      _
    // Predicated region
    $region46: #{tpu_custom_call.1} parent=1 // pred_check
      _
    $region47: #{tpu_custom_call.1} parent=1 // pred_check_branch
      %106 = sbr.rel (0) target = $region49
    $region48: #{tpu_custom_call.1} parent=1 // pred_region
      %107 = dma.done [#allocation11], 128
    $region49: #{tpu_custom_call.1} parent=1 // pred_fallthru
      _
    // Predicated region
    $region50: #{tpu_custom_call.1} parent=1 // pred_check
      _
    $region51: #{tpu_custom_call.1} parent=1 // pred_check_branch
      %109 = sbr.rel (0) target = $region53
    $region52: #{tpu_custom_call.1} parent=1 // pred_region
      %110 = dma.done [#allocation14], 128
    $region53: #{tpu_custom_call.1} parent=1 // pred_fallthru
      _
    // Predicated region
    $region54: #{tpu_custom_call.1} parent=1 // pred_check
      _
    $region55: #{tpu_custom_call.1} parent=1 // pred_check_branch
      %112 = sbr.rel (0) target = $region57
    $region56: #{tpu_custom_call.1} parent=1 // pred_region
      %113 = dma.done [#allocation14], 64
    $region57: #{tpu_custom_call.1} parent=1 // pred_fallthru
      _
    %s115 = sshll.u32 1, 14
    %s116 = sxor.u32 4294967295, %s115
    %s118 = sld [smem:[#allocation0]]
    %s119 = sadd.s32 2, %s118
    %s121 = sshll.u32 7, 26
    %s122 = sxor.u32 4294967295, %s121
    %s123 = sand.u32 0, %s122
    %s124 = sshll.u32 %s119, 26
    %s125 = sor.u32 %s123, %s124
    %s126 = sshll.u32 [#allocation2], 4
    %s127 = int_to_ptr.vmem [resolvable:$true] %s126
    %130 = sst [smem:[#allocation18]] 1024
    %s131 = scalar_lea.smem [#allocation18], 1
    %132 = sst [smem:[%s131]] 1024
    %s133 = scalar_lea.smem [#allocation18], 2
    %134 = sst [smem:[%s133]] 8
    %s135 = scalar_lea.smem [#allocation18], 3
    %136 = sst [smem:[%s135]] 64
    %s137 = scalar_lea.smem [#allocation18], 4
    %138 = sst [smem:[%s137]] 128
    %s139 = scalar_lea.smem [#allocation18], 5
    %140 = sst [smem:[%s139]] 2
    %s141 = scalar_lea.smem [#allocation18], 6
    %142 = sst [smem:[%s141]] 512
    %s143 = scalar_lea.smem [#allocation18], 7
    %144 = sst [smem:[%s143]] 64
    %s145 = scalar_lea.smem [#allocation18], 8
    %146 = sst [smem:[%s145]] 4
    %148 = dma.general %s1, 32768, %s127, [#allocation3], [#allocation17], [#allocation18], %s125, 0
    %v149 = vld [vmem:[#allocation4] sm:$0xf]
    %s150 = scalar_lea.vmem [#allocation2], 4096
    %s151 = scalar_lea.sflag [#allocation3], 1
    %s153 = sshll.u32 1, 14
    %s154 = sxor.u32 4294967295, %s153
    %s156 = sadd.s32 2, %s118
    %s158 = sshll.u32 7, 26
    %s159 = sxor.u32 4294967295, %s158
    %s160 = sand.u32 0, %s159
    %s161 = sshll.u32 %s156, 26
    %s162 = sor.u32 %s160, %s161
    %s163 = sshll.u32 %s150, 4
    %s164 = int_to_ptr.vmem [resolvable:$true] %s163
    %167 = sst [smem:[#allocation20]] 1024
    %s168 = scalar_lea.smem [#allocation20], 1
    %169 = sst [smem:[%s168]] 1024
    %s170 = scalar_lea.smem [#allocation20], 2
    %171 = sst [smem:[%s170]] 8
    %s172 = scalar_lea.smem [#allocation20], 3
    %173 = sst [smem:[%s172]] 64
    %s174 = scalar_lea.smem [#allocation20], 4
    %175 = sst [smem:[%s174]] 128
    %s176 = scalar_lea.smem [#allocation20], 5
    %177 = sst [smem:[%s176]] 2
    %s178 = scalar_lea.smem [#allocation20], 6
    %179 = sst [smem:[%s178]] 512
    %s180 = scalar_lea.smem [#allocation20], 7
    %181 = sst [smem:[%s180]] 64
    %s182 = scalar_lea.smem [#allocation20], 8
    %183 = sst [smem:[%s182]] 4
    %185 = dma.general %s2, 65536, %s164, %s151, [#allocation19], [#allocation20], %s162, 0
    %s186 = smul.u32 4, 64
    %s187 = smul.u32 %s186, 8
    %s188 = sshll.u32 %s187, 4
    %189 = dma.done [#allocation3], %s188
    %v190 = vld [vmem:[#allocation2] sm:$0xff]
    %v191 = vld [vmem:[#allocation2 + $0x8] sm:$0xff]
    %v192 = vld [vmem:[#allocation2 + $0x10] sm:$0xff]
    %v193 = vld [vmem:[#allocation2 + $0x18] sm:$0xff]
    %v194 = vld [vmem:[#allocation2 + $0x20] sm:$0xff]
    %v195 = vld [vmem:[#allocation2 + $0x28] sm:$0xff]
    %v196 = vld [vmem:[#allocation2 + $0x30] sm:$0xff]
    %v197 = vld [vmem:[#allocation2 + $0x38] sm:$0xff]
    %v198 = vld [vmem:[#allocation2 + $0x40] sm:$0xff]
    %v199 = vld [vmem:[#allocation2 + $0x48] sm:$0xff]
    %v200 = vld [vmem:[#allocation2 + $0x50] sm:$0xff]
    %v201 = vld [vmem:[#allocation2 + $0x58] sm:$0xff]
    %v202 = vld [vmem:[#allocation2 + $0x60] sm:$0xff]
    %v203 = vld [vmem:[#allocation2 + $0x68] sm:$0xff]
    %v204 = vld [vmem:[#allocation2 + $0x70] sm:$0xff]
    %v205 = vld [vmem:[#allocation2 + $0x78] sm:$0xff]
    %v206 = vld [vmem:[#allocation2 + $0x80] sm:$0xff]
    %v207 = vld [vmem:[#allocation2 + $0x88] sm:$0xff]
    %v208 = vld [vmem:[#allocation2 + $0x90] sm:$0xff]
    %v209 = vld [vmem:[#allocation2 + $0x98] sm:$0xff]
    %v210 = vld [vmem:[#allocation2 + $0xa0] sm:$0xff]
    %v211 = vld [vmem:[#allocation2 + $0xa8] sm:$0xff]
    %v212 = vld [vmem:[#allocation2 + $0xb0] sm:$0xff]
    %v213 = vld [vmem:[#allocation2 + $0xb8] sm:$0xff]
    %v214 = vld [vmem:[#allocation2 + $0xc0] sm:$0xff]
    %v215 = vld [vmem:[#allocation2 + $0xc8] sm:$0xff]
    %v216 = vld [vmem:[#allocation2 + $0xd0] sm:$0xff]
    %v217 = vld [vmem:[#allocation2 + $0xd8] sm:$0xff]
    %v218 = vld [vmem:[#allocation2 + $0xe0] sm:$0xff]
    %v219 = vld [vmem:[#allocation2 + $0xe8] sm:$0xff]
    %v220 = vld [vmem:[#allocation2 + $0xf0] sm:$0xff]
    %v221 = vld [vmem:[#allocation2 + $0xf8] sm:$0xff]
    %v222 = vld [vmem:[#allocation2 + $0x100] sm:$0xff]
    %v223 = vld [vmem:[#allocation2 + $0x108] sm:$0xff]
    %v224 = vld [vmem:[#allocation2 + $0x110] sm:$0xff]
    %v225 = vld [vmem:[#allocation2 + $0x118] sm:$0xff]
    %v226 = vld [vmem:[#allocation2 + $0x120] sm:$0xff]
    %v227 = vld [vmem:[#allocation2 + $0x128] sm:$0xff]
    %v228 = vld [vmem:[#allocation2 + $0x130] sm:$0xff]
    %v229 = vld [vmem:[#allocation2 + $0x138] sm:$0xff]
    %v230 = vld [vmem:[#allocation2 + $0x140] sm:$0xff]
    %v231 = vld [vmem:[#allocation2 + $0x148] sm:$0xff]
    %v232 = vld [vmem:[#allocation2 + $0x150] sm:$0xff]
    %v233 = vld [vmem:[#allocation2 + $0x158] sm:$0xff]
    %v234 = vld [vmem:[#allocation2 + $0x160] sm:$0xff]
    %v235 = vld [vmem:[#allocation2 + $0x168] sm:$0xff]
    %v236 = vld [vmem:[#allocation2 + $0x170] sm:$0xff]
    %v237 = vld [vmem:[#allocation2 + $0x178] sm:$0xff]
    %v238 = vld [vmem:[#allocation2 + $0x180] sm:$0xff]
    %v239 = vld [vmem:[#allocation2 + $0x188] sm:$0xff]
    %v240 = vld [vmem:[#allocation2 + $0x190] sm:$0xff]
    %v241 = vld [vmem:[#allocation2 + $0x198] sm:$0xff]
    %v242 = vld [vmem:[#allocation2 + $0x1a0] sm:$0xff]
    %v243 = vld [vmem:[#allocation2 + $0x1a8] sm:$0xff]
    %v244 = vld [vmem:[#allocation2 + $0x1b0] sm:$0xff]
    %v245 = vld [vmem:[#allocation2 + $0x1b8] sm:$0xff]
    %v246 = vld [vmem:[#allocation2 + $0x1c0] sm:$0xff]
    %v247 = vld [vmem:[#allocation2 + $0x1c8] sm:$0xff]
    %v248 = vld [vmem:[#allocation2 + $0x1d0] sm:$0xff]
    %v249 = vld [vmem:[#allocation2 + $0x1d8] sm:$0xff]
    %v250 = vld [vmem:[#allocation2 + $0x1e0] sm:$0xff]
    %v251 = vld [vmem:[#allocation2 + $0x1e8] sm:$0xff]
    %v252 = vld [vmem:[#allocation2 + $0x1f0] sm:$0xff]
    %v253 = vld [vmem:[#allocation2 + $0x1f8] sm:$0xff]
    %v254 = vld [vmem:[#allocation2 + $0x200] sm:$0xff]
    %v255 = vld [vmem:[#allocation2 + $0x208] sm:$0xff]
    %v256 = vld [vmem:[#allocation2 + $0x210] sm:$0xff]
    %v257 = vld [vmem:[#allocation2 + $0x218] sm:$0xff]
    %v258 = vld [vmem:[#allocation2 + $0x220] sm:$0xff]
    %v259 = vld [vmem:[#allocation2 + $0x228] sm:$0xff]
    %v260 = vld [vmem:[#allocation2 + $0x230] sm:$0xff]
    %v261 = vld [vmem:[#allocation2 + $0x238] sm:$0xff]
    %v262 = vld [vmem:[#allocation2 + $0x240] sm:$0xff]
    %v263 = vld [vmem:[#allocation2 + $0x248] sm:$0xff]
    %v264 = vld [vmem:[#allocation2 + $0x250] sm:$0xff]
    %v265 = vld [vmem:[#allocation2 + $0x258] sm:$0xff]
    %v266 = vld [vmem:[#allocation2 + $0x260] sm:$0xff]
    %v267 = vld [vmem:[#allocation2 + $0x268] sm:$0xff]
    %v268 = vld [vmem:[#allocation2 + $0x270] sm:$0xff]
    %v269 = vld [vmem:[#allocation2 + $0x278] sm:$0xff]
    %v270 = vld [vmem:[#allocation2 + $0x280] sm:$0xff]
    %v271 = vld [vmem:[#allocation2 + $0x288] sm:$0xff]
    %v272 = vld [vmem:[#allocation2 + $0x290] sm:$0xff]
    %v273 = vld [vmem:[#allocation2 + $0x298] sm:$0xff]
    %v274 = vld [vmem:[#allocation2 + $0x2a0] sm:$0xff]
    %v275 = vld [vmem:[#allocation2 + $0x2a8] sm:$0xff]
    %v276 = vld [vmem:[#allocation2 + $0x2b0] sm:$0xff]
    %v277 = vld [vmem:[#allocation2 + $0x2b8] sm:$0xff]
    %v278 = vld [vmem:[#allocation2 + $0x2c0] sm:$0xff]
    %v279 = vld [vmem:[#allocation2 + $0x2c8] sm:$0xff]
    %v280 = vld [vmem:[#allocation2 + $0x2d0] sm:$0xff]
    %v281 = vld [vmem:[#allocation2 + $0x2d8] sm:$0xff]
    %v282 = vld [vmem:[#allocation2 + $0x2e0] sm:$0xff]
    %v283 = vld [vmem:[#allocation2 + $0x2e8] sm:$0xff]
    %v284 = vld [vmem:[#allocation2 + $0x2f0] sm:$0xff]
    %v285 = vld [vmem:[#allocation2 + $0x2f8] sm:$0xff]
    %v286 = vld [vmem:[#allocation2 + $0x300] sm:$0xff]
    %v287 = vld [vmem:[#allocation2 + $0x308] sm:$0xff]
    %v288 = vld [vmem:[#allocation2 + $0x310] sm:$0xff]
    %v289 = vld [vmem:[#allocation2 + $0x318] sm:$0xff]
    %v290 = vld [vmem:[#allocation2 + $0x320] sm:$0xff]
    %v291 = vld [vmem:[#allocation2 + $0x328] sm:$0xff]
    %v292 = vld [vmem:[#allocation2 + $0x330] sm:$0xff]
    %v293 = vld [vmem:[#allocation2 + $0x338] sm:$0xff]
    %v294 = vld [vmem:[#allocation2 + $0x340] sm:$0xff]
    %v295 = vld [vmem:[#allocation2 + $0x348] sm:$0xff]
    %v296 = vld [vmem:[#allocation2 + $0x350] sm:$0xff]
    %v297 = vld [vmem:[#allocation2 + $0x358] sm:$0xff]
    %v298 = vld [vmem:[#allocation2 + $0x360] sm:$0xff]
    %v299 = vld [vmem:[#allocation2 + $0x368] sm:$0xff]
    %v300 = vld [vmem:[#allocation2 + $0x370] sm:$0xff]
    %v301 = vld [vmem:[#allocation2 + $0x378] sm:$0xff]
    %v302 = vld [vmem:[#allocation2 + $0x380] sm:$0xff]
    %v303 = vld [vmem:[#allocation2 + $0x388] sm:$0xff]
    %v304 = vld [vmem:[#allocation2 + $0x390] sm:$0xff]
    %v305 = vld [vmem:[#allocation2 + $0x398] sm:$0xff]
    %v306 = vld [vmem:[#allocation2 + $0x3a0] sm:$0xff]
    %v307 = vld [vmem:[#allocation2 + $0x3a8] sm:$0xff]
    %v308 = vld [vmem:[#allocation2 + $0x3b0] sm:$0xff]
    %v309 = vld [vmem:[#allocation2 + $0x3b8] sm:$0xff]
    %v310 = vld [vmem:[#allocation2 + $0x3c0] sm:$0xff]
    %v311 = vld [vmem:[#allocation2 + $0x3c8] sm:$0xff]
    %v312 = vld [vmem:[#allocation2 + $0x3d0] sm:$0xff]
    %v313 = vld [vmem:[#allocation2 + $0x3d8] sm:$0xff]
    %v314 = vld [vmem:[#allocation2 + $0x3e0] sm:$0xff]
    %v315 = vld [vmem:[#allocation2 + $0x3e8] sm:$0xff]
    %v316 = vld [vmem:[#allocation2 + $0x3f0] sm:$0xff]
    %v317 = vld [vmem:[#allocation2 + $0x3f8] sm:$0xff]
    %v318 = vld [vmem:[#allocation2 + $0x400] sm:$0xff]
    %v319 = vld [vmem:[#allocation2 + $0x408] sm:$0xff]
    %v320 = vld [vmem:[#allocation2 + $0x410] sm:$0xff]
    %v321 = vld [vmem:[#allocation2 + $0x418] sm:$0xff]
    %v322 = vld [vmem:[#allocation2 + $0x420] sm:$0xff]
    %v323 = vld [vmem:[#allocation2 + $0x428] sm:$0xff]
    %v324 = vld [vmem:[#allocation2 + $0x430] sm:$0xff]
    %v325 = vld [vmem:[#allocation2 + $0x438] sm:$0xff]
    %v326 = vld [vmem:[#allocation2 + $0x440] sm:$0xff]
    %v327 = vld [vmem:[#allocation2 + $0x448] sm:$0xff]
    %v328 = vld [vmem:[#allocation2 + $0x450] sm:$0xff]
    %v329 = vld [vmem:[#allocation2 + $0x458] sm:$0xff]
    %v330 = vld [vmem:[#allocation2 + $0x460] sm:$0xff]
    %v331 = vld [vmem:[#allocation2 + $0x468] sm:$0xff]
    %v332 = vld [vmem:[#allocation2 + $0x470] sm:$0xff]
    %v333 = vld [vmem:[#allocation2 + $0x478] sm:$0xff]
    %v334 = vld [vmem:[#allocation2 + $0x480] sm:$0xff]
    %v335 = vld [vmem:[#allocation2 + $0x488] sm:$0xff]
    %v336 = vld [vmem:[#allocation2 + $0x490] sm:$0xff]
    %v337 = vld [vmem:[#allocation2 + $0x498] sm:$0xff]
    %v338 = vld [vmem:[#allocation2 + $0x4a0] sm:$0xff]
    %v339 = vld [vmem:[#allocation2 + $0x4a8] sm:$0xff]
    %v340 = vld [vmem:[#allocation2 + $0x4b0] sm:$0xff]
    %v341 = vld [vmem:[#allocation2 + $0x4b8] sm:$0xff]
    %v342 = vld [vmem:[#allocation2 + $0x4c0] sm:$0xff]
    %v343 = vld [vmem:[#allocation2 + $0x4c8] sm:$0xff]
    %v344 = vld [vmem:[#allocation2 + $0x4d0] sm:$0xff]
    %v345 = vld [vmem:[#allocation2 + $0x4d8] sm:$0xff]
    %v346 = vld [vmem:[#allocation2 + $0x4e0] sm:$0xff]
    %v347 = vld [vmem:[#allocation2 + $0x4e8] sm:$0xff]
    %v348 = vld [vmem:[#allocation2 + $0x4f0] sm:$0xff]
    %v349 = vld [vmem:[#allocation2 + $0x4f8] sm:$0xff]
    %v350 = vld [vmem:[#allocation2 + $0x500] sm:$0xff]
    %v351 = vld [vmem:[#allocation2 + $0x508] sm:$0xff]
    %v352 = vld [vmem:[#allocation2 + $0x510] sm:$0xff]
    %v353 = vld [vmem:[#allocation2 + $0x518] sm:$0xff]
    %v354 = vld [vmem:[#allocation2 + $0x520] sm:$0xff]
    %v355 = vld [vmem:[#allocation2 + $0x528] sm:$0xff]
    %v356 = vld [vmem:[#allocation2 + $0x530] sm:$0xff]
    %v357 = vld [vmem:[#allocation2 + $0x538] sm:$0xff]
    %v358 = vld [vmem:[#allocation2 + $0x540] sm:$0xff]
    %v359 = vld [vmem:[#allocation2 + $0x548] sm:$0xff]
    %v360 = vld [vmem:[#allocation2 + $0x550] sm:$0xff]
    %v361 = vld [vmem:[#allocation2 + $0x558] sm:$0xff]
    %v362 = vld [vmem:[#allocation2 + $0x560] sm:$0xff]
    %v363 = vld [vmem:[#allocation2 + $0x568] sm:$0xff]
    %v364 = vld [vmem:[#allocation2 + $0x570] sm:$0xff]
    %v365 = vld [vmem:[#allocation2 + $0x578] sm:$0xff]
    %v366 = vld [vmem:[#allocation2 + $0x580] sm:$0xff]
    %v367 = vld [vmem:[#allocation2 + $0x588] sm:$0xff]
    %v368 = vld [vmem:[#allocation2 + $0x590] sm:$0xff]
    %v369 = vld [vmem:[#allocation2 + $0x598] sm:$0xff]
    %v370 = vld [vmem:[#allocation2 + $0x5a0] sm:$0xff]
    %v371 = vld [vmem:[#allocation2 + $0x5a8] sm:$0xff]
    %v372 = vld [vmem:[#allocation2 + $0x5b0] sm:$0xff]
    %v373 = vld [vmem:[#allocation2 + $0x5b8] sm:$0xff]
    %v374 = vld [vmem:[#allocation2 + $0x5c0] sm:$0xff]
    %v375 = vld [vmem:[#allocation2 + $0x5c8] sm:$0xff]
    %v376 = vld [vmem:[#allocation2 + $0x5d0] sm:$0xff]
    %v377 = vld [vmem:[#allocation2 + $0x5d8] sm:$0xff]
    %v378 = vld [vmem:[#allocation2 + $0x5e0] sm:$0xff]
    %v379 = vld [vmem:[#allocation2 + $0x5e8] sm:$0xff]
    %v380 = vld [vmem:[#allocation2 + $0x5f0] sm:$0xff]
    %v381 = vld [vmem:[#allocation2 + $0x5f8] sm:$0xff]
    %v382 = vld [vmem:[#allocation2 + $0x600] sm:$0xff]
    %v383 = vld [vmem:[#allocation2 + $0x608] sm:$0xff]
    %v384 = vld [vmem:[#allocation2 + $0x610] sm:$0xff]
    %v385 = vld [vmem:[#allocation2 + $0x618] sm:$0xff]
    %v386 = vld [vmem:[#allocation2 + $0x620] sm:$0xff]
    %v387 = vld [vmem:[#allocation2 + $0x628] sm:$0xff]
    %v388 = vld [vmem:[#allocation2 + $0x630] sm:$0xff]
    %v389 = vld [vmem:[#allocation2 + $0x638] sm:$0xff]
    %v390 = vld [vmem:[#allocation2 + $0x640] sm:$0xff]
    %v391 = vld [vmem:[#allocation2 + $0x648] sm:$0xff]
    %v392 = vld [vmem:[#allocation2 + $0x650] sm:$0xff]
    %v393 = vld [vmem:[#allocation2 + $0x658] sm:$0xff]
    %v394 = vld [vmem:[#allocation2 + $0x660] sm:$0xff]
    %v395 = vld [vmem:[#allocation2 + $0x668] sm:$0xff]
    %v396 = vld [vmem:[#allocation2 + $0x670] sm:$0xff]
    %v397 = vld [vmem:[#allocation2 + $0x678] sm:$0xff]
    %v398 = vld [vmem:[#allocation2 + $0x680] sm:$0xff]
    %v399 = vld [vmem:[#allocation2 + $0x688] sm:$0xff]
    %v400 = vld [vmem:[#allocation2 + $0x690] sm:$0xff]
    %v401 = vld [vmem:[#allocation2 + $0x698] sm:$0xff]
    %v402 = vld [vmem:[#allocation2 + $0x6a0] sm:$0xff]
    %v403 = vld [vmem:[#allocation2 + $0x6a8] sm:$0xff]
    %v404 = vld [vmem:[#allocation2 + $0x6b0] sm:$0xff]
    %v405 = vld [vmem:[#allocation2 + $0x6b8] sm:$0xff]
    %v406 = vld [vmem:[#allocation2 + $0x6c0] sm:$0xff]
    %v407 = vld [vmem:[#allocation2 + $0x6c8] sm:$0xff]
    %v408 = vld [vmem:[#allocation2 + $0x6d0] sm:$0xff]
    %v409 = vld [vmem:[#allocation2 + $0x6d8] sm:$0xff]
    %v410 = vld [vmem:[#allocation2 + $0x6e0] sm:$0xff]
    %v411 = vld [vmem:[#allocation2 + $0x6e8] sm:$0xff]
    %v412 = vld [vmem:[#allocation2 + $0x6f0] sm:$0xff]
    %v413 = vld [vmem:[#allocation2 + $0x6f8] sm:$0xff]
    %v414 = vld [vmem:[#allocation2 + $0x700] sm:$0xff]
    %v415 = vld [vmem:[#allocation2 + $0x708] sm:$0xff]
    %v416 = vld [vmem:[#allocation2 + $0x710] sm:$0xff]
    %v417 = vld [vmem:[#allocation2 + $0x718] sm:$0xff]
    %v418 = vld [vmem:[#allocation2 + $0x720] sm:$0xff]
    %v419 = vld [vmem:[#allocation2 + $0x728] sm:$0xff]
    %v420 = vld [vmem:[#allocation2 + $0x730] sm:$0xff]
    %v421 = vld [vmem:[#allocation2 + $0x738] sm:$0xff]
    %v422 = vld [vmem:[#allocation2 + $0x740] sm:$0xff]
    %v423 = vld [vmem:[#allocation2 + $0x748] sm:$0xff]
    %v424 = vld [vmem:[#allocation2 + $0x750] sm:$0xff]
    %v425 = vld [vmem:[#allocation2 + $0x758] sm:$0xff]
    %v426 = vld [vmem:[#allocation2 + $0x760] sm:$0xff]
    %v427 = vld [vmem:[#allocation2 + $0x768] sm:$0xff]
    %v428 = vld [vmem:[#allocation2 + $0x770] sm:$0xff]
    %v429 = vld [vmem:[#allocation2 + $0x778] sm:$0xff]
    %v430 = vld [vmem:[#allocation2 + $0x780] sm:$0xff]
    %v431 = vld [vmem:[#allocation2 + $0x788] sm:$0xff]
    %v432 = vld [vmem:[#allocation2 + $0x790] sm:$0xff]
    %v433 = vld [vmem:[#allocation2 + $0x798] sm:$0xff]
    %v434 = vld [vmem:[#allocation2 + $0x7a0] sm:$0xff]
    %v435 = vld [vmem:[#allocation2 + $0x7a8] sm:$0xff]
    %v436 = vld [vmem:[#allocation2 + $0x7b0] sm:$0xff]
    %v437 = vld [vmem:[#allocation2 + $0x7b8] sm:$0xff]
    %v438 = vld [vmem:[#allocation2 + $0x7c0] sm:$0xff]
    %v439 = vld [vmem:[#allocation2 + $0x7c8] sm:$0xff]
    %v440 = vld [vmem:[#allocation2 + $0x7d0] sm:$0xff]
    %v441 = vld [vmem:[#allocation2 + $0x7d8] sm:$0xff]
    %v442 = vld [vmem:[#allocation2 + $0x7e0] sm:$0xff]
    %v443 = vld [vmem:[#allocation2 + $0x7e8] sm:$0xff]
    %v444 = vld [vmem:[#allocation2 + $0x7f0] sm:$0xff]
    %v445 = vld [vmem:[#allocation2 + $0x7f8] sm:$0xff]
    %v446 = vld [vmem:[#allocation7] sm:$0xff]
    %v448 = vlaneseq
    %v449 = vshrl.u32 %v448, 7
    %v450 = vsub.s32 0, %v449
    %v451 = vrot.slane %v446, %v450
    %v452 = vlaneseq
    %v453 = vshrl.u32 %v452, 7
    %v454 = vsub.s32 1, %v453
    %v455 = vrot.slane %v446, %v454
    %v456 = vlaneseq
    %v457 = vshrl.u32 %v456, 7
    %v458 = vsub.s32 2, %v457
    %v459 = vrot.slane %v446, %v458
    %v460 = vlaneseq
    %v461 = vshrl.u32 %v460, 7
    %v462 = vsub.s32 3, %v461
    %v463 = vrot.slane %v446, %v462
    %v464 = vlaneseq
    %v465 = vshrl.u32 %v464, 7
    %v466 = vsub.s32 4, %v465
    %v467 = vrot.slane %v446, %v466
    %v468 = vlaneseq
    %v469 = vshrl.u32 %v468, 7
    %v470 = vsub.s32 5, %v469
    %v471 = vrot.slane %v446, %v470
    %v472 = vlaneseq
    %v473 = vshrl.u32 %v472, 7
    %v474 = vsub.s32 6, %v473
    %v475 = vrot.slane %v446, %v474
    %v476 = vlaneseq
    %v477 = vshrl.u32 %v476, 7
    %v478 = vsub.s32 7, %v477
    %v479 = vrot.slane %v446, %v478
    %v490 = vunpack.c.l.s4 1966171168
    %v491 = vunpack.c.0.s8 %v490
    %v492 = vlaneseq
    %v493 = vshrl.u32 %v492, 7
    %v494 = vsub.s32 %v491, %v493
    %v495 = vrot.slane %v149, %v494
    %v496 = vcombine.high %v495, %v495
    %v498 = vunpack.c.l.s4 1966171168
    %v499 = vunpack.c.0.s8 %v498
    %v500 = vlaneseq
    %v501 = vshrl.u32 %v500, 7
    %v502 = vsub.s32 %v499, %v501
    %v503 = vrot.slane %v495, %v502
    %v505 = vunpack.c.l.s4 1966171168
    %v506 = vunpack.c.0.s8 %v505
    %v507 = vlaneseq
    %v508 = vshrl.u32 %v507, 7
    %v509 = vsub.s32 %v506, %v508
    %v510 = vrot.slane %v496, %v509
    %v511 = vcombine.high %v503, %v503
    %v512 = vcombine.high %v510, %v510
    %517 = vmatprep.subr.bf16.mxu0 %v191
    %518 = vmatpush1.bf16.msra.mxu0 %v190
    %519 = vmatprep.subr.bf16.mxu0 %v199
    %520 = vmatpush1.bf16.msra.mxu0 %v198
    %521 = vmatprep.subr.bf16.mxu0 %v207
    %522 = vmatpush1.bf16.msra.mxu0 %v206
    %523 = vmatprep.subr.bf16.mxu0 %v215
    %524 = vmatpush1.bf16.msra.mxu0 %v214
    %525 = vmatprep.subr.bf16.mxu0 %v223
    %526 = vmatpush1.bf16.msra.mxu0 %v222
    %527 = vmatprep.subr.bf16.mxu0 %v231
    %528 = vmatpush1.bf16.msra.mxu0 %v230
    %529 = vmatprep.subr.bf16.mxu0 %v239
    %530 = vmatpush1.bf16.msra.mxu0 %v238
    %531 = vmatprep.subr.bf16.mxu0 %v247
    %532 = vmatpush1.bf16.msra.mxu0 %v246
    %533 = vmatprep.subr.bf16.mxu0 %v255
    %534 = vmatpush1.bf16.msra.mxu0 %v254
    %535 = vmatprep.subr.bf16.mxu0 %v263
    %536 = vmatpush1.bf16.msra.mxu0 %v262
    %537 = vmatprep.subr.bf16.mxu0 %v271
    %538 = vmatpush1.bf16.msra.mxu0 %v270
    %539 = vmatprep.subr.bf16.mxu0 %v279
    %540 = vmatpush1.bf16.msra.mxu0 %v278
    %541 = vmatprep.subr.bf16.mxu0 %v287
    %542 = vmatpush1.bf16.msra.mxu0 %v286
    %543 = vmatprep.subr.bf16.mxu0 %v295
    %544 = vmatpush1.bf16.msra.mxu0 %v294
    %545 = vmatprep.subr.bf16.mxu0 %v303
    %546 = vmatpush1.bf16.msra.mxu0 %v302
    %547 = vmatprep.subr.bf16.mxu0 %v311
    %548 = vmatpush1.bf16.msra.mxu0 %v310
    %549 = vmatprep.mubr.bf16.mxu0 %v510
    %550 = vmatmul.mubr.bf16.gmra.mrb[0].mxu0 %v503
    %v551 = vpop.f32.mrb[0].mxu0
    %v552 = vadd.f32 %v451, %v551
    %v553 = vpop.f32.mrb[0].mxu0
    %v554 = vadd.f32 %v455, %v553
    %v555 = vpop.f32.mrb[0].mxu0
    %v556 = vpop.f32.mrb[0].mxu0
    %557 = vdwg.mxu0
    %558 = vmatprep.subr.bf16.mxu0 %v319
    %559 = vmatpush1.bf16.msra.mxu0 %v318
    %560 = vmatprep.subr.bf16.mxu0 %v327
    %561 = vmatpush1.bf16.msra.mxu0 %v326
    %562 = vmatprep.subr.bf16.mxu0 %v335
    %563 = vmatpush1.bf16.msra.mxu0 %v334
    %564 = vmatprep.subr.bf16.mxu0 %v343
    %565 = vmatpush1.bf16.msra.mxu0 %v342
    %566 = vmatprep.subr.bf16.mxu0 %v351
    %567 = vmatpush1.bf16.msra.mxu0 %v350
    %568 = vmatprep.subr.bf16.mxu0 %v359
    %569 = vmatpush1.bf16.msra.mxu0 %v358
    %570 = vmatprep.subr.bf16.mxu0 %v367
    %571 = vmatpush1.bf16.msra.mxu0 %v366
    %572 = vmatprep.subr.bf16.mxu0 %v375
    %573 = vmatpush1.bf16.msra.mxu0 %v374
    %574 = vmatprep.subr.bf16.mxu0 %v383
    %575 = vmatpush1.bf16.msra.mxu0 %v382
    %576 = vmatprep.subr.bf16.mxu0 %v391
    %577 = vmatpush1.bf16.msra.mxu0 %v390
    %578 = vmatprep.subr.bf16.mxu0 %v399
    %579 = vmatpush1.bf16.msra.mxu0 %v398
    %580 = vmatprep.subr.bf16.mxu0 %v407
    %581 = vmatpush1.bf16.msra.mxu0 %v406
    %582 = vmatprep.subr.bf16.mxu0 %v415
    %583 = vmatpush1.bf16.msra.mxu0 %v414
    %584 = vmatprep.subr.bf16.mxu0 %v423
    %585 = vmatpush1.bf16.msra.mxu0 %v422
    %586 = vmatprep.subr.bf16.mxu0 %v431
    %587 = vmatpush1.bf16.msra.mxu0 %v430
    %588 = vmatprep.subr.bf16.mxu0 %v439
    %589 = vmatpush1.bf16.msra.mxu0 %v438
    %590 = vmatprep.mubr.bf16.mxu0 %v512
    %591 = vmatmul.mubr.bf16.gmra.mrb[0].mxu0 %v511
    %v592 = vpop.f32.mrb[0].mxu0
    %v593 = vadd.f32 %v552, %v592
    %v594 = vpop.f32.mrb[0].mxu0
    %v595 = vadd.f32 %v554, %v594
    %v596 = vpop.f32.mrb[0].mxu0
    %v597 = vpop.f32.mrb[0].mxu0
    %598 = vdwg.mxu0
    %599 = vmatprep.subr.bf16.mxu0 %v193
    %600 = vmatpush1.bf16.msra.mxu0 %v192
    %601 = vmatprep.subr.bf16.mxu0 %v201
    %602 = vmatpush1.bf16.msra.mxu0 %v200
    %603 = vmatprep.subr.bf16.mxu0 %v209
    %604 = vmatpush1.bf16.msra.mxu0 %v208
    %605 = vmatprep.subr.bf16.mxu0 %v217
    %606 = vmatpush1.bf16.msra.mxu0 %v216
    %607 = vmatprep.subr.bf16.mxu0 %v225
    %608 = vmatpush1.bf16.msra.mxu0 %v224
    %609 = vmatprep.subr.bf16.mxu0 %v233
    %610 = vmatpush1.bf16.msra.mxu0 %v232
    %611 = vmatprep.subr.bf16.mxu0 %v241
    %612 = vmatpush1.bf16.msra.mxu0 %v240
    %613 = vmatprep.subr.bf16.mxu0 %v249
    %614 = vmatpush1.bf16.msra.mxu0 %v248
    %615 = vmatprep.subr.bf16.mxu0 %v257
    %616 = vmatpush1.bf16.msra.mxu0 %v256
    %617 = vmatprep.subr.bf16.mxu0 %v265
    %618 = vmatpush1.bf16.msra.mxu0 %v264
    %619 = vmatprep.subr.bf16.mxu0 %v273
    %620 = vmatpush1.bf16.msra.mxu0 %v272
    %621 = vmatprep.subr.bf16.mxu0 %v281
    %622 = vmatpush1.bf16.msra.mxu0 %v280
    %623 = vmatprep.subr.bf16.mxu0 %v289
    %624 = vmatpush1.bf16.msra.mxu0 %v288
    %625 = vmatprep.subr.bf16.mxu0 %v297
    %626 = vmatpush1.bf16.msra.mxu0 %v296
    %627 = vmatprep.subr.bf16.mxu0 %v305
    %628 = vmatpush1.bf16.msra.mxu0 %v304
    %629 = vmatprep.subr.bf16.mxu0 %v313
    %630 = vmatpush1.bf16.msra.mxu0 %v312
    %631 = vmatprep.mubr.bf16.mxu0 %v510
    %632 = vmatmul.mubr.bf16.gmra.mrb[0].mxu0 %v503
    %v633 = vpop.f32.mrb[0].mxu0
    %v634 = vadd.f32 %v459, %v633
    %v635 = vpop.f32.mrb[0].mxu0
    %v636 = vadd.f32 %v463, %v635
    %v637 = vpop.f32.mrb[0].mxu0
    %v638 = vpop.f32.mrb[0].mxu0
    %639 = vdwg.mxu0
    %640 = vmatprep.subr.bf16.mxu0 %v321
    %641 = vmatpush1.bf16.msra.mxu0 %v320
    %642 = vmatprep.subr.bf16.mxu0 %v329
    %643 = vmatpush1.bf16.msra.mxu0 %v328
    %644 = vmatprep.subr.bf16.mxu0 %v337
    %645 = vmatpush1.bf16.msra.mxu0 %v336
    %646 = vmatprep.subr.bf16.mxu0 %v345
    %647 = vmatpush1.bf16.msra.mxu0 %v344
    %648 = vmatprep.subr.bf16.mxu0 %v353
    %649 = vmatpush1.bf16.msra.mxu0 %v352
    %650 = vmatprep.subr.bf16.mxu0 %v361
    %651 = vmatpush1.bf16.msra.mxu0 %v360
    %652 = vmatprep.subr.bf16.mxu0 %v369
    %653 = vmatpush1.bf16.msra.mxu0 %v368
    %654 = vmatprep.subr.bf16.mxu0 %v377
    %655 = vmatpush1.bf16.msra.mxu0 %v376
    %656 = vmatprep.subr.bf16.mxu0 %v385
    %657 = vmatpush1.bf16.msra.mxu0 %v384
    %658 = vmatprep.subr.bf16.mxu0 %v393
    %659 = vmatpush1.bf16.msra.mxu0 %v392
    %660 = vmatprep.subr.bf16.mxu0 %v401
    %661 = vmatpush1.bf16.msra.mxu0 %v400
    %662 = vmatprep.subr.bf16.mxu0 %v409
    %663 = vmatpush1.bf16.msra.mxu0 %v408
    %664 = vmatprep.subr.bf16.mxu0 %v417
    %665 = vmatpush1.bf16.msra.mxu0 %v416
    %666 = vmatprep.subr.bf16.mxu0 %v425
    %667 = vmatpush1.bf16.msra.mxu0 %v424
    %668 = vmatprep.subr.bf16.mxu0 %v433
    %669 = vmatpush1.bf16.msra.mxu0 %v432
    %670 = vmatprep.subr.bf16.mxu0 %v441
    %671 = vmatpush1.bf16.msra.mxu0 %v440
    %672 = vmatprep.mubr.bf16.mxu0 %v512
    %673 = vmatmul.mubr.bf16.gmra.mrb[0].mxu0 %v511
    %v674 = vpop.f32.mrb[0].mxu0
    %v675 = vadd.f32 %v634, %v674
    %v676 = vpop.f32.mrb[0].mxu0
    %v677 = vadd.f32 %v636, %v676
    %v678 = vpop.f32.mrb[0].mxu0
    %v679 = vpop.f32.mrb[0].mxu0
    %680 = vdwg.mxu0
    %681 = vmatprep.subr.bf16.mxu0 %v195
    %682 = vmatpush1.bf16.msra.mxu0 %v194
    %683 = vmatprep.subr.bf16.mxu0 %v203
    %684 = vmatpush1.bf16.msra.mxu0 %v202
    %685 = vmatprep.subr.bf16.mxu0 %v211
    %686 = vmatpush1.bf16.msra.mxu0 %v210
    %687 = vmatprep.subr.bf16.mxu0 %v219
    %688 = vmatpush1.bf16.msra.mxu0 %v218
    %689 = vmatprep.subr.bf16.mxu0 %v227
    %690 = vmatpush1.bf16.msra.mxu0 %v226
    %691 = vmatprep.subr.bf16.mxu0 %v235
    %692 = vmatpush1.bf16.msra.mxu0 %v234
    %693 = vmatprep.subr.bf16.mxu0 %v243
    %694 = vmatpush1.bf16.msra.mxu0 %v242
    %695 = vmatprep.subr.bf16.mxu0 %v251
    %696 = vmatpush1.bf16.msra.mxu0 %v250
    %697 = vmatprep.subr.bf16.mxu0 %v259
    %698 = vmatpush1.bf16.msra.mxu0 %v258
    %699 = vmatprep.subr.bf16.mxu0 %v267
    %700 = vmatpush1.bf16.msra.mxu0 %v266
    %701 = vmatprep.subr.bf16.mxu0 %v275
    %702 = vmatpush1.bf16.msra.mxu0 %v274
    %703 = vmatprep.subr.bf16.mxu0 %v283
    %704 = vmatpush1.bf16.msra.mxu0 %v282
    %705 = vmatprep.subr.bf16.mxu0 %v291
    %706 = vmatpush1.bf16.msra.mxu0 %v290
    %707 = vmatprep.subr.bf16.mxu0 %v299
    %708 = vmatpush1.bf16.msra.mxu0 %v298
    %709 = vmatprep.subr.bf16.mxu0 %v307
    %710 = vmatpush1.bf16.msra.mxu0 %v306
    %711 = vmatprep.subr.bf16.mxu0 %v315
    %712 = vmatpush1.bf16.msra.mxu0 %v314
    %713 = vmatprep.mubr.bf16.mxu0 %v510
    %714 = vmatmul.mubr.bf16.gmra.mrb[0].mxu0 %v503
    %v715 = vpop.f32.mrb[0].mxu0
    %v716 = vadd.f32 %v467, %v715
    %v717 = vpop.f32.mrb[0].mxu0
    %v718 = vadd.f32 %v471, %v717
    %v719 = vpop.f32.mrb[0].mxu0
    %v720 = vpop.f32.mrb[0].mxu0
    %721 = vdwg.mxu0
    %722 = vmatprep.subr.bf16.mxu0 %v323
    %723 = vmatpush1.bf16.msra.mxu0 %v322
    %724 = vmatprep.subr.bf16.mxu0 %v331
    %725 = vmatpush1.bf16.msra.mxu0 %v330
    %726 = vmatprep.subr.bf16.mxu0 %v339
    %727 = vmatpush1.bf16.msra.mxu0 %v338
    %728 = vmatprep.subr.bf16.mxu0 %v347
    %729 = vmatpush1.bf16.msra.mxu0 %v346
    %730 = vmatprep.subr.bf16.mxu0 %v355
    %731 = vmatpush1.bf16.msra.mxu0 %v354
    %732 = vmatprep.subr.bf16.mxu0 %v363
    %733 = vmatpush1.bf16.msra.mxu0 %v362
    %734 = vmatprep.subr.bf16.mxu0 %v371
    %735 = vmatpush1.bf16.msra.mxu0 %v370
    %736 = vmatprep.subr.bf16.mxu0 %v379
    %737 = vmatpush1.bf16.msra.mxu0 %v378
    %738 = vmatprep.subr.bf16.mxu0 %v387
    %739 = vmatpush1.bf16.msra.mxu0 %v386
    %740 = vmatprep.subr.bf16.mxu0 %v395
    %741 = vmatpush1.bf16.msra.mxu0 %v394
    %742 = vmatprep.subr.bf16.mxu0 %v403
    %743 = vmatpush1.bf16.msra.mxu0 %v402
    %744 = vmatprep.subr.bf16.mxu0 %v411
    %745 = vmatpush1.bf16.msra.mxu0 %v410
    %746 = vmatprep.subr.bf16.mxu0 %v419
    %747 = vmatpush1.bf16.msra.mxu0 %v418
    %748 = vmatprep.subr.bf16.mxu0 %v427
    %749 = vmatpush1.bf16.msra.mxu0 %v426
    %750 = vmatprep.subr.bf16.mxu0 %v435
    %751 = vmatpush1.bf16.msra.mxu0 %v434
    %752 = vmatprep.subr.bf16.mxu0 %v443
    %753 = vmatpush1.bf16.msra.mxu0 %v442
    %754 = vmatprep.mubr.bf16.mxu0 %v512
    %755 = vmatmul.mubr.bf16.gmra.mrb[0].mxu0 %v511
    %v756 = vpop.f32.mrb[0].mxu0
    %v757 = vadd.f32 %v716, %v756
    %v758 = vpop.f32.mrb[0].mxu0
    %v759 = vadd.f32 %v718, %v758
    %v760 = vpop.f32.mrb[0].mxu0
    %v761 = vpop.f32.mrb[0].mxu0
    %762 = vdwg.mxu0
    %763 = vmatprep.subr.bf16.mxu0 %v197
    %764 = vmatpush1.bf16.msra.mxu0 %v196
    %765 = vmatprep.subr.bf16.mxu0 %v205
    %766 = vmatpush1.bf16.msra.mxu0 %v204
    %767 = vmatprep.subr.bf16.mxu0 %v213
    %768 = vmatpush1.bf16.msra.mxu0 %v212
    %769 = vmatprep.subr.bf16.mxu0 %v221
    %770 = vmatpush1.bf16.msra.mxu0 %v220
    %771 = vmatprep.subr.bf16.mxu0 %v229
    %772 = vmatpush1.bf16.msra.mxu0 %v228
    %773 = vmatprep.subr.bf16.mxu0 %v237
    %774 = vmatpush1.bf16.msra.mxu0 %v236
    %775 = vmatprep.subr.bf16.mxu0 %v245
    %776 = vmatpush1.bf16.msra.mxu0 %v244
    %777 = vmatprep.subr.bf16.mxu0 %v253
    %778 = vmatpush1.bf16.msra.mxu0 %v252
    %779 = vmatprep.subr.bf16.mxu0 %v261
    %780 = vmatpush1.bf16.msra.mxu0 %v260
    %781 = vmatprep.subr.bf16.mxu0 %v269
    %782 = vmatpush1.bf16.msra.mxu0 %v268
    %783 = vmatprep.subr.bf16.mxu0 %v277
    %784 = vmatpush1.bf16.msra.mxu0 %v276
    %785 = vmatprep.subr.bf16.mxu0 %v285
    %786 = vmatpush1.bf16.msra.mxu0 %v284
    %787 = vmatprep.subr.bf16.mxu0 %v293
    %788 = vmatpush1.bf16.msra.mxu0 %v292
    %789 = vmatprep.subr.bf16.mxu0 %v301
    %790 = vmatpush1.bf16.msra.mxu0 %v300
    %791 = vmatprep.subr.bf16.mxu0 %v309
    %792 = vmatpush1.bf16.msra.mxu0 %v308
    %793 = vmatprep.subr.bf16.mxu0 %v317
    %794 = vmatpush1.bf16.msra.mxu0 %v316
    %795 = vmatprep.mubr.bf16.mxu0 %v510
    %796 = vmatmul.mubr.bf16.gmra.mrb[0].mxu0 %v503
    %v797 = vpop.f32.mrb[0].mxu0
    %v798 = vadd.f32 %v475, %v797
    %v799 = vpop.f32.mrb[0].mxu0
    %v800 = vadd.f32 %v479, %v799
    %v801 = vpop.f32.mrb[0].mxu0
    %v802 = vpop.f32.mrb[0].mxu0
    %803 = vdwg.mxu0
    %804 = vmatprep.subr.bf16.mxu0 %v325
    %805 = vmatpush1.bf16.msra.mxu0 %v324
    %806 = vmatprep.subr.bf16.mxu0 %v333
    %807 = vmatpush1.bf16.msra.mxu0 %v332
    %808 = vmatprep.subr.bf16.mxu0 %v341
    %809 = vmatpush1.bf16.msra.mxu0 %v340
    %810 = vmatprep.subr.bf16.mxu0 %v349
    %811 = vmatpush1.bf16.msra.mxu0 %v348
    %812 = vmatprep.subr.bf16.mxu0 %v357
    %813 = vmatpush1.bf16.msra.mxu0 %v356
    %814 = vmatprep.subr.bf16.mxu0 %v365
    %815 = vmatpush1.bf16.msra.mxu0 %v364
    %816 = vmatprep.subr.bf16.mxu0 %v373
    %817 = vmatpush1.bf16.msra.mxu0 %v372
    %818 = vmatprep.subr.bf16.mxu0 %v381
    %819 = vmatpush1.bf16.msra.mxu0 %v380
    %820 = vmatprep.subr.bf16.mxu0 %v389
    %821 = vmatpush1.bf16.msra.mxu0 %v388
    %822 = vmatprep.subr.bf16.mxu0 %v397
    %823 = vmatpush1.bf16.msra.mxu0 %v396
    %824 = vmatprep.subr.bf16.mxu0 %v405
    %825 = vmatpush1.bf16.msra.mxu0 %v404
    %826 = vmatprep.subr.bf16.mxu0 %v413
    %827 = vmatpush1.bf16.msra.mxu0 %v412
    %828 = vmatprep.subr.bf16.mxu0 %v421
    %829 = vmatpush1.bf16.msra.mxu0 %v420
    %830 = vmatprep.subr.bf16.mxu0 %v429
    %831 = vmatpush1.bf16.msra.mxu0 %v428
    %832 = vmatprep.subr.bf16.mxu0 %v437
    %833 = vmatpush1.bf16.msra.mxu0 %v436
    %834 = vmatprep.subr.bf16.mxu0 %v445
    %835 = vmatpush1.bf16.msra.mxu0 %v444
    %836 = vmatprep.mubr.bf16.mxu0 %v512
    %837 = vmatmul.mubr.bf16.gmra.mrb[0].mxu0 %v511
    %v838 = vpop.f32.mrb[0].mxu0
    %v839 = vadd.f32 %v798, %v838
    %v840 = vpop.f32.mrb[0].mxu0
    %v841 = vadd.f32 %v800, %v840
    %v842 = vpop.f32.mrb[0].mxu0
    %v843 = vpop.f32.mrb[0].mxu0
    %844 = vdwg.mxu0
    %v845 = vmax.f32 %v593, 0.0
    %v846 = vmax.f32 %v595, 0.0
    %v847 = vmax.f32 %v675, 0.0
    %v848 = vmax.f32 %v677, 0.0
    %v849 = vmax.f32 %v757, 0.0
    %v850 = vmax.f32 %v759, 0.0
    %v851 = vmax.f32 %v839, 0.0
    %v852 = vmax.f32 %v841, 0.0
    %v853 = vpack.c.bf16 %v845, %v845
    %v854 = vpack.c.bf16 %v846, %v846
    %v855 = vpack.c.bf16 %v847, %v847
    %v856 = vpack.c.bf16 %v848, %v848
    %v857 = vpack.c.bf16 %v849, %v849
    %v858 = vpack.c.bf16 %v850, %v850
    %v859 = vpack.c.bf16 %v851, %v851
    %v860 = vpack.c.bf16 %v852, %v852
    %s862 = sshll.u32 1, 14
    %s863 = sxor.u32 4294967295, %s862
    %s865 = sadd.s32 2, %s118
    %s867 = sshll.u32 7, 26
    %s868 = sxor.u32 4294967295, %s867
    %s869 = sand.u32 0, %s868
    %s870 = sshll.u32 %s865, 26
    %s871 = sor.u32 %s869, %s870
    %s872 = sshll.u32 [#allocation2], 4
    %s873 = int_to_ptr.vmem [resolvable:$true] %s872
    %876 = sst [smem:[#allocation22]] 512
    %s877 = scalar_lea.smem [#allocation22], 1
    %878 = sst [smem:[%s877]] 1024
    %s879 = scalar_lea.smem [#allocation22], 2
    %880 = sst [smem:[%s879]] 4
    %s881 = scalar_lea.smem [#allocation22], 3
    %882 = sst [smem:[%s881]] 64
    %s883 = scalar_lea.smem [#allocation22], 4
    %884 = sst [smem:[%s883]] 128
    %s885 = scalar_lea.smem [#allocation22], 5
    %886 = sst [smem:[%s885]] 2
    %s887 = scalar_lea.smem [#allocation22], 6
    %888 = sst [smem:[%s887]] 256
    %s889 = scalar_lea.smem [#allocation22], 7
    %890 = sst [smem:[%s889]] 64
    %s891 = scalar_lea.smem [#allocation22], 8
    %892 = sst [smem:[%s891]] 4
    %894 = dma.general %s3, 32768, %s873, [#allocation3], [#allocation21], [#allocation22], %s871, 0
    %s895 = smul.u32 4, 128
    %s896 = smul.u32 %s895, 8
    %s897 = sshll.u32 %s896, 4
    %898 = dma.done %s151, %s897
    %v899 = vld [vmem:[%s150] sm:$0xff]
    %v900 = vld [vmem:[%s150 + $0x8] sm:$0xff]
    %v901 = vld [vmem:[%s150 + $0x10] sm:$0xff]
    %v902 = vld [vmem:[%s150 + $0x18] sm:$0xff]
    %v903 = vld [vmem:[%s150 + $0x20] sm:$0xff]
    %v904 = vld [vmem:[%s150 + $0x28] sm:$0xff]
    %v905 = vld [vmem:[%s150 + $0x30] sm:$0xff]
    %v906 = vld [vmem:[%s150 + $0x38] sm:$0xff]
    %v907 = vld [vmem:[%s150 + $0x40] sm:$0xff]
    %v908 = vld [vmem:[%s150 + $0x48] sm:$0xff]
    %v909 = vld [vmem:[%s150 + $0x50] sm:$0xff]
    %v910 = vld [vmem:[%s150 + $0x58] sm:$0xff]
    %v911 = vld [vmem:[%s150 + $0x60] sm:$0xff]
    %v912 = vld [vmem:[%s150 + $0x68] sm:$0xff]
    %v913 = vld [vmem:[%s150 + $0x70] sm:$0xff]
    %v914 = vld [vmem:[%s150 + $0x78] sm:$0xff]
    %v915 = vld [vmem:[%s150 + $0x80] sm:$0xff]
    %v916 = vld [vmem:[%s150 + $0x88] sm:$0xff]
    %v917 = vld [vmem:[%s150 + $0x90] sm:$0xff]
    %v918 = vld [vmem:[%s150 + $0x98] sm:$0xff]
    %v919 = vld [vmem:[%s150 + $0xa0] sm:$0xff]
    %v920 = vld [vmem:[%s150 + $0xa8] sm:$0xff]
    %v921 = vld [vmem:[%s150 + $0xb0] sm:$0xff]
    %v922 = vld [vmem:[%s150 + $0xb8] sm:$0xff]
    %v923 = vld [vmem:[%s150 + $0xc0] sm:$0xff]
    %v924 = vld [vmem:[%s150 + $0xc8] sm:$0xff]
    %v925 = vld [vmem:[%s150 + $0xd0] sm:$0xff]
    %v926 = vld [vmem:[%s150 + $0xd8] sm:$0xff]
    %v927 = vld [vmem:[%s150 + $0xe0] sm:$0xff]
    %v928 = vld [vmem:[%s150 + $0xe8] sm:$0xff]
    %v929 = vld [vmem:[%s150 + $0xf0] sm:$0xff]
    %v930 = vld [vmem:[%s150 + $0xf8] sm:$0xff]
    %v931 = vld [vmem:[%s150 + $0x100] sm:$0xff]
    %v932 = vld [vmem:[%s150 + $0x108] sm:$0xff]
    %v933 = vld [vmem:[%s150 + $0x110] sm:$0xff]
    %v934 = vld [vmem:[%s150 + $0x118] sm:$0xff]
    %v935 = vld [vmem:[%s150 + $0x120] sm:$0xff]
    %v936 = vld [vmem:[%s150 + $0x128] sm:$0xff]
    %v937 = vld [vmem:[%s150 + $0x130] sm:$0xff]
    %v938 = vld [vmem:[%s150 + $0x138] sm:$0xff]
    %v939 = vld [vmem:[%s150 + $0x140] sm:$0xff]
    %v940 = vld [vmem:[%s150 + $0x148] sm:$0xff]
    %v941 = vld [vmem:[%s150 + $0x150] sm:$0xff]
    %v942 = vld [vmem:[%s150 + $0x158] sm:$0xff]
    %v943 = vld [vmem:[%s150 + $0x160] sm:$0xff]
    %v944 = vld [vmem:[%s150 + $0x168] sm:$0xff]
    %v945 = vld [vmem:[%s150 + $0x170] sm:$0xff]
    %v946 = vld [vmem:[%s150 + $0x178] sm:$0xff]
    %v947 = vld [vmem:[%s150 + $0x180] sm:$0xff]
    %v948 = vld [vmem:[%s150 + $0x188] sm:$0xff]
    %v949 = vld [vmem:[%s150 + $0x190] sm:$0xff]
    %v950 = vld [vmem:[%s150 + $0x198] sm:$0xff]
    %v951 = vld [vmem:[%s150 + $0x1a0] sm:$0xff]
    %v952 = vld [vmem:[%s150 + $0x1a8] sm:$0xff]
    %v953 = vld [vmem:[%s150 + $0x1b0] sm:$0xff]
    %v954 = vld [vmem:[%s150 + $0x1b8] sm:$0xff]
    %v955 = vld [vmem:[%s150 + $0x1c0] sm:$0xff]
    %v956 = vld [vmem:[%s150 + $0x1c8] sm:$0xff]
    %v957 = vld [vmem:[%s150 + $0x1d0] sm:$0xff]
    %v958 = vld [vmem:[%s150 + $0x1d8] sm:$0xff]
    %v959 = vld [vmem:[%s150 + $0x1e0] sm:$0xff]
    %v960 = vld [vmem:[%s150 + $0x1e8] sm:$0xff]
    %v961 = vld [vmem:[%s150 + $0x1f0] sm:$0xff]
    %v962 = vld [vmem:[%s150 + $0x1f8] sm:$0xff]
    %v963 = vld [vmem:[%s150 + $0x200] sm:$0xff]
    %v964 = vld [vmem:[%s150 + $0x208] sm:$0xff]
    %v965 = vld [vmem:[%s150 + $0x210] sm:$0xff]
    %v966 = vld [vmem:[%s150 + $0x218] sm:$0xff]
    %v967 = vld [vmem:[%s150 + $0x220] sm:$0xff]
    %v968 = vld [vmem:[%s150 + $0x228] sm:$0xff]
    %v969 = vld [vmem:[%s150 + $0x230] sm:$0xff]
    %v970 = vld [vmem:[%s150 + $0x238] sm:$0xff]
    %v971 = vld [vmem:[%s150 + $0x240] sm:$0xff]
    %v972 = vld [vmem:[%s150 + $0x248] sm:$0xff]
    %v973 = vld [vmem:[%s150 + $0x250] sm:$0xff]
    %v974 = vld [vmem:[%s150 + $0x258] sm:$0xff]
    %v975 = vld [vmem:[%s150 + $0x260] sm:$0xff]
    %v976 = vld [vmem:[%s150 + $0x268] sm:$0xff]
    %v977 = vld [vmem:[%s150 + $0x270] sm:$0xff]
    %v978 = vld [vmem:[%s150 + $0x278] sm:$0xff]
    %v979 = vld [vmem:[%s150 + $0x280] sm:$0xff]
    %v980 = vld [vmem:[%s150 + $0x288] sm:$0xff]
    %v981 = vld [vmem:[%s150 + $0x290] sm:$0xff]
    %v982 = vld [vmem:[%s150 + $0x298] sm:$0xff]
    %v983 = vld [vmem:[%s150 + $0x2a0] sm:$0xff]
    %v984 = vld [vmem:[%s150 + $0x2a8] sm:$0xff]
    %v985 = vld [vmem:[%s150 + $0x2b0] sm:$0xff]
    %v986 = vld [vmem:[%s150 + $0x2b8] sm:$0xff]
    %v987 = vld [vmem:[%s150 + $0x2c0] sm:$0xff]
    %v988 = vld [vmem:[%s150 + $0x2c8] sm:$0xff]
    %v989 = vld [vmem:[%s150 + $0x2d0] sm:$0xff]
    %v990 = vld [vmem:[%s150 + $0x2d8] sm:$0xff]
    %v991 = vld [vmem:[%s150 + $0x2e0] sm:$0xff]
    %v992 = vld [vmem:[%s150 + $0x2e8] sm:$0xff]
    %v993 = vld [vmem:[%s150 + $0x2f0] sm:$0xff]
    %v994 = vld [vmem:[%s150 + $0x2f8] sm:$0xff]
    %v995 = vld [vmem:[%s150 + $0x300] sm:$0xff]
    %v996 = vld [vmem:[%s150 + $0x308] sm:$0xff]
    %v997 = vld [vmem:[%s150 + $0x310] sm:$0xff]
    %v998 = vld [vmem:[%s150 + $0x318] sm:$0xff]
    %v999 = vld [vmem:[%s150 + $0x320] sm:$0xff]
    %v1000 = vld [vmem:[%s150 + $0x328] sm:$0xff]
    %v1001 = vld [vmem:[%s150 + $0x330] sm:$0xff]
    %v1002 = vld [vmem:[%s150 + $0x338] sm:$0xff]
    %v1003 = vld [vmem:[%s150 + $0x340] sm:$0xff]
    %v1004 = vld [vmem:[%s150 + $0x348] sm:$0xff]
    %v1005 = vld [vmem:[%s150 + $0x350] sm:$0xff]
    %v1006 = vld [vmem:[%s150 + $0x358] sm:$0xff]
    %v1007 = vld [vmem:[%s150 + $0x360] sm:$0xff]
    %v1008 = vld [vmem:[%s150 + $0x368] sm:$0xff]
    %v1009 = vld [vmem:[%s150 + $0x370] sm:$0xff]
    %v1010 = vld [vmem:[%s150 + $0x378] sm:$0xff]
    %v1011 = vld [vmem:[%s150 + $0x380] sm:$0xff]
    %v1012 = vld [vmem:[%s150 + $0x388] sm:$0xff]
    %v1013 = vld [vmem:[%s150 + $0x390] sm:$0xff]
    %v1014 = vld [vmem:[%s150 + $0x398] sm:$0xff]
    %v1015 = vld [vmem:[%s150 + $0x3a0] sm:$0xff]
    %v1016 = vld [vmem:[%s150 + $0x3a8] sm:$0xff]
    %v1017 = vld [vmem:[%s150 + $0x3b0] sm:$0xff]
    %v1018 = vld [vmem:[%s150 + $0x3b8] sm:$0xff]
    %v1019 = vld [vmem:[%s150 + $0x3c0] sm:$0xff]
    %v1020 = vld [vmem:[%s150 + $0x3c8] sm:$0xff]
    %v1021 = vld [vmem:[%s150 + $0x3d0] sm:$0xff]
    %v1022 = vld [vmem:[%s150 + $0x3d8] sm:$0xff]
    %v1023 = vld [vmem:[%s150 + $0x3e0] sm:$0xff]
    %v1024 = vld [vmem:[%s150 + $0x3e8] sm:$0xff]
    %v1025 = vld [vmem:[%s150 + $0x3f0] sm:$0xff]
    %v1026 = vld [vmem:[%s150 + $0x3f8] sm:$0xff]
    %v1027 = vld [vmem:[%s150 + $0x400] sm:$0xff]
    %v1028 = vld [vmem:[%s150 + $0x408] sm:$0xff]
    %v1029 = vld [vmem:[%s150 + $0x410] sm:$0xff]
    %v1030 = vld [vmem:[%s150 + $0x418] sm:$0xff]
    %v1031 = vld [vmem:[%s150 + $0x420] sm:$0xff]
    %v1032 = vld [vmem:[%s150 + $0x428] sm:$0xff]
    %v1033 = vld [vmem:[%s150 + $0x430] sm:$0xff]
    %v1034 = vld [vmem:[%s150 + $0x438] sm:$0xff]
    %v1035 = vld [vmem:[%s150 + $0x440] sm:$0xff]
    %v1036 = vld [vmem:[%s150 + $0x448] sm:$0xff]
    %v1037 = vld [vmem:[%s150 + $0x450] sm:$0xff]
    %v1038 = vld [vmem:[%s150 + $0x458] sm:$0xff]
    %v1039 = vld [vmem:[%s150 + $0x460] sm:$0xff]
    %v1040 = vld [vmem:[%s150 + $0x468] sm:$0xff]
    %v1041 = vld [vmem:[%s150 + $0x470] sm:$0xff]
    %v1042 = vld [vmem:[%s150 + $0x478] sm:$0xff]
    %v1043 = vld [vmem:[%s150 + $0x480] sm:$0xff]
    %v1044 = vld [vmem:[%s150 + $0x488] sm:$0xff]
    %v1045 = vld [vmem:[%s150 + $0x490] sm:$0xff]
    %v1046 = vld [vmem:[%s150 + $0x498] sm:$0xff]
    %v1047 = vld [vmem:[%s150 + $0x4a0] sm:$0xff]
    %v1048 = vld [vmem:[%s150 + $0x4a8] sm:$0xff]
    %v1049 = vld [vmem:[%s150 + $0x4b0] sm:$0xff]
    %v1050 = vld [vmem:[%s150 + $0x4b8] sm:$0xff]
    %v1051 = vld [vmem:[%s150 + $0x4c0] sm:$0xff]
    %v1052 = vld [vmem:[%s150 + $0x4c8] sm:$0xff]
    %v1053 = vld [vmem:[%s150 + $0x4d0] sm:$0xff]
    %v1054 = vld [vmem:[%s150 + $0x4d8] sm:$0xff]
    %v1055 = vld [vmem:[%s150 + $0x4e0] sm:$0xff]
    %v1056 = vld [vmem:[%s150 + $0x4e8] sm:$0xff]
    %v1057 = vld [vmem:[%s150 + $0x4f0] sm:$0xff]
    %v1058 = vld [vmem:[%s150 + $0x4f8] sm:$0xff]
    %v1059 = vld [vmem:[%s150 + $0x500] sm:$0xff]
    %v1060 = vld [vmem:[%s150 + $0x508] sm:$0xff]
    %v1061 = vld [vmem:[%s150 + $0x510] sm:$0xff]
    %v1062 = vld [vmem:[%s150 + $0x518] sm:$0xff]
    %v1063 = vld [vmem:[%s150 + $0x520] sm:$0xff]
    %v1064 = vld [vmem:[%s150 + $0x528] sm:$0xff]
    %v1065 = vld [vmem:[%s150 + $0x530] sm:$0xff]
    %v1066 = vld [vmem:[%s150 + $0x538] sm:$0xff]
    %v1067 = vld [vmem:[%s150 + $0x540] sm:$0xff]
    %v1068 = vld [vmem:[%s150 + $0x548] sm:$0xff]
    %v1069 = vld [vmem:[%s150 + $0x550] sm:$0xff]
    %v1070 = vld [vmem:[%s150 + $0x558] sm:$0xff]
    %v1071 = vld [vmem:[%s150 + $0x560] sm:$0xff]
    %v1072 = vld [vmem:[%s150 + $0x568] sm:$0xff]
    %v1073 = vld [vmem:[%s150 + $0x570] sm:$0xff]
    %v1074 = vld [vmem:[%s150 + $0x578] sm:$0xff]
    %v1075 = vld [vmem:[%s150 + $0x580] sm:$0xff]
    %v1076 = vld [vmem:[%s150 + $0x588] sm:$0xff]
    %v1077 = vld [vmem:[%s150 + $0x590] sm:$0xff]
    %v1078 = vld [vmem:[%s150 + $0x598] sm:$0xff]
    %v1079 = vld [vmem:[%s150 + $0x5a0] sm:$0xff]
    %v1080 = vld [vmem:[%s150 + $0x5a8] sm:$0xff]
    %v1081 = vld [vmem:[%s150 + $0x5b0] sm:$0xff]
    %v1082 = vld [vmem:[%s150 + $0x5b8] sm:$0xff]
    %v1083 = vld [vmem:[%s150 + $0x5c0] sm:$0xff]
    %v1084 = vld [vmem:[%s150 + $0x5c8] sm:$0xff]
    %v1085 = vld [vmem:[%s150 + $0x5d0] sm:$0xff]
    %v1086 = vld [vmem:[%s150 + $0x5d8] sm:$0xff]
    %v1087 = vld [vmem:[%s150 + $0x5e0] sm:$0xff]
    %v1088 = vld [vmem:[%s150 + $0x5e8] sm:$0xff]
    %v1089 = vld [vmem:[%s150 + $0x5f0] sm:$0xff]
    %v1090 = vld [vmem:[%s150 + $0x5f8] sm:$0xff]
    %v1091 = vld [vmem:[%s150 + $0x600] sm:$0xff]
    %v1092 = vld [vmem:[%s150 + $0x608] sm:$0xff]
    %v1093 = vld [vmem:[%s150 + $0x610] sm:$0xff]
    %v1094 = vld [vmem:[%s150 + $0x618] sm:$0xff]
    %v1095 = vld [vmem:[%s150 + $0x620] sm:$0xff]
    %v1096 = vld [vmem:[%s150 + $0x628] sm:$0xff]
    %v1097 = vld [vmem:[%s150 + $0x630] sm:$0xff]
    %v1098 = vld [vmem:[%s150 + $0x638] sm:$0xff]
    %v1099 = vld [vmem:[%s150 + $0x640] sm:$0xff]
    %v1100 = vld [vmem:[%s150 + $0x648] sm:$0xff]
    %v1101 = vld [vmem:[%s150 + $0x650] sm:$0xff]
    %v1102 = vld [vmem:[%s150 + $0x658] sm:$0xff]
    %v1103 = vld [vmem:[%s150 + $0x660] sm:$0xff]
    %v1104 = vld [vmem:[%s150 + $0x668] sm:$0xff]
    %v1105 = vld [vmem:[%s150 + $0x670] sm:$0xff]
    %v1106 = vld [vmem:[%s150 + $0x678] sm:$0xff]
    %v1107 = vld [vmem:[%s150 + $0x680] sm:$0xff]
    %v1108 = vld [vmem:[%s150 + $0x688] sm:$0xff]
    %v1109 = vld [vmem:[%s150 + $0x690] sm:$0xff]
    %v1110 = vld [vmem:[%s150 + $0x698] sm:$0xff]
    %v1111 = vld [vmem:[%s150 + $0x6a0] sm:$0xff]
    %v1112 = vld [vmem:[%s150 + $0x6a8] sm:$0xff]
    %v1113 = vld [vmem:[%s150 + $0x6b0] sm:$0xff]
    %v1114 = vld [vmem:[%s150 + $0x6b8] sm:$0xff]
    %v1115 = vld [vmem:[%s150 + $0x6c0] sm:$0xff]
    %v1116 = vld [vmem:[%s150 + $0x6c8] sm:$0xff]
    %v1117 = vld [vmem:[%s150 + $0x6d0] sm:$0xff]
    %v1118 = vld [vmem:[%s150 + $0x6d8] sm:$0xff]
    %v1119 = vld [vmem:[%s150 + $0x6e0] sm:$0xff]
    %v1120 = vld [vmem:[%s150 + $0x6e8] sm:$0xff]
    %v1121 = vld [vmem:[%s150 + $0x6f0] sm:$0xff]
    %v1122 = vld [vmem:[%s150 + $0x6f8] sm:$0xff]
    %v1123 = vld [vmem:[%s150 + $0x700] sm:$0xff]
    %v1124 = vld [vmem:[%s150 + $0x708] sm:$0xff]
    %v1125 = vld [vmem:[%s150 + $0x710] sm:$0xff]
    %v1126 = vld [vmem:[%s150 + $0x718] sm:$0xff]
    %v1127 = vld [vmem:[%s150 + $0x720] sm:$0xff]
    %v1128 = vld [vmem:[%s150 + $0x728] sm:$0xff]
    %v1129 = vld [vmem:[%s150 + $0x730] sm:$0xff]
    %v1130 = vld [vmem:[%s150 + $0x738] sm:$0xff]
    %v1131 = vld [vmem:[%s150 + $0x740] sm:$0xff]
    %v1132 = vld [vmem:[%s150 + $0x748] sm:$0xff]
    %v1133 = vld [vmem:[%s150 + $0x750] sm:$0xff]
    %v1134 = vld [vmem:[%s150 + $0x758] sm:$0xff]
    %v1135 = vld [vmem:[%s150 + $0x760] sm:$0xff]
    %v1136 = vld [vmem:[%s150 + $0x768] sm:$0xff]
    %v1137 = vld [vmem:[%s150 + $0x770] sm:$0xff]
    %v1138 = vld [vmem:[%s150 + $0x778] sm:$0xff]
    %v1139 = vld [vmem:[%s150 + $0x780] sm:$0xff]
    %v1140 = vld [vmem:[%s150 + $0x788] sm:$0xff]
    %v1141 = vld [vmem:[%s150 + $0x790] sm:$0xff]
    %v1142 = vld [vmem:[%s150 + $0x798] sm:$0xff]
    %v1143 = vld [vmem:[%s150 + $0x7a0] sm:$0xff]
    %v1144 = vld [vmem:[%s150 + $0x7a8] sm:$0xff]
    %v1145 = vld [vmem:[%s150 + $0x7b0] sm:$0xff]
    %v1146 = vld [vmem:[%s150 + $0x7b8] sm:$0xff]
    %v1147 = vld [vmem:[%s150 + $0x7c0] sm:$0xff]
    %v1148 = vld [vmem:[%s150 + $0x7c8] sm:$0xff]
    %v1149 = vld [vmem:[%s150 + $0x7d0] sm:$0xff]
    %v1150 = vld [vmem:[%s150 + $0x7d8] sm:$0xff]
    %v1151 = vld [vmem:[%s150 + $0x7e0] sm:$0xff]
    %v1152 = vld [vmem:[%s150 + $0x7e8] sm:$0xff]
    %v1153 = vld [vmem:[%s150 + $0x7f0] sm:$0xff]
    %v1154 = vld [vmem:[%s150 + $0x7f8] sm:$0xff]
    %v1155 = vld [vmem:[%s150 + $0x800] sm:$0xff]
    %v1156 = vld [vmem:[%s150 + $0x808] sm:$0xff]
    %v1157 = vld [vmem:[%s150 + $0x810] sm:$0xff]
    %v1158 = vld [vmem:[%s150 + $0x818] sm:$0xff]
    %v1159 = vld [vmem:[%s150 + $0x820] sm:$0xff]
    %v1160 = vld [vmem:[%s150 + $0x828] sm:$0xff]
    %v1161 = vld [vmem:[%s150 + $0x830] sm:$0xff]
    %v1162 = vld [vmem:[%s150 + $0x838] sm:$0xff]
    %v1163 = vld [vmem:[%s150 + $0x840] sm:$0xff]
    %v1164 = vld [vmem:[%s150 + $0x848] sm:$0xff]
    %v1165 = vld [vmem:[%s150 + $0x850] sm:$0xff]
    %v1166 = vld [vmem:[%s150 + $0x858] sm:$0xff]
    %v1167 = vld [vmem:[%s150 + $0x860] sm:$0xff]
    %v1168 = vld [vmem:[%s150 + $0x868] sm:$0xff]
    %v1169 = vld [vmem:[%s150 + $0x870] sm:$0xff]
    %v1170 = vld [vmem:[%s150 + $0x878] sm:$0xff]
    %v1171 = vld [vmem:[%s150 + $0x880] sm:$0xff]
    %v1172 = vld [vmem:[%s150 + $0x888] sm:$0xff]
    %v1173 = vld [vmem:[%s150 + $0x890] sm:$0xff]
    %v1174 = vld [vmem:[%s150 + $0x898] sm:$0xff]
    %v1175 = vld [vmem:[%s150 + $0x8a0] sm:$0xff]
    %v1176 = vld [vmem:[%s150 + $0x8a8] sm:$0xff]
    %v1177 = vld [vmem:[%s150 + $0x8b0] sm:$0xff]
    %v1178 = vld [vmem:[%s150 + $0x8b8] sm:$0xff]
    %v1179 = vld [vmem:[%s150 + $0x8c0] sm:$0xff]
    %v1180 = vld [vmem:[%s150 + $0x8c8] sm:$0xff]
    %v1181 = vld [vmem:[%s150 + $0x8d0] sm:$0xff]
    %v1182 = vld [vmem:[%s150 + $0x8d8] sm:$0xff]
    %v1183 = vld [vmem:[%s150 + $0x8e0] sm:$0xff]
    %v1184 = vld [vmem:[%s150 + $0x8e8] sm:$0xff]
    %v1185 = vld [vmem:[%s150 + $0x8f0] sm:$0xff]
    %v1186 = vld [vmem:[%s150 + $0x8f8] sm:$0xff]
    %v1187 = vld [vmem:[%s150 + $0x900] sm:$0xff]
    %v1188 = vld [vmem:[%s150 + $0x908] sm:$0xff]
    %v1189 = vld [vmem:[%s150 + $0x910] sm:$0xff]
    %v1190 = vld [vmem:[%s150 + $0x918] sm:$0xff]
    %v1191 = vld [vmem:[%s150 + $0x920] sm:$0xff]
    %v1192 = vld [vmem:[%s150 + $0x928] sm:$0xff]
    %v1193 = vld [vmem:[%s150 + $0x930] sm:$0xff]
    %v1194 = vld [vmem:[%s150 + $0x938] sm:$0xff]
    %v1195 = vld [vmem:[%s150 + $0x940] sm:$0xff]
    %v1196 = vld [vmem:[%s150 + $0x948] sm:$0xff]
    %v1197 = vld [vmem:[%s150 + $0x950] sm:$0xff]
    %v1198 = vld [vmem:[%s150 + $0x958] sm:$0xff]
    %v1199 = vld [vmem:[%s150 + $0x960] sm:$0xff]
    %v1200 = vld [vmem:[%s150 + $0x968] sm:$0xff]
    %v1201 = vld [vmem:[%s150 + $0x970] sm:$0xff]
    %v1202 = vld [vmem:[%s150 + $0x978] sm:$0xff]
    %v1203 = vld [vmem:[%s150 + $0x980] sm:$0xff]
    %v1204 = vld [vmem:[%s150 + $0x988] sm:$0xff]
    %v1205 = vld [vmem:[%s150 + $0x990] sm:$0xff]
    %v1206 = vld [vmem:[%s150 + $0x998] sm:$0xff]
    %v1207 = vld [vmem:[%s150 + $0x9a0] sm:$0xff]
    %v1208 = vld [vmem:[%s150 + $0x9a8] sm:$0xff]
    %v1209 = vld [vmem:[%s150 + $0x9b0] sm:$0xff]
    %v1210 = vld [vmem:[%s150 + $0x9b8] sm:$0xff]
    %v1211 = vld [vmem:[%s150 + $0x9c0] sm:$0xff]
    %v1212 = vld [vmem:[%s150 + $0x9c8] sm:$0xff]
    %v1213 = vld [vmem:[%s150 + $0x9d0] sm:$0xff]
    %v1214 = vld [vmem:[%s150 + $0x9d8] sm:$0xff]
    %v1215 = vld [vmem:[%s150 + $0x9e0] sm:$0xff]
    %v1216 = vld [vmem:[%s150 + $0x9e8] sm:$0xff]
    %v1217 = vld [vmem:[%s150 + $0x9f0] sm:$0xff]
    %v1218 = vld [vmem:[%s150 + $0x9f8] sm:$0xff]
    %v1219 = vld [vmem:[%s150 + $0xa00] sm:$0xff]
    %v1220 = vld [vmem:[%s150 + $0xa08] sm:$0xff]
    %v1221 = vld [vmem:[%s150 + $0xa10] sm:$0xff]
    %v1222 = vld [vmem:[%s150 + $0xa18] sm:$0xff]
    %v1223 = vld [vmem:[%s150 + $0xa20] sm:$0xff]
    %v1224 = vld [vmem:[%s150 + $0xa28] sm:$0xff]
    %v1225 = vld [vmem:[%s150 + $0xa30] sm:$0xff]
    %v1226 = vld [vmem:[%s150 + $0xa38] sm:$0xff]
    %v1227 = vld [vmem:[%s150 + $0xa40] sm:$0xff]
    %v1228 = vld [vmem:[%s150 + $0xa48] sm:$0xff]
    %v1229 = vld [vmem:[%s150 + $0xa50] sm:$0xff]
    %v1230 = vld [vmem:[%s150 + $0xa58] sm:$0xff]
    %v1231 = vld [vmem:[%s150 + $0xa60] sm:$0xff]
    %v1232 = vld [vmem:[%s150 + $0xa68] sm:$0xff]
    %v1233 = vld [vmem:[%s150 + $0xa70] sm:$0xff]
    %v1234 = vld [vmem:[%s150 + $0xa78] sm:$0xff]
    %v1235 = vld [vmem:[%s150 + $0xa80] sm:$0xff]
    %v1236 = vld [vmem:[%s150 + $0xa88] sm:$0xff]
    %v1237 = vld [vmem:[%s150 + $0xa90] sm:$0xff]
    %v1238 = vld [vmem:[%s150 + $0xa98] sm:$0xff]
    %v1239 = vld [vmem:[%s150 + $0xaa0] sm:$0xff]
    %v1240 = vld [vmem:[%s150 + $0xaa8] sm:$0xff]
    %v1241 = vld [vmem:[%s150 + $0xab0] sm:$0xff]
    %v1242 = vld [vmem:[%s150 + $0xab8] sm:$0xff]
    %v1243 = vld [vmem:[%s150 + $0xac0] sm:$0xff]
    %v1244 = vld [vmem:[%s150 + $0xac8] sm:$0xff]
    %v1245 = vld [vmem:[%s150 + $0xad0] sm:$0xff]
    %v1246 = vld [vmem:[%s150 + $0xad8] sm:$0xff]
    %v1247 = vld [vmem:[%s150 + $0xae0] sm:$0xff]
    %v1248 = vld [vmem:[%s150 + $0xae8] sm:$0xff]
    %v1249 = vld [vmem:[%s150 + $0xaf0] sm:$0xff]
    %v1250 = vld [vmem:[%s150 + $0xaf8] sm:$0xff]
    %v1251 = vld [vmem:[%s150 + $0xb00] sm:$0xff]
    %v1252 = vld [vmem:[%s150 + $0xb08] sm:$0xff]
    %v1253 = vld [vmem:[%s150 + $0xb10] sm:$0xff]
    %v1254 = vld [vmem:[%s150 + $0xb18] sm:$0xff]
    %v1255 = vld [vmem:[%s150 + $0xb20] sm:$0xff]
    %v1256 = vld [vmem:[%s150 + $0xb28] sm:$0xff]
    %v1257 = vld [vmem:[%s150 + $0xb30] sm:$0xff]
    %v1258 = vld [vmem:[%s150 + $0xb38] sm:$0xff]
    %v1259 = vld [vmem:[%s150 + $0xb40] sm:$0xff]
    %v1260 = vld [vmem:[%s150 + $0xb48] sm:$0xff]
    %v1261 = vld [vmem:[%s150 + $0xb50] sm:$0xff]
    %v1262 = vld [vmem:[%s150 + $0xb58] sm:$0xff]
    %v1263 = vld [vmem:[%s150 + $0xb60] sm:$0xff]
    %v1264 = vld [vmem:[%s150 + $0xb68] sm:$0xff]
    %v1265 = vld [vmem:[%s150 + $0xb70] sm:$0xff]
    %v1266 = vld [vmem:[%s150 + $0xb78] sm:$0xff]
    %v1267 = vld [vmem:[%s150 + $0xb80] sm:$0xff]
    %v1268 = vld [vmem:[%s150 + $0xb88] sm:$0xff]
    %v1269 = vld [vmem:[%s150 + $0xb90] sm:$0xff]
    %v1270 = vld [vmem:[%s150 + $0xb98] sm:$0xff]
    %v1271 = vld [vmem:[%s150 + $0xba0] sm:$0xff]
    %v1272 = vld [vmem:[%s150 + $0xba8] sm:$0xff]
    %v1273 = vld [vmem:[%s150 + $0xbb0] sm:$0xff]
    %v1274 = vld [vmem:[%s150 + $0xbb8] sm:$0xff]
    %v1275 = vld [vmem:[%s150 + $0xbc0] sm:$0xff]
    %v1276 = vld [vmem:[%s150 + $0xbc8] sm:$0xff]
    %v1277 = vld [vmem:[%s150 + $0xbd0] sm:$0xff]
    %v1278 = vld [vmem:[%s150 + $0xbd8] sm:$0xff]
    %v1279 = vld [vmem:[%s150 + $0xbe0] sm:$0xff]
    %v1280 = vld [vmem:[%s150 + $0xbe8] sm:$0xff]
    %v1281 = vld [vmem:[%s150 + $0xbf0] sm:$0xff]
    %v1282 = vld [vmem:[%s150 + $0xbf8] sm:$0xff]
    %v1283 = vld [vmem:[%s150 + $0xc00] sm:$0xff]
    %v1284 = vld [vmem:[%s150 + $0xc08] sm:$0xff]
    %v1285 = vld [vmem:[%s150 + $0xc10] sm:$0xff]
    %v1286 = vld [vmem:[%s150 + $0xc18] sm:$0xff]
    %v1287 = vld [vmem:[%s150 + $0xc20] sm:$0xff]
    %v1288 = vld [vmem:[%s150 + $0xc28] sm:$0xff]
    %v1289 = vld [vmem:[%s150 + $0xc30] sm:$0xff]
    %v1290 = vld [vmem:[%s150 + $0xc38] sm:$0xff]
    %v1291 = vld [vmem:[%s150 + $0xc40] sm:$0xff]
    %v1292 = vld [vmem:[%s150 + $0xc48] sm:$0xff]
    %v1293 = vld [vmem:[%s150 + $0xc50] sm:$0xff]
    %v1294 = vld [vmem:[%s150 + $0xc58] sm:$0xff]
    %v1295 = vld [vmem:[%s150 + $0xc60] sm:$0xff]
    %v1296 = vld [vmem:[%s150 + $0xc68] sm:$0xff]
    %v1297 = vld [vmem:[%s150 + $0xc70] sm:$0xff]
    %v1298 = vld [vmem:[%s150 + $0xc78] sm:$0xff]
    %v1299 = vld [vmem:[%s150 + $0xc80] sm:$0xff]
    %v1300 = vld [vmem:[%s150 + $0xc88] sm:$0xff]
    %v1301 = vld [vmem:[%s150 + $0xc90] sm:$0xff]
    %v1302 = vld [vmem:[%s150 + $0xc98] sm:$0xff]
    %v1303 = vld [vmem:[%s150 + $0xca0] sm:$0xff]
    %v1304 = vld [vmem:[%s150 + $0xca8] sm:$0xff]
    %v1305 = vld [vmem:[%s150 + $0xcb0] sm:$0xff]
    %v1306 = vld [vmem:[%s150 + $0xcb8] sm:$0xff]
    %v1307 = vld [vmem:[%s150 + $0xcc0] sm:$0xff]
    %v1308 = vld [vmem:[%s150 + $0xcc8] sm:$0xff]
    %v1309 = vld [vmem:[%s150 + $0xcd0] sm:$0xff]
    %v1310 = vld [vmem:[%s150 + $0xcd8] sm:$0xff]
    %v1311 = vld [vmem:[%s150 + $0xce0] sm:$0xff]
    %v1312 = vld [vmem:[%s150 + $0xce8] sm:$0xff]
    %v1313 = vld [vmem:[%s150 + $0xcf0] sm:$0xff]
    %v1314 = vld [vmem:[%s150 + $0xcf8] sm:$0xff]
    %v1315 = vld [vmem:[%s150 + $0xd00] sm:$0xff]
    %v1316 = vld [vmem:[%s150 + $0xd08] sm:$0xff]
    %v1317 = vld [vmem:[%s150 + $0xd10] sm:$0xff]
    %v1318 = vld [vmem:[%s150 + $0xd18] sm:$0xff]
    %v1319 = vld [vmem:[%s150 + $0xd20] sm:$0xff]
    %v1320 = vld [vmem:[%s150 + $0xd28] sm:$0xff]
    %v1321 = vld [vmem:[%s150 + $0xd30] sm:$0xff]
    %v1322 = vld [vmem:[%s150 + $0xd38] sm:$0xff]
    %v1323 = vld [vmem:[%s150 + $0xd40] sm:$0xff]
    %v1324 = vld [vmem:[%s150 + $0xd48] sm:$0xff]
    %v1325 = vld [vmem:[%s150 + $0xd50] sm:$0xff]
    %v1326 = vld [vmem:[%s150 + $0xd58] sm:$0xff]
    %v1327 = vld [vmem:[%s150 + $0xd60] sm:$0xff]
    %v1328 = vld [vmem:[%s150 + $0xd68] sm:$0xff]
    %v1329 = vld [vmem:[%s150 + $0xd70] sm:$0xff]
    %v1330 = vld [vmem:[%s150 + $0xd78] sm:$0xff]
    %v1331 = vld [vmem:[%s150 + $0xd80] sm:$0xff]
    %v1332 = vld [vmem:[%s150 + $0xd88] sm:$0xff]
    %v1333 = vld [vmem:[%s150 + $0xd90] sm:$0xff]
    %v1334 = vld [vmem:[%s150 + $0xd98] sm:$0xff]
    %v1335 = vld [vmem:[%s150 + $0xda0] sm:$0xff]
    %v1336 = vld [vmem:[%s150 + $0xda8] sm:$0xff]
    %v1337 = vld [vmem:[%s150 + $0xdb0] sm:$0xff]
    %v1338 = vld [vmem:[%s150 + $0xdb8] sm:$0xff]
    %v1339 = vld [vmem:[%s150 + $0xdc0] sm:$0xff]
    %v1340 = vld [vmem:[%s150 + $0xdc8] sm:$0xff]
    %v1341 = vld [vmem:[%s150 + $0xdd0] sm:$0xff]
    %v1342 = vld [vmem:[%s150 + $0xdd8] sm:$0xff]
    %v1343 = vld [vmem:[%s150 + $0xde0] sm:$0xff]
    %v1344 = vld [vmem:[%s150 + $0xde8] sm:$0xff]
    %v1345 = vld [vmem:[%s150 + $0xdf0] sm:$0xff]
    %v1346 = vld [vmem:[%s150 + $0xdf8] sm:$0xff]
    %v1347 = vld [vmem:[%s150 + $0xe00] sm:$0xff]
    %v1348 = vld [vmem:[%s150 + $0xe08] sm:$0xff]
    %v1349 = vld [vmem:[%s150 + $0xe10] sm:$0xff]
    %v1350 = vld [vmem:[%s150 + $0xe18] sm:$0xff]
    %v1351 = vld [vmem:[%s150 + $0xe20] sm:$0xff]
    %v1352 = vld [vmem:[%s150 + $0xe28] sm:$0xff]
    %v1353 = vld [vmem:[%s150 + $0xe30] sm:$0xff]
    %v1354 = vld [vmem:[%s150 + $0xe38] sm:$0xff]
    %v1355 = vld [vmem:[%s150 + $0xe40] sm:$0xff]
    %v1356 = vld [vmem:[%s150 + $0xe48] sm:$0xff]
    %v1357 = vld [vmem:[%s150 + $0xe50] sm:$0xff]
    %v1358 = vld [vmem:[%s150 + $0xe58] sm:$0xff]
    %v1359 = vld [vmem:[%s150 + $0xe60] sm:$0xff]
    %v1360 = vld [vmem:[%s150 + $0xe68] sm:$0xff]
    %v1361 = vld [vmem:[%s150 + $0xe70] sm:$0xff]
    %v1362 = vld [vmem:[%s150 + $0xe78] sm:$0xff]
    %v1363 = vld [vmem:[%s150 + $0xe80] sm:$0xff]
    %v1364 = vld [vmem:[%s150 + $0xe88] sm:$0xff]
    %v1365 = vld [vmem:[%s150 + $0xe90] sm:$0xff]
    %v1366 = vld [vmem:[%s150 + $0xe98] sm:$0xff]
    %v1367 = vld [vmem:[%s150 + $0xea0] sm:$0xff]
    %v1368 = vld [vmem:[%s150 + $0xea8] sm:$0xff]
    %v1369 = vld [vmem:[%s150 + $0xeb0] sm:$0xff]
    %v1370 = vld [vmem:[%s150 + $0xeb8] sm:$0xff]
    %v1371 = vld [vmem:[%s150 + $0xec0] sm:$0xff]
    %v1372 = vld [vmem:[%s150 + $0xec8] sm:$0xff]
    %v1373 = vld [vmem:[%s150 + $0xed0] sm:$0xff]
    %v1374 = vld [vmem:[%s150 + $0xed8] sm:$0xff]
    %v1375 = vld [vmem:[%s150 + $0xee0] sm:$0xff]
    %v1376 = vld [vmem:[%s150 + $0xee8] sm:$0xff]
    %v1377 = vld [vmem:[%s150 + $0xef0] sm:$0xff]
    %v1378 = vld [vmem:[%s150 + $0xef8] sm:$0xff]
    %v1379 = vld [vmem:[%s150 + $0xf00] sm:$0xff]
    %v1380 = vld [vmem:[%s150 + $0xf08] sm:$0xff]
    %v1381 = vld [vmem:[%s150 + $0xf10] sm:$0xff]
    %v1382 = vld [vmem:[%s150 + $0xf18] sm:$0xff]
    %v1383 = vld [vmem:[%s150 + $0xf20] sm:$0xff]
    %v1384 = vld [vmem:[%s150 + $0xf28] sm:$0xff]
    %v1385 = vld [vmem:[%s150 + $0xf30] sm:$0xff]
    %v1386 = vld [vmem:[%s150 + $0xf38] sm:$0xff]
    %v1387 = vld [vmem:[%s150 + $0xf40] sm:$0xff]
    %v1388 = vld [vmem:[%s150 + $0xf48] sm:$0xff]
    %v1389 = vld [vmem:[%s150 + $0xf50] sm:$0xff]
    %v1390 = vld [vmem:[%s150 + $0xf58] sm:$0xff]
    %v1391 = vld [vmem:[%s150 + $0xf60] sm:$0xff]
    %v1392 = vld [vmem:[%s150 + $0xf68] sm:$0xff]
    %v1393 = vld [vmem:[%s150 + $0xf70] sm:$0xff]
    %v1394 = vld [vmem:[%s150 + $0xf78] sm:$0xff]
    %v1395 = vld [vmem:[%s150 + $0xf80] sm:$0xff]
    %v1396 = vld [vmem:[%s150 + $0xf88] sm:$0xff]
    %v1397 = vld [vmem:[%s150 + $0xf90] sm:$0xff]
    %v1398 = vld [vmem:[%s150 + $0xf98] sm:$0xff]
    %v1399 = vld [vmem:[%s150 + $0xfa0] sm:$0xff]
    %v1400 = vld [vmem:[%s150 + $0xfa8] sm:$0xff]
    %v1401 = vld [vmem:[%s150 + $0xfb0] sm:$0xff]
    %v1402 = vld [vmem:[%s150 + $0xfb8] sm:$0xff]
    %v1403 = vld [vmem:[%s150 + $0xfc0] sm:$0xff]
    %v1404 = vld [vmem:[%s150 + $0xfc8] sm:$0xff]
    %v1405 = vld [vmem:[%s150 + $0xfd0] sm:$0xff]
    %v1406 = vld [vmem:[%s150 + $0xfd8] sm:$0xff]
    %v1407 = vld [vmem:[%s150 + $0xfe0] sm:$0xff]
    %v1408 = vld [vmem:[%s150 + $0xfe8] sm:$0xff]
    %v1409 = vld [vmem:[%s150 + $0xff0] sm:$0xff]
    %v1410 = vld [vmem:[%s150 + $0xff8] sm:$0xff]
    %v1411 = vld [vmem:[#allocation9] sm:$0xff]
    %v1413 = vlaneseq
    %v1414 = vshrl.u32 %v1413, 7
    %v1415 = vsub.s32 0, %v1414
    %v1416 = vrot.slane %v1411, %v1415
    %v1417 = vlaneseq
    %v1418 = vshrl.u32 %v1417, 7
    %v1419 = vsub.s32 1, %v1418
    %v1420 = vrot.slane %v1411, %v1419
    %v1421 = vlaneseq
    %v1422 = vshrl.u32 %v1421, 7
    %v1423 = vsub.s32 2, %v1422
    %v1424 = vrot.slane %v1411, %v1423
    %v1425 = vlaneseq
    %v1426 = vshrl.u32 %v1425, 7
    %v1427 = vsub.s32 3, %v1426
    %v1428 = vrot.slane %v1411, %v1427
    %v1429 = vlaneseq
    %v1430 = vshrl.u32 %v1429, 7
    %v1431 = vsub.s32 4, %v1430
    %v1432 = vrot.slane %v1411, %v1431
    %v1433 = vlaneseq
    %v1434 = vshrl.u32 %v1433, 7
    %v1435 = vsub.s32 5, %v1434
    %v1436 = vrot.slane %v1411, %v1435
    %v1437 = vlaneseq
    %v1438 = vshrl.u32 %v1437, 7
    %v1439 = vsub.s32 6, %v1438
    %v1440 = vrot.slane %v1411, %v1439
    %v1441 = vlaneseq
    %v1442 = vshrl.u32 %v1441, 7
    %v1443 = vsub.s32 7, %v1442
    %v1444 = vrot.slane %v1411, %v1443
    %1453 = vmatprep.subr.bf16.mxu0 %v900
    %1454 = vmatpush1.bf16.msra.mxu0 %v899
    %1455 = vmatprep.subr.bf16.mxu0 %v908
    %1456 = vmatpush1.bf16.msra.mxu0 %v907
    %1457 = vmatprep.subr.bf16.mxu0 %v916
    %1458 = vmatpush1.bf16.msra.mxu0 %v915
    %1459 = vmatprep.subr.bf16.mxu0 %v924
    %1460 = vmatpush1.bf16.msra.mxu0 %v923
    %1461 = vmatprep.subr.bf16.mxu0 %v932
    %1462 = vmatpush1.bf16.msra.mxu0 %v931
    %1463 = vmatprep.subr.bf16.mxu0 %v940
    %1464 = vmatpush1.bf16.msra.mxu0 %v939
    %1465 = vmatprep.subr.bf16.mxu0 %v948
    %1466 = vmatpush1.bf16.msra.mxu0 %v947
    %1467 = vmatprep.subr.bf16.mxu0 %v956
    %1468 = vmatpush1.bf16.msra.mxu0 %v955
    %1469 = vmatprep.subr.bf16.mxu0 %v964
    %1470 = vmatpush1.bf16.msra.mxu0 %v963
    %1471 = vmatprep.subr.bf16.mxu0 %v972
    %1472 = vmatpush1.bf16.msra.mxu0 %v971
    %1473 = vmatprep.subr.bf16.mxu0 %v980
    %1474 = vmatpush1.bf16.msra.mxu0 %v979
    %1475 = vmatprep.subr.bf16.mxu0 %v988
    %1476 = vmatpush1.bf16.msra.mxu0 %v987
    %1477 = vmatprep.subr.bf16.mxu0 %v996
    %1478 = vmatpush1.bf16.msra.mxu0 %v995
    %1479 = vmatprep.subr.bf16.mxu0 %v1004
    %1480 = vmatpush1.bf16.msra.mxu0 %v1003
    %1481 = vmatprep.subr.bf16.mxu0 %v1012
    %1482 = vmatpush1.bf16.msra.mxu0 %v1011
    %1483 = vmatprep.subr.bf16.mxu0 %v1020
    %1484 = vmatpush1.bf16.msra.mxu0 %v1019
    %1485 = vmatprep.mubr.bf16.mxu0 %v854
    %1486 = vmatmul.mubr.bf16.gmra.mrb[0].mxu0 %v853
    %v1487 = vpop.f32.mrb[0].mxu0
    %v1488 = vadd.f32 %v1416, %v1487
    %v1489 = vpop.f32.mrb[0].mxu0
    %v1490 = vadd.f32 %v1420, %v1489
    %v1491 = vpop.f32.mrb[0].mxu0
    %v1492 = vpop.f32.mrb[0].mxu0
    %1493 = vdwg.mxu0
    %1494 = vmatprep.subr.bf16.mxu0 %v1028
    %1495 = vmatpush1.bf16.msra.mxu0 %v1027
    %1496 = vmatprep.subr.bf16.mxu0 %v1036
    %1497 = vmatpush1.bf16.msra.mxu0 %v1035
    %1498 = vmatprep.subr.bf16.mxu0 %v1044
    %1499 = vmatpush1.bf16.msra.mxu0 %v1043
    %1500 = vmatprep.subr.bf16.mxu0 %v1052
    %1501 = vmatpush1.bf16.msra.mxu0 %v1051
    %1502 = vmatprep.subr.bf16.mxu0 %v1060
    %1503 = vmatpush1.bf16.msra.mxu0 %v1059
    %1504 = vmatprep.subr.bf16.mxu0 %v1068
    %1505 = vmatpush1.bf16.msra.mxu0 %v1067
    %1506 = vmatprep.subr.bf16.mxu0 %v1076
    %1507 = vmatpush1.bf16.msra.mxu0 %v1075
    %1508 = vmatprep.subr.bf16.mxu0 %v1084
    %1509 = vmatpush1.bf16.msra.mxu0 %v1083
    %1510 = vmatprep.subr.bf16.mxu0 %v1092
    %1511 = vmatpush1.bf16.msra.mxu0 %v1091
    %1512 = vmatprep.subr.bf16.mxu0 %v1100
    %1513 = vmatpush1.bf16.msra.mxu0 %v1099
    %1514 = vmatprep.subr.bf16.mxu0 %v1108
    %1515 = vmatpush1.bf16.msra.mxu0 %v1107
    %1516 = vmatprep.subr.bf16.mxu0 %v1116
    %1517 = vmatpush1.bf16.msra.mxu0 %v1115
    %1518 = vmatprep.subr.bf16.mxu0 %v1124
    %1519 = vmatpush1.bf16.msra.mxu0 %v1123
    %1520 = vmatprep.subr.bf16.mxu0 %v1132
    %1521 = vmatpush1.bf16.msra.mxu0 %v1131
    %1522 = vmatprep.subr.bf16.mxu0 %v1140
    %1523 = vmatpush1.bf16.msra.mxu0 %v1139
    %1524 = vmatprep.subr.bf16.mxu0 %v1148
    %1525 = vmatpush1.bf16.msra.mxu0 %v1147
    %1526 = vmatprep.mubr.bf16.mxu0 %v856
    %1527 = vmatmul.mubr.bf16.gmra.mrb[0].mxu0 %v855
    %v1528 = vpop.f32.mrb[0].mxu0
    %v1529 = vadd.f32 %v1488, %v1528
    %v1530 = vpop.f32.mrb[0].mxu0
    %v1531 = vadd.f32 %v1490, %v1530
    %v1532 = vpop.f32.mrb[0].mxu0
    %v1533 = vpop.f32.mrb[0].mxu0
    %1534 = vdwg.mxu0
    %1535 = vmatprep.subr.bf16.mxu0 %v1156
    %1536 = vmatpush1.bf16.msra.mxu0 %v1155
    %1537 = vmatprep.subr.bf16.mxu0 %v1164
    %1538 = vmatpush1.bf16.msra.mxu0 %v1163
    %1539 = vmatprep.subr.bf16.mxu0 %v1172
    %1540 = vmatpush1.bf16.msra.mxu0 %v1171
    %1541 = vmatprep.subr.bf16.mxu0 %v1180
    %1542 = vmatpush1.bf16.msra.mxu0 %v1179
    %1543 = vmatprep.subr.bf16.mxu0 %v1188
    %1544 = vmatpush1.bf16.msra.mxu0 %v1187
    %1545 = vmatprep.subr.bf16.mxu0 %v1196
    %1546 = vmatpush1.bf16.msra.mxu0 %v1195
    %1547 = vmatprep.subr.bf16.mxu0 %v1204
    %1548 = vmatpush1.bf16.msra.mxu0 %v1203
    %1549 = vmatprep.subr.bf16.mxu0 %v1212
    %1550 = vmatpush1.bf16.msra.mxu0 %v1211
    %1551 = vmatprep.subr.bf16.mxu0 %v1220
    %1552 = vmatpush1.bf16.msra.mxu0 %v1219
    %1553 = vmatprep.subr.bf16.mxu0 %v1228
    %1554 = vmatpush1.bf16.msra.mxu0 %v1227
    %1555 = vmatprep.subr.bf16.mxu0 %v1236
    %1556 = vmatpush1.bf16.msra.mxu0 %v1235
    %1557 = vmatprep.subr.bf16.mxu0 %v1244
    %1558 = vmatpush1.bf16.msra.mxu0 %v1243
    %1559 = vmatprep.subr.bf16.mxu0 %v1252
    %1560 = vmatpush1.bf16.msra.mxu0 %v1251
    %1561 = vmatprep.subr.bf16.mxu0 %v1260
    %1562 = vmatpush1.bf16.msra.mxu0 %v1259
    %1563 = vmatprep.subr.bf16.mxu0 %v1268
    %1564 = vmatpush1.bf16.msra.mxu0 %v1267
    %1565 = vmatprep.subr.bf16.mxu0 %v1276
    %1566 = vmatpush1.bf16.msra.mxu0 %v1275
    %1567 = vmatprep.mubr.bf16.mxu0 %v858
    %1568 = vmatmul.mubr.bf16.gmra.mrb[0].mxu0 %v857
    %v1569 = vpop.f32.mrb[0].mxu0
    %v1570 = vadd.f32 %v1529, %v1569
    %v1571 = vpop.f32.mrb[0].mxu0
    %v1572 = vadd.f32 %v1531, %v1571
    %v1573 = vpop.f32.mrb[0].mxu0
    %v1574 = vpop.f32.mrb[0].mxu0
    %1575 = vdwg.mxu0
    %1576 = vmatprep.subr.bf16.mxu0 %v1284
    %1577 = vmatpush1.bf16.msra.mxu0 %v1283
    %1578 = vmatprep.subr.bf16.mxu0 %v1292
    %1579 = vmatpush1.bf16.msra.mxu0 %v1291
    %1580 = vmatprep.subr.bf16.mxu0 %v1300
    %1581 = vmatpush1.bf16.msra.mxu0 %v1299
    %1582 = vmatprep.subr.bf16.mxu0 %v1308
    %1583 = vmatpush1.bf16.msra.mxu0 %v1307
    %1584 = vmatprep.subr.bf16.mxu0 %v1316
    %1585 = vmatpush1.bf16.msra.mxu0 %v1315
    %1586 = vmatprep.subr.bf16.mxu0 %v1324
    %1587 = vmatpush1.bf16.msra.mxu0 %v1323
    %1588 = vmatprep.subr.bf16.mxu0 %v1332
    %1589 = vmatpush1.bf16.msra.mxu0 %v1331
    %1590 = vmatprep.subr.bf16.mxu0 %v1340
    %1591 = vmatpush1.bf16.msra.mxu0 %v1339
    %1592 = vmatprep.subr.bf16.mxu0 %v1348
    %1593 = vmatpush1.bf16.msra.mxu0 %v1347
    %1594 = vmatprep.subr.bf16.mxu0 %v1356
    %1595 = vmatpush1.bf16.msra.mxu0 %v1355
    %1596 = vmatprep.subr.bf16.mxu0 %v1364
    %1597 = vmatpush1.bf16.msra.mxu0 %v1363
    %1598 = vmatprep.subr.bf16.mxu0 %v1372
    %1599 = vmatpush1.bf16.msra.mxu0 %v1371
    %1600 = vmatprep.subr.bf16.mxu0 %v1380
    %1601 = vmatpush1.bf16.msra.mxu0 %v1379
    %1602 = vmatprep.subr.bf16.mxu0 %v1388
    %1603 = vmatpush1.bf16.msra.mxu0 %v1387
    %1604 = vmatprep.subr.bf16.mxu0 %v1396
    %1605 = vmatpush1.bf16.msra.mxu0 %v1395
    %1606 = vmatprep.subr.bf16.mxu0 %v1404
    %1607 = vmatpush1.bf16.msra.mxu0 %v1403
    %1608 = vmatprep.mubr.bf16.mxu0 %v860
    %1609 = vmatmul.mubr.bf16.gmra.mrb[0].mxu0 %v859
    %v1610 = vpop.f32.mrb[0].mxu0
    %v1611 = vadd.f32 %v1570, %v1610
    %v1612 = vpop.f32.mrb[0].mxu0
    %v1613 = vadd.f32 %v1572, %v1612
    %v1614 = vpop.f32.mrb[0].mxu0
    %v1615 = vpop.f32.mrb[0].mxu0
    %1616 = vdwg.mxu0
    %1617 = vmatprep.subr.bf16.mxu0 %v902
    %1618 = vmatpush1.bf16.msra.mxu0 %v901
    %1619 = vmatprep.subr.bf16.mxu0 %v910
    %1620 = vmatpush1.bf16.msra.mxu0 %v909
    %1621 = vmatprep.subr.bf16.mxu0 %v918
    %1622 = vmatpush1.bf16.msra.mxu0 %v917
    %1623 = vmatprep.subr.bf16.mxu0 %v926
    %1624 = vmatpush1.bf16.msra.mxu0 %v925
    %1625 = vmatprep.subr.bf16.mxu0 %v934
    %1626 = vmatpush1.bf16.msra.mxu0 %v933
    %1627 = vmatprep.subr.bf16.mxu0 %v942
    %1628 = vmatpush1.bf16.msra.mxu0 %v941
    %1629 = vmatprep.subr.bf16.mxu0 %v950
    %1630 = vmatpush1.bf16.msra.mxu0 %v949
    %1631 = vmatprep.subr.bf16.mxu0 %v958
    %1632 = vmatpush1.bf16.msra.mxu0 %v957
    %1633 = vmatprep.subr.bf16.mxu0 %v966
    %1634 = vmatpush1.bf16.msra.mxu0 %v965
    %1635 = vmatprep.subr.bf16.mxu0 %v974
    %1636 = vmatpush1.bf16.msra.mxu0 %v973
    %1637 = vmatprep.subr.bf16.mxu0 %v982
    %1638 = vmatpush1.bf16.msra.mxu0 %v981
    %1639 = vmatprep.subr.bf16.mxu0 %v990
    %1640 = vmatpush1.bf16.msra.mxu0 %v989
    %1641 = vmatprep.subr.bf16.mxu0 %v998
    %1642 = vmatpush1.bf16.msra.mxu0 %v997
    %1643 = vmatprep.subr.bf16.mxu0 %v1006
    %1644 = vmatpush1.bf16.msra.mxu0 %v1005
    %1645 = vmatprep.subr.bf16.mxu0 %v1014
    %1646 = vmatpush1.bf16.msra.mxu0 %v1013
    %1647 = vmatprep.subr.bf16.mxu0 %v1022
    %1648 = vmatpush1.bf16.msra.mxu0 %v1021
    %1649 = vmatprep.mubr.bf16.mxu0 %v854
    %1650 = vmatmul.mubr.bf16.gmra.mrb[0].mxu0 %v853
    %v1651 = vpop.f32.mrb[0].mxu0
    %v1652 = vadd.f32 %v1424, %v1651
    %v1653 = vpop.f32.mrb[0].mxu0
    %v1654 = vadd.f32 %v1428, %v1653
    %v1655 = vpop.f32.mrb[0].mxu0
    %v1656 = vpop.f32.mrb[0].mxu0
    %1657 = vdwg.mxu0
    %1658 = vmatprep.subr.bf16.mxu0 %v1030
    %1659 = vmatpush1.bf16.msra.mxu0 %v1029
    %1660 = vmatprep.subr.bf16.mxu0 %v1038
    %1661 = vmatpush1.bf16.msra.mxu0 %v1037
    %1662 = vmatprep.subr.bf16.mxu0 %v1046
    %1663 = vmatpush1.bf16.msra.mxu0 %v1045
    %1664 = vmatprep.subr.bf16.mxu0 %v1054
    %1665 = vmatpush1.bf16.msra.mxu0 %v1053
    %1666 = vmatprep.subr.bf16.mxu0 %v1062
    %1667 = vmatpush1.bf16.msra.mxu0 %v1061
    %1668 = vmatprep.subr.bf16.mxu0 %v1070
    %1669 = vmatpush1.bf16.msra.mxu0 %v1069
    %1670 = vmatprep.subr.bf16.mxu0 %v1078
    %1671 = vmatpush1.bf16.msra.mxu0 %v1077
    %1672 = vmatprep.subr.bf16.mxu0 %v1086
    %1673 = vmatpush1.bf16.msra.mxu0 %v1085
    %1674 = vmatprep.subr.bf16.mxu0 %v1094
    %1675 = vmatpush1.bf16.msra.mxu0 %v1093
    %1676 = vmatprep.subr.bf16.mxu0 %v1102
    %1677 = vmatpush1.bf16.msra.mxu0 %v1101
    %1678 = vmatprep.subr.bf16.mxu0 %v1110
    %1679 = vmatpush1.bf16.msra.mxu0 %v1109
    %1680 = vmatprep.subr.bf16.mxu0 %v1118
    %1681 = vmatpush1.bf16.msra.mxu0 %v1117
    %1682 = vmatprep.subr.bf16.mxu0 %v1126
    %1683 = vmatpush1.bf16.msra.mxu0 %v1125
    %1684 = vmatprep.subr.bf16.mxu0 %v1134
    %1685 = vmatpush1.bf16.msra.mxu0 %v1133
    %1686 = vmatprep.subr.bf16.mxu0 %v1142
    %1687 = vmatpush1.bf16.msra.mxu0 %v1141
    %1688 = vmatprep.subr.bf16.mxu0 %v1150
    %1689 = vmatpush1.bf16.msra.mxu0 %v1149
    %1690 = vmatprep.mubr.bf16.mxu0 %v856
    %1691 = vmatmul.mubr.bf16.gmra.mrb[0].mxu0 %v855
    %v1692 = vpop.f32.mrb[0].mxu0
    %v1693 = vadd.f32 %v1652, %v1692
    %v1694 = vpop.f32.mrb[0].mxu0
    %v1695 = vadd.f32 %v1654, %v1694
    %v1696 = vpop.f32.mrb[0].mxu0
    %v1697 = vpop.f32.mrb[0].mxu0
    %1698 = vdwg.mxu0
    %1699 = vmatprep.subr.bf16.mxu0 %v1158
    %1700 = vmatpush1.bf16.msra.mxu0 %v1157
    %1701 = vmatprep.subr.bf16.mxu0 %v1166
    %1702 = vmatpush1.bf16.msra.mxu0 %v1165
    %1703 = vmatprep.subr.bf16.mxu0 %v1174
    %1704 = vmatpush1.bf16.msra.mxu0 %v1173
    %1705 = vmatprep.subr.bf16.mxu0 %v1182
    %1706 = vmatpush1.bf16.msra.mxu0 %v1181
    %1707 = vmatprep.subr.bf16.mxu0 %v1190
    %1708 = vmatpush1.bf16.msra.mxu0 %v1189
    %1709 = vmatprep.subr.bf16.mxu0 %v1198
    %1710 = vmatpush1.bf16.msra.mxu0 %v1197
    %1711 = vmatprep.subr.bf16.mxu0 %v1206
    %1712 = vmatpush1.bf16.msra.mxu0 %v1205
    %1713 = vmatprep.subr.bf16.mxu0 %v1214
    %1714 = vmatpush1.bf16.msra.mxu0 %v1213
    %1715 = vmatprep.subr.bf16.mxu0 %v1222
    %1716 = vmatpush1.bf16.msra.mxu0 %v1221
    %1717 = vmatprep.subr.bf16.mxu0 %v1230
    %1718 = vmatpush1.bf16.msra.mxu0 %v1229
    %1719 = vmatprep.subr.bf16.mxu0 %v1238
    %1720 = vmatpush1.bf16.msra.mxu0 %v1237
    %1721 = vmatprep.subr.bf16.mxu0 %v1246
    %1722 = vmatpush1.bf16.msra.mxu0 %v1245
    %1723 = vmatprep.subr.bf16.mxu0 %v1254
    %1724 = vmatpush1.bf16.msra.mxu0 %v1253
    %1725 = vmatprep.subr.bf16.mxu0 %v1262
    %1726 = vmatpush1.bf16.msra.mxu0 %v1261
    %1727 = vmatprep.subr.bf16.mxu0 %v1270
    %1728 = vmatpush1.bf16.msra.mxu0 %v1269
    %1729 = vmatprep.subr.bf16.mxu0 %v1278
    %1730 = vmatpush1.bf16.msra.mxu0 %v1277
    %1731 = vmatprep.mubr.bf16.mxu0 %v858
    %1732 = vmatmul.mubr.bf16.gmra.mrb[0].mxu0 %v857
    %v1733 = vpop.f32.mrb[0].mxu0
    %v1734 = vadd.f32 %v1693, %v1733
    %v1735 = vpop.f32.mrb[0].mxu0
    %v1736 = vadd.f32 %v1695, %v1735
    %v1737 = vpop.f32.mrb[0].mxu0
    %v1738 = vpop.f32.mrb[0].mxu0
    %1739 = vdwg.mxu0
    %1740 = vmatprep.subr.bf16.mxu0 %v1286
    %1741 = vmatpush1.bf16.msra.mxu0 %v1285
    %1742 = vmatprep.subr.bf16.mxu0 %v1294
    %1743 = vmatpush1.bf16.msra.mxu0 %v1293
    %1744 = vmatprep.subr.bf16.mxu0 %v1302
    %1745 = vmatpush1.bf16.msra.mxu0 %v1301
    %1746 = vmatprep.subr.bf16.mxu0 %v1310
    %1747 = vmatpush1.bf16.msra.mxu0 %v1309
    %1748 = vmatprep.subr.bf16.mxu0 %v1318
    %1749 = vmatpush1.bf16.msra.mxu0 %v1317
    %1750 = vmatprep.subr.bf16.mxu0 %v1326
    %1751 = vmatpush1.bf16.msra.mxu0 %v1325
    %1752 = vmatprep.subr.bf16.mxu0 %v1334
    %1753 = vmatpush1.bf16.msra.mxu0 %v1333
    %1754 = vmatprep.subr.bf16.mxu0 %v1342
    %1755 = vmatpush1.bf16.msra.mxu0 %v1341
    %1756 = vmatprep.subr.bf16.mxu0 %v1350
    %1757 = vmatpush1.bf16.msra.mxu0 %v1349
    %1758 = vmatprep.subr.bf16.mxu0 %v1358
    %1759 = vmatpush1.bf16.msra.mxu0 %v1357
    %1760 = vmatprep.subr.bf16.mxu0 %v1366
    %1761 = vmatpush1.bf16.msra.mxu0 %v1365
    %1762 = vmatprep.subr.bf16.mxu0 %v1374
    %1763 = vmatpush1.bf16.msra.mxu0 %v1373
    %1764 = vmatprep.subr.bf16.mxu0 %v1382
    %1765 = vmatpush1.bf16.msra.mxu0 %v1381
    %1766 = vmatprep.subr.bf16.mxu0 %v1390
    %1767 = vmatpush1.bf16.msra.mxu0 %v1389
    %1768 = vmatprep.subr.bf16.mxu0 %v1398
    %1769 = vmatpush1.bf16.msra.mxu0 %v1397
    %1770 = vmatprep.subr.bf16.mxu0 %v1406
    %1771 = vmatpush1.bf16.msra.mxu0 %v1405
    %1772 = vmatprep.mubr.bf16.mxu0 %v860
    %1773 = vmatmul.mubr.bf16.gmra.mrb[0].mxu0 %v859
    %v1774 = vpop.f32.mrb[0].mxu0
    %v1775 = vadd.f32 %v1734, %v1774
    %v1776 = vpop.f32.mrb[0].mxu0
    %v1777 = vadd.f32 %v1736, %v1776
    %v1778 = vpop.f32.mrb[0].mxu0
    %v1779 = vpop.f32.mrb[0].mxu0
    %1780 = vdwg.mxu0
    %1781 = vmatprep.subr.bf16.mxu0 %v904
    %1782 = vmatpush1.bf16.msra.mxu0 %v903
    %1783 = vmatprep.subr.bf16.mxu0 %v912
    %1784 = vmatpush1.bf16.msra.mxu0 %v911
    %1785 = vmatprep.subr.bf16.mxu0 %v920
    %1786 = vmatpush1.bf16.msra.mxu0 %v919
    %1787 = vmatprep.subr.bf16.mxu0 %v928
    %1788 = vmatpush1.bf16.msra.mxu0 %v927
    %1789 = vmatprep.subr.bf16.mxu0 %v936
    %1790 = vmatpush1.bf16.msra.mxu0 %v935
    %1791 = vmatprep.subr.bf16.mxu0 %v944
    %1792 = vmatpush1.bf16.msra.mxu0 %v943
    %1793 = vmatprep.subr.bf16.mxu0 %v952
    %1794 = vmatpush1.bf16.msra.mxu0 %v951
    %1795 = vmatprep.subr.bf16.mxu0 %v960
    %1796 = vmatpush1.bf16.msra.mxu0 %v959
    %1797 = vmatprep.subr.bf16.mxu0 %v968
    %1798 = vmatpush1.bf16.msra.mxu0 %v967
    %1799 = vmatprep.subr.bf16.mxu0 %v976
    %1800 = vmatpush1.bf16.msra.mxu0 %v975
    %1801 = vmatprep.subr.bf16.mxu0 %v984
    %1802 = vmatpush1.bf16.msra.mxu0 %v983
    %1803 = vmatprep.subr.bf16.mxu0 %v992
    %1804 = vmatpush1.bf16.msra.mxu0 %v991
    %1805 = vmatprep.subr.bf16.mxu0 %v1000
    %1806 = vmatpush1.bf16.msra.mxu0 %v999
    %1807 = vmatprep.subr.bf16.mxu0 %v1008
    %1808 = vmatpush1.bf16.msra.mxu0 %v1007
    %1809 = vmatprep.subr.bf16.mxu0 %v1016
    %1810 = vmatpush1.bf16.msra.mxu0 %v1015
    %1811 = vmatprep.subr.bf16.mxu0 %v1024
    %1812 = vmatpush1.bf16.msra.mxu0 %v1023
    %1813 = vmatprep.mubr.bf16.mxu0 %v854
    %1814 = vmatmul.mubr.bf16.gmra.mrb[0].mxu0 %v853
    %v1815 = vpop.f32.mrb[0].mxu0
    %v1816 = vadd.f32 %v1432, %v1815
    %v1817 = vpop.f32.mrb[0].mxu0
    %v1818 = vadd.f32 %v1436, %v1817
    %v1819 = vpop.f32.mrb[0].mxu0
    %v1820 = vpop.f32.mrb[0].mxu0
    %1821 = vdwg.mxu0
    %1822 = vmatprep.subr.bf16.mxu0 %v1032
    %1823 = vmatpush1.bf16.msra.mxu0 %v1031
    %1824 = vmatprep.subr.bf16.mxu0 %v1040
    %1825 = vmatpush1.bf16.msra.mxu0 %v1039
    %1826 = vmatprep.subr.bf16.mxu0 %v1048
    %1827 = vmatpush1.bf16.msra.mxu0 %v1047
    %1828 = vmatprep.subr.bf16.mxu0 %v1056
    %1829 = vmatpush1.bf16.msra.mxu0 %v1055
    %1830 = vmatprep.subr.bf16.mxu0 %v1064
    %1831 = vmatpush1.bf16.msra.mxu0 %v1063
    %1832 = vmatprep.subr.bf16.mxu0 %v1072
    %1833 = vmatpush1.bf16.msra.mxu0 %v1071
    %1834 = vmatprep.subr.bf16.mxu0 %v1080
    %1835 = vmatpush1.bf16.msra.mxu0 %v1079
    %1836 = vmatprep.subr.bf16.mxu0 %v1088
    %1837 = vmatpush1.bf16.msra.mxu0 %v1087
    %1838 = vmatprep.subr.bf16.mxu0 %v1096
    %1839 = vmatpush1.bf16.msra.mxu0 %v1095
    %1840 = vmatprep.subr.bf16.mxu0 %v1104
    %1841 = vmatpush1.bf16.msra.mxu0 %v1103
    %1842 = vmatprep.subr.bf16.mxu0 %v1112
    %1843 = vmatpush1.bf16.msra.mxu0 %v1111
    %1844 = vmatprep.subr.bf16.mxu0 %v1120
    %1845 = vmatpush1.bf16.msra.mxu0 %v1119
    %1846 = vmatprep.subr.bf16.mxu0 %v1128
    %1847 = vmatpush1.bf16.msra.mxu0 %v1127
    %1848 = vmatprep.subr.bf16.mxu0 %v1136
    %1849 = vmatpush1.bf16.msra.mxu0 %v1135
    %1850 = vmatprep.subr.bf16.mxu0 %v1144
    %1851 = vmatpush1.bf16.msra.mxu0 %v1143
    %1852 = vmatprep.subr.bf16.mxu0 %v1152
    %1853 = vmatpush1.bf16.msra.mxu0 %v1151
    %1854 = vmatprep.mubr.bf16.mxu0 %v856
    %1855 = vmatmul.mubr.bf16.gmra.mrb[0].mxu0 %v855
    %v1856 = vpop.f32.mrb[0].mxu0
    %v1857 = vadd.f32 %v1816, %v1856
    %v1858 = vpop.f32.mrb[0].mxu0
    %v1859 = vadd.f32 %v1818, %v1858
    %v1860 = vpop.f32.mrb[0].mxu0
    %v1861 = vpop.f32.mrb[0].mxu0
    %1862 = vdwg.mxu0
    %1863 = vmatprep.subr.bf16.mxu0 %v1160
    %1864 = vmatpush1.bf16.msra.mxu0 %v1159
    %1865 = vmatprep.subr.bf16.mxu0 %v1168
    %1866 = vmatpush1.bf16.msra.mxu0 %v1167
    %1867 = vmatprep.subr.bf16.mxu0 %v1176
    %1868 = vmatpush1.bf16.msra.mxu0 %v1175
    %1869 = vmatprep.subr.bf16.mxu0 %v1184
    %1870 = vmatpush1.bf16.msra.mxu0 %v1183
    %1871 = vmatprep.subr.bf16.mxu0 %v1192
    %1872 = vmatpush1.bf16.msra.mxu0 %v1191
    %1873 = vmatprep.subr.bf16.mxu0 %v1200
    %1874 = vmatpush1.bf16.msra.mxu0 %v1199
    %1875 = vmatprep.subr.bf16.mxu0 %v1208
    %1876 = vmatpush1.bf16.msra.mxu0 %v1207
    %1877 = vmatprep.subr.bf16.mxu0 %v1216
    %1878 = vmatpush1.bf16.msra.mxu0 %v1215
    %1879 = vmatprep.subr.bf16.mxu0 %v1224
    %1880 = vmatpush1.bf16.msra.mxu0 %v1223
    %1881 = vmatprep.subr.bf16.mxu0 %v1232
    %1882 = vmatpush1.bf16.msra.mxu0 %v1231
    %1883 = vmatprep.subr.bf16.mxu0 %v1240
    %1884 = vmatpush1.bf16.msra.mxu0 %v1239
    %1885 = vmatprep.subr.bf16.mxu0 %v1248
    %1886 = vmatpush1.bf16.msra.mxu0 %v1247
    %1887 = vmatprep.subr.bf16.mxu0 %v1256
    %1888 = vmatpush1.bf16.msra.mxu0 %v1255
    %1889 = vmatprep.subr.bf16.mxu0 %v1264
    %1890 = vmatpush1.bf16.msra.mxu0 %v1263
    %1891 = vmatprep.subr.bf16.mxu0 %v1272
    %1892 = vmatpush1.bf16.msra.mxu0 %v1271
    %1893 = vmatprep.subr.bf16.mxu0 %v1280
    %1894 = vmatpush1.bf16.msra.mxu0 %v1279
    %1895 = vmatprep.mubr.bf16.mxu0 %v858
    %1896 = vmatmul.mubr.bf16.gmra.mrb[0].mxu0 %v857
    %v1897 = vpop.f32.mrb[0].mxu0
    %v1898 = vadd.f32 %v1857, %v1897
    %v1899 = vpop.f32.mrb[0].mxu0
    %v1900 = vadd.f32 %v1859, %v1899
    %v1901 = vpop.f32.mrb[0].mxu0
    %v1902 = vpop.f32.mrb[0].mxu0
    %1903 = vdwg.mxu0
    %1904 = vmatprep.subr.bf16.mxu0 %v1288
    %1905 = vmatpush1.bf16.msra.mxu0 %v1287
    %1906 = vmatprep.subr.bf16.mxu0 %v1296
    %1907 = vmatpush1.bf16.msra.mxu0 %v1295
    %1908 = vmatprep.subr.bf16.mxu0 %v1304
    %1909 = vmatpush1.bf16.msra.mxu0 %v1303
    %1910 = vmatprep.subr.bf16.mxu0 %v1312
    %1911 = vmatpush1.bf16.msra.mxu0 %v1311
    %1912 = vmatprep.subr.bf16.mxu0 %v1320
    %1913 = vmatpush1.bf16.msra.mxu0 %v1319
    %1914 = vmatprep.subr.bf16.mxu0 %v1328
    %1915 = vmatpush1.bf16.msra.mxu0 %v1327
    %1916 = vmatprep.subr.bf16.mxu0 %v1336
    %1917 = vmatpush1.bf16.msra.mxu0 %v1335
    %1918 = vmatprep.subr.bf16.mxu0 %v1344
    %1919 = vmatpush1.bf16.msra.mxu0 %v1343
    %1920 = vmatprep.subr.bf16.mxu0 %v1352
    %1921 = vmatpush1.bf16.msra.mxu0 %v1351
    %1922 = vmatprep.subr.bf16.mxu0 %v1360
    %1923 = vmatpush1.bf16.msra.mxu0 %v1359
    %1924 = vmatprep.subr.bf16.mxu0 %v1368
    %1925 = vmatpush1.bf16.msra.mxu0 %v1367
    %1926 = vmatprep.subr.bf16.mxu0 %v1376
    %1927 = vmatpush1.bf16.msra.mxu0 %v1375
    %1928 = vmatprep.subr.bf16.mxu0 %v1384
    %1929 = vmatpush1.bf16.msra.mxu0 %v1383
    %1930 = vmatprep.subr.bf16.mxu0 %v1392
    %1931 = vmatpush1.bf16.msra.mxu0 %v1391
    %1932 = vmatprep.subr.bf16.mxu0 %v1400
    %1933 = vmatpush1.bf16.msra.mxu0 %v1399
    %1934 = vmatprep.subr.bf16.mxu0 %v1408
    %1935 = vmatpush1.bf16.msra.mxu0 %v1407
    %1936 = vmatprep.mubr.bf16.mxu0 %v860
    %1937 = vmatmul.mubr.bf16.gmra.mrb[0].mxu0 %v859
    %v1938 = vpop.f32.mrb[0].mxu0
    %v1939 = vadd.f32 %v1898, %v1938
    %v1940 = vpop.f32.mrb[0].mxu0
    %v1941 = vadd.f32 %v1900, %v1940
    %v1942 = vpop.f32.mrb[0].mxu0
    %v1943 = vpop.f32.mrb[0].mxu0
    %1944 = vdwg.mxu0
    %1945 = vmatprep.subr.bf16.mxu0 %v906
    %1946 = vmatpush1.bf16.msra.mxu0 %v905
    %1947 = vmatprep.subr.bf16.mxu0 %v914
    %1948 = vmatpush1.bf16.msra.mxu0 %v913
    %1949 = vmatprep.subr.bf16.mxu0 %v922
    %1950 = vmatpush1.bf16.msra.mxu0 %v921
    %1951 = vmatprep.subr.bf16.mxu0 %v930
    %1952 = vmatpush1.bf16.msra.mxu0 %v929
    %1953 = vmatprep.subr.bf16.mxu0 %v938
    %1954 = vmatpush1.bf16.msra.mxu0 %v937
    %1955 = vmatprep.subr.bf16.mxu0 %v946
    %1956 = vmatpush1.bf16.msra.mxu0 %v945
    %1957 = vmatprep.subr.bf16.mxu0 %v954
    %1958 = vmatpush1.bf16.msra.mxu0 %v953
    %1959 = vmatprep.subr.bf16.mxu0 %v962
    %1960 = vmatpush1.bf16.msra.mxu0 %v961
    %1961 = vmatprep.subr.bf16.mxu0 %v970
    %1962 = vmatpush1.bf16.msra.mxu0 %v969
    %1963 = vmatprep.subr.bf16.mxu0 %v978
    %1964 = vmatpush1.bf16.msra.mxu0 %v977
    %1965 = vmatprep.subr.bf16.mxu0 %v986
    %1966 = vmatpush1.bf16.msra.mxu0 %v985
    %1967 = vmatprep.subr.bf16.mxu0 %v994
    %1968 = vmatpush1.bf16.msra.mxu0 %v993
    %1969 = vmatprep.subr.bf16.mxu0 %v1002
    %1970 = vmatpush1.bf16.msra.mxu0 %v1001
    %1971 = vmatprep.subr.bf16.mxu0 %v1010
    %1972 = vmatpush1.bf16.msra.mxu0 %v1009
    %1973 = vmatprep.subr.bf16.mxu0 %v1018
    %1974 = vmatpush1.bf16.msra.mxu0 %v1017
    %1975 = vmatprep.subr.bf16.mxu0 %v1026
    %1976 = vmatpush1.bf16.msra.mxu0 %v1025
    %1977 = vmatprep.mubr.bf16.mxu0 %v854
    %1978 = vmatmul.mubr.bf16.gmra.mrb[0].mxu0 %v853
    %v1979 = vpop.f32.mrb[0].mxu0
    %v1980 = vadd.f32 %v1440, %v1979
    %v1981 = vpop.f32.mrb[0].mxu0
    %v1982 = vadd.f32 %v1444, %v1981
    %v1983 = vpop.f32.mrb[0].mxu0
    %v1984 = vpop.f32.mrb[0].mxu0
    %1985 = vdwg.mxu0
    %1986 = vmatprep.subr.bf16.mxu0 %v1034
    %1987 = vmatpush1.bf16.msra.mxu0 %v1033
    %1988 = vmatprep.subr.bf16.mxu0 %v1042
    %1989 = vmatpush1.bf16.msra.mxu0 %v1041
    %1990 = vmatprep.subr.bf16.mxu0 %v1050
    %1991 = vmatpush1.bf16.msra.mxu0 %v1049
    %1992 = vmatprep.subr.bf16.mxu0 %v1058
    %1993 = vmatpush1.bf16.msra.mxu0 %v1057
    %1994 = vmatprep.subr.bf16.mxu0 %v1066
    %1995 = vmatpush1.bf16.msra.mxu0 %v1065
    %1996 = vmatprep.subr.bf16.mxu0 %v1074
    %1997 = vmatpush1.bf16.msra.mxu0 %v1073
    %1998 = vmatprep.subr.bf16.mxu0 %v1082
    %1999 = vmatpush1.bf16.msra.mxu0 %v1081
    %2000 = vmatprep.subr.bf16.mxu0 %v1090
    %2001 = vmatpush1.bf16.msra.mxu0 %v1089
    %2002 = vmatprep.subr.bf16.mxu0 %v1098
    %2003 = vmatpush1.bf16.msra.mxu0 %v1097
    %2004 = vmatprep.subr.bf16.mxu0 %v1106
    %2005 = vmatpush1.bf16.msra.mxu0 %v1105
    %2006 = vmatprep.subr.bf16.mxu0 %v1114
    %2007 = vmatpush1.bf16.msra.mxu0 %v1113
    %2008 = vmatprep.subr.bf16.mxu0 %v1122
    %2009 = vmatpush1.bf16.msra.mxu0 %v1121
    %2010 = vmatprep.subr.bf16.mxu0 %v1130
    %2011 = vmatpush1.bf16.msra.mxu0 %v1129
    %2012 = vmatprep.subr.bf16.mxu0 %v1138
    %2013 = vmatpush1.bf16.msra.mxu0 %v1137
    %2014 = vmatprep.subr.bf16.mxu0 %v1146
    %2015 = vmatpush1.bf16.msra.mxu0 %v1145
    %2016 = vmatprep.subr.bf16.mxu0 %v1154
    %2017 = vmatpush1.bf16.msra.mxu0 %v1153
    %2018 = vmatprep.mubr.bf16.mxu0 %v856
    %2019 = vmatmul.mubr.bf16.gmra.mrb[0].mxu0 %v855
    %v2020 = vpop.f32.mrb[0].mxu0
    %v2021 = vadd.f32 %v1980, %v2020
    %v2022 = vpop.f32.mrb[0].mxu0
    %v2023 = vadd.f32 %v1982, %v2022
    %v2024 = vpop.f32.mrb[0].mxu0
    %v2025 = vpop.f32.mrb[0].mxu0
    %2026 = vdwg.mxu0
    %2027 = vmatprep.subr.bf16.mxu0 %v1162
    %2028 = vmatpush1.bf16.msra.mxu0 %v1161
    %2029 = vmatprep.subr.bf16.mxu0 %v1170
    %2030 = vmatpush1.bf16.msra.mxu0 %v1169
    %2031 = vmatprep.subr.bf16.mxu0 %v1178
    %2032 = vmatpush1.bf16.msra.mxu0 %v1177
    %2033 = vmatprep.subr.bf16.mxu0 %v1186
    %2034 = vmatpush1.bf16.msra.mxu0 %v1185
    %2035 = vmatprep.subr.bf16.mxu0 %v1194
    %2036 = vmatpush1.bf16.msra.mxu0 %v1193
    %2037 = vmatprep.subr.bf16.mxu0 %v1202
    %2038 = vmatpush1.bf16.msra.mxu0 %v1201
    %2039 = vmatprep.subr.bf16.mxu0 %v1210
    %2040 = vmatpush1.bf16.msra.mxu0 %v1209
    %2041 = vmatprep.subr.bf16.mxu0 %v1218
    %2042 = vmatpush1.bf16.msra.mxu0 %v1217
    %2043 = vmatprep.subr.bf16.mxu0 %v1226
    %2044 = vmatpush1.bf16.msra.mxu0 %v1225
    %2045 = vmatprep.subr.bf16.mxu0 %v1234
    %2046 = vmatpush1.bf16.msra.mxu0 %v1233
    %2047 = vmatprep.subr.bf16.mxu0 %v1242
    %2048 = vmatpush1.bf16.msra.mxu0 %v1241
    %2049 = vmatprep.subr.bf16.mxu0 %v1250
    %2050 = vmatpush1.bf16.msra.mxu0 %v1249
    %2051 = vmatprep.subr.bf16.mxu0 %v1258
    %2052 = vmatpush1.bf16.msra.mxu0 %v1257
    %2053 = vmatprep.subr.bf16.mxu0 %v1266
    %2054 = vmatpush1.bf16.msra.mxu0 %v1265
    %2055 = vmatprep.subr.bf16.mxu0 %v1274
    %2056 = vmatpush1.bf16.msra.mxu0 %v1273
    %2057 = vmatprep.subr.bf16.mxu0 %v1282
    %2058 = vmatpush1.bf16.msra.mxu0 %v1281
    %2059 = vmatprep.mubr.bf16.mxu0 %v858
    %2060 = vmatmul.mubr.bf16.gmra.mrb[0].mxu0 %v857
    %v2061 = vpop.f32.mrb[0].mxu0
    %v2062 = vadd.f32 %v2021, %v2061
    %v2063 = vpop.f32.mrb[0].mxu0
    %v2064 = vadd.f32 %v2023, %v2063
    %v2065 = vpop.f32.mrb[0].mxu0
    %v2066 = vpop.f32.mrb[0].mxu0
    %2067 = vdwg.mxu0
    %2068 = vmatprep.subr.bf16.mxu0 %v1290
    %2069 = vmatpush1.bf16.msra.mxu0 %v1289
    %2070 = vmatprep.subr.bf16.mxu0 %v1298
    %2071 = vmatpush1.bf16.msra.mxu0 %v1297
    %2072 = vmatprep.subr.bf16.mxu0 %v1306
    %2073 = vmatpush1.bf16.msra.mxu0 %v1305
    %2074 = vmatprep.subr.bf16.mxu0 %v1314
    %2075 = vmatpush1.bf16.msra.mxu0 %v1313
    %2076 = vmatprep.subr.bf16.mxu0 %v1322
    %2077 = vmatpush1.bf16.msra.mxu0 %v1321
    %2078 = vmatprep.subr.bf16.mxu0 %v1330
    %2079 = vmatpush1.bf16.msra.mxu0 %v1329
    %2080 = vmatprep.subr.bf16.mxu0 %v1338
    %2081 = vmatpush1.bf16.msra.mxu0 %v1337
    %2082 = vmatprep.subr.bf16.mxu0 %v1346
    %2083 = vmatpush1.bf16.msra.mxu0 %v1345
    %2084 = vmatprep.subr.bf16.mxu0 %v1354
    %2085 = vmatpush1.bf16.msra.mxu0 %v1353
    %2086 = vmatprep.subr.bf16.mxu0 %v1362
    %2087 = vmatpush1.bf16.msra.mxu0 %v1361
    %2088 = vmatprep.subr.bf16.mxu0 %v1370
    %2089 = vmatpush1.bf16.msra.mxu0 %v1369
    %2090 = vmatprep.subr.bf16.mxu0 %v1378
    %2091 = vmatpush1.bf16.msra.mxu0 %v1377
    %2092 = vmatprep.subr.bf16.mxu0 %v1386
    %2093 = vmatpush1.bf16.msra.mxu0 %v1385
    %2094 = vmatprep.subr.bf16.mxu0 %v1394
    %2095 = vmatpush1.bf16.msra.mxu0 %v1393
    %2096 = vmatprep.subr.bf16.mxu0 %v1402
    %2097 = vmatpush1.bf16.msra.mxu0 %v1401
    %2098 = vmatprep.subr.bf16.mxu0 %v1410
    %2099 = vmatpush1.bf16.msra.mxu0 %v1409
    %2100 = vmatprep.mubr.bf16.mxu0 %v860
    %2101 = vmatmul.mubr.bf16.gmra.mrb[0].mxu0 %v859
    %v2102 = vpop.f32.mrb[0].mxu0
    %v2103 = vadd.f32 %v2062, %v2102
    %v2104 = vpop.f32.mrb[0].mxu0
    %v2105 = vadd.f32 %v2064, %v2104
    %v2106 = vpop.f32.mrb[0].mxu0
    %v2107 = vpop.f32.mrb[0].mxu0
    %2108 = vdwg.mxu0
    %v2109 = vmax.f32 %v1611, 0.0
    %v2110 = vmax.f32 %v1613, 0.0
    %v2111 = vmax.f32 %v1775, 0.0
    %v2112 = vmax.f32 %v1777, 0.0
    %v2113 = vmax.f32 %v1939, 0.0
    %v2114 = vmax.f32 %v1941, 0.0
    %v2115 = vmax.f32 %v2103, 0.0
    %v2116 = vmax.f32 %v2105, 0.0
    %v2117 = vpack.c.bf16 %v2109, %v2109
    %v2118 = vpack.c.bf16 %v2110, %v2110
    %v2119 = vpack.c.bf16 %v2111, %v2111
    %v2120 = vpack.c.bf16 %v2112, %v2112
    %v2121 = vpack.c.bf16 %v2113, %v2113
    %v2122 = vpack.c.bf16 %v2114, %v2114
    %v2123 = vpack.c.bf16 %v2115, %v2115
    %v2124 = vpack.c.bf16 %v2116, %v2116
    %s2126 = sshll.u32 1, 14
    %s2127 = sxor.u32 4294967295, %s2126
    %s2129 = sadd.s32 2, %s118
    %s2131 = sshll.u32 7, 26
    %s2132 = sxor.u32 4294967295, %s2131
    %s2133 = sand.u32 0, %s2132
    %s2134 = sshll.u32 %s2129, 26
    %s2135 = sor.u32 %s2133, %s2134
    %s2136 = sshll.u32 %s150, 4
    %s2137 = int_to_ptr.vmem [resolvable:$true] %s2136
    %2140 = sst [smem:[#allocation24]] 1024
    %s2141 = scalar_lea.smem [#allocation24], 1
    %2142 = sst [smem:[%s2141]] 1024
    %s2143 = scalar_lea.smem [#allocation24], 2
    %2144 = sst [smem:[%s2143]] 8
    %s2145 = scalar_lea.smem [#allocation24], 3
    %2146 = sst [smem:[%s2145]] 64
    %s2147 = scalar_lea.smem [#allocation24], 4
    %2148 = sst [smem:[%s2147]] 128
    %s2149 = scalar_lea.smem [#allocation24], 5
    %2150 = sst [smem:[%s2149]] 2
    %s2151 = scalar_lea.smem [#allocation24], 6
    %2152 = sst [smem:[%s2151]] 512
    %s2153 = scalar_lea.smem [#allocation24], 7
    %2154 = sst [smem:[%s2153]] 64
    %s2155 = scalar_lea.smem [#allocation24], 8
    %2156 = sst [smem:[%s2155]] 4
    %2158 = dma.general %s4, 32768, %s2137, %s151, [#allocation23], [#allocation24], %s2135, 0
    %s2159 = smul.u32 %s895, 4
    %s2160 = sshll.u32 %s2159, 4
    %2161 = dma.done [#allocation3], %s2160
    %v2162 = vld [vmem:[#allocation2] sm:$0xff]
    %v2163 = vld [vmem:[#allocation2 + $0x8] sm:$0xff]
    %v2164 = vld [vmem:[#allocation2 + $0x10] sm:$0xff]
    %v2165 = vld [vmem:[#allocation2 + $0x18] sm:$0xff]
    %v2166 = vld [vmem:[#allocation2 + $0x40] sm:$0xff]
    %v2167 = vld [vmem:[#allocation2 + $0x48] sm:$0xff]
    %v2168 = vld [vmem:[#allocation2 + $0x50] sm:$0xff]
    %v2169 = vld [vmem:[#allocation2 + $0x58] sm:$0xff]
    %v2170 = vld [vmem:[#allocation2 + $0x80] sm:$0xff]
    %v2171 = vld [vmem:[#allocation2 + $0x88] sm:$0xff]
    %v2172 = vld [vmem:[#allocation2 + $0x90] sm:$0xff]
    %v2173 = vld [vmem:[#allocation2 + $0x98] sm:$0xff]
    %v2174 = vld [vmem:[#allocation2 + $0xc0] sm:$0xff]
    %v2175 = vld [vmem:[#allocation2 + $0xc8] sm:$0xff]
    %v2176 = vld [vmem:[#allocation2 + $0xd0] sm:$0xff]
    %v2177 = vld [vmem:[#allocation2 + $0xd8] sm:$0xff]
    %v2178 = vld [vmem:[#allocation2 + $0x100] sm:$0xff]
    %v2179 = vld [vmem:[#allocation2 + $0x108] sm:$0xff]
    %v2180 = vld [vmem:[#allocation2 + $0x110] sm:$0xff]
    %v2181 = vld [vmem:[#allocation2 + $0x118] sm:$0xff]
    %v2182 = vld [vmem:[#allocation2 + $0x140] sm:$0xff]
    %v2183 = vld [vmem:[#allocation2 + $0x148] sm:$0xff]
    %v2184 = vld [vmem:[#allocation2 + $0x150] sm:$0xff]
    %v2185 = vld [vmem:[#allocation2 + $0x158] sm:$0xff]
    %v2186 = vld [vmem:[#allocation2 + $0x180] sm:$0xff]
    %v2187 = vld [vmem:[#allocation2 + $0x188] sm:$0xff]
    %v2188 = vld [vmem:[#allocation2 + $0x190] sm:$0xff]
    %v2189 = vld [vmem:[#allocation2 + $0x198] sm:$0xff]
    %v2190 = vld [vmem:[#allocation2 + $0x1c0] sm:$0xff]
    %v2191 = vld [vmem:[#allocation2 + $0x1c8] sm:$0xff]
    %v2192 = vld [vmem:[#allocation2 + $0x1d0] sm:$0xff]
    %v2193 = vld [vmem:[#allocation2 + $0x1d8] sm:$0xff]
    %v2194 = vld [vmem:[#allocation2 + $0x200] sm:$0xff]
    %v2195 = vld [vmem:[#allocation2 + $0x208] sm:$0xff]
    %v2196 = vld [vmem:[#allocation2 + $0x210] sm:$0xff]
    %v2197 = vld [vmem:[#allocation2 + $0x218] sm:$0xff]
    %v2198 = vld [vmem:[#allocation2 + $0x240] sm:$0xff]
    %v2199 = vld [vmem:[#allocation2 + $0x248] sm:$0xff]
    %v2200 = vld [vmem:[#allocation2 + $0x250] sm:$0xff]
    %v2201 = vld [vmem:[#allocation2 + $0x258] sm:$0xff]
    %v2202 = vld [vmem:[#allocation2 + $0x280] sm:$0xff]
    %v2203 = vld [vmem:[#allocation2 + $0x288] sm:$0xff]
    %v2204 = vld [vmem:[#allocation2 + $0x290] sm:$0xff]
    %v2205 = vld [vmem:[#allocation2 + $0x298] sm:$0xff]
    %v2206 = vld [vmem:[#allocation2 + $0x2c0] sm:$0xff]
    %v2207 = vld [vmem:[#allocation2 + $0x2c8] sm:$0xff]
    %v2208 = vld [vmem:[#allocation2 + $0x2d0] sm:$0xff]
    %v2209 = vld [vmem:[#allocation2 + $0x2d8] sm:$0xff]
    %v2210 = vld [vmem:[#allocation2 + $0x300] sm:$0xff]
    %v2211 = vld [vmem:[#allocation2 + $0x308] sm:$0xff]
    %v2212 = vld [vmem:[#allocation2 + $0x310] sm:$0xff]
    %v2213 = vld [vmem:[#allocation2 + $0x318] sm:$0xff]
    %v2214 = vld [vmem:[#allocation2 + $0x340] sm:$0xff]
    %v2215 = vld [vmem:[#allocation2 + $0x348] sm:$0xff]
    %v2216 = vld [vmem:[#allocation2 + $0x350] sm:$0xff]
    %v2217 = vld [vmem:[#allocation2 + $0x358] sm:$0xff]
    %v2218 = vld [vmem:[#allocation2 + $0x380] sm:$0xff]
    %v2219 = vld [vmem:[#allocation2 + $0x388] sm:$0xff]
    %v2220 = vld [vmem:[#allocation2 + $0x390] sm:$0xff]
    %v2221 = vld [vmem:[#allocation2 + $0x398] sm:$0xff]
    %v2222 = vld [vmem:[#allocation2 + $0x3c0] sm:$0xff]
    %v2223 = vld [vmem:[#allocation2 + $0x3c8] sm:$0xff]
    %v2224 = vld [vmem:[#allocation2 + $0x3d0] sm:$0xff]
    %v2225 = vld [vmem:[#allocation2 + $0x3d8] sm:$0xff]
    %v2226 = vld [vmem:[#allocation2 + $0x400] sm:$0xff]
    %v2227 = vld [vmem:[#allocation2 + $0x408] sm:$0xff]
    %v2228 = vld [vmem:[#allocation2 + $0x410] sm:$0xff]
    %v2229 = vld [vmem:[#allocation2 + $0x418] sm:$0xff]
    %v2230 = vld [vmem:[#allocation2 + $0x440] sm:$0xff]
    %v2231 = vld [vmem:[#allocation2 + $0x448] sm:$0xff]
    %v2232 = vld [vmem:[#allocation2 + $0x450] sm:$0xff]
    %v2233 = vld [vmem:[#allocation2 + $0x458] sm:$0xff]
    %v2234 = vld [vmem:[#allocation2 + $0x480] sm:$0xff]
    %v2235 = vld [vmem:[#allocation2 + $0x488] sm:$0xff]
    %v2236 = vld [vmem:[#allocation2 + $0x490] sm:$0xff]
    %v2237 = vld [vmem:[#allocation2 + $0x498] sm:$0xff]
    %v2238 = vld [vmem:[#allocation2 + $0x4c0] sm:$0xff]
    %v2239 = vld [vmem:[#allocation2 + $0x4c8] sm:$0xff]
    %v2240 = vld [vmem:[#allocation2 + $0x4d0] sm:$0xff]
    %v2241 = vld [vmem:[#allocation2 + $0x4d8] sm:$0xff]
    %v2242 = vld [vmem:[#allocation2 + $0x500] sm:$0xff]
    %v2243 = vld [vmem:[#allocation2 + $0x508] sm:$0xff]
    %v2244 = vld [vmem:[#allocation2 + $0x510] sm:$0xff]
    %v2245 = vld [vmem:[#allocation2 + $0x518] sm:$0xff]
    %v2246 = vld [vmem:[#allocation2 + $0x540] sm:$0xff]
    %v2247 = vld [vmem:[#allocation2 + $0x548] sm:$0xff]
    %v2248 = vld [vmem:[#allocation2 + $0x550] sm:$0xff]
    %v2249 = vld [vmem:[#allocation2 + $0x558] sm:$0xff]
    %v2250 = vld [vmem:[#allocation2 + $0x580] sm:$0xff]
    %v2251 = vld [vmem:[#allocation2 + $0x588] sm:$0xff]
    %v2252 = vld [vmem:[#allocation2 + $0x590] sm:$0xff]
    %v2253 = vld [vmem:[#allocation2 + $0x598] sm:$0xff]
    %v2254 = vld [vmem:[#allocation2 + $0x5c0] sm:$0xff]
    %v2255 = vld [vmem:[#allocation2 + $0x5c8] sm:$0xff]
    %v2256 = vld [vmem:[#allocation2 + $0x5d0] sm:$0xff]
    %v2257 = vld [vmem:[#allocation2 + $0x5d8] sm:$0xff]
    %v2258 = vld [vmem:[#allocation2 + $0x600] sm:$0xff]
    %v2259 = vld [vmem:[#allocation2 + $0x608] sm:$0xff]
    %v2260 = vld [vmem:[#allocation2 + $0x610] sm:$0xff]
    %v2261 = vld [vmem:[#allocation2 + $0x618] sm:$0xff]
    %v2262 = vld [vmem:[#allocation2 + $0x640] sm:$0xff]
    %v2263 = vld [vmem:[#allocation2 + $0x648] sm:$0xff]
    %v2264 = vld [vmem:[#allocation2 + $0x650] sm:$0xff]
    %v2265 = vld [vmem:[#allocation2 + $0x658] sm:$0xff]
    %v2266 = vld [vmem:[#allocation2 + $0x680] sm:$0xff]
    %v2267 = vld [vmem:[#allocation2 + $0x688] sm:$0xff]
    %v2268 = vld [vmem:[#allocation2 + $0x690] sm:$0xff]
    %v2269 = vld [vmem:[#allocation2 + $0x698] sm:$0xff]
    %v2270 = vld [vmem:[#allocation2 + $0x6c0] sm:$0xff]
    %v2271 = vld [vmem:[#allocation2 + $0x6c8] sm:$0xff]
    %v2272 = vld [vmem:[#allocation2 + $0x6d0] sm:$0xff]
    %v2273 = vld [vmem:[#allocation2 + $0x6d8] sm:$0xff]
    %v2274 = vld [vmem:[#allocation2 + $0x700] sm:$0xff]
    %v2275 = vld [vmem:[#allocation2 + $0x708] sm:$0xff]
    %v2276 = vld [vmem:[#allocation2 + $0x710] sm:$0xff]
    %v2277 = vld [vmem:[#allocation2 + $0x718] sm:$0xff]
    %v2278 = vld [vmem:[#allocation2 + $0x740] sm:$0xff]
    %v2279 = vld [vmem:[#allocation2 + $0x748] sm:$0xff]
    %v2280 = vld [vmem:[#allocation2 + $0x750] sm:$0xff]
    %v2281 = vld [vmem:[#allocation2 + $0x758] sm:$0xff]
    %v2282 = vld [vmem:[#allocation2 + $0x780] sm:$0xff]
    %v2283 = vld [vmem:[#allocation2 + $0x788] sm:$0xff]
    %v2284 = vld [vmem:[#allocation2 + $0x790] sm:$0xff]
    %v2285 = vld [vmem:[#allocation2 + $0x798] sm:$0xff]
    %v2286 = vld [vmem:[#allocation2 + $0x7c0] sm:$0xff]
    %v2287 = vld [vmem:[#allocation2 + $0x7c8] sm:$0xff]
    %v2288 = vld [vmem:[#allocation2 + $0x7d0] sm:$0xff]
    %v2289 = vld [vmem:[#allocation2 + $0x7d8] sm:$0xff]
    %v2290 = vld [vmem:[#allocation2 + $0x800] sm:$0xff]
    %v2291 = vld [vmem:[#allocation2 + $0x808] sm:$0xff]
    %v2292 = vld [vmem:[#allocation2 + $0x810] sm:$0xff]
    %v2293 = vld [vmem:[#allocation2 + $0x818] sm:$0xff]
    %v2294 = vld [vmem:[#allocation2 + $0x840] sm:$0xff]
    %v2295 = vld [vmem:[#allocation2 + $0x848] sm:$0xff]
    %v2296 = vld [vmem:[#allocation2 + $0x850] sm:$0xff]
    %v2297 = vld [vmem:[#allocation2 + $0x858] sm:$0xff]
    %v2298 = vld [vmem:[#allocation2 + $0x880] sm:$0xff]
    %v2299 = vld [vmem:[#allocation2 + $0x888] sm:$0xff]
    %v2300 = vld [vmem:[#allocation2 + $0x890] sm:$0xff]
    %v2301 = vld [vmem:[#allocation2 + $0x898] sm:$0xff]
    %v2302 = vld [vmem:[#allocation2 + $0x8c0] sm:$0xff]
    %v2303 = vld [vmem:[#allocation2 + $0x8c8] sm:$0xff]
    %v2304 = vld [vmem:[#allocation2 + $0x8d0] sm:$0xff]
    %v2305 = vld [vmem:[#allocation2 + $0x8d8] sm:$0xff]
    %v2306 = vld [vmem:[#allocation2 + $0x900] sm:$0xff]
    %v2307 = vld [vmem:[#allocation2 + $0x908] sm:$0xff]
    %v2308 = vld [vmem:[#allocation2 + $0x910] sm:$0xff]
    %v2309 = vld [vmem:[#allocation2 + $0x918] sm:$0xff]
    %v2310 = vld [vmem:[#allocation2 + $0x940] sm:$0xff]
    %v2311 = vld [vmem:[#allocation2 + $0x948] sm:$0xff]
    %v2312 = vld [vmem:[#allocation2 + $0x950] sm:$0xff]
    %v2313 = vld [vmem:[#allocation2 + $0x958] sm:$0xff]
    %v2314 = vld [vmem:[#allocation2 + $0x980] sm:$0xff]
    %v2315 = vld [vmem:[#allocation2 + $0x988] sm:$0xff]
    %v2316 = vld [vmem:[#allocation2 + $0x990] sm:$0xff]
    %v2317 = vld [vmem:[#allocation2 + $0x998] sm:$0xff]
    %v2318 = vld [vmem:[#allocation2 + $0x9c0] sm:$0xff]
    %v2319 = vld [vmem:[#allocation2 + $0x9c8] sm:$0xff]
    %v2320 = vld [vmem:[#allocation2 + $0x9d0] sm:$0xff]
    %v2321 = vld [vmem:[#allocation2 + $0x9d8] sm:$0xff]
    %v2322 = vld [vmem:[#allocation2 + $0xa00] sm:$0xff]
    %v2323 = vld [vmem:[#allocation2 + $0xa08] sm:$0xff]
    %v2324 = vld [vmem:[#allocation2 + $0xa10] sm:$0xff]
    %v2325 = vld [vmem:[#allocation2 + $0xa18] sm:$0xff]
    %v2326 = vld [vmem:[#allocation2 + $0xa40] sm:$0xff]
    %v2327 = vld [vmem:[#allocation2 + $0xa48] sm:$0xff]
    %v2328 = vld [vmem:[#allocation2 + $0xa50] sm:$0xff]
    %v2329 = vld [vmem:[#allocation2 + $0xa58] sm:$0xff]
    %v2330 = vld [vmem:[#allocation2 + $0xa80] sm:$0xff]
    %v2331 = vld [vmem:[#allocation2 + $0xa88] sm:$0xff]
    %v2332 = vld [vmem:[#allocation2 + $0xa90] sm:$0xff]
    %v2333 = vld [vmem:[#allocation2 + $0xa98] sm:$0xff]
    %v2334 = vld [vmem:[#allocation2 + $0xac0] sm:$0xff]
    %v2335 = vld [vmem:[#allocation2 + $0xac8] sm:$0xff]
    %v2336 = vld [vmem:[#allocation2 + $0xad0] sm:$0xff]
    %v2337 = vld [vmem:[#allocation2 + $0xad8] sm:$0xff]
    %v2338 = vld [vmem:[#allocation2 + $0xb00] sm:$0xff]
    %v2339 = vld [vmem:[#allocation2 + $0xb08] sm:$0xff]
    %v2340 = vld [vmem:[#allocation2 + $0xb10] sm:$0xff]
    %v2341 = vld [vmem:[#allocation2 + $0xb18] sm:$0xff]
    %v2342 = vld [vmem:[#allocation2 + $0xb40] sm:$0xff]
    %v2343 = vld [vmem:[#allocation2 + $0xb48] sm:$0xff]
    %v2344 = vld [vmem:[#allocation2 + $0xb50] sm:$0xff]
    %v2345 = vld [vmem:[#allocation2 + $0xb58] sm:$0xff]
    %v2346 = vld [vmem:[#allocation2 + $0xb80] sm:$0xff]
    %v2347 = vld [vmem:[#allocation2 + $0xb88] sm:$0xff]
    %v2348 = vld [vmem:[#allocation2 + $0xb90] sm:$0xff]
    %v2349 = vld [vmem:[#allocation2 + $0xb98] sm:$0xff]
    %v2350 = vld [vmem:[#allocation2 + $0xbc0] sm:$0xff]
    %v2351 = vld [vmem:[#allocation2 + $0xbc8] sm:$0xff]
    %v2352 = vld [vmem:[#allocation2 + $0xbd0] sm:$0xff]
    %v2353 = vld [vmem:[#allocation2 + $0xbd8] sm:$0xff]
    %v2354 = vld [vmem:[#allocation2 + $0xc00] sm:$0xff]
    %v2355 = vld [vmem:[#allocation2 + $0xc08] sm:$0xff]
    %v2356 = vld [vmem:[#allocation2 + $0xc10] sm:$0xff]
    %v2357 = vld [vmem:[#allocation2 + $0xc18] sm:$0xff]
    %v2358 = vld [vmem:[#allocation2 + $0xc40] sm:$0xff]
    %v2359 = vld [vmem:[#allocation2 + $0xc48] sm:$0xff]
    %v2360 = vld [vmem:[#allocation2 + $0xc50] sm:$0xff]
    %v2361 = vld [vmem:[#allocation2 + $0xc58] sm:$0xff]
    %v2362 = vld [vmem:[#allocation2 + $0xc80] sm:$0xff]
    %v2363 = vld [vmem:[#allocation2 + $0xc88] sm:$0xff]
    %v2364 = vld [vmem:[#allocation2 + $0xc90] sm:$0xff]
    %v2365 = vld [vmem:[#allocation2 + $0xc98] sm:$0xff]
    %v2366 = vld [vmem:[#allocation2 + $0xcc0] sm:$0xff]
    %v2367 = vld [vmem:[#allocation2 + $0xcc8] sm:$0xff]
    %v2368 = vld [vmem:[#allocation2 + $0xcd0] sm:$0xff]
    %v2369 = vld [vmem:[#allocation2 + $0xcd8] sm:$0xff]
    %v2370 = vld [vmem:[#allocation2 + $0xd00] sm:$0xff]
    %v2371 = vld [vmem:[#allocation2 + $0xd08] sm:$0xff]
    %v2372 = vld [vmem:[#allocation2 + $0xd10] sm:$0xff]
    %v2373 = vld [vmem:[#allocation2 + $0xd18] sm:$0xff]
    %v2374 = vld [vmem:[#allocation2 + $0xd40] sm:$0xff]
    %v2375 = vld [vmem:[#allocation2 + $0xd48] sm:$0xff]
    %v2376 = vld [vmem:[#allocation2 + $0xd50] sm:$0xff]
    %v2377 = vld [vmem:[#allocation2 + $0xd58] sm:$0xff]
    %v2378 = vld [vmem:[#allocation2 + $0xd80] sm:$0xff]
    %v2379 = vld [vmem:[#allocation2 + $0xd88] sm:$0xff]
    %v2380 = vld [vmem:[#allocation2 + $0xd90] sm:$0xff]
    %v2381 = vld [vmem:[#allocation2 + $0xd98] sm:$0xff]
    %v2382 = vld [vmem:[#allocation2 + $0xdc0] sm:$0xff]
    %v2383 = vld [vmem:[#allocation2 + $0xdc8] sm:$0xff]
    %v2384 = vld [vmem:[#allocation2 + $0xdd0] sm:$0xff]
    %v2385 = vld [vmem:[#allocation2 + $0xdd8] sm:$0xff]
    %v2386 = vld [vmem:[#allocation2 + $0xe00] sm:$0xff]
    %v2387 = vld [vmem:[#allocation2 + $0xe08] sm:$0xff]
    %v2388 = vld [vmem:[#allocation2 + $0xe10] sm:$0xff]
    %v2389 = vld [vmem:[#allocation2 + $0xe18] sm:$0xff]
    %v2390 = vld [vmem:[#allocation2 + $0xe40] sm:$0xff]
    %v2391 = vld [vmem:[#allocation2 + $0xe48] sm:$0xff]
    %v2392 = vld [vmem:[#allocation2 + $0xe50] sm:$0xff]
    %v2393 = vld [vmem:[#allocation2 + $0xe58] sm:$0xff]
    %v2394 = vld [vmem:[#allocation2 + $0xe80] sm:$0xff]
    %v2395 = vld [vmem:[#allocation2 + $0xe88] sm:$0xff]
    %v2396 = vld [vmem:[#allocation2 + $0xe90] sm:$0xff]
    %v2397 = vld [vmem:[#allocation2 + $0xe98] sm:$0xff]
    %v2398 = vld [vmem:[#allocation2 + $0xec0] sm:$0xff]
    %v2399 = vld [vmem:[#allocation2 + $0xec8] sm:$0xff]
    %v2400 = vld [vmem:[#allocation2 + $0xed0] sm:$0xff]
    %v2401 = vld [vmem:[#allocation2 + $0xed8] sm:$0xff]
    %v2402 = vld [vmem:[#allocation2 + $0xf00] sm:$0xff]
    %v2403 = vld [vmem:[#allocation2 + $0xf08] sm:$0xff]
    %v2404 = vld [vmem:[#allocation2 + $0xf10] sm:$0xff]
    %v2405 = vld [vmem:[#allocation2 + $0xf18] sm:$0xff]
    %v2406 = vld [vmem:[#allocation2 + $0xf40] sm:$0xff]
    %v2407 = vld [vmem:[#allocation2 + $0xf48] sm:$0xff]
    %v2408 = vld [vmem:[#allocation2 + $0xf50] sm:$0xff]
    %v2409 = vld [vmem:[#allocation2 + $0xf58] sm:$0xff]
    %v2410 = vld [vmem:[#allocation2 + $0xf80] sm:$0xff]
    %v2411 = vld [vmem:[#allocation2 + $0xf88] sm:$0xff]
    %v2412 = vld [vmem:[#allocation2 + $0xf90] sm:$0xff]
    %v2413 = vld [vmem:[#allocation2 + $0xf98] sm:$0xff]
    %v2414 = vld [vmem:[#allocation2 + $0xfc0] sm:$0xff]
    %v2415 = vld [vmem:[#allocation2 + $0xfc8] sm:$0xff]
    %v2416 = vld [vmem:[#allocation2 + $0xfd0] sm:$0xff]
    %v2417 = vld [vmem:[#allocation2 + $0xfd8] sm:$0xff]
    %v2418 = vld [vmem:[#allocation10] sm:$0xf]
    %v2420 = vlaneseq
    %v2421 = vshrl.u32 %v2420, 7
    %v2422 = vsub.s32 0, %v2421
    %v2423 = vrot.slane %v2418, %v2422
    %v2424 = vlaneseq
    %v2425 = vshrl.u32 %v2424, 7
    %v2426 = vsub.s32 1, %v2425
    %v2427 = vrot.slane %v2418, %v2426
    %v2428 = vlaneseq
    %v2429 = vshrl.u32 %v2428, 7
    %v2430 = vsub.s32 2, %v2429
    %v2431 = vrot.slane %v2418, %v2430
    %v2432 = vlaneseq
    %v2433 = vshrl.u32 %v2432, 7
    %v2434 = vsub.s32 3, %v2433
    %v2435 = vrot.slane %v2418, %v2434
    %2440 = vmatprep.subr.bf16.mxu0 %v2163
    %2441 = vmatpush1.bf16.msra.mxu0 %v2162
    %2442 = vmatprep.subr.bf16.mxu0 %v2167
    %2443 = vmatpush1.bf16.msra.mxu0 %v2166
    %2444 = vmatprep.subr.bf16.mxu0 %v2171
    %2445 = vmatpush1.bf16.msra.mxu0 %v2170
    %2446 = vmatprep.subr.bf16.mxu0 %v2175
    %2447 = vmatpush1.bf16.msra.mxu0 %v2174
    %2448 = vmatprep.subr.bf16.mxu0 %v2179
    %2449 = vmatpush1.bf16.msra.mxu0 %v2178
    %2450 = vmatprep.subr.bf16.mxu0 %v2183
    %2451 = vmatpush1.bf16.msra.mxu0 %v2182
    %2452 = vmatprep.subr.bf16.mxu0 %v2187
    %2453 = vmatpush1.bf16.msra.mxu0 %v2186
    %2454 = vmatprep.subr.bf16.mxu0 %v2191
    %2455 = vmatpush1.bf16.msra.mxu0 %v2190
    %2456 = vmatprep.subr.bf16.mxu0 %v2195
    %2457 = vmatpush1.bf16.msra.mxu0 %v2194
    %2458 = vmatprep.subr.bf16.mxu0 %v2199
    %2459 = vmatpush1.bf16.msra.mxu0 %v2198
    %2460 = vmatprep.subr.bf16.mxu0 %v2203
    %2461 = vmatpush1.bf16.msra.mxu0 %v2202
    %2462 = vmatprep.subr.bf16.mxu0 %v2207
    %2463 = vmatpush1.bf16.msra.mxu0 %v2206
    %2464 = vmatprep.subr.bf16.mxu0 %v2211
    %2465 = vmatpush1.bf16.msra.mxu0 %v2210
    %2466 = vmatprep.subr.bf16.mxu0 %v2215
    %2467 = vmatpush1.bf16.msra.mxu0 %v2214
    %2468 = vmatprep.subr.bf16.mxu0 %v2219
    %2469 = vmatpush1.bf16.msra.mxu0 %v2218
    %2470 = vmatprep.subr.bf16.mxu0 %v2223
    %2471 = vmatpush1.bf16.msra.mxu0 %v2222
    %2472 = vmatprep.mubr.bf16.mxu0 %v2118
    %2473 = vmatmul.mubr.bf16.gmra.mrb[0].mxu0 %v2117
    %v2474 = vpop.f32.mrb[0].mxu0
    %v2475 = vadd.f32 %v2423, %v2474
    %v2476 = vpop.f32.mrb[0].mxu0
    %v2477 = vadd.f32 %v2427, %v2476
    %v2478 = vpop.f32.mrb[0].mxu0
    %v2479 = vpop.f32.mrb[0].mxu0
    %2480 = vdwg.mxu0
    %2481 = vmatprep.subr.bf16.mxu0 %v2227
    %2482 = vmatpush1.bf16.msra.mxu0 %v2226
    %2483 = vmatprep.subr.bf16.mxu0 %v2231
    %2484 = vmatpush1.bf16.msra.mxu0 %v2230
    %2485 = vmatprep.subr.bf16.mxu0 %v2235
    %2486 = vmatpush1.bf16.msra.mxu0 %v2234
    %2487 = vmatprep.subr.bf16.mxu0 %v2239
    %2488 = vmatpush1.bf16.msra.mxu0 %v2238
    %2489 = vmatprep.subr.bf16.mxu0 %v2243
    %2490 = vmatpush1.bf16.msra.mxu0 %v2242
    %2491 = vmatprep.subr.bf16.mxu0 %v2247
    %2492 = vmatpush1.bf16.msra.mxu0 %v2246
    %2493 = vmatprep.subr.bf16.mxu0 %v2251
    %2494 = vmatpush1.bf16.msra.mxu0 %v2250
    %2495 = vmatprep.subr.bf16.mxu0 %v2255
    %2496 = vmatpush1.bf16.msra.mxu0 %v2254
    %2497 = vmatprep.subr.bf16.mxu0 %v2259
    %2498 = vmatpush1.bf16.msra.mxu0 %v2258
    %2499 = vmatprep.subr.bf16.mxu0 %v2263
    %2500 = vmatpush1.bf16.msra.mxu0 %v2262
    %2501 = vmatprep.subr.bf16.mxu0 %v2267
    %2502 = vmatpush1.bf16.msra.mxu0 %v2266
    %2503 = vmatprep.subr.bf16.mxu0 %v2271
    %2504 = vmatpush1.bf16.msra.mxu0 %v2270
    %2505 = vmatprep.subr.bf16.mxu0 %v2275
    %2506 = vmatpush1.bf16.msra.mxu0 %v2274
    %2507 = vmatprep.subr.bf16.mxu0 %v2279
    %2508 = vmatpush1.bf16.msra.mxu0 %v2278
    %2509 = vmatprep.subr.bf16.mxu0 %v2283
    %2510 = vmatpush1.bf16.msra.mxu0 %v2282
    %2511 = vmatprep.subr.bf16.mxu0 %v2287
    %2512 = vmatpush1.bf16.msra.mxu0 %v2286
    %2513 = vmatprep.mubr.bf16.mxu0 %v2120
    %2514 = vmatmul.mubr.bf16.gmra.mrb[0].mxu0 %v2119
    %v2515 = vpop.f32.mrb[0].mxu0
    %v2516 = vadd.f32 %v2475, %v2515
    %v2517 = vpop.f32.mrb[0].mxu0
    %v2518 = vadd.f32 %v2477, %v2517
    %v2519 = vpop.f32.mrb[0].mxu0
    %v2520 = vpop.f32.mrb[0].mxu0
    %2521 = vdwg.mxu0
    %2522 = vmatprep.subr.bf16.mxu0 %v2291
    %2523 = vmatpush1.bf16.msra.mxu0 %v2290
    %2524 = vmatprep.subr.bf16.mxu0 %v2295
    %2525 = vmatpush1.bf16.msra.mxu0 %v2294
    %2526 = vmatprep.subr.bf16.mxu0 %v2299
    %2527 = vmatpush1.bf16.msra.mxu0 %v2298
    %2528 = vmatprep.subr.bf16.mxu0 %v2303
    %2529 = vmatpush1.bf16.msra.mxu0 %v2302
    %2530 = vmatprep.subr.bf16.mxu0 %v2307
    %2531 = vmatpush1.bf16.msra.mxu0 %v2306
    %2532 = vmatprep.subr.bf16.mxu0 %v2311
    %2533 = vmatpush1.bf16.msra.mxu0 %v2310
    %2534 = vmatprep.subr.bf16.mxu0 %v2315
    %2535 = vmatpush1.bf16.msra.mxu0 %v2314
    %2536 = vmatprep.subr.bf16.mxu0 %v2319
    %2537 = vmatpush1.bf16.msra.mxu0 %v2318
    %2538 = vmatprep.subr.bf16.mxu0 %v2323
    %2539 = vmatpush1.bf16.msra.mxu0 %v2322
    %2540 = vmatprep.subr.bf16.mxu0 %v2327
    %2541 = vmatpush1.bf16.msra.mxu0 %v2326
    %2542 = vmatprep.subr.bf16.mxu0 %v2331
    %2543 = vmatpush1.bf16.msra.mxu0 %v2330
    %2544 = vmatprep.subr.bf16.mxu0 %v2335
    %2545 = vmatpush1.bf16.msra.mxu0 %v2334
    %2546 = vmatprep.subr.bf16.mxu0 %v2339
    %2547 = vmatpush1.bf16.msra.mxu0 %v2338
    %2548 = vmatprep.subr.bf16.mxu0 %v2343
    %2549 = vmatpush1.bf16.msra.mxu0 %v2342
    %2550 = vmatprep.subr.bf16.mxu0 %v2347
    %2551 = vmatpush1.bf16.msra.mxu0 %v2346
    %2552 = vmatprep.subr.bf16.mxu0 %v2351
    %2553 = vmatpush1.bf16.msra.mxu0 %v2350
    %2554 = vmatprep.mubr.bf16.mxu0 %v2122
    %2555 = vmatmul.mubr.bf16.gmra.mrb[0].mxu0 %v2121
    %v2556 = vpop.f32.mrb[0].mxu0
    %v2557 = vadd.f32 %v2516, %v2556
    %v2558 = vpop.f32.mrb[0].mxu0
    %v2559 = vadd.f32 %v2518, %v2558
    %v2560 = vpop.f32.mrb[0].mxu0
    %v2561 = vpop.f32.mrb[0].mxu0
    %2562 = vdwg.mxu0
    %2563 = vmatprep.subr.bf16.mxu0 %v2355
    %2564 = vmatpush1.bf16.msra.mxu0 %v2354
    %2565 = vmatprep.subr.bf16.mxu0 %v2359
    %2566 = vmatpush1.bf16.msra.mxu0 %v2358
    %2567 = vmatprep.subr.bf16.mxu0 %v2363
    %2568 = vmatpush1.bf16.msra.mxu0 %v2362
    %2569 = vmatprep.subr.bf16.mxu0 %v2367
    %2570 = vmatpush1.bf16.msra.mxu0 %v2366
    %2571 = vmatprep.subr.bf16.mxu0 %v2371
    %2572 = vmatpush1.bf16.msra.mxu0 %v2370
    %2573 = vmatprep.subr.bf16.mxu0 %v2375
    %2574 = vmatpush1.bf16.msra.mxu0 %v2374
    %2575 = vmatprep.subr.bf16.mxu0 %v2379
    %2576 = vmatpush1.bf16.msra.mxu0 %v2378
    %2577 = vmatprep.subr.bf16.mxu0 %v2383
    %2578 = vmatpush1.bf16.msra.mxu0 %v2382
    %2579 = vmatprep.subr.bf16.mxu0 %v2387
    %2580 = vmatpush1.bf16.msra.mxu0 %v2386
    %2581 = vmatprep.subr.bf16.mxu0 %v2391
    %2582 = vmatpush1.bf16.msra.mxu0 %v2390
    %2583 = vmatprep.subr.bf16.mxu0 %v2395
    %2584 = vmatpush1.bf16.msra.mxu0 %v2394
    %2585 = vmatprep.subr.bf16.mxu0 %v2399
    %2586 = vmatpush1.bf16.msra.mxu0 %v2398
    %2587 = vmatprep.subr.bf16.mxu0 %v2403
    %2588 = vmatpush1.bf16.msra.mxu0 %v2402
    %2589 = vmatprep.subr.bf16.mxu0 %v2407
    %2590 = vmatpush1.bf16.msra.mxu0 %v2406
    %2591 = vmatprep.subr.bf16.mxu0 %v2411
    %2592 = vmatpush1.bf16.msra.mxu0 %v2410
    %2593 = vmatprep.subr.bf16.mxu0 %v2415
    %2594 = vmatpush1.bf16.msra.mxu0 %v2414
    %2595 = vmatprep.mubr.bf16.mxu0 %v2124
    %2596 = vmatmul.mubr.bf16.gmra.mrb[0].mxu0 %v2123
    %v2597 = vpop.f32.mrb[0].mxu0
    %v2598 = vadd.f32 %v2557, %v2597
    %v2599 = vpop.f32.mrb[0].mxu0
    %v2600 = vadd.f32 %v2559, %v2599
    %v2601 = vpop.f32.mrb[0].mxu0
    %v2602 = vpop.f32.mrb[0].mxu0
    %2603 = vdwg.mxu0
    %2604 = vmatprep.subr.bf16.mxu0 %v2165
    %2605 = vmatpush1.bf16.msra.mxu0 %v2164
    %2606 = vmatprep.subr.bf16.mxu0 %v2169
    %2607 = vmatpush1.bf16.msra.mxu0 %v2168
    %2608 = vmatprep.subr.bf16.mxu0 %v2173
    %2609 = vmatpush1.bf16.msra.mxu0 %v2172
    %2610 = vmatprep.subr.bf16.mxu0 %v2177
    %2611 = vmatpush1.bf16.msra.mxu0 %v2176
    %2612 = vmatprep.subr.bf16.mxu0 %v2181
    %2613 = vmatpush1.bf16.msra.mxu0 %v2180
    %2614 = vmatprep.subr.bf16.mxu0 %v2185
    %2615 = vmatpush1.bf16.msra.mxu0 %v2184
    %2616 = vmatprep.subr.bf16.mxu0 %v2189
    %2617 = vmatpush1.bf16.msra.mxu0 %v2188
    %2618 = vmatprep.subr.bf16.mxu0 %v2193
    %2619 = vmatpush1.bf16.msra.mxu0 %v2192
    %2620 = vmatprep.subr.bf16.mxu0 %v2197
    %2621 = vmatpush1.bf16.msra.mxu0 %v2196
    %2622 = vmatprep.subr.bf16.mxu0 %v2201
    %2623 = vmatpush1.bf16.msra.mxu0 %v2200
    %2624 = vmatprep.subr.bf16.mxu0 %v2205
    %2625 = vmatpush1.bf16.msra.mxu0 %v2204
    %2626 = vmatprep.subr.bf16.mxu0 %v2209
    %2627 = vmatpush1.bf16.msra.mxu0 %v2208
    %2628 = vmatprep.subr.bf16.mxu0 %v2213
    %2629 = vmatpush1.bf16.msra.mxu0 %v2212
    %2630 = vmatprep.subr.bf16.mxu0 %v2217
    %2631 = vmatpush1.bf16.msra.mxu0 %v2216
    %2632 = vmatprep.subr.bf16.mxu0 %v2221
    %2633 = vmatpush1.bf16.msra.mxu0 %v2220
    %2634 = vmatprep.subr.bf16.mxu0 %v2225
    %2635 = vmatpush1.bf16.msra.mxu0 %v2224
    %2636 = vmatprep.mubr.bf16.mxu0 %v2118
    %2637 = vmatmul.mubr.bf16.gmra.mrb[0].mxu0 %v2117
    %v2638 = vpop.f32.mrb[0].mxu0
    %v2639 = vadd.f32 %v2431, %v2638
    %v2640 = vpop.f32.mrb[0].mxu0
    %v2641 = vadd.f32 %v2435, %v2640
    %v2642 = vpop.f32.mrb[0].mxu0
    %v2643 = vpop.f32.mrb[0].mxu0
    %2644 = vdwg.mxu0
    %2645 = vmatprep.subr.bf16.mxu0 %v2229
    %2646 = vmatpush1.bf16.msra.mxu0 %v2228
    %2647 = vmatprep.subr.bf16.mxu0 %v2233
    %2648 = vmatpush1.bf16.msra.mxu0 %v2232
    %2649 = vmatprep.subr.bf16.mxu0 %v2237
    %2650 = vmatpush1.bf16.msra.mxu0 %v2236
    %2651 = vmatprep.subr.bf16.mxu0 %v2241
    %2652 = vmatpush1.bf16.msra.mxu0 %v2240
    %2653 = vmatprep.subr.bf16.mxu0 %v2245
    %2654 = vmatpush1.bf16.msra.mxu0 %v2244
    %2655 = vmatprep.subr.bf16.mxu0 %v2249
    %2656 = vmatpush1.bf16.msra.mxu0 %v2248
    %2657 = vmatprep.subr.bf16.mxu0 %v2253
    %2658 = vmatpush1.bf16.msra.mxu0 %v2252
    %2659 = vmatprep.subr.bf16.mxu0 %v2257
    %2660 = vmatpush1.bf16.msra.mxu0 %v2256
    %2661 = vmatprep.subr.bf16.mxu0 %v2261
    %2662 = vmatpush1.bf16.msra.mxu0 %v2260
    %2663 = vmatprep.subr.bf16.mxu0 %v2265
    %2664 = vmatpush1.bf16.msra.mxu0 %v2264
    %2665 = vmatprep.subr.bf16.mxu0 %v2269
    %2666 = vmatpush1.bf16.msra.mxu0 %v2268
    %2667 = vmatprep.subr.bf16.mxu0 %v2273
    %2668 = vmatpush1.bf16.msra.mxu0 %v2272
    %2669 = vmatprep.subr.bf16.mxu0 %v2277
    %2670 = vmatpush1.bf16.msra.mxu0 %v2276
    %2671 = vmatprep.subr.bf16.mxu0 %v2281
    %2672 = vmatpush1.bf16.msra.mxu0 %v2280
    %2673 = vmatprep.subr.bf16.mxu0 %v2285
    %2674 = vmatpush1.bf16.msra.mxu0 %v2284
    %2675 = vmatprep.subr.bf16.mxu0 %v2289
    %2676 = vmatpush1.bf16.msra.mxu0 %v2288
    %2677 = vmatprep.mubr.bf16.mxu0 %v2120
    %2678 = vmatmul.mubr.bf16.gmra.mrb[0].mxu0 %v2119
    %v2679 = vpop.f32.mrb[0].mxu0
    %v2680 = vadd.f32 %v2639, %v2679
    %v2681 = vpop.f32.mrb[0].mxu0
    %v2682 = vadd.f32 %v2641, %v2681
    %v2683 = vpop.f32.mrb[0].mxu0
    %v2684 = vpop.f32.mrb[0].mxu0
    %2685 = vdwg.mxu0
    %2686 = vmatprep.subr.bf16.mxu0 %v2293
    %2687 = vmatpush1.bf16.msra.mxu0 %v2292
    %2688 = vmatprep.subr.bf16.mxu0 %v2297
    %2689 = vmatpush1.bf16.msra.mxu0 %v2296
    %2690 = vmatprep.subr.bf16.mxu0 %v2301
    %2691 = vmatpush1.bf16.msra.mxu0 %v2300
    %2692 = vmatprep.subr.bf16.mxu0 %v2305
    %2693 = vmatpush1.bf16.msra.mxu0 %v2304
    %2694 = vmatprep.subr.bf16.mxu0 %v2309
    %2695 = vmatpush1.bf16.msra.mxu0 %v2308
    %2696 = vmatprep.subr.bf16.mxu0 %v2313
    %2697 = vmatpush1.bf16.msra.mxu0 %v2312
    %2698 = vmatprep.subr.bf16.mxu0 %v2317
    %2699 = vmatpush1.bf16.msra.mxu0 %v2316
    %2700 = vmatprep.subr.bf16.mxu0 %v2321
    %2701 = vmatpush1.bf16.msra.mxu0 %v2320
    %2702 = vmatprep.subr.bf16.mxu0 %v2325
    %2703 = vmatpush1.bf16.msra.mxu0 %v2324
    %2704 = vmatprep.subr.bf16.mxu0 %v2329
    %2705 = vmatpush1.bf16.msra.mxu0 %v2328
    %2706 = vmatprep.subr.bf16.mxu0 %v2333
    %2707 = vmatpush1.bf16.msra.mxu0 %v2332
    %2708 = vmatprep.subr.bf16.mxu0 %v2337
    %2709 = vmatpush1.bf16.msra.mxu0 %v2336
    %2710 = vmatprep.subr.bf16.mxu0 %v2341
    %2711 = vmatpush1.bf16.msra.mxu0 %v2340
    %2712 = vmatprep.subr.bf16.mxu0 %v2345
    %2713 = vmatpush1.bf16.msra.mxu0 %v2344
    %2714 = vmatprep.subr.bf16.mxu0 %v2349
    %2715 = vmatpush1.bf16.msra.mxu0 %v2348
    %2716 = vmatprep.subr.bf16.mxu0 %v2353
    %2717 = vmatpush1.bf16.msra.mxu0 %v2352
    %2718 = vmatprep.mubr.bf16.mxu0 %v2122
    %2719 = vmatmul.mubr.bf16.gmra.mrb[0].mxu0 %v2121
    %v2720 = vpop.f32.mrb[0].mxu0
    %v2721 = vadd.f32 %v2680, %v2720
    %v2722 = vpop.f32.mrb[0].mxu0
    %v2723 = vadd.f32 %v2682, %v2722
    %v2724 = vpop.f32.mrb[0].mxu0
    %v2725 = vpop.f32.mrb[0].mxu0
    %2726 = vdwg.mxu0
    %2727 = vmatprep.subr.bf16.mxu0 %v2357
    %2728 = vmatpush1.bf16.msra.mxu0 %v2356
    %2729 = vmatprep.subr.bf16.mxu0 %v2361
    %2730 = vmatpush1.bf16.msra.mxu0 %v2360
    %2731 = vmatprep.subr.bf16.mxu0 %v2365
    %2732 = vmatpush1.bf16.msra.mxu0 %v2364
    %2733 = vmatprep.subr.bf16.mxu0 %v2369
    %2734 = vmatpush1.bf16.msra.mxu0 %v2368
    %2735 = vmatprep.subr.bf16.mxu0 %v2373
    %2736 = vmatpush1.bf16.msra.mxu0 %v2372
    %2737 = vmatprep.subr.bf16.mxu0 %v2377
    %2738 = vmatpush1.bf16.msra.mxu0 %v2376
    %2739 = vmatprep.subr.bf16.mxu0 %v2381
    %2740 = vmatpush1.bf16.msra.mxu0 %v2380
    %2741 = vmatprep.subr.bf16.mxu0 %v2385
    %2742 = vmatpush1.bf16.msra.mxu0 %v2384
    %2743 = vmatprep.subr.bf16.mxu0 %v2389
    %2744 = vmatpush1.bf16.msra.mxu0 %v2388
    %2745 = vmatprep.subr.bf16.mxu0 %v2393
    %2746 = vmatpush1.bf16.msra.mxu0 %v2392
    %2747 = vmatprep.subr.bf16.mxu0 %v2397
    %2748 = vmatpush1.bf16.msra.mxu0 %v2396
    %2749 = vmatprep.subr.bf16.mxu0 %v2401
    %2750 = vmatpush1.bf16.msra.mxu0 %v2400
    %2751 = vmatprep.subr.bf16.mxu0 %v2405
    %2752 = vmatpush1.bf16.msra.mxu0 %v2404
    %2753 = vmatprep.subr.bf16.mxu0 %v2409
    %2754 = vmatpush1.bf16.msra.mxu0 %v2408
    %2755 = vmatprep.subr.bf16.mxu0 %v2413
    %2756 = vmatpush1.bf16.msra.mxu0 %v2412
    %2757 = vmatprep.subr.bf16.mxu0 %v2417
    %2758 = vmatpush1.bf16.msra.mxu0 %v2416
    %2759 = vmatprep.mubr.bf16.mxu0 %v2124
    %2760 = vmatmul.mubr.bf16.gmra.mrb[0].mxu0 %v2123
    %v2761 = vpop.f32.mrb[0].mxu0
    %v2762 = vadd.f32 %v2721, %v2761
    %v2763 = vpop.f32.mrb[0].mxu0
    %v2764 = vadd.f32 %v2723, %v2763
    %v2765 = vpop.f32.mrb[0].mxu0
    %v2766 = vpop.f32.mrb[0].mxu0
    %2767 = vdwg.mxu0
    %v2768 = vxor.u32 %v2598, 2147483648
    %v2769 = vxor.u32 %v2600, 2147483648
    %v2770 = vxor.u32 %v2762, 2147483648
    %v2771 = vxor.u32 %v2764, 2147483648
    %v2772 = vmul.f32 %v2768, 1.442695
    %v2773 = vpow.pop %v2772
    %v2774 = vmul.f32 %v2769, 1.442695
    %v2775 = vpow.pop %v2774
    %v2776 = vmul.f32 %v2770, 1.442695
    %v2777 = vpow.pop %v2776
    %v2778 = vmul.f32 %v2771, 1.442695
    %v2779 = vpow.pop %v2778
    %v2780 = vadd.f32 %v2773, 1.0
    %v2781 = vadd.f32 %v2775, 1.0
    %v2782 = vadd.f32 %v2777, 1.0
    %v2783 = vadd.f32 %v2779, 1.0
    %v2784 = vrcp.pop %v2780
    %v2785 = vmul.f32 1.0, %v2784
    %v2786 = vrcp.pop %v2781
    %v2787 = vmul.f32 1.0, %v2786
    %v2788 = vrcp.pop %v2782
    %v2789 = vmul.f32 1.0, %v2788
    %v2790 = vrcp.pop %v2783
    %v2791 = vmul.f32 1.0, %v2790
    %v2792 = vpack.c.bf16 %v2785, %v2785
    %v2793 = vpack.c.bf16 %v2787, %v2787
    %v2794 = vpack.c.bf16 %v2789, %v2789
    %v2795 = vpack.c.bf16 %v2791, %v2791
    %s2797 = sshll.u32 1, 14
    %s2798 = sxor.u32 4294967295, %s2797
    %s2800 = sadd.s32 2, %s118
    %s2802 = sshll.u32 7, 26
    %s2803 = sxor.u32 4294967295, %s2802
    %s2804 = sand.u32 0, %s2803
    %s2805 = sshll.u32 %s2800, 26
    %s2806 = sor.u32 %s2804, %s2805
    %s2807 = sshll.u32 [#allocation2], 4
    %s2808 = int_to_ptr.vmem [resolvable:$true] %s2807
    %2811 = sst [smem:[#allocation26]] 1024
    %s2812 = scalar_lea.smem [#allocation26], 1
    %2813 = sst [smem:[%s2812]] 1024
    %s2814 = scalar_lea.smem [#allocation26], 2
    %2815 = sst [smem:[%s2814]] 8
    %s2816 = scalar_lea.smem [#allocation26], 3
    %2817 = sst [smem:[%s2816]] 64
    %s2818 = scalar_lea.smem [#allocation26], 4
    %2819 = sst [smem:[%s2818]] 128
    %s2820 = scalar_lea.smem [#allocation26], 5
    %2821 = sst [smem:[%s2820]] 2
    %s2822 = scalar_lea.smem [#allocation26], 6
    %2823 = sst [smem:[%s2822]] 512
    %s2824 = scalar_lea.smem [#allocation26], 7
    %2825 = sst [smem:[%s2824]] 64
    %s2826 = scalar_lea.smem [#allocation26], 8
    %2827 = sst [smem:[%s2826]] 4
    %2829 = dma.general %s5, 65536, %s2808, [#allocation3], [#allocation25], [#allocation26], %s2806, 0
    %s2830 = sshll.u32 %s187, 4
    %2831 = dma.done %s151, %s2830
    %v2832 = vld [vmem:[%s150] sm:$0xff]
    %v2833 = vld [vmem:[%s150 + $0x8] sm:$0xff]
    %v2834 = vld [vmem:[%s150 + $0x10] sm:$0xff]
    %v2835 = vld [vmem:[%s150 + $0x18] sm:$0xff]
    %v2836 = vld [vmem:[%s150 + $0x20] sm:$0xff]
    %v2837 = vld [vmem:[%s150 + $0x28] sm:$0xff]
    %v2838 = vld [vmem:[%s150 + $0x30] sm:$0xff]
    %v2839 = vld [vmem:[%s150 + $0x38] sm:$0xff]
    %v2840 = vld [vmem:[%s150 + $0x40] sm:$0xff]
    %v2841 = vld [vmem:[%s150 + $0x48] sm:$0xff]
    %v2842 = vld [vmem:[%s150 + $0x50] sm:$0xff]
    %v2843 = vld [vmem:[%s150 + $0x58] sm:$0xff]
    %v2844 = vld [vmem:[%s150 + $0x60] sm:$0xff]
    %v2845 = vld [vmem:[%s150 + $0x68] sm:$0xff]
    %v2846 = vld [vmem:[%s150 + $0x70] sm:$0xff]
    %v2847 = vld [vmem:[%s150 + $0x78] sm:$0xff]
    %v2848 = vld [vmem:[%s150 + $0x80] sm:$0xff]
    %v2849 = vld [vmem:[%s150 + $0x88] sm:$0xff]
    %v2850 = vld [vmem:[%s150 + $0x90] sm:$0xff]
    %v2851 = vld [vmem:[%s150 + $0x98] sm:$0xff]
    %v2852 = vld [vmem:[%s150 + $0xa0] sm:$0xff]
    %v2853 = vld [vmem:[%s150 + $0xa8] sm:$0xff]
    %v2854 = vld [vmem:[%s150 + $0xb0] sm:$0xff]
    %v2855 = vld [vmem:[%s150 + $0xb8] sm:$0xff]
    %v2856 = vld [vmem:[%s150 + $0xc0] sm:$0xff]
    %v2857 = vld [vmem:[%s150 + $0xc8] sm:$0xff]
    %v2858 = vld [vmem:[%s150 + $0xd0] sm:$0xff]
    %v2859 = vld [vmem:[%s150 + $0xd8] sm:$0xff]
    %v2860 = vld [vmem:[%s150 + $0xe0] sm:$0xff]
    %v2861 = vld [vmem:[%s150 + $0xe8] sm:$0xff]
    %v2862 = vld [vmem:[%s150 + $0xf0] sm:$0xff]
    %v2863 = vld [vmem:[%s150 + $0xf8] sm:$0xff]
    %v2864 = vld [vmem:[%s150 + $0x100] sm:$0xff]
    %v2865 = vld [vmem:[%s150 + $0x108] sm:$0xff]
    %v2866 = vld [vmem:[%s150 + $0x110] sm:$0xff]
    %v2867 = vld [vmem:[%s150 + $0x118] sm:$0xff]
    %v2868 = vld [vmem:[%s150 + $0x120] sm:$0xff]
    %v2869 = vld [vmem:[%s150 + $0x128] sm:$0xff]
    %v2870 = vld [vmem:[%s150 + $0x130] sm:$0xff]
    %v2871 = vld [vmem:[%s150 + $0x138] sm:$0xff]
    %v2872 = vld [vmem:[%s150 + $0x140] sm:$0xff]
    %v2873 = vld [vmem:[%s150 + $0x148] sm:$0xff]
    %v2874 = vld [vmem:[%s150 + $0x150] sm:$0xff]
    %v2875 = vld [vmem:[%s150 + $0x158] sm:$0xff]
    %v2876 = vld [vmem:[%s150 + $0x160] sm:$0xff]
    %v2877 = vld [vmem:[%s150 + $0x168] sm:$0xff]
    %v2878 = vld [vmem:[%s150 + $0x170] sm:$0xff]
    %v2879 = vld [vmem:[%s150 + $0x178] sm:$0xff]
    %v2880 = vld [vmem:[%s150 + $0x180] sm:$0xff]
    %v2881 = vld [vmem:[%s150 + $0x188] sm:$0xff]
    %v2882 = vld [vmem:[%s150 + $0x190] sm:$0xff]
    %v2883 = vld [vmem:[%s150 + $0x198] sm:$0xff]
    %v2884 = vld [vmem:[%s150 + $0x1a0] sm:$0xff]
    %v2885 = vld [vmem:[%s150 + $0x1a8] sm:$0xff]
    %v2886 = vld [vmem:[%s150 + $0x1b0] sm:$0xff]
    %v2887 = vld [vmem:[%s150 + $0x1b8] sm:$0xff]
    %v2888 = vld [vmem:[%s150 + $0x1c0] sm:$0xff]
    %v2889 = vld [vmem:[%s150 + $0x1c8] sm:$0xff]
    %v2890 = vld [vmem:[%s150 + $0x1d0] sm:$0xff]
    %v2891 = vld [vmem:[%s150 + $0x1d8] sm:$0xff]
    %v2892 = vld [vmem:[%s150 + $0x1e0] sm:$0xff]
    %v2893 = vld [vmem:[%s150 + $0x1e8] sm:$0xff]
    %v2894 = vld [vmem:[%s150 + $0x1f0] sm:$0xff]
    %v2895 = vld [vmem:[%s150 + $0x1f8] sm:$0xff]
    %v2896 = vld [vmem:[%s150 + $0x200] sm:$0xff]
    %v2897 = vld [vmem:[%s150 + $0x208] sm:$0xff]
    %v2898 = vld [vmem:[%s150 + $0x210] sm:$0xff]
    %v2899 = vld [vmem:[%s150 + $0x218] sm:$0xff]
    %v2900 = vld [vmem:[%s150 + $0x220] sm:$0xff]
    %v2901 = vld [vmem:[%s150 + $0x228] sm:$0xff]
    %v2902 = vld [vmem:[%s150 + $0x230] sm:$0xff]
    %v2903 = vld [vmem:[%s150 + $0x238] sm:$0xff]
    %v2904 = vld [vmem:[%s150 + $0x240] sm:$0xff]
    %v2905 = vld [vmem:[%s150 + $0x248] sm:$0xff]
    %v2906 = vld [vmem:[%s150 + $0x250] sm:$0xff]
    %v2907 = vld [vmem:[%s150 + $0x258] sm:$0xff]
    %v2908 = vld [vmem:[%s150 + $0x260] sm:$0xff]
    %v2909 = vld [vmem:[%s150 + $0x268] sm:$0xff]
    %v2910 = vld [vmem:[%s150 + $0x270] sm:$0xff]
    %v2911 = vld [vmem:[%s150 + $0x278] sm:$0xff]
    %v2912 = vld [vmem:[%s150 + $0x280] sm:$0xff]
    %v2913 = vld [vmem:[%s150 + $0x288] sm:$0xff]
    %v2914 = vld [vmem:[%s150 + $0x290] sm:$0xff]
    %v2915 = vld [vmem:[%s150 + $0x298] sm:$0xff]
    %v2916 = vld [vmem:[%s150 + $0x2a0] sm:$0xff]
    %v2917 = vld [vmem:[%s150 + $0x2a8] sm:$0xff]
    %v2918 = vld [vmem:[%s150 + $0x2b0] sm:$0xff]
    %v2919 = vld [vmem:[%s150 + $0x2b8] sm:$0xff]
    %v2920 = vld [vmem:[%s150 + $0x2c0] sm:$0xff]
    %v2921 = vld [vmem:[%s150 + $0x2c8] sm:$0xff]
    %v2922 = vld [vmem:[%s150 + $0x2d0] sm:$0xff]
    %v2923 = vld [vmem:[%s150 + $0x2d8] sm:$0xff]
    %v2924 = vld [vmem:[%s150 + $0x2e0] sm:$0xff]
    %v2925 = vld [vmem:[%s150 + $0x2e8] sm:$0xff]
    %v2926 = vld [vmem:[%s150 + $0x2f0] sm:$0xff]
    %v2927 = vld [vmem:[%s150 + $0x2f8] sm:$0xff]
    %v2928 = vld [vmem:[%s150 + $0x300] sm:$0xff]
    %v2929 = vld [vmem:[%s150 + $0x308] sm:$0xff]
    %v2930 = vld [vmem:[%s150 + $0x310] sm:$0xff]
    %v2931 = vld [vmem:[%s150 + $0x318] sm:$0xff]
    %v2932 = vld [vmem:[%s150 + $0x320] sm:$0xff]
    %v2933 = vld [vmem:[%s150 + $0x328] sm:$0xff]
    %v2934 = vld [vmem:[%s150 + $0x330] sm:$0xff]
    %v2935 = vld [vmem:[%s150 + $0x338] sm:$0xff]
    %v2936 = vld [vmem:[%s150 + $0x340] sm:$0xff]
    %v2937 = vld [vmem:[%s150 + $0x348] sm:$0xff]
    %v2938 = vld [vmem:[%s150 + $0x350] sm:$0xff]
    %v2939 = vld [vmem:[%s150 + $0x358] sm:$0xff]
    %v2940 = vld [vmem:[%s150 + $0x360] sm:$0xff]
    %v2941 = vld [vmem:[%s150 + $0x368] sm:$0xff]
    %v2942 = vld [vmem:[%s150 + $0x370] sm:$0xff]
    %v2943 = vld [vmem:[%s150 + $0x378] sm:$0xff]
    %v2944 = vld [vmem:[%s150 + $0x380] sm:$0xff]
    %v2945 = vld [vmem:[%s150 + $0x388] sm:$0xff]
    %v2946 = vld [vmem:[%s150 + $0x390] sm:$0xff]
    %v2947 = vld [vmem:[%s150 + $0x398] sm:$0xff]
    %v2948 = vld [vmem:[%s150 + $0x3a0] sm:$0xff]
    %v2949 = vld [vmem:[%s150 + $0x3a8] sm:$0xff]
    %v2950 = vld [vmem:[%s150 + $0x3b0] sm:$0xff]
    %v2951 = vld [vmem:[%s150 + $0x3b8] sm:$0xff]
    %v2952 = vld [vmem:[%s150 + $0x3c0] sm:$0xff]
    %v2953 = vld [vmem:[%s150 + $0x3c8] sm:$0xff]
    %v2954 = vld [vmem:[%s150 + $0x3d0] sm:$0xff]
    %v2955 = vld [vmem:[%s150 + $0x3d8] sm:$0xff]
    %v2956 = vld [vmem:[%s150 + $0x3e0] sm:$0xff]
    %v2957 = vld [vmem:[%s150 + $0x3e8] sm:$0xff]
    %v2958 = vld [vmem:[%s150 + $0x3f0] sm:$0xff]
    %v2959 = vld [vmem:[%s150 + $0x3f8] sm:$0xff]
    %v2960 = vld [vmem:[%s150 + $0x400] sm:$0xff]
    %v2961 = vld [vmem:[%s150 + $0x408] sm:$0xff]
    %v2962 = vld [vmem:[%s150 + $0x410] sm:$0xff]
    %v2963 = vld [vmem:[%s150 + $0x418] sm:$0xff]
    %v2964 = vld [vmem:[%s150 + $0x420] sm:$0xff]
    %v2965 = vld [vmem:[%s150 + $0x428] sm:$0xff]
    %v2966 = vld [vmem:[%s150 + $0x430] sm:$0xff]
    %v2967 = vld [vmem:[%s150 + $0x438] sm:$0xff]
    %v2968 = vld [vmem:[%s150 + $0x440] sm:$0xff]
    %v2969 = vld [vmem:[%s150 + $0x448] sm:$0xff]
    %v2970 = vld [vmem:[%s150 + $0x450] sm:$0xff]
    %v2971 = vld [vmem:[%s150 + $0x458] sm:$0xff]
    %v2972 = vld [vmem:[%s150 + $0x460] sm:$0xff]
    %v2973 = vld [vmem:[%s150 + $0x468] sm:$0xff]
    %v2974 = vld [vmem:[%s150 + $0x470] sm:$0xff]
    %v2975 = vld [vmem:[%s150 + $0x478] sm:$0xff]
    %v2976 = vld [vmem:[%s150 + $0x480] sm:$0xff]
    %v2977 = vld [vmem:[%s150 + $0x488] sm:$0xff]
    %v2978 = vld [vmem:[%s150 + $0x490] sm:$0xff]
    %v2979 = vld [vmem:[%s150 + $0x498] sm:$0xff]
    %v2980 = vld [vmem:[%s150 + $0x4a0] sm:$0xff]
    %v2981 = vld [vmem:[%s150 + $0x4a8] sm:$0xff]
    %v2982 = vld [vmem:[%s150 + $0x4b0] sm:$0xff]
    %v2983 = vld [vmem:[%s150 + $0x4b8] sm:$0xff]
    %v2984 = vld [vmem:[%s150 + $0x4c0] sm:$0xff]
    %v2985 = vld [vmem:[%s150 + $0x4c8] sm:$0xff]
    %v2986 = vld [vmem:[%s150 + $0x4d0] sm:$0xff]
    %v2987 = vld [vmem:[%s150 + $0x4d8] sm:$0xff]
    %v2988 = vld [vmem:[%s150 + $0x4e0] sm:$0xff]
    %v2989 = vld [vmem:[%s150 + $0x4e8] sm:$0xff]
    %v2990 = vld [vmem:[%s150 + $0x4f0] sm:$0xff]
    %v2991 = vld [vmem:[%s150 + $0x4f8] sm:$0xff]
    %v2992 = vld [vmem:[%s150 + $0x500] sm:$0xff]
    %v2993 = vld [vmem:[%s150 + $0x508] sm:$0xff]
    %v2994 = vld [vmem:[%s150 + $0x510] sm:$0xff]
    %v2995 = vld [vmem:[%s150 + $0x518] sm:$0xff]
    %v2996 = vld [vmem:[%s150 + $0x520] sm:$0xff]
    %v2997 = vld [vmem:[%s150 + $0x528] sm:$0xff]
    %v2998 = vld [vmem:[%s150 + $0x530] sm:$0xff]
    %v2999 = vld [vmem:[%s150 + $0x538] sm:$0xff]
    %v3000 = vld [vmem:[%s150 + $0x540] sm:$0xff]
    %v3001 = vld [vmem:[%s150 + $0x548] sm:$0xff]
    %v3002 = vld [vmem:[%s150 + $0x550] sm:$0xff]
    %v3003 = vld [vmem:[%s150 + $0x558] sm:$0xff]
    %v3004 = vld [vmem:[%s150 + $0x560] sm:$0xff]
    %v3005 = vld [vmem:[%s150 + $0x568] sm:$0xff]
    %v3006 = vld [vmem:[%s150 + $0x570] sm:$0xff]
    %v3007 = vld [vmem:[%s150 + $0x578] sm:$0xff]
    %v3008 = vld [vmem:[%s150 + $0x580] sm:$0xff]
    %v3009 = vld [vmem:[%s150 + $0x588] sm:$0xff]
    %v3010 = vld [vmem:[%s150 + $0x590] sm:$0xff]
    %v3011 = vld [vmem:[%s150 + $0x598] sm:$0xff]
    %v3012 = vld [vmem:[%s150 + $0x5a0] sm:$0xff]
    %v3013 = vld [vmem:[%s150 + $0x5a8] sm:$0xff]
    %v3014 = vld [vmem:[%s150 + $0x5b0] sm:$0xff]
    %v3015 = vld [vmem:[%s150 + $0x5b8] sm:$0xff]
    %v3016 = vld [vmem:[%s150 + $0x5c0] sm:$0xff]
    %v3017 = vld [vmem:[%s150 + $0x5c8] sm:$0xff]
    %v3018 = vld [vmem:[%s150 + $0x5d0] sm:$0xff]
    %v3019 = vld [vmem:[%s150 + $0x5d8] sm:$0xff]
    %v3020 = vld [vmem:[%s150 + $0x5e0] sm:$0xff]
    %v3021 = vld [vmem:[%s150 + $0x5e8] sm:$0xff]
    %v3022 = vld [vmem:[%s150 + $0x5f0] sm:$0xff]
    %v3023 = vld [vmem:[%s150 + $0x5f8] sm:$0xff]
    %v3024 = vld [vmem:[%s150 + $0x600] sm:$0xff]
    %v3025 = vld [vmem:[%s150 + $0x608] sm:$0xff]
    %v3026 = vld [vmem:[%s150 + $0x610] sm:$0xff]
    %v3027 = vld [vmem:[%s150 + $0x618] sm:$0xff]
    %v3028 = vld [vmem:[%s150 + $0x620] sm:$0xff]
    %v3029 = vld [vmem:[%s150 + $0x628] sm:$0xff]
    %v3030 = vld [vmem:[%s150 + $0x630] sm:$0xff]
    %v3031 = vld [vmem:[%s150 + $0x638] sm:$0xff]
    %v3032 = vld [vmem:[%s150 + $0x640] sm:$0xff]
    %v3033 = vld [vmem:[%s150 + $0x648] sm:$0xff]
    %v3034 = vld [vmem:[%s150 + $0x650] sm:$0xff]
    %v3035 = vld [vmem:[%s150 + $0x658] sm:$0xff]
    %v3036 = vld [vmem:[%s150 + $0x660] sm:$0xff]
    %v3037 = vld [vmem:[%s150 + $0x668] sm:$0xff]
    %v3038 = vld [vmem:[%s150 + $0x670] sm:$0xff]
    %v3039 = vld [vmem:[%s150 + $0x678] sm:$0xff]
    %v3040 = vld [vmem:[%s150 + $0x680] sm:$0xff]
    %v3041 = vld [vmem:[%s150 + $0x688] sm:$0xff]
    %v3042 = vld [vmem:[%s150 + $0x690] sm:$0xff]
    %v3043 = vld [vmem:[%s150 + $0x698] sm:$0xff]
    %v3044 = vld [vmem:[%s150 + $0x6a0] sm:$0xff]
    %v3045 = vld [vmem:[%s150 + $0x6a8] sm:$0xff]
    %v3046 = vld [vmem:[%s150 + $0x6b0] sm:$0xff]
    %v3047 = vld [vmem:[%s150 + $0x6b8] sm:$0xff]
    %v3048 = vld [vmem:[%s150 + $0x6c0] sm:$0xff]
    %v3049 = vld [vmem:[%s150 + $0x6c8] sm:$0xff]
    %v3050 = vld [vmem:[%s150 + $0x6d0] sm:$0xff]
    %v3051 = vld [vmem:[%s150 + $0x6d8] sm:$0xff]
    %v3052 = vld [vmem:[%s150 + $0x6e0] sm:$0xff]
    %v3053 = vld [vmem:[%s150 + $0x6e8] sm:$0xff]
    %v3054 = vld [vmem:[%s150 + $0x6f0] sm:$0xff]
    %v3055 = vld [vmem:[%s150 + $0x6f8] sm:$0xff]
    %v3056 = vld [vmem:[%s150 + $0x700] sm:$0xff]
    %v3057 = vld [vmem:[%s150 + $0x708] sm:$0xff]
    %v3058 = vld [vmem:[%s150 + $0x710] sm:$0xff]
    %v3059 = vld [vmem:[%s150 + $0x718] sm:$0xff]
    %v3060 = vld [vmem:[%s150 + $0x720] sm:$0xff]
    %v3061 = vld [vmem:[%s150 + $0x728] sm:$0xff]
    %v3062 = vld [vmem:[%s150 + $0x730] sm:$0xff]
    %v3063 = vld [vmem:[%s150 + $0x738] sm:$0xff]
    %v3064 = vld [vmem:[%s150 + $0x740] sm:$0xff]
    %v3065 = vld [vmem:[%s150 + $0x748] sm:$0xff]
    %v3066 = vld [vmem:[%s150 + $0x750] sm:$0xff]
    %v3067 = vld [vmem:[%s150 + $0x758] sm:$0xff]
    %v3068 = vld [vmem:[%s150 + $0x760] sm:$0xff]
    %v3069 = vld [vmem:[%s150 + $0x768] sm:$0xff]
    %v3070 = vld [vmem:[%s150 + $0x770] sm:$0xff]
    %v3071 = vld [vmem:[%s150 + $0x778] sm:$0xff]
    %v3072 = vld [vmem:[%s150 + $0x780] sm:$0xff]
    %v3073 = vld [vmem:[%s150 + $0x788] sm:$0xff]
    %v3074 = vld [vmem:[%s150 + $0x790] sm:$0xff]
    %v3075 = vld [vmem:[%s150 + $0x798] sm:$0xff]
    %v3076 = vld [vmem:[%s150 + $0x7a0] sm:$0xff]
    %v3077 = vld [vmem:[%s150 + $0x7a8] sm:$0xff]
    %v3078 = vld [vmem:[%s150 + $0x7b0] sm:$0xff]
    %v3079 = vld [vmem:[%s150 + $0x7b8] sm:$0xff]
    %v3080 = vld [vmem:[%s150 + $0x7c0] sm:$0xff]
    %v3081 = vld [vmem:[%s150 + $0x7c8] sm:$0xff]
    %v3082 = vld [vmem:[%s150 + $0x7d0] sm:$0xff]
    %v3083 = vld [vmem:[%s150 + $0x7d8] sm:$0xff]
    %v3084 = vld [vmem:[%s150 + $0x7e0] sm:$0xff]
    %v3085 = vld [vmem:[%s150 + $0x7e8] sm:$0xff]
    %v3086 = vld [vmem:[%s150 + $0x7f0] sm:$0xff]
    %v3087 = vld [vmem:[%s150 + $0x7f8] sm:$0xff]
    %v3088 = vld [vmem:[#allocation12] sm:$0xff]
    %v3090 = vlaneseq
    %v3091 = vshrl.u32 %v3090, 7
    %v3092 = vsub.s32 0, %v3091
    %v3093 = vrot.slane %v3088, %v3092
    %v3094 = vlaneseq
    %v3095 = vshrl.u32 %v3094, 7
    %v3096 = vsub.s32 1, %v3095
    %v3097 = vrot.slane %v3088, %v3096
    %v3098 = vlaneseq
    %v3099 = vshrl.u32 %v3098, 7
    %v3100 = vsub.s32 2, %v3099
    %v3101 = vrot.slane %v3088, %v3100
    %v3102 = vlaneseq
    %v3103 = vshrl.u32 %v3102, 7
    %v3104 = vsub.s32 3, %v3103
    %v3105 = vrot.slane %v3088, %v3104
    %v3106 = vlaneseq
    %v3107 = vshrl.u32 %v3106, 7
    %v3108 = vsub.s32 4, %v3107
    %v3109 = vrot.slane %v3088, %v3108
    %v3110 = vlaneseq
    %v3111 = vshrl.u32 %v3110, 7
    %v3112 = vsub.s32 5, %v3111
    %v3113 = vrot.slane %v3088, %v3112
    %v3114 = vlaneseq
    %v3115 = vshrl.u32 %v3114, 7
    %v3116 = vsub.s32 6, %v3115
    %v3117 = vrot.slane %v3088, %v3116
    %v3118 = vlaneseq
    %v3119 = vshrl.u32 %v3118, 7
    %v3120 = vsub.s32 7, %v3119
    %v3121 = vrot.slane %v3088, %v3120
    %3130 = vmatprep.subr.bf16.mxu0 %v2833
    %3131 = vmatpush1.bf16.msra.mxu0 %v2832
    %3132 = vmatprep.subr.bf16.mxu0 %v2841
    %3133 = vmatpush1.bf16.msra.mxu0 %v2840
    %3134 = vmatprep.subr.bf16.mxu0 %v2849
    %3135 = vmatpush1.bf16.msra.mxu0 %v2848
    %3136 = vmatprep.subr.bf16.mxu0 %v2857
    %3137 = vmatpush1.bf16.msra.mxu0 %v2856
    %3138 = vmatprep.subr.bf16.mxu0 %v2865
    %3139 = vmatpush1.bf16.msra.mxu0 %v2864
    %3140 = vmatprep.subr.bf16.mxu0 %v2873
    %3141 = vmatpush1.bf16.msra.mxu0 %v2872
    %3142 = vmatprep.subr.bf16.mxu0 %v2881
    %3143 = vmatpush1.bf16.msra.mxu0 %v2880
    %3144 = vmatprep.subr.bf16.mxu0 %v2889
    %3145 = vmatpush1.bf16.msra.mxu0 %v2888
    %3146 = vmatprep.subr.bf16.mxu0 %v2897
    %3147 = vmatpush1.bf16.msra.mxu0 %v2896
    %3148 = vmatprep.subr.bf16.mxu0 %v2905
    %3149 = vmatpush1.bf16.msra.mxu0 %v2904
    %3150 = vmatprep.subr.bf16.mxu0 %v2913
    %3151 = vmatpush1.bf16.msra.mxu0 %v2912
    %3152 = vmatprep.subr.bf16.mxu0 %v2921
    %3153 = vmatpush1.bf16.msra.mxu0 %v2920
    %3154 = vmatprep.subr.bf16.mxu0 %v2929
    %3155 = vmatpush1.bf16.msra.mxu0 %v2928
    %3156 = vmatprep.subr.bf16.mxu0 %v2937
    %3157 = vmatpush1.bf16.msra.mxu0 %v2936
    %3158 = vmatprep.subr.bf16.mxu0 %v2945
    %3159 = vmatpush1.bf16.msra.mxu0 %v2944
    %3160 = vmatprep.subr.bf16.mxu0 %v2953
    %3161 = vmatpush1.bf16.msra.mxu0 %v2952
    %3162 = vmatprep.mubr.bf16.mxu0 %v2793
    %3163 = vmatmul.mubr.bf16.gmra.mrb[0].mxu0 %v2792
    %v3164 = vpop.f32.mrb[0].mxu0
    %v3165 = vadd.f32 %v3093, %v3164
    %v3166 = vpop.f32.mrb[0].mxu0
    %v3167 = vadd.f32 %v3097, %v3166
    %v3168 = vpop.f32.mrb[0].mxu0
    %v3169 = vpop.f32.mrb[0].mxu0
    %3170 = vdwg.mxu0
    %3171 = vmatprep.subr.bf16.mxu0 %v2961
    %3172 = vmatpush1.bf16.msra.mxu0 %v2960
    %3173 = vmatprep.subr.bf16.mxu0 %v2969
    %3174 = vmatpush1.bf16.msra.mxu0 %v2968
    %3175 = vmatprep.subr.bf16.mxu0 %v2977
    %3176 = vmatpush1.bf16.msra.mxu0 %v2976
    %3177 = vmatprep.subr.bf16.mxu0 %v2985
    %3178 = vmatpush1.bf16.msra.mxu0 %v2984
    %3179 = vmatprep.subr.bf16.mxu0 %v2993
    %3180 = vmatpush1.bf16.msra.mxu0 %v2992
    %3181 = vmatprep.subr.bf16.mxu0 %v3001
    %3182 = vmatpush1.bf16.msra.mxu0 %v3000
    %3183 = vmatprep.subr.bf16.mxu0 %v3009
    %3184 = vmatpush1.bf16.msra.mxu0 %v3008
    %3185 = vmatprep.subr.bf16.mxu0 %v3017
    %3186 = vmatpush1.bf16.msra.mxu0 %v3016
    %3187 = vmatprep.subr.bf16.mxu0 %v3025
    %3188 = vmatpush1.bf16.msra.mxu0 %v3024
    %3189 = vmatprep.subr.bf16.mxu0 %v3033
    %3190 = vmatpush1.bf16.msra.mxu0 %v3032
    %3191 = vmatprep.subr.bf16.mxu0 %v3041
    %3192 = vmatpush1.bf16.msra.mxu0 %v3040
    %3193 = vmatprep.subr.bf16.mxu0 %v3049
    %3194 = vmatpush1.bf16.msra.mxu0 %v3048
    %3195 = vmatprep.subr.bf16.mxu0 %v3057
    %3196 = vmatpush1.bf16.msra.mxu0 %v3056
    %3197 = vmatprep.subr.bf16.mxu0 %v3065
    %3198 = vmatpush1.bf16.msra.mxu0 %v3064
    %3199 = vmatprep.subr.bf16.mxu0 %v3073
    %3200 = vmatpush1.bf16.msra.mxu0 %v3072
    %3201 = vmatprep.subr.bf16.mxu0 %v3081
    %3202 = vmatpush1.bf16.msra.mxu0 %v3080
    %3203 = vmatprep.mubr.bf16.mxu0 %v2795
    %3204 = vmatmul.mubr.bf16.gmra.mrb[0].mxu0 %v2794
    %v3205 = vpop.f32.mrb[0].mxu0
    %v3206 = vadd.f32 %v3165, %v3205
    %v3207 = vpop.f32.mrb[0].mxu0
    %v3208 = vadd.f32 %v3167, %v3207
    %v3209 = vpop.f32.mrb[0].mxu0
    %v3210 = vpop.f32.mrb[0].mxu0
    %3211 = vdwg.mxu0
    %3212 = vmatprep.subr.bf16.mxu0 %v2835
    %3213 = vmatpush1.bf16.msra.mxu0 %v2834
    %3214 = vmatprep.subr.bf16.mxu0 %v2843
    %3215 = vmatpush1.bf16.msra.mxu0 %v2842
    %3216 = vmatprep.subr.bf16.mxu0 %v2851
    %3217 = vmatpush1.bf16.msra.mxu0 %v2850
    %3218 = vmatprep.subr.bf16.mxu0 %v2859
    %3219 = vmatpush1.bf16.msra.mxu0 %v2858
    %3220 = vmatprep.subr.bf16.mxu0 %v2867
    %3221 = vmatpush1.bf16.msra.mxu0 %v2866
    %3222 = vmatprep.subr.bf16.mxu0 %v2875
    %3223 = vmatpush1.bf16.msra.mxu0 %v2874
    %3224 = vmatprep.subr.bf16.mxu0 %v2883
    %3225 = vmatpush1.bf16.msra.mxu0 %v2882
    %3226 = vmatprep.subr.bf16.mxu0 %v2891
    %3227 = vmatpush1.bf16.msra.mxu0 %v2890
    %3228 = vmatprep.subr.bf16.mxu0 %v2899
    %3229 = vmatpush1.bf16.msra.mxu0 %v2898
    %3230 = vmatprep.subr.bf16.mxu0 %v2907
    %3231 = vmatpush1.bf16.msra.mxu0 %v2906
    %3232 = vmatprep.subr.bf16.mxu0 %v2915
    %3233 = vmatpush1.bf16.msra.mxu0 %v2914
    %3234 = vmatprep.subr.bf16.mxu0 %v2923
    %3235 = vmatpush1.bf16.msra.mxu0 %v2922
    %3236 = vmatprep.subr.bf16.mxu0 %v2931
    %3237 = vmatpush1.bf16.msra.mxu0 %v2930
    %3238 = vmatprep.subr.bf16.mxu0 %v2939
    %3239 = vmatpush1.bf16.msra.mxu0 %v2938
    %3240 = vmatprep.subr.bf16.mxu0 %v2947
    %3241 = vmatpush1.bf16.msra.mxu0 %v2946
    %3242 = vmatprep.subr.bf16.mxu0 %v2955
    %3243 = vmatpush1.bf16.msra.mxu0 %v2954
    %3244 = vmatprep.mubr.bf16.mxu0 %v2793
    %3245 = vmatmul.mubr.bf16.gmra.mrb[0].mxu0 %v2792
    %v3246 = vpop.f32.mrb[0].mxu0
    %v3247 = vadd.f32 %v3101, %v3246
    %v3248 = vpop.f32.mrb[0].mxu0
    %v3249 = vadd.f32 %v3105, %v3248
    %v3250 = vpop.f32.mrb[0].mxu0
    %v3251 = vpop.f32.mrb[0].mxu0
    %3252 = vdwg.mxu0
    %3253 = vmatprep.subr.bf16.mxu0 %v2963
    %3254 = vmatpush1.bf16.msra.mxu0 %v2962
    %3255 = vmatprep.subr.bf16.mxu0 %v2971
    %3256 = vmatpush1.bf16.msra.mxu0 %v2970
    %3257 = vmatprep.subr.bf16.mxu0 %v2979
    %3258 = vmatpush1.bf16.msra.mxu0 %v2978
    %3259 = vmatprep.subr.bf16.mxu0 %v2987
    %3260 = vmatpush1.bf16.msra.mxu0 %v2986
    %3261 = vmatprep.subr.bf16.mxu0 %v2995
    %3262 = vmatpush1.bf16.msra.mxu0 %v2994
    %3263 = vmatprep.subr.bf16.mxu0 %v3003
    %3264 = vmatpush1.bf16.msra.mxu0 %v3002
    %3265 = vmatprep.subr.bf16.mxu0 %v3011
    %3266 = vmatpush1.bf16.msra.mxu0 %v3010
    %3267 = vmatprep.subr.bf16.mxu0 %v3019
    %3268 = vmatpush1.bf16.msra.mxu0 %v3018
    %3269 = vmatprep.subr.bf16.mxu0 %v3027
    %3270 = vmatpush1.bf16.msra.mxu0 %v3026
    %3271 = vmatprep.subr.bf16.mxu0 %v3035
    %3272 = vmatpush1.bf16.msra.mxu0 %v3034
    %3273 = vmatprep.subr.bf16.mxu0 %v3043
    %3274 = vmatpush1.bf16.msra.mxu0 %v3042
    %3275 = vmatprep.subr.bf16.mxu0 %v3051
    %3276 = vmatpush1.bf16.msra.mxu0 %v3050
    %3277 = vmatprep.subr.bf16.mxu0 %v3059
    %3278 = vmatpush1.bf16.msra.mxu0 %v3058
    %3279 = vmatprep.subr.bf16.mxu0 %v3067
    %3280 = vmatpush1.bf16.msra.mxu0 %v3066
    %3281 = vmatprep.subr.bf16.mxu0 %v3075
    %3282 = vmatpush1.bf16.msra.mxu0 %v3074
    %3283 = vmatprep.subr.bf16.mxu0 %v3083
    %3284 = vmatpush1.bf16.msra.mxu0 %v3082
    %3285 = vmatprep.mubr.bf16.mxu0 %v2795
    %3286 = vmatmul.mubr.bf16.gmra.mrb[0].mxu0 %v2794
    %v3287 = vpop.f32.mrb[0].mxu0
    %v3288 = vadd.f32 %v3247, %v3287
    %v3289 = vpop.f32.mrb[0].mxu0
    %v3290 = vadd.f32 %v3249, %v3289
    %v3291 = vpop.f32.mrb[0].mxu0
    %v3292 = vpop.f32.mrb[0].mxu0
    %3293 = vdwg.mxu0
    %3294 = vmatprep.subr.bf16.mxu0 %v2837
    %3295 = vmatpush1.bf16.msra.mxu0 %v2836
    %3296 = vmatprep.subr.bf16.mxu0 %v2845
    %3297 = vmatpush1.bf16.msra.mxu0 %v2844
    %3298 = vmatprep.subr.bf16.mxu0 %v2853
    %3299 = vmatpush1.bf16.msra.mxu0 %v2852
    %3300 = vmatprep.subr.bf16.mxu0 %v2861
    %3301 = vmatpush1.bf16.msra.mxu0 %v2860
    %3302 = vmatprep.subr.bf16.mxu0 %v2869
    %3303 = vmatpush1.bf16.msra.mxu0 %v2868
    %3304 = vmatprep.subr.bf16.mxu0 %v2877
    %3305 = vmatpush1.bf16.msra.mxu0 %v2876
    %3306 = vmatprep.subr.bf16.mxu0 %v2885
    %3307 = vmatpush1.bf16.msra.mxu0 %v2884
    %3308 = vmatprep.subr.bf16.mxu0 %v2893
    %3309 = vmatpush1.bf16.msra.mxu0 %v2892
    %3310 = vmatprep.subr.bf16.mxu0 %v2901
    %3311 = vmatpush1.bf16.msra.mxu0 %v2900
    %3312 = vmatprep.subr.bf16.mxu0 %v2909
    %3313 = vmatpush1.bf16.msra.mxu0 %v2908
    %3314 = vmatprep.subr.bf16.mxu0 %v2917
    %3315 = vmatpush1.bf16.msra.mxu0 %v2916
    %3316 = vmatprep.subr.bf16.mxu0 %v2925
    %3317 = vmatpush1.bf16.msra.mxu0 %v2924
    %3318 = vmatprep.subr.bf16.mxu0 %v2933
    %3319 = vmatpush1.bf16.msra.mxu0 %v2932
    %3320 = vmatprep.subr.bf16.mxu0 %v2941
    %3321 = vmatpush1.bf16.msra.mxu0 %v2940
    %3322 = vmatprep.subr.bf16.mxu0 %v2949
    %3323 = vmatpush1.bf16.msra.mxu0 %v2948
    %3324 = vmatprep.subr.bf16.mxu0 %v2957
    %3325 = vmatpush1.bf16.msra.mxu0 %v2956
    %3326 = vmatprep.mubr.bf16.mxu0 %v2793
    %3327 = vmatmul.mubr.bf16.gmra.mrb[0].mxu0 %v2792
    %v3328 = vpop.f32.mrb[0].mxu0
    %v3329 = vadd.f32 %v3109, %v3328
    %v3330 = vpop.f32.mrb[0].mxu0
    %v3331 = vadd.f32 %v3113, %v3330
    %v3332 = vpop.f32.mrb[0].mxu0
    %v3333 = vpop.f32.mrb[0].mxu0
    %3334 = vdwg.mxu0
    %3335 = vmatprep.subr.bf16.mxu0 %v2965
    %3336 = vmatpush1.bf16.msra.mxu0 %v2964
    %3337 = vmatprep.subr.bf16.mxu0 %v2973
    %3338 = vmatpush1.bf16.msra.mxu0 %v2972
    %3339 = vmatprep.subr.bf16.mxu0 %v2981
    %3340 = vmatpush1.bf16.msra.mxu0 %v2980
    %3341 = vmatprep.subr.bf16.mxu0 %v2989
    %3342 = vmatpush1.bf16.msra.mxu0 %v2988
    %3343 = vmatprep.subr.bf16.mxu0 %v2997
    %3344 = vmatpush1.bf16.msra.mxu0 %v2996
    %3345 = vmatprep.subr.bf16.mxu0 %v3005
    %3346 = vmatpush1.bf16.msra.mxu0 %v3004
    %3347 = vmatprep.subr.bf16.mxu0 %v3013
    %3348 = vmatpush1.bf16.msra.mxu0 %v3012
    %3349 = vmatprep.subr.bf16.mxu0 %v3021
    %3350 = vmatpush1.bf16.msra.mxu0 %v3020
    %3351 = vmatprep.subr.bf16.mxu0 %v3029
    %3352 = vmatpush1.bf16.msra.mxu0 %v3028
    %3353 = vmatprep.subr.bf16.mxu0 %v3037
    %3354 = vmatpush1.bf16.msra.mxu0 %v3036
    %3355 = vmatprep.subr.bf16.mxu0 %v3045
    %3356 = vmatpush1.bf16.msra.mxu0 %v3044
    %3357 = vmatprep.subr.bf16.mxu0 %v3053
    %3358 = vmatpush1.bf16.msra.mxu0 %v3052
    %3359 = vmatprep.subr.bf16.mxu0 %v3061
    %3360 = vmatpush1.bf16.msra.mxu0 %v3060
    %3361 = vmatprep.subr.bf16.mxu0 %v3069
    %3362 = vmatpush1.bf16.msra.mxu0 %v3068
    %3363 = vmatprep.subr.bf16.mxu0 %v3077
    %3364 = vmatpush1.bf16.msra.mxu0 %v3076
    %3365 = vmatprep.subr.bf16.mxu0 %v3085
    %3366 = vmatpush1.bf16.msra.mxu0 %v3084
    %3367 = vmatprep.mubr.bf16.mxu0 %v2795
    %3368 = vmatmul.mubr.bf16.gmra.mrb[0].mxu0 %v2794
    %v3369 = vpop.f32.mrb[0].mxu0
    %v3370 = vadd.f32 %v3329, %v3369
    %v3371 = vpop.f32.mrb[0].mxu0
    %v3372 = vadd.f32 %v3331, %v3371
    %v3373 = vpop.f32.mrb[0].mxu0
    %v3374 = vpop.f32.mrb[0].mxu0
    %3375 = vdwg.mxu0
    %3376 = vmatprep.subr.bf16.mxu0 %v2839
    %3377 = vmatpush1.bf16.msra.mxu0 %v2838
    %3378 = vmatprep.subr.bf16.mxu0 %v2847
    %3379 = vmatpush1.bf16.msra.mxu0 %v2846
    %3380 = vmatprep.subr.bf16.mxu0 %v2855
    %3381 = vmatpush1.bf16.msra.mxu0 %v2854
    %3382 = vmatprep.subr.bf16.mxu0 %v2863
    %3383 = vmatpush1.bf16.msra.mxu0 %v2862
    %3384 = vmatprep.subr.bf16.mxu0 %v2871
    %3385 = vmatpush1.bf16.msra.mxu0 %v2870
    %3386 = vmatprep.subr.bf16.mxu0 %v2879
    %3387 = vmatpush1.bf16.msra.mxu0 %v2878
    %3388 = vmatprep.subr.bf16.mxu0 %v2887
    %3389 = vmatpush1.bf16.msra.mxu0 %v2886
    %3390 = vmatprep.subr.bf16.mxu0 %v2895
    %3391 = vmatpush1.bf16.msra.mxu0 %v2894
    %3392 = vmatprep.subr.bf16.mxu0 %v2903
    %3393 = vmatpush1.bf16.msra.mxu0 %v2902
    %3394 = vmatprep.subr.bf16.mxu0 %v2911
    %3395 = vmatpush1.bf16.msra.mxu0 %v2910
    %3396 = vmatprep.subr.bf16.mxu0 %v2919
    %3397 = vmatpush1.bf16.msra.mxu0 %v2918
    %3398 = vmatprep.subr.bf16.mxu0 %v2927
    %3399 = vmatpush1.bf16.msra.mxu0 %v2926
    %3400 = vmatprep.subr.bf16.mxu0 %v2935
    %3401 = vmatpush1.bf16.msra.mxu0 %v2934
    %3402 = vmatprep.subr.bf16.mxu0 %v2943
    %3403 = vmatpush1.bf16.msra.mxu0 %v2942
    %3404 = vmatprep.subr.bf16.mxu0 %v2951
    %3405 = vmatpush1.bf16.msra.mxu0 %v2950
    %3406 = vmatprep.subr.bf16.mxu0 %v2959
    %3407 = vmatpush1.bf16.msra.mxu0 %v2958
    %3408 = vmatprep.mubr.bf16.mxu0 %v2793
    %3409 = vmatmul.mubr.bf16.gmra.mrb[0].mxu0 %v2792
    %v3410 = vpop.f32.mrb[0].mxu0
    %v3411 = vadd.f32 %v3117, %v3410
    %v3412 = vpop.f32.mrb[0].mxu0
    %v3413 = vadd.f32 %v3121, %v3412
    %v3414 = vpop.f32.mrb[0].mxu0
    %v3415 = vpop.f32.mrb[0].mxu0
    %3416 = vdwg.mxu0
    %3417 = vmatprep.subr.bf16.mxu0 %v2967
    %3418 = vmatpush1.bf16.msra.mxu0 %v2966
    %3419 = vmatprep.subr.bf16.mxu0 %v2975
    %3420 = vmatpush1.bf16.msra.mxu0 %v2974
    %3421 = vmatprep.subr.bf16.mxu0 %v2983
    %3422 = vmatpush1.bf16.msra.mxu0 %v2982
    %3423 = vmatprep.subr.bf16.mxu0 %v2991
    %3424 = vmatpush1.bf16.msra.mxu0 %v2990
    %3425 = vmatprep.subr.bf16.mxu0 %v2999
    %3426 = vmatpush1.bf16.msra.mxu0 %v2998
    %3427 = vmatprep.subr.bf16.mxu0 %v3007
    %3428 = vmatpush1.bf16.msra.mxu0 %v3006
    %3429 = vmatprep.subr.bf16.mxu0 %v3015
    %3430 = vmatpush1.bf16.msra.mxu0 %v3014
    %3431 = vmatprep.subr.bf16.mxu0 %v3023
    %3432 = vmatpush1.bf16.msra.mxu0 %v3022
    %3433 = vmatprep.subr.bf16.mxu0 %v3031
    %3434 = vmatpush1.bf16.msra.mxu0 %v3030
    %3435 = vmatprep.subr.bf16.mxu0 %v3039
    %3436 = vmatpush1.bf16.msra.mxu0 %v3038
    %3437 = vmatprep.subr.bf16.mxu0 %v3047
    %3438 = vmatpush1.bf16.msra.mxu0 %v3046
    %3439 = vmatprep.subr.bf16.mxu0 %v3055
    %3440 = vmatpush1.bf16.msra.mxu0 %v3054
    %3441 = vmatprep.subr.bf16.mxu0 %v3063
    %3442 = vmatpush1.bf16.msra.mxu0 %v3062
    %3443 = vmatprep.subr.bf16.mxu0 %v3071
    %3444 = vmatpush1.bf16.msra.mxu0 %v3070
    %3445 = vmatprep.subr.bf16.mxu0 %v3079
    %3446 = vmatpush1.bf16.msra.mxu0 %v3078
    %3447 = vmatprep.subr.bf16.mxu0 %v3087
    %3448 = vmatpush1.bf16.msra.mxu0 %v3086
    %3449 = vmatprep.mubr.bf16.mxu0 %v2795
    %3450 = vmatmul.mubr.bf16.gmra.mrb[0].mxu0 %v2794
    %v3451 = vpop.f32.mrb[0].mxu0
    %v3452 = vadd.f32 %v3411, %v3451
    %v3453 = vpop.f32.mrb[0].mxu0
    %v3454 = vadd.f32 %v3413, %v3453
    %v3455 = vpop.f32.mrb[0].mxu0
    %v3456 = vpop.f32.mrb[0].mxu0
    %3457 = vdwg.mxu0
    %v3458 = vmax.f32 %v3206, 0.0
    %v3459 = vmax.f32 %v3208, 0.0
    %v3460 = vmax.f32 %v3288, 0.0
    %v3461 = vmax.f32 %v3290, 0.0
    %v3462 = vmax.f32 %v3370, 0.0
    %v3463 = vmax.f32 %v3372, 0.0
    %v3464 = vmax.f32 %v3452, 0.0
    %v3465 = vmax.f32 %v3454, 0.0
    %v3466 = vpack.c.bf16 %v3458, %v3458
    %v3467 = vpack.c.bf16 %v3459, %v3459
    %v3468 = vpack.c.bf16 %v3460, %v3460
    %v3469 = vpack.c.bf16 %v3461, %v3461
    %v3470 = vpack.c.bf16 %v3462, %v3462
    %v3471 = vpack.c.bf16 %v3463, %v3463
    %v3472 = vpack.c.bf16 %v3464, %v3464
    %v3473 = vpack.c.bf16 %v3465, %v3465
    %s3475 = sshll.u32 1, 14
    %s3476 = sxor.u32 4294967295, %s3475
    %s3478 = sadd.s32 2, %s118
    %s3480 = sshll.u32 7, 26
    %s3481 = sxor.u32 4294967295, %s3480
    %s3482 = sand.u32 0, %s3481
    %s3483 = sshll.u32 %s3478, 26
    %s3484 = sor.u32 %s3482, %s3483
    %s3485 = sshll.u32 %s150, 4
    %s3486 = int_to_ptr.vmem [resolvable:$true] %s3485
    %3489 = sst [smem:[#allocation28]] 512
    %s3490 = scalar_lea.smem [#allocation28], 1
    %3491 = sst [smem:[%s3490]] 1024
    %s3492 = scalar_lea.smem [#allocation28], 2
    %3493 = sst [smem:[%s3492]] 4
    %s3494 = scalar_lea.smem [#allocation28], 3
    %3495 = sst [smem:[%s3494]] 64
    %s3496 = scalar_lea.smem [#allocation28], 4
    %3497 = sst [smem:[%s3496]] 128
    %s3498 = scalar_lea.smem [#allocation28], 5
    %3499 = sst [smem:[%s3498]] 2
    %s3500 = scalar_lea.smem [#allocation28], 6
    %3501 = sst [smem:[%s3500]] 256
    %s3502 = scalar_lea.smem [#allocation28], 7
    %3503 = sst [smem:[%s3502]] 64
    %s3504 = scalar_lea.smem [#allocation28], 8
    %3505 = sst [smem:[%s3504]] 4
    %3507 = dma.general %s6, 32768, %s3486, %s151, [#allocation27], [#allocation28], %s3484, 0
    %s3508 = sshll.u32 %s896, 4
    %3509 = dma.done [#allocation3], %s3508
    %v3510 = vld [vmem:[#allocation2] sm:$0xff]
    %v3511 = vld [vmem:[#allocation2 + $0x8] sm:$0xff]
    %v3512 = vld [vmem:[#allocation2 + $0x10] sm:$0xff]
    %v3513 = vld [vmem:[#allocation2 + $0x18] sm:$0xff]
    %v3514 = vld [vmem:[#allocation2 + $0x20] sm:$0xff]
    %v3515 = vld [vmem:[#allocation2 + $0x28] sm:$0xff]
    %v3516 = vld [vmem:[#allocation2 + $0x30] sm:$0xff]
    %v3517 = vld [vmem:[#allocation2 + $0x38] sm:$0xff]
    %v3518 = vld [vmem:[#allocation2 + $0x40] sm:$0xff]
    %v3519 = vld [vmem:[#allocation2 + $0x48] sm:$0xff]
    %v3520 = vld [vmem:[#allocation2 + $0x50] sm:$0xff]
    %v3521 = vld [vmem:[#allocation2 + $0x58] sm:$0xff]
    %v3522 = vld [vmem:[#allocation2 + $0x60] sm:$0xff]
    %v3523 = vld [vmem:[#allocation2 + $0x68] sm:$0xff]
    %v3524 = vld [vmem:[#allocation2 + $0x70] sm:$0xff]
    %v3525 = vld [vmem:[#allocation2 + $0x78] sm:$0xff]
    %v3526 = vld [vmem:[#allocation2 + $0x80] sm:$0xff]
    %v3527 = vld [vmem:[#allocation2 + $0x88] sm:$0xff]
    %v3528 = vld [vmem:[#allocation2 + $0x90] sm:$0xff]
    %v3529 = vld [vmem:[#allocation2 + $0x98] sm:$0xff]
    %v3530 = vld [vmem:[#allocation2 + $0xa0] sm:$0xff]
    %v3531 = vld [vmem:[#allocation2 + $0xa8] sm:$0xff]
    %v3532 = vld [vmem:[#allocation2 + $0xb0] sm:$0xff]
    %v3533 = vld [vmem:[#allocation2 + $0xb8] sm:$0xff]
    %v3534 = vld [vmem:[#allocation2 + $0xc0] sm:$0xff]
    %v3535 = vld [vmem:[#allocation2 + $0xc8] sm:$0xff]
    %v3536 = vld [vmem:[#allocation2 + $0xd0] sm:$0xff]
    %v3537 = vld [vmem:[#allocation2 + $0xd8] sm:$0xff]
    %v3538 = vld [vmem:[#allocation2 + $0xe0] sm:$0xff]
    %v3539 = vld [vmem:[#allocation2 + $0xe8] sm:$0xff]
    %v3540 = vld [vmem:[#allocation2 + $0xf0] sm:$0xff]
    %v3541 = vld [vmem:[#allocation2 + $0xf8] sm:$0xff]
    %v3542 = vld [vmem:[#allocation2 + $0x100] sm:$0xff]
    %v3543 = vld [vmem:[#allocation2 + $0x108] sm:$0xff]
    %v3544 = vld [vmem:[#allocation2 + $0x110] sm:$0xff]
    %v3545 = vld [vmem:[#allocation2 + $0x118] sm:$0xff]
    %v3546 = vld [vmem:[#allocation2 + $0x120] sm:$0xff]
    %v3547 = vld [vmem:[#allocation2 + $0x128] sm:$0xff]
    %v3548 = vld [vmem:[#allocation2 + $0x130] sm:$0xff]
    %v3549 = vld [vmem:[#allocation2 + $0x138] sm:$0xff]
    %v3550 = vld [vmem:[#allocation2 + $0x140] sm:$0xff]
    %v3551 = vld [vmem:[#allocation2 + $0x148] sm:$0xff]
    %v3552 = vld [vmem:[#allocation2 + $0x150] sm:$0xff]
    %v3553 = vld [vmem:[#allocation2 + $0x158] sm:$0xff]
    %v3554 = vld [vmem:[#allocation2 + $0x160] sm:$0xff]
    %v3555 = vld [vmem:[#allocation2 + $0x168] sm:$0xff]
    %v3556 = vld [vmem:[#allocation2 + $0x170] sm:$0xff]
    %v3557 = vld [vmem:[#allocation2 + $0x178] sm:$0xff]
    %v3558 = vld [vmem:[#allocation2 + $0x180] sm:$0xff]
    %v3559 = vld [vmem:[#allocation2 + $0x188] sm:$0xff]
    %v3560 = vld [vmem:[#allocation2 + $0x190] sm:$0xff]
    %v3561 = vld [vmem:[#allocation2 + $0x198] sm:$0xff]
    %v3562 = vld [vmem:[#allocation2 + $0x1a0] sm:$0xff]
    %v3563 = vld [vmem:[#allocation2 + $0x1a8] sm:$0xff]
    %v3564 = vld [vmem:[#allocation2 + $0x1b0] sm:$0xff]
    %v3565 = vld [vmem:[#allocation2 + $0x1b8] sm:$0xff]
    %v3566 = vld [vmem:[#allocation2 + $0x1c0] sm:$0xff]
    %v3567 = vld [vmem:[#allocation2 + $0x1c8] sm:$0xff]
    %v3568 = vld [vmem:[#allocation2 + $0x1d0] sm:$0xff]
    %v3569 = vld [vmem:[#allocation2 + $0x1d8] sm:$0xff]
    %v3570 = vld [vmem:[#allocation2 + $0x1e0] sm:$0xff]
    %v3571 = vld [vmem:[#allocation2 + $0x1e8] sm:$0xff]
    %v3572 = vld [vmem:[#allocation2 + $0x1f0] sm:$0xff]
    %v3573 = vld [vmem:[#allocation2 + $0x1f8] sm:$0xff]
    %v3574 = vld [vmem:[#allocation2 + $0x200] sm:$0xff]
    %v3575 = vld [vmem:[#allocation2 + $0x208] sm:$0xff]
    %v3576 = vld [vmem:[#allocation2 + $0x210] sm:$0xff]
    %v3577 = vld [vmem:[#allocation2 + $0x218] sm:$0xff]
    %v3578 = vld [vmem:[#allocation2 + $0x220] sm:$0xff]
    %v3579 = vld [vmem:[#allocation2 + $0x228] sm:$0xff]
    %v3580 = vld [vmem:[#allocation2 + $0x230] sm:$0xff]
    %v3581 = vld [vmem:[#allocation2 + $0x238] sm:$0xff]
    %v3582 = vld [vmem:[#allocation2 + $0x240] sm:$0xff]
    %v3583 = vld [vmem:[#allocation2 + $0x248] sm:$0xff]
    %v3584 = vld [vmem:[#allocation2 + $0x250] sm:$0xff]
    %v3585 = vld [vmem:[#allocation2 + $0x258] sm:$0xff]
    %v3586 = vld [vmem:[#allocation2 + $0x260] sm:$0xff]
    %v3587 = vld [vmem:[#allocation2 + $0x268] sm:$0xff]
    %v3588 = vld [vmem:[#allocation2 + $0x270] sm:$0xff]
    %v3589 = vld [vmem:[#allocation2 + $0x278] sm:$0xff]
    %v3590 = vld [vmem:[#allocation2 + $0x280] sm:$0xff]
    %v3591 = vld [vmem:[#allocation2 + $0x288] sm:$0xff]
    %v3592 = vld [vmem:[#allocation2 + $0x290] sm:$0xff]
    %v3593 = vld [vmem:[#allocation2 + $0x298] sm:$0xff]
    %v3594 = vld [vmem:[#allocation2 + $0x2a0] sm:$0xff]
    %v3595 = vld [vmem:[#allocation2 + $0x2a8] sm:$0xff]
    %v3596 = vld [vmem:[#allocation2 + $0x2b0] sm:$0xff]
    %v3597 = vld [vmem:[#allocation2 + $0x2b8] sm:$0xff]
    %v3598 = vld [vmem:[#allocation2 + $0x2c0] sm:$0xff]
    %v3599 = vld [vmem:[#allocation2 + $0x2c8] sm:$0xff]
    %v3600 = vld [vmem:[#allocation2 + $0x2d0] sm:$0xff]
    %v3601 = vld [vmem:[#allocation2 + $0x2d8] sm:$0xff]
    %v3602 = vld [vmem:[#allocation2 + $0x2e0] sm:$0xff]
    %v3603 = vld [vmem:[#allocation2 + $0x2e8] sm:$0xff]
    %v3604 = vld [vmem:[#allocation2 + $0x2f0] sm:$0xff]
    %v3605 = vld [vmem:[#allocation2 + $0x2f8] sm:$0xff]
    %v3606 = vld [vmem:[#allocation2 + $0x300] sm:$0xff]
    %v3607 = vld [vmem:[#allocation2 + $0x308] sm:$0xff]
    %v3608 = vld [vmem:[#allocation2 + $0x310] sm:$0xff]
    %v3609 = vld [vmem:[#allocation2 + $0x318] sm:$0xff]
    %v3610 = vld [vmem:[#allocation2 + $0x320] sm:$0xff]
    %v3611 = vld [vmem:[#allocation2 + $0x328] sm:$0xff]
    %v3612 = vld [vmem:[#allocation2 + $0x330] sm:$0xff]
    %v3613 = vld [vmem:[#allocation2 + $0x338] sm:$0xff]
    %v3614 = vld [vmem:[#allocation2 + $0x340] sm:$0xff]
    %v3615 = vld [vmem:[#allocation2 + $0x348] sm:$0xff]
    %v3616 = vld [vmem:[#allocation2 + $0x350] sm:$0xff]
    %v3617 = vld [vmem:[#allocation2 + $0x358] sm:$0xff]
    %v3618 = vld [vmem:[#allocation2 + $0x360] sm:$0xff]
    %v3619 = vld [vmem:[#allocation2 + $0x368] sm:$0xff]
    %v3620 = vld [vmem:[#allocation2 + $0x370] sm:$0xff]
    %v3621 = vld [vmem:[#allocation2 + $0x378] sm:$0xff]
    %v3622 = vld [vmem:[#allocation2 + $0x380] sm:$0xff]
    %v3623 = vld [vmem:[#allocation2 + $0x388] sm:$0xff]
    %v3624 = vld [vmem:[#allocation2 + $0x390] sm:$0xff]
    %v3625 = vld [vmem:[#allocation2 + $0x398] sm:$0xff]
    %v3626 = vld [vmem:[#allocation2 + $0x3a0] sm:$0xff]
    %v3627 = vld [vmem:[#allocation2 + $0x3a8] sm:$0xff]
    %v3628 = vld [vmem:[#allocation2 + $0x3b0] sm:$0xff]
    %v3629 = vld [vmem:[#allocation2 + $0x3b8] sm:$0xff]
    %v3630 = vld [vmem:[#allocation2 + $0x3c0] sm:$0xff]
    %v3631 = vld [vmem:[#allocation2 + $0x3c8] sm:$0xff]
    %v3632 = vld [vmem:[#allocation2 + $0x3d0] sm:$0xff]
    %v3633 = vld [vmem:[#allocation2 + $0x3d8] sm:$0xff]
    %v3634 = vld [vmem:[#allocation2 + $0x3e0] sm:$0xff]
    %v3635 = vld [vmem:[#allocation2 + $0x3e8] sm:$0xff]
    %v3636 = vld [vmem:[#allocation2 + $0x3f0] sm:$0xff]
    %v3637 = vld [vmem:[#allocation2 + $0x3f8] sm:$0xff]
    %v3638 = vld [vmem:[#allocation2 + $0x400] sm:$0xff]
    %v3639 = vld [vmem:[#allocation2 + $0x408] sm:$0xff]
    %v3640 = vld [vmem:[#allocation2 + $0x410] sm:$0xff]
    %v3641 = vld [vmem:[#allocation2 + $0x418] sm:$0xff]
    %v3642 = vld [vmem:[#allocation2 + $0x420] sm:$0xff]
    %v3643 = vld [vmem:[#allocation2 + $0x428] sm:$0xff]
    %v3644 = vld [vmem:[#allocation2 + $0x430] sm:$0xff]
    %v3645 = vld [vmem:[#allocation2 + $0x438] sm:$0xff]
    %v3646 = vld [vmem:[#allocation2 + $0x440] sm:$0xff]
    %v3647 = vld [vmem:[#allocation2 + $0x448] sm:$0xff]
    %v3648 = vld [vmem:[#allocation2 + $0x450] sm:$0xff]
    %v3649 = vld [vmem:[#allocation2 + $0x458] sm:$0xff]
    %v3650 = vld [vmem:[#allocation2 + $0x460] sm:$0xff]
    %v3651 = vld [vmem:[#allocation2 + $0x468] sm:$0xff]
    %v3652 = vld [vmem:[#allocation2 + $0x470] sm:$0xff]
    %v3653 = vld [vmem:[#allocation2 + $0x478] sm:$0xff]
    %v3654 = vld [vmem:[#allocation2 + $0x480] sm:$0xff]
    %v3655 = vld [vmem:[#allocation2 + $0x488] sm:$0xff]
    %v3656 = vld [vmem:[#allocation2 + $0x490] sm:$0xff]
    %v3657 = vld [vmem:[#allocation2 + $0x498] sm:$0xff]
    %v3658 = vld [vmem:[#allocation2 + $0x4a0] sm:$0xff]
    %v3659 = vld [vmem:[#allocation2 + $0x4a8] sm:$0xff]
    %v3660 = vld [vmem:[#allocation2 + $0x4b0] sm:$0xff]
    %v3661 = vld [vmem:[#allocation2 + $0x4b8] sm:$0xff]
    %v3662 = vld [vmem:[#allocation2 + $0x4c0] sm:$0xff]
    %v3663 = vld [vmem:[#allocation2 + $0x4c8] sm:$0xff]
    %v3664 = vld [vmem:[#allocation2 + $0x4d0] sm:$0xff]
    %v3665 = vld [vmem:[#allocation2 + $0x4d8] sm:$0xff]
    %v3666 = vld [vmem:[#allocation2 + $0x4e0] sm:$0xff]
    %v3667 = vld [vmem:[#allocation2 + $0x4e8] sm:$0xff]
    %v3668 = vld [vmem:[#allocation2 + $0x4f0] sm:$0xff]
    %v3669 = vld [vmem:[#allocation2 + $0x4f8] sm:$0xff]
    %v3670 = vld [vmem:[#allocation2 + $0x500] sm:$0xff]
    %v3671 = vld [vmem:[#allocation2 + $0x508] sm:$0xff]
    %v3672 = vld [vmem:[#allocation2 + $0x510] sm:$0xff]
    %v3673 = vld [vmem:[#allocation2 + $0x518] sm:$0xff]
    %v3674 = vld [vmem:[#allocation2 + $0x520] sm:$0xff]
    %v3675 = vld [vmem:[#allocation2 + $0x528] sm:$0xff]
    %v3676 = vld [vmem:[#allocation2 + $0x530] sm:$0xff]
    %v3677 = vld [vmem:[#allocation2 + $0x538] sm:$0xff]
    %v3678 = vld [vmem:[#allocation2 + $0x540] sm:$0xff]
    %v3679 = vld [vmem:[#allocation2 + $0x548] sm:$0xff]
    %v3680 = vld [vmem:[#allocation2 + $0x550] sm:$0xff]
    %v3681 = vld [vmem:[#allocation2 + $0x558] sm:$0xff]
    %v3682 = vld [vmem:[#allocation2 + $0x560] sm:$0xff]
    %v3683 = vld [vmem:[#allocation2 + $0x568] sm:$0xff]
    %v3684 = vld [vmem:[#allocation2 + $0x570] sm:$0xff]
    %v3685 = vld [vmem:[#allocation2 + $0x578] sm:$0xff]
    %v3686 = vld [vmem:[#allocation2 + $0x580] sm:$0xff]
    %v3687 = vld [vmem:[#allocation2 + $0x588] sm:$0xff]
    %v3688 = vld [vmem:[#allocation2 + $0x590] sm:$0xff]
    %v3689 = vld [vmem:[#allocation2 + $0x598] sm:$0xff]
    %v3690 = vld [vmem:[#allocation2 + $0x5a0] sm:$0xff]
    %v3691 = vld [vmem:[#allocation2 + $0x5a8] sm:$0xff]
    %v3692 = vld [vmem:[#allocation2 + $0x5b0] sm:$0xff]
    %v3693 = vld [vmem:[#allocation2 + $0x5b8] sm:$0xff]
    %v3694 = vld [vmem:[#allocation2 + $0x5c0] sm:$0xff]
    %v3695 = vld [vmem:[#allocation2 + $0x5c8] sm:$0xff]
    %v3696 = vld [vmem:[#allocation2 + $0x5d0] sm:$0xff]
    %v3697 = vld [vmem:[#allocation2 + $0x5d8] sm:$0xff]
    %v3698 = vld [vmem:[#allocation2 + $0x5e0] sm:$0xff]
    %v3699 = vld [vmem:[#allocation2 + $0x5e8] sm:$0xff]
    %v3700 = vld [vmem:[#allocation2 + $0x5f0] sm:$0xff]
    %v3701 = vld [vmem:[#allocation2 + $0x5f8] sm:$0xff]
    %v3702 = vld [vmem:[#allocation2 + $0x600] sm:$0xff]
    %v3703 = vld [vmem:[#allocation2 + $0x608] sm:$0xff]
    %v3704 = vld [vmem:[#allocation2 + $0x610] sm:$0xff]
    %v3705 = vld [vmem:[#allocation2 + $0x618] sm:$0xff]
    %v3706 = vld [vmem:[#allocation2 + $0x620] sm:$0xff]
    %v3707 = vld [vmem:[#allocation2 + $0x628] sm:$0xff]
    %v3708 = vld [vmem:[#allocation2 + $0x630] sm:$0xff]
    %v3709 = vld [vmem:[#allocation2 + $0x638] sm:$0xff]
    %v3710 = vld [vmem:[#allocation2 + $0x640] sm:$0xff]
    %v3711 = vld [vmem:[#allocation2 + $0x648] sm:$0xff]
    %v3712 = vld [vmem:[#allocation2 + $0x650] sm:$0xff]
    %v3713 = vld [vmem:[#allocation2 + $0x658] sm:$0xff]
    %v3714 = vld [vmem:[#allocation2 + $0x660] sm:$0xff]
    %v3715 = vld [vmem:[#allocation2 + $0x668] sm:$0xff]
    %v3716 = vld [vmem:[#allocation2 + $0x670] sm:$0xff]
    %v3717 = vld [vmem:[#allocation2 + $0x678] sm:$0xff]
    %v3718 = vld [vmem:[#allocation2 + $0x680] sm:$0xff]
    %v3719 = vld [vmem:[#allocation2 + $0x688] sm:$0xff]
    %v3720 = vld [vmem:[#allocation2 + $0x690] sm:$0xff]
    %v3721 = vld [vmem:[#allocation2 + $0x698] sm:$0xff]
    %v3722 = vld [vmem:[#allocation2 + $0x6a0] sm:$0xff]
    %v3723 = vld [vmem:[#allocation2 + $0x6a8] sm:$0xff]
    %v3724 = vld [vmem:[#allocation2 + $0x6b0] sm:$0xff]
    %v3725 = vld [vmem:[#allocation2 + $0x6b8] sm:$0xff]
    %v3726 = vld [vmem:[#allocation2 + $0x6c0] sm:$0xff]
    %v3727 = vld [vmem:[#allocation2 + $0x6c8] sm:$0xff]
    %v3728 = vld [vmem:[#allocation2 + $0x6d0] sm:$0xff]
    %v3729 = vld [vmem:[#allocation2 + $0x6d8] sm:$0xff]
    %v3730 = vld [vmem:[#allocation2 + $0x6e0] sm:$0xff]
    %v3731 = vld [vmem:[#allocation2 + $0x6e8] sm:$0xff]
    %v3732 = vld [vmem:[#allocation2 + $0x6f0] sm:$0xff]
    %v3733 = vld [vmem:[#allocation2 + $0x6f8] sm:$0xff]
    %v3734 = vld [vmem:[#allocation2 + $0x700] sm:$0xff]
    %v3735 = vld [vmem:[#allocation2 + $0x708] sm:$0xff]
    %v3736 = vld [vmem:[#allocation2 + $0x710] sm:$0xff]
    %v3737 = vld [vmem:[#allocation2 + $0x718] sm:$0xff]
    %v3738 = vld [vmem:[#allocation2 + $0x720] sm:$0xff]
    %v3739 = vld [vmem:[#allocation2 + $0x728] sm:$0xff]
    %v3740 = vld [vmem:[#allocation2 + $0x730] sm:$0xff]
    %v3741 = vld [vmem:[#allocation2 + $0x738] sm:$0xff]
    %v3742 = vld [vmem:[#allocation2 + $0x740] sm:$0xff]
    %v3743 = vld [vmem:[#allocation2 + $0x748] sm:$0xff]
    %v3744 = vld [vmem:[#allocation2 + $0x750] sm:$0xff]
    %v3745 = vld [vmem:[#allocation2 + $0x758] sm:$0xff]
    %v3746 = vld [vmem:[#allocation2 + $0x760] sm:$0xff]
    %v3747 = vld [vmem:[#allocation2 + $0x768] sm:$0xff]
    %v3748 = vld [vmem:[#allocation2 + $0x770] sm:$0xff]
    %v3749 = vld [vmem:[#allocation2 + $0x778] sm:$0xff]
    %v3750 = vld [vmem:[#allocation2 + $0x780] sm:$0xff]
    %v3751 = vld [vmem:[#allocation2 + $0x788] sm:$0xff]
    %v3752 = vld [vmem:[#allocation2 + $0x790] sm:$0xff]
    %v3753 = vld [vmem:[#allocation2 + $0x798] sm:$0xff]
    %v3754 = vld [vmem:[#allocation2 + $0x7a0] sm:$0xff]
    %v3755 = vld [vmem:[#allocation2 + $0x7a8] sm:$0xff]
    %v3756 = vld [vmem:[#allocation2 + $0x7b0] sm:$0xff]
    %v3757 = vld [vmem:[#allocation2 + $0x7b8] sm:$0xff]
    %v3758 = vld [vmem:[#allocation2 + $0x7c0] sm:$0xff]
    %v3759 = vld [vmem:[#allocation2 + $0x7c8] sm:$0xff]
    %v3760 = vld [vmem:[#allocation2 + $0x7d0] sm:$0xff]
    %v3761 = vld [vmem:[#allocation2 + $0x7d8] sm:$0xff]
    %v3762 = vld [vmem:[#allocation2 + $0x7e0] sm:$0xff]
    %v3763 = vld [vmem:[#allocation2 + $0x7e8] sm:$0xff]
    %v3764 = vld [vmem:[#allocation2 + $0x7f0] sm:$0xff]
    %v3765 = vld [vmem:[#allocation2 + $0x7f8] sm:$0xff]
    %v3766 = vld [vmem:[#allocation2 + $0x800] sm:$0xff]
    %v3767 = vld [vmem:[#allocation2 + $0x808] sm:$0xff]
    %v3768 = vld [vmem:[#allocation2 + $0x810] sm:$0xff]
    %v3769 = vld [vmem:[#allocation2 + $0x818] sm:$0xff]
    %v3770 = vld [vmem:[#allocation2 + $0x820] sm:$0xff]
    %v3771 = vld [vmem:[#allocation2 + $0x828] sm:$0xff]
    %v3772 = vld [vmem:[#allocation2 + $0x830] sm:$0xff]
    %v3773 = vld [vmem:[#allocation2 + $0x838] sm:$0xff]
    %v3774 = vld [vmem:[#allocation2 + $0x840] sm:$0xff]
    %v3775 = vld [vmem:[#allocation2 + $0x848] sm:$0xff]
    %v3776 = vld [vmem:[#allocation2 + $0x850] sm:$0xff]
    %v3777 = vld [vmem:[#allocation2 + $0x858] sm:$0xff]
    %v3778 = vld [vmem:[#allocation2 + $0x860] sm:$0xff]
    %v3779 = vld [vmem:[#allocation2 + $0x868] sm:$0xff]
    %v3780 = vld [vmem:[#allocation2 + $0x870] sm:$0xff]
    %v3781 = vld [vmem:[#allocation2 + $0x878] sm:$0xff]
    %v3782 = vld [vmem:[#allocation2 + $0x880] sm:$0xff]
    %v3783 = vld [vmem:[#allocation2 + $0x888] sm:$0xff]
    %v3784 = vld [vmem:[#allocation2 + $0x890] sm:$0xff]
    %v3785 = vld [vmem:[#allocation2 + $0x898] sm:$0xff]
    %v3786 = vld [vmem:[#allocation2 + $0x8a0] sm:$0xff]
    %v3787 = vld [vmem:[#allocation2 + $0x8a8] sm:$0xff]
    %v3788 = vld [vmem:[#allocation2 + $0x8b0] sm:$0xff]
    %v3789 = vld [vmem:[#allocation2 + $0x8b8] sm:$0xff]
    %v3790 = vld [vmem:[#allocation2 + $0x8c0] sm:$0xff]
    %v3791 = vld [vmem:[#allocation2 + $0x8c8] sm:$0xff]
    %v3792 = vld [vmem:[#allocation2 + $0x8d0] sm:$0xff]
    %v3793 = vld [vmem:[#allocation2 + $0x8d8] sm:$0xff]
    %v3794 = vld [vmem:[#allocation2 + $0x8e0] sm:$0xff]
    %v3795 = vld [vmem:[#allocation2 + $0x8e8] sm:$0xff]
    %v3796 = vld [vmem:[#allocation2 + $0x8f0] sm:$0xff]
    %v3797 = vld [vmem:[#allocation2 + $0x8f8] sm:$0xff]
    %v3798 = vld [vmem:[#allocation2 + $0x900] sm:$0xff]
    %v3799 = vld [vmem:[#allocation2 + $0x908] sm:$0xff]
    %v3800 = vld [vmem:[#allocation2 + $0x910] sm:$0xff]
    %v3801 = vld [vmem:[#allocation2 + $0x918] sm:$0xff]
    %v3802 = vld [vmem:[#allocation2 + $0x920] sm:$0xff]
    %v3803 = vld [vmem:[#allocation2 + $0x928] sm:$0xff]
    %v3804 = vld [vmem:[#allocation2 + $0x930] sm:$0xff]
    %v3805 = vld [vmem:[#allocation2 + $0x938] sm:$0xff]
    %v3806 = vld [vmem:[#allocation2 + $0x940] sm:$0xff]
    %v3807 = vld [vmem:[#allocation2 + $0x948] sm:$0xff]
    %v3808 = vld [vmem:[#allocation2 + $0x950] sm:$0xff]
    %v3809 = vld [vmem:[#allocation2 + $0x958] sm:$0xff]
    %v3810 = vld [vmem:[#allocation2 + $0x960] sm:$0xff]
    %v3811 = vld [vmem:[#allocation2 + $0x968] sm:$0xff]
    %v3812 = vld [vmem:[#allocation2 + $0x970] sm:$0xff]
    %v3813 = vld [vmem:[#allocation2 + $0x978] sm:$0xff]
    %v3814 = vld [vmem:[#allocation2 + $0x980] sm:$0xff]
    %v3815 = vld [vmem:[#allocation2 + $0x988] sm:$0xff]
    %v3816 = vld [vmem:[#allocation2 + $0x990] sm:$0xff]
    %v3817 = vld [vmem:[#allocation2 + $0x998] sm:$0xff]
    %v3818 = vld [vmem:[#allocation2 + $0x9a0] sm:$0xff]
    %v3819 = vld [vmem:[#allocation2 + $0x9a8] sm:$0xff]
    %v3820 = vld [vmem:[#allocation2 + $0x9b0] sm:$0xff]
    %v3821 = vld [vmem:[#allocation2 + $0x9b8] sm:$0xff]
    %v3822 = vld [vmem:[#allocation2 + $0x9c0] sm:$0xff]
    %v3823 = vld [vmem:[#allocation2 + $0x9c8] sm:$0xff]
    %v3824 = vld [vmem:[#allocation2 + $0x9d0] sm:$0xff]
    %v3825 = vld [vmem:[#allocation2 + $0x9d8] sm:$0xff]
    %v3826 = vld [vmem:[#allocation2 + $0x9e0] sm:$0xff]
    %v3827 = vld [vmem:[#allocation2 + $0x9e8] sm:$0xff]
    %v3828 = vld [vmem:[#allocation2 + $0x9f0] sm:$0xff]
    %v3829 = vld [vmem:[#allocation2 + $0x9f8] sm:$0xff]
    %v3830 = vld [vmem:[#allocation2 + $0xa00] sm:$0xff]
    %v3831 = vld [vmem:[#allocation2 + $0xa08] sm:$0xff]
    %v3832 = vld [vmem:[#allocation2 + $0xa10] sm:$0xff]
    %v3833 = vld [vmem:[#allocation2 + $0xa18] sm:$0xff]
    %v3834 = vld [vmem:[#allocation2 + $0xa20] sm:$0xff]
    %v3835 = vld [vmem:[#allocation2 + $0xa28] sm:$0xff]
    %v3836 = vld [vmem:[#allocation2 + $0xa30] sm:$0xff]
    %v3837 = vld [vmem:[#allocation2 + $0xa38] sm:$0xff]
    %v3838 = vld [vmem:[#allocation2 + $0xa40] sm:$0xff]
    %v3839 = vld [vmem:[#allocation2 + $0xa48] sm:$0xff]
    %v3840 = vld [vmem:[#allocation2 + $0xa50] sm:$0xff]
    %v3841 = vld [vmem:[#allocation2 + $0xa58] sm:$0xff]
    %v3842 = vld [vmem:[#allocation2 + $0xa60] sm:$0xff]
    %v3843 = vld [vmem:[#allocation2 + $0xa68] sm:$0xff]
    %v3844 = vld [vmem:[#allocation2 + $0xa70] sm:$0xff]
    %v3845 = vld [vmem:[#allocation2 + $0xa78] sm:$0xff]
    %v3846 = vld [vmem:[#allocation2 + $0xa80] sm:$0xff]
    %v3847 = vld [vmem:[#allocation2 + $0xa88] sm:$0xff]
    %v3848 = vld [vmem:[#allocation2 + $0xa90] sm:$0xff]
    %v3849 = vld [vmem:[#allocation2 + $0xa98] sm:$0xff]
    %v3850 = vld [vmem:[#allocation2 + $0xaa0] sm:$0xff]
    %v3851 = vld [vmem:[#allocation2 + $0xaa8] sm:$0xff]
    %v3852 = vld [vmem:[#allocation2 + $0xab0] sm:$0xff]
    %v3853 = vld [vmem:[#allocation2 + $0xab8] sm:$0xff]
    %v3854 = vld [vmem:[#allocation2 + $0xac0] sm:$0xff]
    %v3855 = vld [vmem:[#allocation2 + $0xac8] sm:$0xff]
    %v3856 = vld [vmem:[#allocation2 + $0xad0] sm:$0xff]
    %v3857 = vld [vmem:[#allocation2 + $0xad8] sm:$0xff]
    %v3858 = vld [vmem:[#allocation2 + $0xae0] sm:$0xff]
    %v3859 = vld [vmem:[#allocation2 + $0xae8] sm:$0xff]
    %v3860 = vld [vmem:[#allocation2 + $0xaf0] sm:$0xff]
    %v3861 = vld [vmem:[#allocation2 + $0xaf8] sm:$0xff]
    %v3862 = vld [vmem:[#allocation2 + $0xb00] sm:$0xff]
    %v3863 = vld [vmem:[#allocation2 + $0xb08] sm:$0xff]
    %v3864 = vld [vmem:[#allocation2 + $0xb10] sm:$0xff]
    %v3865 = vld [vmem:[#allocation2 + $0xb18] sm:$0xff]
    %v3866 = vld [vmem:[#allocation2 + $0xb20] sm:$0xff]
    %v3867 = vld [vmem:[#allocation2 + $0xb28] sm:$0xff]
    %v3868 = vld [vmem:[#allocation2 + $0xb30] sm:$0xff]
    %v3869 = vld [vmem:[#allocation2 + $0xb38] sm:$0xff]
    %v3870 = vld [vmem:[#allocation2 + $0xb40] sm:$0xff]
    %v3871 = vld [vmem:[#allocation2 + $0xb48] sm:$0xff]
    %v3872 = vld [vmem:[#allocation2 + $0xb50] sm:$0xff]
    %v3873 = vld [vmem:[#allocation2 + $0xb58] sm:$0xff]
    %v3874 = vld [vmem:[#allocation2 + $0xb60] sm:$0xff]
    %v3875 = vld [vmem:[#allocation2 + $0xb68] sm:$0xff]
    %v3876 = vld [vmem:[#allocation2 + $0xb70] sm:$0xff]
    %v3877 = vld [vmem:[#allocation2 + $0xb78] sm:$0xff]
    %v3878 = vld [vmem:[#allocation2 + $0xb80] sm:$0xff]
    %v3879 = vld [vmem:[#allocation2 + $0xb88] sm:$0xff]
    %v3880 = vld [vmem:[#allocation2 + $0xb90] sm:$0xff]
    %v3881 = vld [vmem:[#allocation2 + $0xb98] sm:$0xff]
    %v3882 = vld [vmem:[#allocation2 + $0xba0] sm:$0xff]
    %v3883 = vld [vmem:[#allocation2 + $0xba8] sm:$0xff]
    %v3884 = vld [vmem:[#allocation2 + $0xbb0] sm:$0xff]
    %v3885 = vld [vmem:[#allocation2 + $0xbb8] sm:$0xff]
    %v3886 = vld [vmem:[#allocation2 + $0xbc0] sm:$0xff]
    %v3887 = vld [vmem:[#allocation2 + $0xbc8] sm:$0xff]
    %v3888 = vld [vmem:[#allocation2 + $0xbd0] sm:$0xff]
    %v3889 = vld [vmem:[#allocation2 + $0xbd8] sm:$0xff]
    %v3890 = vld [vmem:[#allocation2 + $0xbe0] sm:$0xff]
    %v3891 = vld [vmem:[#allocation2 + $0xbe8] sm:$0xff]
    %v3892 = vld [vmem:[#allocation2 + $0xbf0] sm:$0xff]
    %v3893 = vld [vmem:[#allocation2 + $0xbf8] sm:$0xff]
    %v3894 = vld [vmem:[#allocation2 + $0xc00] sm:$0xff]
    %v3895 = vld [vmem:[#allocation2 + $0xc08] sm:$0xff]
    %v3896 = vld [vmem:[#allocation2 + $0xc10] sm:$0xff]
    %v3897 = vld [vmem:[#allocation2 + $0xc18] sm:$0xff]
    %v3898 = vld [vmem:[#allocation2 + $0xc20] sm:$0xff]
    %v3899 = vld [vmem:[#allocation2 + $0xc28] sm:$0xff]
    %v3900 = vld [vmem:[#allocation2 + $0xc30] sm:$0xff]
    %v3901 = vld [vmem:[#allocation2 + $0xc38] sm:$0xff]
    %v3902 = vld [vmem:[#allocation2 + $0xc40] sm:$0xff]
    %v3903 = vld [vmem:[#allocation2 + $0xc48] sm:$0xff]
    %v3904 = vld [vmem:[#allocation2 + $0xc50] sm:$0xff]
    %v3905 = vld [vmem:[#allocation2 + $0xc58] sm:$0xff]
    %v3906 = vld [vmem:[#allocation2 + $0xc60] sm:$0xff]
    %v3907 = vld [vmem:[#allocation2 + $0xc68] sm:$0xff]
    %v3908 = vld [vmem:[#allocation2 + $0xc70] sm:$0xff]
    %v3909 = vld [vmem:[#allocation2 + $0xc78] sm:$0xff]
    %v3910 = vld [vmem:[#allocation2 + $0xc80] sm:$0xff]
    %v3911 = vld [vmem:[#allocation2 + $0xc88] sm:$0xff]
    %v3912 = vld [vmem:[#allocation2 + $0xc90] sm:$0xff]
    %v3913 = vld [vmem:[#allocation2 + $0xc98] sm:$0xff]
    %v3914 = vld [vmem:[#allocation2 + $0xca0] sm:$0xff]
    %v3915 = vld [vmem:[#allocation2 + $0xca8] sm:$0xff]
    %v3916 = vld [vmem:[#allocation2 + $0xcb0] sm:$0xff]
    %v3917 = vld [vmem:[#allocation2 + $0xcb8] sm:$0xff]
    %v3918 = vld [vmem:[#allocation2 + $0xcc0] sm:$0xff]
    %v3919 = vld [vmem:[#allocation2 + $0xcc8] sm:$0xff]
    %v3920 = vld [vmem:[#allocation2 + $0xcd0] sm:$0xff]
    %v3921 = vld [vmem:[#allocation2 + $0xcd8] sm:$0xff]
    %v3922 = vld [vmem:[#allocation2 + $0xce0] sm:$0xff]
    %v3923 = vld [vmem:[#allocation2 + $0xce8] sm:$0xff]
    %v3924 = vld [vmem:[#allocation2 + $0xcf0] sm:$0xff]
    %v3925 = vld [vmem:[#allocation2 + $0xcf8] sm:$0xff]
    %v3926 = vld [vmem:[#allocation2 + $0xd00] sm:$0xff]
    %v3927 = vld [vmem:[#allocation2 + $0xd08] sm:$0xff]
    %v3928 = vld [vmem:[#allocation2 + $0xd10] sm:$0xff]
    %v3929 = vld [vmem:[#allocation2 + $0xd18] sm:$0xff]
    %v3930 = vld [vmem:[#allocation2 + $0xd20] sm:$0xff]
    %v3931 = vld [vmem:[#allocation2 + $0xd28] sm:$0xff]
    %v3932 = vld [vmem:[#allocation2 + $0xd30] sm:$0xff]
    %v3933 = vld [vmem:[#allocation2 + $0xd38] sm:$0xff]
    %v3934 = vld [vmem:[#allocation2 + $0xd40] sm:$0xff]
    %v3935 = vld [vmem:[#allocation2 + $0xd48] sm:$0xff]
    %v3936 = vld [vmem:[#allocation2 + $0xd50] sm:$0xff]
    %v3937 = vld [vmem:[#allocation2 + $0xd58] sm:$0xff]
    %v3938 = vld [vmem:[#allocation2 + $0xd60] sm:$0xff]
    %v3939 = vld [vmem:[#allocation2 + $0xd68] sm:$0xff]
    %v3940 = vld [vmem:[#allocation2 + $0xd70] sm:$0xff]
    %v3941 = vld [vmem:[#allocation2 + $0xd78] sm:$0xff]
    %v3942 = vld [vmem:[#allocation2 + $0xd80] sm:$0xff]
    %v3943 = vld [vmem:[#allocation2 + $0xd88] sm:$0xff]
    %v3944 = vld [vmem:[#allocation2 + $0xd90] sm:$0xff]
    %v3945 = vld [vmem:[#allocation2 + $0xd98] sm:$0xff]
    %v3946 = vld [vmem:[#allocation2 + $0xda0] sm:$0xff]
    %v3947 = vld [vmem:[#allocation2 + $0xda8] sm:$0xff]
    %v3948 = vld [vmem:[#allocation2 + $0xdb0] sm:$0xff]
    %v3949 = vld [vmem:[#allocation2 + $0xdb8] sm:$0xff]
    %v3950 = vld [vmem:[#allocation2 + $0xdc0] sm:$0xff]
    %v3951 = vld [vmem:[#allocation2 + $0xdc8] sm:$0xff]
    %v3952 = vld [vmem:[#allocation2 + $0xdd0] sm:$0xff]
    %v3953 = vld [vmem:[#allocation2 + $0xdd8] sm:$0xff]
    %v3954 = vld [vmem:[#allocation2 + $0xde0] sm:$0xff]
    %v3955 = vld [vmem:[#allocation2 + $0xde8] sm:$0xff]
    %v3956 = vld [vmem:[#allocation2 + $0xdf0] sm:$0xff]
    %v3957 = vld [vmem:[#allocation2 + $0xdf8] sm:$0xff]
    %v3958 = vld [vmem:[#allocation2 + $0xe00] sm:$0xff]
    %v3959 = vld [vmem:[#allocation2 + $0xe08] sm:$0xff]
    %v3960 = vld [vmem:[#allocation2 + $0xe10] sm:$0xff]
    %v3961 = vld [vmem:[#allocation2 + $0xe18] sm:$0xff]
    %v3962 = vld [vmem:[#allocation2 + $0xe20] sm:$0xff]
    %v3963 = vld [vmem:[#allocation2 + $0xe28] sm:$0xff]
    %v3964 = vld [vmem:[#allocation2 + $0xe30] sm:$0xff]
    %v3965 = vld [vmem:[#allocation2 + $0xe38] sm:$0xff]
    %v3966 = vld [vmem:[#allocation2 + $0xe40] sm:$0xff]
    %v3967 = vld [vmem:[#allocation2 + $0xe48] sm:$0xff]
    %v3968 = vld [vmem:[#allocation2 + $0xe50] sm:$0xff]
    %v3969 = vld [vmem:[#allocation2 + $0xe58] sm:$0xff]
    %v3970 = vld [vmem:[#allocation2 + $0xe60] sm:$0xff]
    %v3971 = vld [vmem:[#allocation2 + $0xe68] sm:$0xff]
    %v3972 = vld [vmem:[#allocation2 + $0xe70] sm:$0xff]
    %v3973 = vld [vmem:[#allocation2 + $0xe78] sm:$0xff]
    %v3974 = vld [vmem:[#allocation2 + $0xe80] sm:$0xff]
    %v3975 = vld [vmem:[#allocation2 + $0xe88] sm:$0xff]
    %v3976 = vld [vmem:[#allocation2 + $0xe90] sm:$0xff]
    %v3977 = vld [vmem:[#allocation2 + $0xe98] sm:$0xff]
    %v3978 = vld [vmem:[#allocation2 + $0xea0] sm:$0xff]
    %v3979 = vld [vmem:[#allocation2 + $0xea8] sm:$0xff]
    %v3980 = vld [vmem:[#allocation2 + $0xeb0] sm:$0xff]
    %v3981 = vld [vmem:[#allocation2 + $0xeb8] sm:$0xff]
    %v3982 = vld [vmem:[#allocation2 + $0xec0] sm:$0xff]
    %v3983 = vld [vmem:[#allocation2 + $0xec8] sm:$0xff]
    %v3984 = vld [vmem:[#allocation2 + $0xed0] sm:$0xff]
    %v3985 = vld [vmem:[#allocation2 + $0xed8] sm:$0xff]
    %v3986 = vld [vmem:[#allocation2 + $0xee0] sm:$0xff]
    %v3987 = vld [vmem:[#allocation2 + $0xee8] sm:$0xff]
    %v3988 = vld [vmem:[#allocation2 + $0xef0] sm:$0xff]
    %v3989 = vld [vmem:[#allocation2 + $0xef8] sm:$0xff]
    %v3990 = vld [vmem:[#allocation2 + $0xf00] sm:$0xff]
    %v3991 = vld [vmem:[#allocation2 + $0xf08] sm:$0xff]
    %v3992 = vld [vmem:[#allocation2 + $0xf10] sm:$0xff]
    %v3993 = vld [vmem:[#allocation2 + $0xf18] sm:$0xff]
    %v3994 = vld [vmem:[#allocation2 + $0xf20] sm:$0xff]
    %v3995 = vld [vmem:[#allocation2 + $0xf28] sm:$0xff]
    %v3996 = vld [vmem:[#allocation2 + $0xf30] sm:$0xff]
    %v3997 = vld [vmem:[#allocation2 + $0xf38] sm:$0xff]
    %v3998 = vld [vmem:[#allocation2 + $0xf40] sm:$0xff]
    %v3999 = vld [vmem:[#allocation2 + $0xf48] sm:$0xff]
    %v4000 = vld [vmem:[#allocation2 + $0xf50] sm:$0xff]
    %v4001 = vld [vmem:[#allocation2 + $0xf58] sm:$0xff]
    %v4002 = vld [vmem:[#allocation2 + $0xf60] sm:$0xff]
    %v4003 = vld [vmem:[#allocation2 + $0xf68] sm:$0xff]
    %v4004 = vld [vmem:[#allocation2 + $0xf70] sm:$0xff]
    %v4005 = vld [vmem:[#allocation2 + $0xf78] sm:$0xff]
    %v4006 = vld [vmem:[#allocation2 + $0xf80] sm:$0xff]
    %v4007 = vld [vmem:[#allocation2 + $0xf88] sm:$0xff]
    %v4008 = vld [vmem:[#allocation2 + $0xf90] sm:$0xff]
    %v4009 = vld [vmem:[#allocation2 + $0xf98] sm:$0xff]
    %v4010 = vld [vmem:[#allocation2 + $0xfa0] sm:$0xff]
    %v4011 = vld [vmem:[#allocation2 + $0xfa8] sm:$0xff]
    %v4012 = vld [vmem:[#allocation2 + $0xfb0] sm:$0xff]
    %v4013 = vld [vmem:[#allocation2 + $0xfb8] sm:$0xff]
    %v4014 = vld [vmem:[#allocation2 + $0xfc0] sm:$0xff]
    %v4015 = vld [vmem:[#allocation2 + $0xfc8] sm:$0xff]
    %v4016 = vld [vmem:[#allocation2 + $0xfd0] sm:$0xff]
    %v4017 = vld [vmem:[#allocation2 + $0xfd8] sm:$0xff]
    %v4018 = vld [vmem:[#allocation2 + $0xfe0] sm:$0xff]
    %v4019 = vld [vmem:[#allocation2 + $0xfe8] sm:$0xff]
    %v4020 = vld [vmem:[#allocation2 + $0xff0] sm:$0xff]
    %v4021 = vld [vmem:[#allocation2 + $0xff8] sm:$0xff]
    %v4022 = vld [vmem:[#allocation13] sm:$0xff]
    %v4024 = vlaneseq
    %v4025 = vshrl.u32 %v4024, 7
    %v4026 = vsub.s32 0, %v4025
    %v4027 = vrot.slane %v4022, %v4026
    %v4028 = vlaneseq
    %v4029 = vshrl.u32 %v4028, 7
    %v4030 = vsub.s32 1, %v4029
    %v4031 = vrot.slane %v4022, %v4030
    %v4032 = vlaneseq
    %v4033 = vshrl.u32 %v4032, 7
    %v4034 = vsub.s32 2, %v4033
    %v4035 = vrot.slane %v4022, %v4034
    %v4036 = vlaneseq
    %v4037 = vshrl.u32 %v4036, 7
    %v4038 = vsub.s32 3, %v4037
    %v4039 = vrot.slane %v4022, %v4038
    %v4040 = vlaneseq
    %v4041 = vshrl.u32 %v4040, 7
    %v4042 = vsub.s32 4, %v4041
    %v4043 = vrot.slane %v4022, %v4042
    %v4044 = vlaneseq
    %v4045 = vshrl.u32 %v4044, 7
    %v4046 = vsub.s32 5, %v4045
    %v4047 = vrot.slane %v4022, %v4046
    %v4048 = vlaneseq
    %v4049 = vshrl.u32 %v4048, 7
    %v4050 = vsub.s32 6, %v4049
    %v4051 = vrot.slane %v4022, %v4050
    %v4052 = vlaneseq
    %v4053 = vshrl.u32 %v4052, 7
    %v4054 = vsub.s32 7, %v4053
    %v4055 = vrot.slane %v4022, %v4054
    %4064 = vmatprep.subr.bf16.mxu0 %v3511
    %4065 = vmatpush1.bf16.msra.mxu0 %v3510
    %4066 = vmatprep.subr.bf16.mxu0 %v3519
    %4067 = vmatpush1.bf16.msra.mxu0 %v3518
    %4068 = vmatprep.subr.bf16.mxu0 %v3527
    %4069 = vmatpush1.bf16.msra.mxu0 %v3526
    %4070 = vmatprep.subr.bf16.mxu0 %v3535
    %4071 = vmatpush1.bf16.msra.mxu0 %v3534
    %4072 = vmatprep.subr.bf16.mxu0 %v3543
    %4073 = vmatpush1.bf16.msra.mxu0 %v3542
    %4074 = vmatprep.subr.bf16.mxu0 %v3551
    %4075 = vmatpush1.bf16.msra.mxu0 %v3550
    %4076 = vmatprep.subr.bf16.mxu0 %v3559
    %4077 = vmatpush1.bf16.msra.mxu0 %v3558
    %4078 = vmatprep.subr.bf16.mxu0 %v3567
    %4079 = vmatpush1.bf16.msra.mxu0 %v3566
    %4080 = vmatprep.subr.bf16.mxu0 %v3575
    %4081 = vmatpush1.bf16.msra.mxu0 %v3574
    %4082 = vmatprep.subr.bf16.mxu0 %v3583
    %4083 = vmatpush1.bf16.msra.mxu0 %v3582
    %4084 = vmatprep.subr.bf16.mxu0 %v3591
    %4085 = vmatpush1.bf16.msra.mxu0 %v3590
    %4086 = vmatprep.subr.bf16.mxu0 %v3599
    %4087 = vmatpush1.bf16.msra.mxu0 %v3598
    %4088 = vmatprep.subr.bf16.mxu0 %v3607
    %4089 = vmatpush1.bf16.msra.mxu0 %v3606
    %4090 = vmatprep.subr.bf16.mxu0 %v3615
    %4091 = vmatpush1.bf16.msra.mxu0 %v3614
    %4092 = vmatprep.subr.bf16.mxu0 %v3623
    %4093 = vmatpush1.bf16.msra.mxu0 %v3622
    %4094 = vmatprep.subr.bf16.mxu0 %v3631
    %4095 = vmatpush1.bf16.msra.mxu0 %v3630
    %4096 = vmatprep.mubr.bf16.mxu0 %v3467
    %4097 = vmatmul.mubr.bf16.gmra.mrb[0].mxu0 %v3466
    %v4098 = vpop.f32.mrb[0].mxu0
    %v4099 = vadd.f32 %v4027, %v4098
    %v4100 = vpop.f32.mrb[0].mxu0
    %v4101 = vadd.f32 %v4031, %v4100
    %v4102 = vpop.f32.mrb[0].mxu0
    %v4103 = vpop.f32.mrb[0].mxu0
    %4104 = vdwg.mxu0
    %4105 = vmatprep.subr.bf16.mxu0 %v3639
    %4106 = vmatpush1.bf16.msra.mxu0 %v3638
    %4107 = vmatprep.subr.bf16.mxu0 %v3647
    %4108 = vmatpush1.bf16.msra.mxu0 %v3646
    %4109 = vmatprep.subr.bf16.mxu0 %v3655
    %4110 = vmatpush1.bf16.msra.mxu0 %v3654
    %4111 = vmatprep.subr.bf16.mxu0 %v3663
    %4112 = vmatpush1.bf16.msra.mxu0 %v3662
    %4113 = vmatprep.subr.bf16.mxu0 %v3671
    %4114 = vmatpush1.bf16.msra.mxu0 %v3670
    %4115 = vmatprep.subr.bf16.mxu0 %v3679
    %4116 = vmatpush1.bf16.msra.mxu0 %v3678
    %4117 = vmatprep.subr.bf16.mxu0 %v3687
    %4118 = vmatpush1.bf16.msra.mxu0 %v3686
    %4119 = vmatprep.subr.bf16.mxu0 %v3695
    %4120 = vmatpush1.bf16.msra.mxu0 %v3694
    %4121 = vmatprep.subr.bf16.mxu0 %v3703
    %4122 = vmatpush1.bf16.msra.mxu0 %v3702
    %4123 = vmatprep.subr.bf16.mxu0 %v3711
    %4124 = vmatpush1.bf16.msra.mxu0 %v3710
    %4125 = vmatprep.subr.bf16.mxu0 %v3719
    %4126 = vmatpush1.bf16.msra.mxu0 %v3718
    %4127 = vmatprep.subr.bf16.mxu0 %v3727
    %4128 = vmatpush1.bf16.msra.mxu0 %v3726
    %4129 = vmatprep.subr.bf16.mxu0 %v3735
    %4130 = vmatpush1.bf16.msra.mxu0 %v3734
    %4131 = vmatprep.subr.bf16.mxu0 %v3743
    %4132 = vmatpush1.bf16.msra.mxu0 %v3742
    %4133 = vmatprep.subr.bf16.mxu0 %v3751
    %4134 = vmatpush1.bf16.msra.mxu0 %v3750
    %4135 = vmatprep.subr.bf16.mxu0 %v3759
    %4136 = vmatpush1.bf16.msra.mxu0 %v3758
    %4137 = vmatprep.mubr.bf16.mxu0 %v3469
    %4138 = vmatmul.mubr.bf16.gmra.mrb[0].mxu0 %v3468
    %v4139 = vpop.f32.mrb[0].mxu0
    %v4140 = vadd.f32 %v4099, %v4139
    %v4141 = vpop.f32.mrb[0].mxu0
    %v4142 = vadd.f32 %v4101, %v4141
    %v4143 = vpop.f32.mrb[0].mxu0
    %v4144 = vpop.f32.mrb[0].mxu0
    %4145 = vdwg.mxu0
    %4146 = vmatprep.subr.bf16.mxu0 %v3767
    %4147 = vmatpush1.bf16.msra.mxu0 %v3766
    %4148 = vmatprep.subr.bf16.mxu0 %v3775
    %4149 = vmatpush1.bf16.msra.mxu0 %v3774
    %4150 = vmatprep.subr.bf16.mxu0 %v3783
    %4151 = vmatpush1.bf16.msra.mxu0 %v3782
    %4152 = vmatprep.subr.bf16.mxu0 %v3791
    %4153 = vmatpush1.bf16.msra.mxu0 %v3790
    %4154 = vmatprep.subr.bf16.mxu0 %v3799
    %4155 = vmatpush1.bf16.msra.mxu0 %v3798
    %4156 = vmatprep.subr.bf16.mxu0 %v3807
    %4157 = vmatpush1.bf16.msra.mxu0 %v3806
    %4158 = vmatprep.subr.bf16.mxu0 %v3815
    %4159 = vmatpush1.bf16.msra.mxu0 %v3814
    %4160 = vmatprep.subr.bf16.mxu0 %v3823
    %4161 = vmatpush1.bf16.msra.mxu0 %v3822
    %4162 = vmatprep.subr.bf16.mxu0 %v3831
    %4163 = vmatpush1.bf16.msra.mxu0 %v3830
    %4164 = vmatprep.subr.bf16.mxu0 %v3839
    %4165 = vmatpush1.bf16.msra.mxu0 %v3838
    %4166 = vmatprep.subr.bf16.mxu0 %v3847
    %4167 = vmatpush1.bf16.msra.mxu0 %v3846
    %4168 = vmatprep.subr.bf16.mxu0 %v3855
    %4169 = vmatpush1.bf16.msra.mxu0 %v3854
    %4170 = vmatprep.subr.bf16.mxu0 %v3863
    %4171 = vmatpush1.bf16.msra.mxu0 %v3862
    %4172 = vmatprep.subr.bf16.mxu0 %v3871
    %4173 = vmatpush1.bf16.msra.mxu0 %v3870
    %4174 = vmatprep.subr.bf16.mxu0 %v3879
    %4175 = vmatpush1.bf16.msra.mxu0 %v3878
    %4176 = vmatprep.subr.bf16.mxu0 %v3887
    %4177 = vmatpush1.bf16.msra.mxu0 %v3886
    %4178 = vmatprep.mubr.bf16.mxu0 %v3471
    %4179 = vmatmul.mubr.bf16.gmra.mrb[0].mxu0 %v3470
    %v4180 = vpop.f32.mrb[0].mxu0
    %v4181 = vadd.f32 %v4140, %v4180
    %v4182 = vpop.f32.mrb[0].mxu0
    %v4183 = vadd.f32 %v4142, %v4182
    %v4184 = vpop.f32.mrb[0].mxu0
    %v4185 = vpop.f32.mrb[0].mxu0
    %4186 = vdwg.mxu0
    %4187 = vmatprep.subr.bf16.mxu0 %v3895
    %4188 = vmatpush1.bf16.msra.mxu0 %v3894
    %4189 = vmatprep.subr.bf16.mxu0 %v3903
    %4190 = vmatpush1.bf16.msra.mxu0 %v3902
    %4191 = vmatprep.subr.bf16.mxu0 %v3911
    %4192 = vmatpush1.bf16.msra.mxu0 %v3910
    %4193 = vmatprep.subr.bf16.mxu0 %v3919
    %4194 = vmatpush1.bf16.msra.mxu0 %v3918
    %4195 = vmatprep.subr.bf16.mxu0 %v3927
    %4196 = vmatpush1.bf16.msra.mxu0 %v3926
    %4197 = vmatprep.subr.bf16.mxu0 %v3935
    %4198 = vmatpush1.bf16.msra.mxu0 %v3934
    %4199 = vmatprep.subr.bf16.mxu0 %v3943
    %4200 = vmatpush1.bf16.msra.mxu0 %v3942
    %4201 = vmatprep.subr.bf16.mxu0 %v3951
    %4202 = vmatpush1.bf16.msra.mxu0 %v3950
    %4203 = vmatprep.subr.bf16.mxu0 %v3959
    %4204 = vmatpush1.bf16.msra.mxu0 %v3958
    %4205 = vmatprep.subr.bf16.mxu0 %v3967
    %4206 = vmatpush1.bf16.msra.mxu0 %v3966
    %4207 = vmatprep.subr.bf16.mxu0 %v3975
    %4208 = vmatpush1.bf16.msra.mxu0 %v3974
    %4209 = vmatprep.subr.bf16.mxu0 %v3983
    %4210 = vmatpush1.bf16.msra.mxu0 %v3982
    %4211 = vmatprep.subr.bf16.mxu0 %v3991
    %4212 = vmatpush1.bf16.msra.mxu0 %v3990
    %4213 = vmatprep.subr.bf16.mxu0 %v3999
    %4214 = vmatpush1.bf16.msra.mxu0 %v3998
    %4215 = vmatprep.subr.bf16.mxu0 %v4007
    %4216 = vmatpush1.bf16.msra.mxu0 %v4006
    %4217 = vmatprep.subr.bf16.mxu0 %v4015
    %4218 = vmatpush1.bf16.msra.mxu0 %v4014
    %4219 = vmatprep.mubr.bf16.mxu0 %v3473
    %4220 = vmatmul.mubr.bf16.gmra.mrb[0].mxu0 %v3472
    %v4221 = vpop.f32.mrb[0].mxu0
    %v4222 = vadd.f32 %v4181, %v4221
    %v4223 = vpop.f32.mrb[0].mxu0
    %v4224 = vadd.f32 %v4183, %v4223
    %v4225 = vpop.f32.mrb[0].mxu0
    %v4226 = vpop.f32.mrb[0].mxu0
    %4227 = vdwg.mxu0
    %4228 = vmatprep.subr.bf16.mxu0 %v3513
    %4229 = vmatpush1.bf16.msra.mxu0 %v3512
    %4230 = vmatprep.subr.bf16.mxu0 %v3521
    %4231 = vmatpush1.bf16.msra.mxu0 %v3520
    %4232 = vmatprep.subr.bf16.mxu0 %v3529
    %4233 = vmatpush1.bf16.msra.mxu0 %v3528
    %4234 = vmatprep.subr.bf16.mxu0 %v3537
    %4235 = vmatpush1.bf16.msra.mxu0 %v3536
    %4236 = vmatprep.subr.bf16.mxu0 %v3545
    %4237 = vmatpush1.bf16.msra.mxu0 %v3544
    %4238 = vmatprep.subr.bf16.mxu0 %v3553
    %4239 = vmatpush1.bf16.msra.mxu0 %v3552
    %4240 = vmatprep.subr.bf16.mxu0 %v3561
    %4241 = vmatpush1.bf16.msra.mxu0 %v3560
    %4242 = vmatprep.subr.bf16.mxu0 %v3569
    %4243 = vmatpush1.bf16.msra.mxu0 %v3568
    %4244 = vmatprep.subr.bf16.mxu0 %v3577
    %4245 = vmatpush1.bf16.msra.mxu0 %v3576
    %4246 = vmatprep.subr.bf16.mxu0 %v3585
    %4247 = vmatpush1.bf16.msra.mxu0 %v3584
    %4248 = vmatprep.subr.bf16.mxu0 %v3593
    %4249 = vmatpush1.bf16.msra.mxu0 %v3592
    %4250 = vmatprep.subr.bf16.mxu0 %v3601
    %4251 = vmatpush1.bf16.msra.mxu0 %v3600
    %4252 = vmatprep.subr.bf16.mxu0 %v3609
    %4253 = vmatpush1.bf16.msra.mxu0 %v3608
    %4254 = vmatprep.subr.bf16.mxu0 %v3617
    %4255 = vmatpush1.bf16.msra.mxu0 %v3616
    %4256 = vmatprep.subr.bf16.mxu0 %v3625
    %4257 = vmatpush1.bf16.msra.mxu0 %v3624
    %4258 = vmatprep.subr.bf16.mxu0 %v3633
    %4259 = vmatpush1.bf16.msra.mxu0 %v3632
    %4260 = vmatprep.mubr.bf16.mxu0 %v3467
    %4261 = vmatmul.mubr.bf16.gmra.mrb[0].mxu0 %v3466
    %v4262 = vpop.f32.mrb[0].mxu0
    %v4263 = vadd.f32 %v4035, %v4262
    %v4264 = vpop.f32.mrb[0].mxu0
    %v4265 = vadd.f32 %v4039, %v4264
    %v4266 = vpop.f32.mrb[0].mxu0
    %v4267 = vpop.f32.mrb[0].mxu0
    %4268 = vdwg.mxu0
    %4269 = vmatprep.subr.bf16.mxu0 %v3641
    %4270 = vmatpush1.bf16.msra.mxu0 %v3640
    %4271 = vmatprep.subr.bf16.mxu0 %v3649
    %4272 = vmatpush1.bf16.msra.mxu0 %v3648
    %4273 = vmatprep.subr.bf16.mxu0 %v3657
    %4274 = vmatpush1.bf16.msra.mxu0 %v3656
    %4275 = vmatprep.subr.bf16.mxu0 %v3665
    %4276 = vmatpush1.bf16.msra.mxu0 %v3664
    %4277 = vmatprep.subr.bf16.mxu0 %v3673
    %4278 = vmatpush1.bf16.msra.mxu0 %v3672
    %4279 = vmatprep.subr.bf16.mxu0 %v3681
    %4280 = vmatpush1.bf16.msra.mxu0 %v3680
    %4281 = vmatprep.subr.bf16.mxu0 %v3689
    %4282 = vmatpush1.bf16.msra.mxu0 %v3688
    %4283 = vmatprep.subr.bf16.mxu0 %v3697
    %4284 = vmatpush1.bf16.msra.mxu0 %v3696
    %4285 = vmatprep.subr.bf16.mxu0 %v3705
    %4286 = vmatpush1.bf16.msra.mxu0 %v3704
    %4287 = vmatprep.subr.bf16.mxu0 %v3713
    %4288 = vmatpush1.bf16.msra.mxu0 %v3712
    %4289 = vmatprep.subr.bf16.mxu0 %v3721
    %4290 = vmatpush1.bf16.msra.mxu0 %v3720
    %4291 = vmatprep.subr.bf16.mxu0 %v3729
    %4292 = vmatpush1.bf16.msra.mxu0 %v3728
    %4293 = vmatprep.subr.bf16.mxu0 %v3737
    %4294 = vmatpush1.bf16.msra.mxu0 %v3736
    %4295 = vmatprep.subr.bf16.mxu0 %v3745
    %4296 = vmatpush1.bf16.msra.mxu0 %v3744
    %4297 = vmatprep.subr.bf16.mxu0 %v3753
    %4298 = vmatpush1.bf16.msra.mxu0 %v3752
    %4299 = vmatprep.subr.bf16.mxu0 %v3761
    %4300 = vmatpush1.bf16.msra.mxu0 %v3760
    %4301 = vmatprep.mubr.bf16.mxu0 %v3469
    %4302 = vmatmul.mubr.bf16.gmra.mrb[0].mxu0 %v3468
    %v4303 = vpop.f32.mrb[0].mxu0
    %v4304 = vadd.f32 %v4263, %v4303
    %v4305 = vpop.f32.mrb[0].mxu0
    %v4306 = vadd.f32 %v4265, %v4305
    %v4307 = vpop.f32.mrb[0].mxu0
    %v4308 = vpop.f32.mrb[0].mxu0
    %4309 = vdwg.mxu0
    %4310 = vmatprep.subr.bf16.mxu0 %v3769
    %4311 = vmatpush1.bf16.msra.mxu0 %v3768
    %4312 = vmatprep.subr.bf16.mxu0 %v3777
    %4313 = vmatpush1.bf16.msra.mxu0 %v3776
    %4314 = vmatprep.subr.bf16.mxu0 %v3785
    %4315 = vmatpush1.bf16.msra.mxu0 %v3784
    %4316 = vmatprep.subr.bf16.mxu0 %v3793
    %4317 = vmatpush1.bf16.msra.mxu0 %v3792
    %4318 = vmatprep.subr.bf16.mxu0 %v3801
    %4319 = vmatpush1.bf16.msra.mxu0 %v3800
    %4320 = vmatprep.subr.bf16.mxu0 %v3809
    %4321 = vmatpush1.bf16.msra.mxu0 %v3808
    %4322 = vmatprep.subr.bf16.mxu0 %v3817
    %4323 = vmatpush1.bf16.msra.mxu0 %v3816
    %4324 = vmatprep.subr.bf16.mxu0 %v3825
    %4325 = vmatpush1.bf16.msra.mxu0 %v3824
    %4326 = vmatprep.subr.bf16.mxu0 %v3833
    %4327 = vmatpush1.bf16.msra.mxu0 %v3832
    %4328 = vmatprep.subr.bf16.mxu0 %v3841
    %4329 = vmatpush1.bf16.msra.mxu0 %v3840
    %4330 = vmatprep.subr.bf16.mxu0 %v3849
    %4331 = vmatpush1.bf16.msra.mxu0 %v3848
    %4332 = vmatprep.subr.bf16.mxu0 %v3857
    %4333 = vmatpush1.bf16.msra.mxu0 %v3856
    %4334 = vmatprep.subr.bf16.mxu0 %v3865
    %4335 = vmatpush1.bf16.msra.mxu0 %v3864
    %4336 = vmatprep.subr.bf16.mxu0 %v3873
    %4337 = vmatpush1.bf16.msra.mxu0 %v3872
    %4338 = vmatprep.subr.bf16.mxu0 %v3881
    %4339 = vmatpush1.bf16.msra.mxu0 %v3880
    %4340 = vmatprep.subr.bf16.mxu0 %v3889
    %4341 = vmatpush1.bf16.msra.mxu0 %v3888
    %4342 = vmatprep.mubr.bf16.mxu0 %v3471
    %4343 = vmatmul.mubr.bf16.gmra.mrb[0].mxu0 %v3470
    %v4344 = vpop.f32.mrb[0].mxu0
    %v4345 = vadd.f32 %v4304, %v4344
    %v4346 = vpop.f32.mrb[0].mxu0
    %v4347 = vadd.f32 %v4306, %v4346
    %v4348 = vpop.f32.mrb[0].mxu0
    %v4349 = vpop.f32.mrb[0].mxu0
    %4350 = vdwg.mxu0
    %4351 = vmatprep.subr.bf16.mxu0 %v3897
    %4352 = vmatpush1.bf16.msra.mxu0 %v3896
    %4353 = vmatprep.subr.bf16.mxu0 %v3905
    %4354 = vmatpush1.bf16.msra.mxu0 %v3904
    %4355 = vmatprep.subr.bf16.mxu0 %v3913
    %4356 = vmatpush1.bf16.msra.mxu0 %v3912
    %4357 = vmatprep.subr.bf16.mxu0 %v3921
    %4358 = vmatpush1.bf16.msra.mxu0 %v3920
    %4359 = vmatprep.subr.bf16.mxu0 %v3929
    %4360 = vmatpush1.bf16.msra.mxu0 %v3928
    %4361 = vmatprep.subr.bf16.mxu0 %v3937
    %4362 = vmatpush1.bf16.msra.mxu0 %v3936
    %4363 = vmatprep.subr.bf16.mxu0 %v3945
    %4364 = vmatpush1.bf16.msra.mxu0 %v3944
    %4365 = vmatprep.subr.bf16.mxu0 %v3953
    %4366 = vmatpush1.bf16.msra.mxu0 %v3952
    %4367 = vmatprep.subr.bf16.mxu0 %v3961
    %4368 = vmatpush1.bf16.msra.mxu0 %v3960
    %4369 = vmatprep.subr.bf16.mxu0 %v3969
    %4370 = vmatpush1.bf16.msra.mxu0 %v3968
    %4371 = vmatprep.subr.bf16.mxu0 %v3977
    %4372 = vmatpush1.bf16.msra.mxu0 %v3976
    %4373 = vmatprep.subr.bf16.mxu0 %v3985
    %4374 = vmatpush1.bf16.msra.mxu0 %v3984
    %4375 = vmatprep.subr.bf16.mxu0 %v3993
    %4376 = vmatpush1.bf16.msra.mxu0 %v3992
    %4377 = vmatprep.subr.bf16.mxu0 %v4001
    %4378 = vmatpush1.bf16.msra.mxu0 %v4000
    %4379 = vmatprep.subr.bf16.mxu0 %v4009
    %4380 = vmatpush1.bf16.msra.mxu0 %v4008
    %4381 = vmatprep.subr.bf16.mxu0 %v4017
    %4382 = vmatpush1.bf16.msra.mxu0 %v4016
    %4383 = vmatprep.mubr.bf16.mxu0 %v3473
    %4384 = vmatmul.mubr.bf16.gmra.mrb[0].mxu0 %v3472
    %v4385 = vpop.f32.mrb[0].mxu0
    %v4386 = vadd.f32 %v4345, %v4385
    %v4387 = vpop.f32.mrb[0].mxu0
    %v4388 = vadd.f32 %v4347, %v4387
    %v4389 = vpop.f32.mrb[0].mxu0
    %v4390 = vpop.f32.mrb[0].mxu0
    %4391 = vdwg.mxu0
    %4392 = vmatprep.subr.bf16.mxu0 %v3515
    %4393 = vmatpush1.bf16.msra.mxu0 %v3514
    %4394 = vmatprep.subr.bf16.mxu0 %v3523
    %4395 = vmatpush1.bf16.msra.mxu0 %v3522
    %4396 = vmatprep.subr.bf16.mxu0 %v3531
    %4397 = vmatpush1.bf16.msra.mxu0 %v3530
    %4398 = vmatprep.subr.bf16.mxu0 %v3539
    %4399 = vmatpush1.bf16.msra.mxu0 %v3538
    %4400 = vmatprep.subr.bf16.mxu0 %v3547
    %4401 = vmatpush1.bf16.msra.mxu0 %v3546
    %4402 = vmatprep.subr.bf16.mxu0 %v3555
    %4403 = vmatpush1.bf16.msra.mxu0 %v3554
    %4404 = vmatprep.subr.bf16.mxu0 %v3563
    %4405 = vmatpush1.bf16.msra.mxu0 %v3562
    %4406 = vmatprep.subr.bf16.mxu0 %v3571
    %4407 = vmatpush1.bf16.msra.mxu0 %v3570
    %4408 = vmatprep.subr.bf16.mxu0 %v3579
    %4409 = vmatpush1.bf16.msra.mxu0 %v3578
    %4410 = vmatprep.subr.bf16.mxu0 %v3587
    %4411 = vmatpush1.bf16.msra.mxu0 %v3586
    %4412 = vmatprep.subr.bf16.mxu0 %v3595
    %4413 = vmatpush1.bf16.msra.mxu0 %v3594
    %4414 = vmatprep.subr.bf16.mxu0 %v3603
    %4415 = vmatpush1.bf16.msra.mxu0 %v3602
    %4416 = vmatprep.subr.bf16.mxu0 %v3611
    %4417 = vmatpush1.bf16.msra.mxu0 %v3610
    %4418 = vmatprep.subr.bf16.mxu0 %v3619
    %4419 = vmatpush1.bf16.msra.mxu0 %v3618
    %4420 = vmatprep.subr.bf16.mxu0 %v3627
    %4421 = vmatpush1.bf16.msra.mxu0 %v3626
    %4422 = vmatprep.subr.bf16.mxu0 %v3635
    %4423 = vmatpush1.bf16.msra.mxu0 %v3634
    %4424 = vmatprep.mubr.bf16.mxu0 %v3467
    %4425 = vmatmul.mubr.bf16.gmra.mrb[0].mxu0 %v3466
    %v4426 = vpop.f32.mrb[0].mxu0
    %v4427 = vadd.f32 %v4043, %v4426
    %v4428 = vpop.f32.mrb[0].mxu0
    %v4429 = vadd.f32 %v4047, %v4428
    %v4430 = vpop.f32.mrb[0].mxu0
    %v4431 = vpop.f32.mrb[0].mxu0
    %4432 = vdwg.mxu0
    %4433 = vmatprep.subr.bf16.mxu0 %v3643
    %4434 = vmatpush1.bf16.msra.mxu0 %v3642
    %4435 = vmatprep.subr.bf16.mxu0 %v3651
    %4436 = vmatpush1.bf16.msra.mxu0 %v3650
    %4437 = vmatprep.subr.bf16.mxu0 %v3659
    %4438 = vmatpush1.bf16.msra.mxu0 %v3658
    %4439 = vmatprep.subr.bf16.mxu0 %v3667
    %4440 = vmatpush1.bf16.msra.mxu0 %v3666
    %4441 = vmatprep.subr.bf16.mxu0 %v3675
    %4442 = vmatpush1.bf16.msra.mxu0 %v3674
    %4443 = vmatprep.subr.bf16.mxu0 %v3683
    %4444 = vmatpush1.bf16.msra.mxu0 %v3682
    %4445 = vmatprep.subr.bf16.mxu0 %v3691
    %4446 = vmatpush1.bf16.msra.mxu0 %v3690
    %4447 = vmatprep.subr.bf16.mxu0 %v3699
    %4448 = vmatpush1.bf16.msra.mxu0 %v3698
    %4449 = vmatprep.subr.bf16.mxu0 %v3707
    %4450 = vmatpush1.bf16.msra.mxu0 %v3706
    %4451 = vmatprep.subr.bf16.mxu0 %v3715
    %4452 = vmatpush1.bf16.msra.mxu0 %v3714
    %4453 = vmatprep.subr.bf16.mxu0 %v3723
    %4454 = vmatpush1.bf16.msra.mxu0 %v3722
    %4455 = vmatprep.subr.bf16.mxu0 %v3731
    %4456 = vmatpush1.bf16.msra.mxu0 %v3730
    %4457 = vmatprep.subr.bf16.mxu0 %v3739
    %4458 = vmatpush1.bf16.msra.mxu0 %v3738
    %4459 = vmatprep.subr.bf16.mxu0 %v3747
    %4460 = vmatpush1.bf16.msra.mxu0 %v3746
    %4461 = vmatprep.subr.bf16.mxu0 %v3755
    %4462 = vmatpush1.bf16.msra.mxu0 %v3754
    %4463 = vmatprep.subr.bf16.mxu0 %v3763
    %4464 = vmatpush1.bf16.msra.mxu0 %v3762
    %4465 = vmatprep.mubr.bf16.mxu0 %v3469
    %4466 = vmatmul.mubr.bf16.gmra.mrb[0].mxu0 %v3468
    %v4467 = vpop.f32.mrb[0].mxu0
    %v4468 = vadd.f32 %v4427, %v4467
    %v4469 = vpop.f32.mrb[0].mxu0
    %v4470 = vadd.f32 %v4429, %v4469
    %v4471 = vpop.f32.mrb[0].mxu0
    %v4472 = vpop.f32.mrb[0].mxu0
    %4473 = vdwg.mxu0
    %4474 = vmatprep.subr.bf16.mxu0 %v3771
    %4475 = vmatpush1.bf16.msra.mxu0 %v3770
    %4476 = vmatprep.subr.bf16.mxu0 %v3779
    %4477 = vmatpush1.bf16.msra.mxu0 %v3778
    %4478 = vmatprep.subr.bf16.mxu0 %v3787
    %4479 = vmatpush1.bf16.msra.mxu0 %v3786
    %4480 = vmatprep.subr.bf16.mxu0 %v3795
    %4481 = vmatpush1.bf16.msra.mxu0 %v3794
    %4482 = vmatprep.subr.bf16.mxu0 %v3803
    %4483 = vmatpush1.bf16.msra.mxu0 %v3802
    %4484 = vmatprep.subr.bf16.mxu0 %v3811
    %4485 = vmatpush1.bf16.msra.mxu0 %v3810
    %4486 = vmatprep.subr.bf16.mxu0 %v3819
    %4487 = vmatpush1.bf16.msra.mxu0 %v3818
    %4488 = vmatprep.subr.bf16.mxu0 %v3827
    %4489 = vmatpush1.bf16.msra.mxu0 %v3826
    %4490 = vmatprep.subr.bf16.mxu0 %v3835
    %4491 = vmatpush1.bf16.msra.mxu0 %v3834
    %4492 = vmatprep.subr.bf16.mxu0 %v3843
    %4493 = vmatpush1.bf16.msra.mxu0 %v3842
    %4494 = vmatprep.subr.bf16.mxu0 %v3851
    %4495 = vmatpush1.bf16.msra.mxu0 %v3850
    %4496 = vmatprep.subr.bf16.mxu0 %v3859
    %4497 = vmatpush1.bf16.msra.mxu0 %v3858
    %4498 = vmatprep.subr.bf16.mxu0 %v3867
    %4499 = vmatpush1.bf16.msra.mxu0 %v3866
    %4500 = vmatprep.subr.bf16.mxu0 %v3875
    %4501 = vmatpush1.bf16.msra.mxu0 %v3874
    %4502 = vmatprep.subr.bf16.mxu0 %v3883
    %4503 = vmatpush1.bf16.msra.mxu0 %v3882
    %4504 = vmatprep.subr.bf16.mxu0 %v3891
    %4505 = vmatpush1.bf16.msra.mxu0 %v3890
    %4506 = vmatprep.mubr.bf16.mxu0 %v3471
    %4507 = vmatmul.mubr.bf16.gmra.mrb[0].mxu0 %v3470
    %v4508 = vpop.f32.mrb[0].mxu0
    %v4509 = vadd.f32 %v4468, %v4508
    %v4510 = vpop.f32.mrb[0].mxu0
    %v4511 = vadd.f32 %v4470, %v4510
    %v4512 = vpop.f32.mrb[0].mxu0
    %v4513 = vpop.f32.mrb[0].mxu0
    %4514 = vdwg.mxu0
    %4515 = vmatprep.subr.bf16.mxu0 %v3899
    %4516 = vmatpush1.bf16.msra.mxu0 %v3898
    %4517 = vmatprep.subr.bf16.mxu0 %v3907
    %4518 = vmatpush1.bf16.msra.mxu0 %v3906
    %4519 = vmatprep.subr.bf16.mxu0 %v3915
    %4520 = vmatpush1.bf16.msra.mxu0 %v3914
    %4521 = vmatprep.subr.bf16.mxu0 %v3923
    %4522 = vmatpush1.bf16.msra.mxu0 %v3922
    %4523 = vmatprep.subr.bf16.mxu0 %v3931
    %4524 = vmatpush1.bf16.msra.mxu0 %v3930
    %4525 = vmatprep.subr.bf16.mxu0 %v3939
    %4526 = vmatpush1.bf16.msra.mxu0 %v3938
    %4527 = vmatprep.subr.bf16.mxu0 %v3947
    %4528 = vmatpush1.bf16.msra.mxu0 %v3946
    %4529 = vmatprep.subr.bf16.mxu0 %v3955
    %4530 = vmatpush1.bf16.msra.mxu0 %v3954
    %4531 = vmatprep.subr.bf16.mxu0 %v3963
    %4532 = vmatpush1.bf16.msra.mxu0 %v3962
    %4533 = vmatprep.subr.bf16.mxu0 %v3971
    %4534 = vmatpush1.bf16.msra.mxu0 %v3970
    %4535 = vmatprep.subr.bf16.mxu0 %v3979
    %4536 = vmatpush1.bf16.msra.mxu0 %v3978
    %4537 = vmatprep.subr.bf16.mxu0 %v3987
    %4538 = vmatpush1.bf16.msra.mxu0 %v3986
    %4539 = vmatprep.subr.bf16.mxu0 %v3995
    %4540 = vmatpush1.bf16.msra.mxu0 %v3994
    %4541 = vmatprep.subr.bf16.mxu0 %v4003
    %4542 = vmatpush1.bf16.msra.mxu0 %v4002
    %4543 = vmatprep.subr.bf16.mxu0 %v4011
    %4544 = vmatpush1.bf16.msra.mxu0 %v4010
    %4545 = vmatprep.subr.bf16.mxu0 %v4019
    %4546 = vmatpush1.bf16.msra.mxu0 %v4018
    %4547 = vmatprep.mubr.bf16.mxu0 %v3473
    %4548 = vmatmul.mubr.bf16.gmra.mrb[0].mxu0 %v3472
    %v4549 = vpop.f32.mrb[0].mxu0
    %v4550 = vadd.f32 %v4509, %v4549
    %v4551 = vpop.f32.mrb[0].mxu0
    %v4552 = vadd.f32 %v4511, %v4551
    %v4553 = vpop.f32.mrb[0].mxu0
    %v4554 = vpop.f32.mrb[0].mxu0
    %4555 = vdwg.mxu0
    %4556 = vmatprep.subr.bf16.mxu0 %v3517
    %4557 = vmatpush1.bf16.msra.mxu0 %v3516
    %4558 = vmatprep.subr.bf16.mxu0 %v3525
    %4559 = vmatpush1.bf16.msra.mxu0 %v3524
    %4560 = vmatprep.subr.bf16.mxu0 %v3533
    %4561 = vmatpush1.bf16.msra.mxu0 %v3532
    %4562 = vmatprep.subr.bf16.mxu0 %v3541
    %4563 = vmatpush1.bf16.msra.mxu0 %v3540
    %4564 = vmatprep.subr.bf16.mxu0 %v3549
    %4565 = vmatpush1.bf16.msra.mxu0 %v3548
    %4566 = vmatprep.subr.bf16.mxu0 %v3557
    %4567 = vmatpush1.bf16.msra.mxu0 %v3556
    %4568 = vmatprep.subr.bf16.mxu0 %v3565
    %4569 = vmatpush1.bf16.msra.mxu0 %v3564
    %4570 = vmatprep.subr.bf16.mxu0 %v3573
    %4571 = vmatpush1.bf16.msra.mxu0 %v3572
    %4572 = vmatprep.subr.bf16.mxu0 %v3581
    %4573 = vmatpush1.bf16.msra.mxu0 %v3580
    %4574 = vmatprep.subr.bf16.mxu0 %v3589
    %4575 = vmatpush1.bf16.msra.mxu0 %v3588
    %4576 = vmatprep.subr.bf16.mxu0 %v3597
    %4577 = vmatpush1.bf16.msra.mxu0 %v3596
    %4578 = vmatprep.subr.bf16.mxu0 %v3605
    %4579 = vmatpush1.bf16.msra.mxu0 %v3604
    %4580 = vmatprep.subr.bf16.mxu0 %v3613
    %4581 = vmatpush1.bf16.msra.mxu0 %v3612
    %4582 = vmatprep.subr.bf16.mxu0 %v3621
    %4583 = vmatpush1.bf16.msra.mxu0 %v3620
    %4584 = vmatprep.subr.bf16.mxu0 %v3629
    %4585 = vmatpush1.bf16.msra.mxu0 %v3628
    %4586 = vmatprep.subr.bf16.mxu0 %v3637
    %4587 = vmatpush1.bf16.msra.mxu0 %v3636
    %4588 = vmatprep.mubr.bf16.mxu0 %v3467
    %4589 = vmatmul.mubr.bf16.gmra.mrb[0].mxu0 %v3466
    %v4590 = vpop.f32.mrb[0].mxu0
    %v4591 = vadd.f32 %v4051, %v4590
    %v4592 = vpop.f32.mrb[0].mxu0
    %v4593 = vadd.f32 %v4055, %v4592
    %v4594 = vpop.f32.mrb[0].mxu0
    %v4595 = vpop.f32.mrb[0].mxu0
    %4596 = vdwg.mxu0
    %4597 = vmatprep.subr.bf16.mxu0 %v3645
    %4598 = vmatpush1.bf16.msra.mxu0 %v3644
    %4599 = vmatprep.subr.bf16.mxu0 %v3653
    %4600 = vmatpush1.bf16.msra.mxu0 %v3652
    %4601 = vmatprep.subr.bf16.mxu0 %v3661
    %4602 = vmatpush1.bf16.msra.mxu0 %v3660
    %4603 = vmatprep.subr.bf16.mxu0 %v3669
    %4604 = vmatpush1.bf16.msra.mxu0 %v3668
    %4605 = vmatprep.subr.bf16.mxu0 %v3677
    %4606 = vmatpush1.bf16.msra.mxu0 %v3676
    %4607 = vmatprep.subr.bf16.mxu0 %v3685
    %4608 = vmatpush1.bf16.msra.mxu0 %v3684
    %4609 = vmatprep.subr.bf16.mxu0 %v3693
    %4610 = vmatpush1.bf16.msra.mxu0 %v3692
    %4611 = vmatprep.subr.bf16.mxu0 %v3701
    %4612 = vmatpush1.bf16.msra.mxu0 %v3700
    %4613 = vmatprep.subr.bf16.mxu0 %v3709
    %4614 = vmatpush1.bf16.msra.mxu0 %v3708
    %4615 = vmatprep.subr.bf16.mxu0 %v3717
    %4616 = vmatpush1.bf16.msra.mxu0 %v3716
    %4617 = vmatprep.subr.bf16.mxu0 %v3725
    %4618 = vmatpush1.bf16.msra.mxu0 %v3724
    %4619 = vmatprep.subr.bf16.mxu0 %v3733
    %4620 = vmatpush1.bf16.msra.mxu0 %v3732
    %4621 = vmatprep.subr.bf16.mxu0 %v3741
    %4622 = vmatpush1.bf16.msra.mxu0 %v3740
    %4623 = vmatprep.subr.bf16.mxu0 %v3749
    %4624 = vmatpush1.bf16.msra.mxu0 %v3748
    %4625 = vmatprep.subr.bf16.mxu0 %v3757
    %4626 = vmatpush1.bf16.msra.mxu0 %v3756
    %4627 = vmatprep.subr.bf16.mxu0 %v3765
    %4628 = vmatpush1.bf16.msra.mxu0 %v3764
    %4629 = vmatprep.mubr.bf16.mxu0 %v3469
    %4630 = vmatmul.mubr.bf16.gmra.mrb[0].mxu0 %v3468
    %v4631 = vpop.f32.mrb[0].mxu0
    %v4632 = vadd.f32 %v4591, %v4631
    %v4633 = vpop.f32.mrb[0].mxu0
    %v4634 = vadd.f32 %v4593, %v4633
    %v4635 = vpop.f32.mrb[0].mxu0
    %v4636 = vpop.f32.mrb[0].mxu0
    %4637 = vdwg.mxu0
    %4638 = vmatprep.subr.bf16.mxu0 %v3773
    %4639 = vmatpush1.bf16.msra.mxu0 %v3772
    %4640 = vmatprep.subr.bf16.mxu0 %v3781
    %4641 = vmatpush1.bf16.msra.mxu0 %v3780
    %4642 = vmatprep.subr.bf16.mxu0 %v3789
    %4643 = vmatpush1.bf16.msra.mxu0 %v3788
    %4644 = vmatprep.subr.bf16.mxu0 %v3797
    %4645 = vmatpush1.bf16.msra.mxu0 %v3796
    %4646 = vmatprep.subr.bf16.mxu0 %v3805
    %4647 = vmatpush1.bf16.msra.mxu0 %v3804
    %4648 = vmatprep.subr.bf16.mxu0 %v3813
    %4649 = vmatpush1.bf16.msra.mxu0 %v3812
    %4650 = vmatprep.subr.bf16.mxu0 %v3821
    %4651 = vmatpush1.bf16.msra.mxu0 %v3820
    %4652 = vmatprep.subr.bf16.mxu0 %v3829
    %4653 = vmatpush1.bf16.msra.mxu0 %v3828
    %4654 = vmatprep.subr.bf16.mxu0 %v3837
    %4655 = vmatpush1.bf16.msra.mxu0 %v3836
    %4656 = vmatprep.subr.bf16.mxu0 %v3845
    %4657 = vmatpush1.bf16.msra.mxu0 %v3844
    %4658 = vmatprep.subr.bf16.mxu0 %v3853
    %4659 = vmatpush1.bf16.msra.mxu0 %v3852
    %4660 = vmatprep.subr.bf16.mxu0 %v3861
    %4661 = vmatpush1.bf16.msra.mxu0 %v3860
    %4662 = vmatprep.subr.bf16.mxu0 %v3869
    %4663 = vmatpush1.bf16.msra.mxu0 %v3868
    %4664 = vmatprep.subr.bf16.mxu0 %v3877
    %4665 = vmatpush1.bf16.msra.mxu0 %v3876
    %4666 = vmatprep.subr.bf16.mxu0 %v3885
    %4667 = vmatpush1.bf16.msra.mxu0 %v3884
    %4668 = vmatprep.subr.bf16.mxu0 %v3893
    %4669 = vmatpush1.bf16.msra.mxu0 %v3892
    %4670 = vmatprep.mubr.bf16.mxu0 %v3471
    %4671 = vmatmul.mubr.bf16.gmra.mrb[0].mxu0 %v3470
    %v4672 = vpop.f32.mrb[0].mxu0
    %v4673 = vadd.f32 %v4632, %v4672
    %v4674 = vpop.f32.mrb[0].mxu0
    %v4675 = vadd.f32 %v4634, %v4674
    %v4676 = vpop.f32.mrb[0].mxu0
    %v4677 = vpop.f32.mrb[0].mxu0
    %4678 = vdwg.mxu0
    %4679 = vmatprep.subr.bf16.mxu0 %v3901
    %4680 = vmatpush1.bf16.msra.mxu0 %v3900
    %4681 = vmatprep.subr.bf16.mxu0 %v3909
    %4682 = vmatpush1.bf16.msra.mxu0 %v3908
    %4683 = vmatprep.subr.bf16.mxu0 %v3917
    %4684 = vmatpush1.bf16.msra.mxu0 %v3916
    %4685 = vmatprep.subr.bf16.mxu0 %v3925
    %4686 = vmatpush1.bf16.msra.mxu0 %v3924
    %4687 = vmatprep.subr.bf16.mxu0 %v3933
    %4688 = vmatpush1.bf16.msra.mxu0 %v3932
    %4689 = vmatprep.subr.bf16.mxu0 %v3941
    %4690 = vmatpush1.bf16.msra.mxu0 %v3940
    %4691 = vmatprep.subr.bf16.mxu0 %v3949
    %4692 = vmatpush1.bf16.msra.mxu0 %v3948
    %4693 = vmatprep.subr.bf16.mxu0 %v3957
    %4694 = vmatpush1.bf16.msra.mxu0 %v3956
    %4695 = vmatprep.subr.bf16.mxu0 %v3965
    %4696 = vmatpush1.bf16.msra.mxu0 %v3964
    %4697 = vmatprep.subr.bf16.mxu0 %v3973
    %4698 = vmatpush1.bf16.msra.mxu0 %v3972
    %4699 = vmatprep.subr.bf16.mxu0 %v3981
    %4700 = vmatpush1.bf16.msra.mxu0 %v3980
    %4701 = vmatprep.subr.bf16.mxu0 %v3989
    %4702 = vmatpush1.bf16.msra.mxu0 %v3988
    %4703 = vmatprep.subr.bf16.mxu0 %v3997
    %4704 = vmatpush1.bf16.msra.mxu0 %v3996
    %4705 = vmatprep.subr.bf16.mxu0 %v4005
    %4706 = vmatpush1.bf16.msra.mxu0 %v4004
    %4707 = vmatprep.subr.bf16.mxu0 %v4013
    %4708 = vmatpush1.bf16.msra.mxu0 %v4012
    %4709 = vmatprep.subr.bf16.mxu0 %v4021
    %4710 = vmatpush1.bf16.msra.mxu0 %v4020
    %4711 = vmatprep.mubr.bf16.mxu0 %v3473
    %4712 = vmatmul.mubr.bf16.gmra.mrb[0].mxu0 %v3472
    %v4713 = vpop.f32.mrb[0].mxu0
    %v4714 = vadd.f32 %v4673, %v4713
    %v4715 = vpop.f32.mrb[0].mxu0
    %v4716 = vadd.f32 %v4675, %v4715
    %v4717 = vpop.f32.mrb[0].mxu0
    %v4718 = vpop.f32.mrb[0].mxu0
    %4719 = vdwg.mxu0
    %v4720 = vmax.f32 %v4222, 0.0
    %v4721 = vmax.f32 %v4224, 0.0
    %v4722 = vmax.f32 %v4386, 0.0
    %v4723 = vmax.f32 %v4388, 0.0
    %v4724 = vmax.f32 %v4550, 0.0
    %v4725 = vmax.f32 %v4552, 0.0
    %v4726 = vmax.f32 %v4714, 0.0
    %v4727 = vmax.f32 %v4716, 0.0
    %v4728 = vpack.c.bf16 %v4720, %v4720
    %v4729 = vpack.c.bf16 %v4721, %v4721
    %v4730 = vpack.c.bf16 %v4722, %v4722
    %v4731 = vpack.c.bf16 %v4723, %v4723
    %v4732 = vpack.c.bf16 %v4724, %v4724
    %v4733 = vpack.c.bf16 %v4725, %v4725
    %v4734 = vpack.c.bf16 %v4726, %v4726
    %v4735 = vpack.c.bf16 %v4727, %v4727
    %s4736 = sshll.u32 %s2159, 4
    %4737 = dma.done %s151, %s4736
    %v4738 = vld [vmem:[%s150] sm:$0xff]
    %v4739 = vld [vmem:[%s150 + $0x8] sm:$0xff]
    %v4740 = vld [vmem:[%s150 + $0x10] sm:$0xff]
    %v4741 = vld [vmem:[%s150 + $0x18] sm:$0xff]
    %v4742 = vld [vmem:[%s150 + $0x40] sm:$0xff]
    %v4743 = vld [vmem:[%s150 + $0x48] sm:$0xff]
    %v4744 = vld [vmem:[%s150 + $0x50] sm:$0xff]
    %v4745 = vld [vmem:[%s150 + $0x58] sm:$0xff]
    %v4746 = vld [vmem:[%s150 + $0x80] sm:$0xff]
    %v4747 = vld [vmem:[%s150 + $0x88] sm:$0xff]
    %v4748 = vld [vmem:[%s150 + $0x90] sm:$0xff]
    %v4749 = vld [vmem:[%s150 + $0x98] sm:$0xff]
    %v4750 = vld [vmem:[%s150 + $0xc0] sm:$0xff]
    %v4751 = vld [vmem:[%s150 + $0xc8] sm:$0xff]
    %v4752 = vld [vmem:[%s150 + $0xd0] sm:$0xff]
    %v4753 = vld [vmem:[%s150 + $0xd8] sm:$0xff]
    %v4754 = vld [vmem:[%s150 + $0x100] sm:$0xff]
    %v4755 = vld [vmem:[%s150 + $0x108] sm:$0xff]
    %v4756 = vld [vmem:[%s150 + $0x110] sm:$0xff]
    %v4757 = vld [vmem:[%s150 + $0x118] sm:$0xff]
    %v4758 = vld [vmem:[%s150 + $0x140] sm:$0xff]
    %v4759 = vld [vmem:[%s150 + $0x148] sm:$0xff]
    %v4760 = vld [vmem:[%s150 + $0x150] sm:$0xff]
    %v4761 = vld [vmem:[%s150 + $0x158] sm:$0xff]
    %v4762 = vld [vmem:[%s150 + $0x180] sm:$0xff]
    %v4763 = vld [vmem:[%s150 + $0x188] sm:$0xff]
    %v4764 = vld [vmem:[%s150 + $0x190] sm:$0xff]
    %v4765 = vld [vmem:[%s150 + $0x198] sm:$0xff]
    %v4766 = vld [vmem:[%s150 + $0x1c0] sm:$0xff]
    %v4767 = vld [vmem:[%s150 + $0x1c8] sm:$0xff]
    %v4768 = vld [vmem:[%s150 + $0x1d0] sm:$0xff]
    %v4769 = vld [vmem:[%s150 + $0x1d8] sm:$0xff]
    %v4770 = vld [vmem:[%s150 + $0x200] sm:$0xff]
    %v4771 = vld [vmem:[%s150 + $0x208] sm:$0xff]
    %v4772 = vld [vmem:[%s150 + $0x210] sm:$0xff]
    %v4773 = vld [vmem:[%s150 + $0x218] sm:$0xff]
    %v4774 = vld [vmem:[%s150 + $0x240] sm:$0xff]
    %v4775 = vld [vmem:[%s150 + $0x248] sm:$0xff]
    %v4776 = vld [vmem:[%s150 + $0x250] sm:$0xff]
    %v4777 = vld [vmem:[%s150 + $0x258] sm:$0xff]
    %v4778 = vld [vmem:[%s150 + $0x280] sm:$0xff]
    %v4779 = vld [vmem:[%s150 + $0x288] sm:$0xff]
    %v4780 = vld [vmem:[%s150 + $0x290] sm:$0xff]
    %v4781 = vld [vmem:[%s150 + $0x298] sm:$0xff]
    %v4782 = vld [vmem:[%s150 + $0x2c0] sm:$0xff]
    %v4783 = vld [vmem:[%s150 + $0x2c8] sm:$0xff]
    %v4784 = vld [vmem:[%s150 + $0x2d0] sm:$0xff]
    %v4785 = vld [vmem:[%s150 + $0x2d8] sm:$0xff]
    %v4786 = vld [vmem:[%s150 + $0x300] sm:$0xff]
    %v4787 = vld [vmem:[%s150 + $0x308] sm:$0xff]
    %v4788 = vld [vmem:[%s150 + $0x310] sm:$0xff]
    %v4789 = vld [vmem:[%s150 + $0x318] sm:$0xff]
    %v4790 = vld [vmem:[%s150 + $0x340] sm:$0xff]
    %v4791 = vld [vmem:[%s150 + $0x348] sm:$0xff]
    %v4792 = vld [vmem:[%s150 + $0x350] sm:$0xff]
    %v4793 = vld [vmem:[%s150 + $0x358] sm:$0xff]
    %v4794 = vld [vmem:[%s150 + $0x380] sm:$0xff]
    %v4795 = vld [vmem:[%s150 + $0x388] sm:$0xff]
    %v4796 = vld [vmem:[%s150 + $0x390] sm:$0xff]
    %v4797 = vld [vmem:[%s150 + $0x398] sm:$0xff]
    %v4798 = vld [vmem:[%s150 + $0x3c0] sm:$0xff]
    %v4799 = vld [vmem:[%s150 + $0x3c8] sm:$0xff]
    %v4800 = vld [vmem:[%s150 + $0x3d0] sm:$0xff]
    %v4801 = vld [vmem:[%s150 + $0x3d8] sm:$0xff]
    %v4802 = vld [vmem:[%s150 + $0x400] sm:$0xff]
    %v4803 = vld [vmem:[%s150 + $0x408] sm:$0xff]
    %v4804 = vld [vmem:[%s150 + $0x410] sm:$0xff]
    %v4805 = vld [vmem:[%s150 + $0x418] sm:$0xff]
    %v4806 = vld [vmem:[%s150 + $0x440] sm:$0xff]
    %v4807 = vld [vmem:[%s150 + $0x448] sm:$0xff]
    %v4808 = vld [vmem:[%s150 + $0x450] sm:$0xff]
    %v4809 = vld [vmem:[%s150 + $0x458] sm:$0xff]
    %v4810 = vld [vmem:[%s150 + $0x480] sm:$0xff]
    %v4811 = vld [vmem:[%s150 + $0x488] sm:$0xff]
    %v4812 = vld [vmem:[%s150 + $0x490] sm:$0xff]
    %v4813 = vld [vmem:[%s150 + $0x498] sm:$0xff]
    %v4814 = vld [vmem:[%s150 + $0x4c0] sm:$0xff]
    %v4815 = vld [vmem:[%s150 + $0x4c8] sm:$0xff]
    %v4816 = vld [vmem:[%s150 + $0x4d0] sm:$0xff]
    %v4817 = vld [vmem:[%s150 + $0x4d8] sm:$0xff]
    %v4818 = vld [vmem:[%s150 + $0x500] sm:$0xff]
    %v4819 = vld [vmem:[%s150 + $0x508] sm:$0xff]
    %v4820 = vld [vmem:[%s150 + $0x510] sm:$0xff]
    %v4821 = vld [vmem:[%s150 + $0x518] sm:$0xff]
    %v4822 = vld [vmem:[%s150 + $0x540] sm:$0xff]
    %v4823 = vld [vmem:[%s150 + $0x548] sm:$0xff]
    %v4824 = vld [vmem:[%s150 + $0x550] sm:$0xff]
    %v4825 = vld [vmem:[%s150 + $0x558] sm:$0xff]
    %v4826 = vld [vmem:[%s150 + $0x580] sm:$0xff]
    %v4827 = vld [vmem:[%s150 + $0x588] sm:$0xff]
    %v4828 = vld [vmem:[%s150 + $0x590] sm:$0xff]
    %v4829 = vld [vmem:[%s150 + $0x598] sm:$0xff]
    %v4830 = vld [vmem:[%s150 + $0x5c0] sm:$0xff]
    %v4831 = vld [vmem:[%s150 + $0x5c8] sm:$0xff]
    %v4832 = vld [vmem:[%s150 + $0x5d0] sm:$0xff]
    %v4833 = vld [vmem:[%s150 + $0x5d8] sm:$0xff]
    %v4834 = vld [vmem:[%s150 + $0x600] sm:$0xff]
    %v4835 = vld [vmem:[%s150 + $0x608] sm:$0xff]
    %v4836 = vld [vmem:[%s150 + $0x610] sm:$0xff]
    %v4837 = vld [vmem:[%s150 + $0x618] sm:$0xff]
    %v4838 = vld [vmem:[%s150 + $0x640] sm:$0xff]
    %v4839 = vld [vmem:[%s150 + $0x648] sm:$0xff]
    %v4840 = vld [vmem:[%s150 + $0x650] sm:$0xff]
    %v4841 = vld [vmem:[%s150 + $0x658] sm:$0xff]
    %v4842 = vld [vmem:[%s150 + $0x680] sm:$0xff]
    %v4843 = vld [vmem:[%s150 + $0x688] sm:$0xff]
    %v4844 = vld [vmem:[%s150 + $0x690] sm:$0xff]
    %v4845 = vld [vmem:[%s150 + $0x698] sm:$0xff]
    %v4846 = vld [vmem:[%s150 + $0x6c0] sm:$0xff]
    %v4847 = vld [vmem:[%s150 + $0x6c8] sm:$0xff]
    %v4848 = vld [vmem:[%s150 + $0x6d0] sm:$0xff]
    %v4849 = vld [vmem:[%s150 + $0x6d8] sm:$0xff]
    %v4850 = vld [vmem:[%s150 + $0x700] sm:$0xff]
    %v4851 = vld [vmem:[%s150 + $0x708] sm:$0xff]
    %v4852 = vld [vmem:[%s150 + $0x710] sm:$0xff]
    %v4853 = vld [vmem:[%s150 + $0x718] sm:$0xff]
    %v4854 = vld [vmem:[%s150 + $0x740] sm:$0xff]
    %v4855 = vld [vmem:[%s150 + $0x748] sm:$0xff]
    %v4856 = vld [vmem:[%s150 + $0x750] sm:$0xff]
    %v4857 = vld [vmem:[%s150 + $0x758] sm:$0xff]
    %v4858 = vld [vmem:[%s150 + $0x780] sm:$0xff]
    %v4859 = vld [vmem:[%s150 + $0x788] sm:$0xff]
    %v4860 = vld [vmem:[%s150 + $0x790] sm:$0xff]
    %v4861 = vld [vmem:[%s150 + $0x798] sm:$0xff]
    %v4862 = vld [vmem:[%s150 + $0x7c0] sm:$0xff]
    %v4863 = vld [vmem:[%s150 + $0x7c8] sm:$0xff]
    %v4864 = vld [vmem:[%s150 + $0x7d0] sm:$0xff]
    %v4865 = vld [vmem:[%s150 + $0x7d8] sm:$0xff]
    %v4866 = vld [vmem:[%s150 + $0x800] sm:$0xff]
    %v4867 = vld [vmem:[%s150 + $0x808] sm:$0xff]
    %v4868 = vld [vmem:[%s150 + $0x810] sm:$0xff]
    %v4869 = vld [vmem:[%s150 + $0x818] sm:$0xff]
    %v4870 = vld [vmem:[%s150 + $0x840] sm:$0xff]
    %v4871 = vld [vmem:[%s150 + $0x848] sm:$0xff]
    %v4872 = vld [vmem:[%s150 + $0x850] sm:$0xff]
    %v4873 = vld [vmem:[%s150 + $0x858] sm:$0xff]
    %v4874 = vld [vmem:[%s150 + $0x880] sm:$0xff]
    %v4875 = vld [vmem:[%s150 + $0x888] sm:$0xff]
    %v4876 = vld [vmem:[%s150 + $0x890] sm:$0xff]
    %v4877 = vld [vmem:[%s150 + $0x898] sm:$0xff]
    %v4878 = vld [vmem:[%s150 + $0x8c0] sm:$0xff]
    %v4879 = vld [vmem:[%s150 + $0x8c8] sm:$0xff]
    %v4880 = vld [vmem:[%s150 + $0x8d0] sm:$0xff]
    %v4881 = vld [vmem:[%s150 + $0x8d8] sm:$0xff]
    %v4882 = vld [vmem:[%s150 + $0x900] sm:$0xff]
    %v4883 = vld [vmem:[%s150 + $0x908] sm:$0xff]
    %v4884 = vld [vmem:[%s150 + $0x910] sm:$0xff]
    %v4885 = vld [vmem:[%s150 + $0x918] sm:$0xff]
    %v4886 = vld [vmem:[%s150 + $0x940] sm:$0xff]
    %v4887 = vld [vmem:[%s150 + $0x948] sm:$0xff]
    %v4888 = vld [vmem:[%s150 + $0x950] sm:$0xff]
    %v4889 = vld [vmem:[%s150 + $0x958] sm:$0xff]
    %v4890 = vld [vmem:[%s150 + $0x980] sm:$0xff]
    %v4891 = vld [vmem:[%s150 + $0x988] sm:$0xff]
    %v4892 = vld [vmem:[%s150 + $0x990] sm:$0xff]
    %v4893 = vld [vmem:[%s150 + $0x998] sm:$0xff]
    %v4894 = vld [vmem:[%s150 + $0x9c0] sm:$0xff]
    %v4895 = vld [vmem:[%s150 + $0x9c8] sm:$0xff]
    %v4896 = vld [vmem:[%s150 + $0x9d0] sm:$0xff]
    %v4897 = vld [vmem:[%s150 + $0x9d8] sm:$0xff]
    %v4898 = vld [vmem:[%s150 + $0xa00] sm:$0xff]
    %v4899 = vld [vmem:[%s150 + $0xa08] sm:$0xff]
    %v4900 = vld [vmem:[%s150 + $0xa10] sm:$0xff]
    %v4901 = vld [vmem:[%s150 + $0xa18] sm:$0xff]
    %v4902 = vld [vmem:[%s150 + $0xa40] sm:$0xff]
    %v4903 = vld [vmem:[%s150 + $0xa48] sm:$0xff]
    %v4904 = vld [vmem:[%s150 + $0xa50] sm:$0xff]
    %v4905 = vld [vmem:[%s150 + $0xa58] sm:$0xff]
    %v4906 = vld [vmem:[%s150 + $0xa80] sm:$0xff]
    %v4907 = vld [vmem:[%s150 + $0xa88] sm:$0xff]
    %v4908 = vld [vmem:[%s150 + $0xa90] sm:$0xff]
    %v4909 = vld [vmem:[%s150 + $0xa98] sm:$0xff]
    %v4910 = vld [vmem:[%s150 + $0xac0] sm:$0xff]
    %v4911 = vld [vmem:[%s150 + $0xac8] sm:$0xff]
    %v4912 = vld [vmem:[%s150 + $0xad0] sm:$0xff]
    %v4913 = vld [vmem:[%s150 + $0xad8] sm:$0xff]
    %v4914 = vld [vmem:[%s150 + $0xb00] sm:$0xff]
    %v4915 = vld [vmem:[%s150 + $0xb08] sm:$0xff]
    %v4916 = vld [vmem:[%s150 + $0xb10] sm:$0xff]
    %v4917 = vld [vmem:[%s150 + $0xb18] sm:$0xff]
    %v4918 = vld [vmem:[%s150 + $0xb40] sm:$0xff]
    %v4919 = vld [vmem:[%s150 + $0xb48] sm:$0xff]
    %v4920 = vld [vmem:[%s150 + $0xb50] sm:$0xff]
    %v4921 = vld [vmem:[%s150 + $0xb58] sm:$0xff]
    %v4922 = vld [vmem:[%s150 + $0xb80] sm:$0xff]
    %v4923 = vld [vmem:[%s150 + $0xb88] sm:$0xff]
    %v4924 = vld [vmem:[%s150 + $0xb90] sm:$0xff]
    %v4925 = vld [vmem:[%s150 + $0xb98] sm:$0xff]
    %v4926 = vld [vmem:[%s150 + $0xbc0] sm:$0xff]
    %v4927 = vld [vmem:[%s150 + $0xbc8] sm:$0xff]
    %v4928 = vld [vmem:[%s150 + $0xbd0] sm:$0xff]
    %v4929 = vld [vmem:[%s150 + $0xbd8] sm:$0xff]
    %v4930 = vld [vmem:[%s150 + $0xc00] sm:$0xff]
    %v4931 = vld [vmem:[%s150 + $0xc08] sm:$0xff]
    %v4932 = vld [vmem:[%s150 + $0xc10] sm:$0xff]
    %v4933 = vld [vmem:[%s150 + $0xc18] sm:$0xff]
    %v4934 = vld [vmem:[%s150 + $0xc40] sm:$0xff]
    %v4935 = vld [vmem:[%s150 + $0xc48] sm:$0xff]
    %v4936 = vld [vmem:[%s150 + $0xc50] sm:$0xff]
    %v4937 = vld [vmem:[%s150 + $0xc58] sm:$0xff]
    %v4938 = vld [vmem:[%s150 + $0xc80] sm:$0xff]
    %v4939 = vld [vmem:[%s150 + $0xc88] sm:$0xff]
    %v4940 = vld [vmem:[%s150 + $0xc90] sm:$0xff]
    %v4941 = vld [vmem:[%s150 + $0xc98] sm:$0xff]
    %v4942 = vld [vmem:[%s150 + $0xcc0] sm:$0xff]
    %v4943 = vld [vmem:[%s150 + $0xcc8] sm:$0xff]
    %v4944 = vld [vmem:[%s150 + $0xcd0] sm:$0xff]
    %v4945 = vld [vmem:[%s150 + $0xcd8] sm:$0xff]
    %v4946 = vld [vmem:[%s150 + $0xd00] sm:$0xff]
    %v4947 = vld [vmem:[%s150 + $0xd08] sm:$0xff]
    %v4948 = vld [vmem:[%s150 + $0xd10] sm:$0xff]
    %v4949 = vld [vmem:[%s150 + $0xd18] sm:$0xff]
    %v4950 = vld [vmem:[%s150 + $0xd40] sm:$0xff]
    %v4951 = vld [vmem:[%s150 + $0xd48] sm:$0xff]
    %v4952 = vld [vmem:[%s150 + $0xd50] sm:$0xff]
    %v4953 = vld [vmem:[%s150 + $0xd58] sm:$0xff]
    %v4954 = vld [vmem:[%s150 + $0xd80] sm:$0xff]
    %v4955 = vld [vmem:[%s150 + $0xd88] sm:$0xff]
    %v4956 = vld [vmem:[%s150 + $0xd90] sm:$0xff]
    %v4957 = vld [vmem:[%s150 + $0xd98] sm:$0xff]
    %v4958 = vld [vmem:[%s150 + $0xdc0] sm:$0xff]
    %v4959 = vld [vmem:[%s150 + $0xdc8] sm:$0xff]
    %v4960 = vld [vmem:[%s150 + $0xdd0] sm:$0xff]
    %v4961 = vld [vmem:[%s150 + $0xdd8] sm:$0xff]
    %v4962 = vld [vmem:[%s150 + $0xe00] sm:$0xff]
    %v4963 = vld [vmem:[%s150 + $0xe08] sm:$0xff]
    %v4964 = vld [vmem:[%s150 + $0xe10] sm:$0xff]
    %v4965 = vld [vmem:[%s150 + $0xe18] sm:$0xff]
    %v4966 = vld [vmem:[%s150 + $0xe40] sm:$0xff]
    %v4967 = vld [vmem:[%s150 + $0xe48] sm:$0xff]
    %v4968 = vld [vmem:[%s150 + $0xe50] sm:$0xff]
    %v4969 = vld [vmem:[%s150 + $0xe58] sm:$0xff]
    %v4970 = vld [vmem:[%s150 + $0xe80] sm:$0xff]
    %v4971 = vld [vmem:[%s150 + $0xe88] sm:$0xff]
    %v4972 = vld [vmem:[%s150 + $0xe90] sm:$0xff]
    %v4973 = vld [vmem:[%s150 + $0xe98] sm:$0xff]
    %v4974 = vld [vmem:[%s150 + $0xec0] sm:$0xff]
    %v4975 = vld [vmem:[%s150 + $0xec8] sm:$0xff]
    %v4976 = vld [vmem:[%s150 + $0xed0] sm:$0xff]
    %v4977 = vld [vmem:[%s150 + $0xed8] sm:$0xff]
    %v4978 = vld [vmem:[%s150 + $0xf00] sm:$0xff]
    %v4979 = vld [vmem:[%s150 + $0xf08] sm:$0xff]
    %v4980 = vld [vmem:[%s150 + $0xf10] sm:$0xff]
    %v4981 = vld [vmem:[%s150 + $0xf18] sm:$0xff]
    %v4982 = vld [vmem:[%s150 + $0xf40] sm:$0xff]
    %v4983 = vld [vmem:[%s150 + $0xf48] sm:$0xff]
    %v4984 = vld [vmem:[%s150 + $0xf50] sm:$0xff]
    %v4985 = vld [vmem:[%s150 + $0xf58] sm:$0xff]
    %v4986 = vld [vmem:[%s150 + $0xf80] sm:$0xff]
    %v4987 = vld [vmem:[%s150 + $0xf88] sm:$0xff]
    %v4988 = vld [vmem:[%s150 + $0xf90] sm:$0xff]
    %v4989 = vld [vmem:[%s150 + $0xf98] sm:$0xff]
    %v4990 = vld [vmem:[%s150 + $0xfc0] sm:$0xff]
    %v4991 = vld [vmem:[%s150 + $0xfc8] sm:$0xff]
    %v4992 = vld [vmem:[%s150 + $0xfd0] sm:$0xff]
    %v4993 = vld [vmem:[%s150 + $0xfd8] sm:$0xff]
    %v4994 = vld [vmem:[#allocation15] sm:$0xf]
    %v4996 = vlaneseq
    %v4997 = vshrl.u32 %v4996, 7
    %v4998 = vsub.s32 0, %v4997
    %v4999 = vrot.slane %v4994, %v4998
    %v5000 = vlaneseq
    %v5001 = vshrl.u32 %v5000, 7
    %v5002 = vsub.s32 1, %v5001
    %v5003 = vrot.slane %v4994, %v5002
    %v5004 = vlaneseq
    %v5005 = vshrl.u32 %v5004, 7
    %v5006 = vsub.s32 2, %v5005
    %v5007 = vrot.slane %v4994, %v5006
    %v5008 = vlaneseq
    %v5009 = vshrl.u32 %v5008, 7
    %v5010 = vsub.s32 3, %v5009
    %v5011 = vrot.slane %v4994, %v5010
    %5016 = vmatprep.subr.bf16.mxu0 %v4739
    %5017 = vmatpush1.bf16.msra.mxu0 %v4738
    %5018 = vmatprep.subr.bf16.mxu0 %v4743
    %5019 = vmatpush1.bf16.msra.mxu0 %v4742
    %5020 = vmatprep.subr.bf16.mxu0 %v4747
    %5021 = vmatpush1.bf16.msra.mxu0 %v4746
    %5022 = vmatprep.subr.bf16.mxu0 %v4751
    %5023 = vmatpush1.bf16.msra.mxu0 %v4750
    %5024 = vmatprep.subr.bf16.mxu0 %v4755
    %5025 = vmatpush1.bf16.msra.mxu0 %v4754
    %5026 = vmatprep.subr.bf16.mxu0 %v4759
    %5027 = vmatpush1.bf16.msra.mxu0 %v4758
    %5028 = vmatprep.subr.bf16.mxu0 %v4763
    %5029 = vmatpush1.bf16.msra.mxu0 %v4762
    %5030 = vmatprep.subr.bf16.mxu0 %v4767
    %5031 = vmatpush1.bf16.msra.mxu0 %v4766
    %5032 = vmatprep.subr.bf16.mxu0 %v4771
    %5033 = vmatpush1.bf16.msra.mxu0 %v4770
    %5034 = vmatprep.subr.bf16.mxu0 %v4775
    %5035 = vmatpush1.bf16.msra.mxu0 %v4774
    %5036 = vmatprep.subr.bf16.mxu0 %v4779
    %5037 = vmatpush1.bf16.msra.mxu0 %v4778
    %5038 = vmatprep.subr.bf16.mxu0 %v4783
    %5039 = vmatpush1.bf16.msra.mxu0 %v4782
    %5040 = vmatprep.subr.bf16.mxu0 %v4787
    %5041 = vmatpush1.bf16.msra.mxu0 %v4786
    %5042 = vmatprep.subr.bf16.mxu0 %v4791
    %5043 = vmatpush1.bf16.msra.mxu0 %v4790
    %5044 = vmatprep.subr.bf16.mxu0 %v4795
    %5045 = vmatpush1.bf16.msra.mxu0 %v4794
    %5046 = vmatprep.subr.bf16.mxu0 %v4799
    %5047 = vmatpush1.bf16.msra.mxu0 %v4798
    %5048 = vmatprep.mubr.bf16.mxu0 %v4729
    %5049 = vmatmul.mubr.bf16.gmra.mrb[0].mxu0 %v4728
    %v5050 = vpop.f32.mrb[0].mxu0
    %v5051 = vadd.f32 %v4999, %v5050
    %v5052 = vpop.f32.mrb[0].mxu0
    %v5053 = vadd.f32 %v5003, %v5052
    %v5054 = vpop.f32.mrb[0].mxu0
    %v5055 = vpop.f32.mrb[0].mxu0
    %5056 = vdwg.mxu0
    %5057 = vmatprep.subr.bf16.mxu0 %v4803
    %5058 = vmatpush1.bf16.msra.mxu0 %v4802
    %5059 = vmatprep.subr.bf16.mxu0 %v4807
    %5060 = vmatpush1.bf16.msra.mxu0 %v4806
    %5061 = vmatprep.subr.bf16.mxu0 %v4811
    %5062 = vmatpush1.bf16.msra.mxu0 %v4810
    %5063 = vmatprep.subr.bf16.mxu0 %v4815
    %5064 = vmatpush1.bf16.msra.mxu0 %v4814
    %5065 = vmatprep.subr.bf16.mxu0 %v4819
    %5066 = vmatpush1.bf16.msra.mxu0 %v4818
    %5067 = vmatprep.subr.bf16.mxu0 %v4823
    %5068 = vmatpush1.bf16.msra.mxu0 %v4822
    %5069 = vmatprep.subr.bf16.mxu0 %v4827
    %5070 = vmatpush1.bf16.msra.mxu0 %v4826
    %5071 = vmatprep.subr.bf16.mxu0 %v4831
    %5072 = vmatpush1.bf16.msra.mxu0 %v4830
    %5073 = vmatprep.subr.bf16.mxu0 %v4835
    %5074 = vmatpush1.bf16.msra.mxu0 %v4834
    %5075 = vmatprep.subr.bf16.mxu0 %v4839
    %5076 = vmatpush1.bf16.msra.mxu0 %v4838
    %5077 = vmatprep.subr.bf16.mxu0 %v4843
    %5078 = vmatpush1.bf16.msra.mxu0 %v4842
    %5079 = vmatprep.subr.bf16.mxu0 %v4847
    %5080 = vmatpush1.bf16.msra.mxu0 %v4846
    %5081 = vmatprep.subr.bf16.mxu0 %v4851
    %5082 = vmatpush1.bf16.msra.mxu0 %v4850
    %5083 = vmatprep.subr.bf16.mxu0 %v4855
    %5084 = vmatpush1.bf16.msra.mxu0 %v4854
    %5085 = vmatprep.subr.bf16.mxu0 %v4859
    %5086 = vmatpush1.bf16.msra.mxu0 %v4858
    %5087 = vmatprep.subr.bf16.mxu0 %v4863
    %5088 = vmatpush1.bf16.msra.mxu0 %v4862
    %5089 = vmatprep.mubr.bf16.mxu0 %v4731
    %5090 = vmatmul.mubr.bf16.gmra.mrb[0].mxu0 %v4730
    %v5091 = vpop.f32.mrb[0].mxu0
    %v5092 = vadd.f32 %v5051, %v5091
    %v5093 = vpop.f32.mrb[0].mxu0
    %v5094 = vadd.f32 %v5053, %v5093
    %v5095 = vpop.f32.mrb[0].mxu0
    %v5096 = vpop.f32.mrb[0].mxu0
    %5097 = vdwg.mxu0
    %5098 = vmatprep.subr.bf16.mxu0 %v4867
    %5099 = vmatpush1.bf16.msra.mxu0 %v4866
    %5100 = vmatprep.subr.bf16.mxu0 %v4871
    %5101 = vmatpush1.bf16.msra.mxu0 %v4870
    %5102 = vmatprep.subr.bf16.mxu0 %v4875
    %5103 = vmatpush1.bf16.msra.mxu0 %v4874
    %5104 = vmatprep.subr.bf16.mxu0 %v4879
    %5105 = vmatpush1.bf16.msra.mxu0 %v4878
    %5106 = vmatprep.subr.bf16.mxu0 %v4883
    %5107 = vmatpush1.bf16.msra.mxu0 %v4882
    %5108 = vmatprep.subr.bf16.mxu0 %v4887
    %5109 = vmatpush1.bf16.msra.mxu0 %v4886
    %5110 = vmatprep.subr.bf16.mxu0 %v4891
    %5111 = vmatpush1.bf16.msra.mxu0 %v4890
    %5112 = vmatprep.subr.bf16.mxu0 %v4895
    %5113 = vmatpush1.bf16.msra.mxu0 %v4894
    %5114 = vmatprep.subr.bf16.mxu0 %v4899
    %5115 = vmatpush1.bf16.msra.mxu0 %v4898
    %5116 = vmatprep.subr.bf16.mxu0 %v4903
    %5117 = vmatpush1.bf16.msra.mxu0 %v4902
    %5118 = vmatprep.subr.bf16.mxu0 %v4907
    %5119 = vmatpush1.bf16.msra.mxu0 %v4906
    %5120 = vmatprep.subr.bf16.mxu0 %v4911
    %5121 = vmatpush1.bf16.msra.mxu0 %v4910
    %5122 = vmatprep.subr.bf16.mxu0 %v4915
    %5123 = vmatpush1.bf16.msra.mxu0 %v4914
    %5124 = vmatprep.subr.bf16.mxu0 %v4919
    %5125 = vmatpush1.bf16.msra.mxu0 %v4918
    %5126 = vmatprep.subr.bf16.mxu0 %v4923
    %5127 = vmatpush1.bf16.msra.mxu0 %v4922
    %5128 = vmatprep.subr.bf16.mxu0 %v4927
    %5129 = vmatpush1.bf16.msra.mxu0 %v4926
    %5130 = vmatprep.mubr.bf16.mxu0 %v4733
    %5131 = vmatmul.mubr.bf16.gmra.mrb[0].mxu0 %v4732
    %v5132 = vpop.f32.mrb[0].mxu0
    %v5133 = vadd.f32 %v5092, %v5132
    %v5134 = vpop.f32.mrb[0].mxu0
    %v5135 = vadd.f32 %v5094, %v5134
    %v5136 = vpop.f32.mrb[0].mxu0
    %v5137 = vpop.f32.mrb[0].mxu0
    %5138 = vdwg.mxu0
    %5139 = vmatprep.subr.bf16.mxu0 %v4931
    %5140 = vmatpush1.bf16.msra.mxu0 %v4930
    %5141 = vmatprep.subr.bf16.mxu0 %v4935
    %5142 = vmatpush1.bf16.msra.mxu0 %v4934
    %5143 = vmatprep.subr.bf16.mxu0 %v4939
    %5144 = vmatpush1.bf16.msra.mxu0 %v4938
    %5145 = vmatprep.subr.bf16.mxu0 %v4943
    %5146 = vmatpush1.bf16.msra.mxu0 %v4942
    %5147 = vmatprep.subr.bf16.mxu0 %v4947
    %5148 = vmatpush1.bf16.msra.mxu0 %v4946
    %5149 = vmatprep.subr.bf16.mxu0 %v4951
    %5150 = vmatpush1.bf16.msra.mxu0 %v4950
    %5151 = vmatprep.subr.bf16.mxu0 %v4955
    %5152 = vmatpush1.bf16.msra.mxu0 %v4954
    %5153 = vmatprep.subr.bf16.mxu0 %v4959
    %5154 = vmatpush1.bf16.msra.mxu0 %v4958
    %5155 = vmatprep.subr.bf16.mxu0 %v4963
    %5156 = vmatpush1.bf16.msra.mxu0 %v4962
    %5157 = vmatprep.subr.bf16.mxu0 %v4967
    %5158 = vmatpush1.bf16.msra.mxu0 %v4966
    %5159 = vmatprep.subr.bf16.mxu0 %v4971
    %5160 = vmatpush1.bf16.msra.mxu0 %v4970
    %5161 = vmatprep.subr.bf16.mxu0 %v4975
    %5162 = vmatpush1.bf16.msra.mxu0 %v4974
    %5163 = vmatprep.subr.bf16.mxu0 %v4979
    %5164 = vmatpush1.bf16.msra.mxu0 %v4978
    %5165 = vmatprep.subr.bf16.mxu0 %v4983
    %5166 = vmatpush1.bf16.msra.mxu0 %v4982
    %5167 = vmatprep.subr.bf16.mxu0 %v4987
    %5168 = vmatpush1.bf16.msra.mxu0 %v4986
    %5169 = vmatprep.subr.bf16.mxu0 %v4991
    %5170 = vmatpush1.bf16.msra.mxu0 %v4990
    %5171 = vmatprep.mubr.bf16.mxu0 %v4735
    %5172 = vmatmul.mubr.bf16.gmra.mrb[0].mxu0 %v4734
    %v5173 = vpop.f32.mrb[0].mxu0
    %v5174 = vadd.f32 %v5133, %v5173
    %v5175 = vpop.f32.mrb[0].mxu0
    %v5176 = vadd.f32 %v5135, %v5175
    %v5177 = vpop.f32.mrb[0].mxu0
    %v5178 = vpop.f32.mrb[0].mxu0
    %5179 = vdwg.mxu0
    %5180 = vmatprep.subr.bf16.mxu0 %v4741
    %5181 = vmatpush1.bf16.msra.mxu0 %v4740
    %5182 = vmatprep.subr.bf16.mxu0 %v4745
    %5183 = vmatpush1.bf16.msra.mxu0 %v4744
    %5184 = vmatprep.subr.bf16.mxu0 %v4749
    %5185 = vmatpush1.bf16.msra.mxu0 %v4748
    %5186 = vmatprep.subr.bf16.mxu0 %v4753
    %5187 = vmatpush1.bf16.msra.mxu0 %v4752
    %5188 = vmatprep.subr.bf16.mxu0 %v4757
    %5189 = vmatpush1.bf16.msra.mxu0 %v4756
    %5190 = vmatprep.subr.bf16.mxu0 %v4761
    %5191 = vmatpush1.bf16.msra.mxu0 %v4760
    %5192 = vmatprep.subr.bf16.mxu0 %v4765
    %5193 = vmatpush1.bf16.msra.mxu0 %v4764
    %5194 = vmatprep.subr.bf16.mxu0 %v4769
    %5195 = vmatpush1.bf16.msra.mxu0 %v4768
    %5196 = vmatprep.subr.bf16.mxu0 %v4773
    %5197 = vmatpush1.bf16.msra.mxu0 %v4772
    %5198 = vmatprep.subr.bf16.mxu0 %v4777
    %5199 = vmatpush1.bf16.msra.mxu0 %v4776
    %5200 = vmatprep.subr.bf16.mxu0 %v4781
    %5201 = vmatpush1.bf16.msra.mxu0 %v4780
    %5202 = vmatprep.subr.bf16.mxu0 %v4785
    %5203 = vmatpush1.bf16.msra.mxu0 %v4784
    %5204 = vmatprep.subr.bf16.mxu0 %v4789
    %5205 = vmatpush1.bf16.msra.mxu0 %v4788
    %5206 = vmatprep.subr.bf16.mxu0 %v4793
    %5207 = vmatpush1.bf16.msra.mxu0 %v4792
    %5208 = vmatprep.subr.bf16.mxu0 %v4797
    %5209 = vmatpush1.bf16.msra.mxu0 %v4796
    %5210 = vmatprep.subr.bf16.mxu0 %v4801
    %5211 = vmatpush1.bf16.msra.mxu0 %v4800
    %5212 = vmatprep.mubr.bf16.mxu0 %v4729
    %5213 = vmatmul.mubr.bf16.gmra.mrb[0].mxu0 %v4728
    %v5214 = vpop.f32.mrb[0].mxu0
    %v5215 = vadd.f32 %v5007, %v5214
    %v5216 = vpop.f32.mrb[0].mxu0
    %v5217 = vadd.f32 %v5011, %v5216
    %v5218 = vpop.f32.mrb[0].mxu0
    %v5219 = vpop.f32.mrb[0].mxu0
    %5220 = vdwg.mxu0
    %5221 = vmatprep.subr.bf16.mxu0 %v4805
    %5222 = vmatpush1.bf16.msra.mxu0 %v4804
    %5223 = vmatprep.subr.bf16.mxu0 %v4809
    %5224 = vmatpush1.bf16.msra.mxu0 %v4808
    %5225 = vmatprep.subr.bf16.mxu0 %v4813
    %5226 = vmatpush1.bf16.msra.mxu0 %v4812
    %5227 = vmatprep.subr.bf16.mxu0 %v4817
    %5228 = vmatpush1.bf16.msra.mxu0 %v4816
    %5229 = vmatprep.subr.bf16.mxu0 %v4821
    %5230 = vmatpush1.bf16.msra.mxu0 %v4820
    %5231 = vmatprep.subr.bf16.mxu0 %v4825
    %5232 = vmatpush1.bf16.msra.mxu0 %v4824
    %5233 = vmatprep.subr.bf16.mxu0 %v4829
    %5234 = vmatpush1.bf16.msra.mxu0 %v4828
    %5235 = vmatprep.subr.bf16.mxu0 %v4833
    %5236 = vmatpush1.bf16.msra.mxu0 %v4832
    %5237 = vmatprep.subr.bf16.mxu0 %v4837
    %5238 = vmatpush1.bf16.msra.mxu0 %v4836
    %5239 = vmatprep.subr.bf16.mxu0 %v4841
    %5240 = vmatpush1.bf16.msra.mxu0 %v4840
    %5241 = vmatprep.subr.bf16.mxu0 %v4845
    %5242 = vmatpush1.bf16.msra.mxu0 %v4844
    %5243 = vmatprep.subr.bf16.mxu0 %v4849
    %5244 = vmatpush1.bf16.msra.mxu0 %v4848
    %5245 = vmatprep.subr.bf16.mxu0 %v4853
    %5246 = vmatpush1.bf16.msra.mxu0 %v4852
    %5247 = vmatprep.subr.bf16.mxu0 %v4857
    %5248 = vmatpush1.bf16.msra.mxu0 %v4856
    %5249 = vmatprep.subr.bf16.mxu0 %v4861
    %5250 = vmatpush1.bf16.msra.mxu0 %v4860
    %5251 = vmatprep.subr.bf16.mxu0 %v4865
    %5252 = vmatpush1.bf16.msra.mxu0 %v4864
    %5253 = vmatprep.mubr.bf16.mxu0 %v4731
    %5254 = vmatmul.mubr.bf16.gmra.mrb[0].mxu0 %v4730
    %v5255 = vpop.f32.mrb[0].mxu0
    %v5256 = vadd.f32 %v5215, %v5255
    %v5257 = vpop.f32.mrb[0].mxu0
    %v5258 = vadd.f32 %v5217, %v5257
    %v5259 = vpop.f32.mrb[0].mxu0
    %v5260 = vpop.f32.mrb[0].mxu0
    %5261 = vdwg.mxu0
    %5262 = vmatprep.subr.bf16.mxu0 %v4869
    %5263 = vmatpush1.bf16.msra.mxu0 %v4868
    %5264 = vmatprep.subr.bf16.mxu0 %v4873
    %5265 = vmatpush1.bf16.msra.mxu0 %v4872
    %5266 = vmatprep.subr.bf16.mxu0 %v4877
    %5267 = vmatpush1.bf16.msra.mxu0 %v4876
    %5268 = vmatprep.subr.bf16.mxu0 %v4881
    %5269 = vmatpush1.bf16.msra.mxu0 %v4880
    %5270 = vmatprep.subr.bf16.mxu0 %v4885
    %5271 = vmatpush1.bf16.msra.mxu0 %v4884
    %5272 = vmatprep.subr.bf16.mxu0 %v4889
    %5273 = vmatpush1.bf16.msra.mxu0 %v4888
    %5274 = vmatprep.subr.bf16.mxu0 %v4893
    %5275 = vmatpush1.bf16.msra.mxu0 %v4892
    %5276 = vmatprep.subr.bf16.mxu0 %v4897
    %5277 = vmatpush1.bf16.msra.mxu0 %v4896
    %5278 = vmatprep.subr.bf16.mxu0 %v4901
    %5279 = vmatpush1.bf16.msra.mxu0 %v4900
    %5280 = vmatprep.subr.bf16.mxu0 %v4905
    %5281 = vmatpush1.bf16.msra.mxu0 %v4904
    %5282 = vmatprep.subr.bf16.mxu0 %v4909
    %5283 = vmatpush1.bf16.msra.mxu0 %v4908
    %5284 = vmatprep.subr.bf16.mxu0 %v4913
    %5285 = vmatpush1.bf16.msra.mxu0 %v4912
    %5286 = vmatprep.subr.bf16.mxu0 %v4917
    %5287 = vmatpush1.bf16.msra.mxu0 %v4916
    %5288 = vmatprep.subr.bf16.mxu0 %v4921
    %5289 = vmatpush1.bf16.msra.mxu0 %v4920
    %5290 = vmatprep.subr.bf16.mxu0 %v4925
    %5291 = vmatpush1.bf16.msra.mxu0 %v4924
    %5292 = vmatprep.subr.bf16.mxu0 %v4929
    %5293 = vmatpush1.bf16.msra.mxu0 %v4928
    %5294 = vmatprep.mubr.bf16.mxu0 %v4733
    %5295 = vmatmul.mubr.bf16.gmra.mrb[0].mxu0 %v4732
    %v5296 = vpop.f32.mrb[0].mxu0
    %v5297 = vadd.f32 %v5256, %v5296
    %v5298 = vpop.f32.mrb[0].mxu0
    %v5299 = vadd.f32 %v5258, %v5298
    %v5300 = vpop.f32.mrb[0].mxu0
    %v5301 = vpop.f32.mrb[0].mxu0
    %5302 = vdwg.mxu0
    %5303 = vmatprep.subr.bf16.mxu0 %v4933
    %5304 = vmatpush1.bf16.msra.mxu0 %v4932
    %5305 = vmatprep.subr.bf16.mxu0 %v4937
    %5306 = vmatpush1.bf16.msra.mxu0 %v4936
    %5307 = vmatprep.subr.bf16.mxu0 %v4941
    %5308 = vmatpush1.bf16.msra.mxu0 %v4940
    %5309 = vmatprep.subr.bf16.mxu0 %v4945
    %5310 = vmatpush1.bf16.msra.mxu0 %v4944
    %5311 = vmatprep.subr.bf16.mxu0 %v4949
    %5312 = vmatpush1.bf16.msra.mxu0 %v4948
    %5313 = vmatprep.subr.bf16.mxu0 %v4953
    %5314 = vmatpush1.bf16.msra.mxu0 %v4952
    %5315 = vmatprep.subr.bf16.mxu0 %v4957
    %5316 = vmatpush1.bf16.msra.mxu0 %v4956
    %5317 = vmatprep.subr.bf16.mxu0 %v4961
    %5318 = vmatpush1.bf16.msra.mxu0 %v4960
    %5319 = vmatprep.subr.bf16.mxu0 %v4965
    %5320 = vmatpush1.bf16.msra.mxu0 %v4964
    %5321 = vmatprep.subr.bf16.mxu0 %v4969
    %5322 = vmatpush1.bf16.msra.mxu0 %v4968
    %5323 = vmatprep.subr.bf16.mxu0 %v4973
    %5324 = vmatpush1.bf16.msra.mxu0 %v4972
    %5325 = vmatprep.subr.bf16.mxu0 %v4977
    %5326 = vmatpush1.bf16.msra.mxu0 %v4976
    %5327 = vmatprep.subr.bf16.mxu0 %v4981
    %5328 = vmatpush1.bf16.msra.mxu0 %v4980
    %5329 = vmatprep.subr.bf16.mxu0 %v4985
    %5330 = vmatpush1.bf16.msra.mxu0 %v4984
    %5331 = vmatprep.subr.bf16.mxu0 %v4989
    %5332 = vmatpush1.bf16.msra.mxu0 %v4988
    %5333 = vmatprep.subr.bf16.mxu0 %v4993
    %5334 = vmatpush1.bf16.msra.mxu0 %v4992
    %5335 = vmatprep.mubr.bf16.mxu0 %v4735
    %5336 = vmatmul.mubr.bf16.gmra.mrb[0].mxu0 %v4734
    %v5337 = vpop.f32.mrb[0].mxu0
    %v5338 = vadd.f32 %v5297, %v5337
    %v5339 = vpop.f32.mrb[0].mxu0
    %v5340 = vadd.f32 %v5299, %v5339
    %v5341 = vpop.f32.mrb[0].mxu0
    %v5342 = vpop.f32.mrb[0].mxu0
    %5343 = vdwg.mxu0
    %v5344 = vxor.u32 %v5174, 2147483648
    %v5345 = vxor.u32 %v5176, 2147483648
    %v5346 = vxor.u32 %v5338, 2147483648
    %v5347 = vxor.u32 %v5340, 2147483648
    %v5348 = vmul.f32 %v5344, 1.442695
    %v5349 = vpow.pop %v5348
    %v5350 = vmul.f32 %v5345, 1.442695
    %v5351 = vpow.pop %v5350
    %v5352 = vmul.f32 %v5346, 1.442695
    %v5353 = vpow.pop %v5352
    %v5354 = vmul.f32 %v5347, 1.442695
    %v5355 = vpow.pop %v5354
    %v5356 = vadd.f32 %v5349, 1.0
    %v5357 = vadd.f32 %v5351, 1.0
    %v5358 = vadd.f32 %v5353, 1.0
    %v5359 = vadd.f32 %v5355, 1.0
    %v5360 = vrcp.pop %v5356
    %v5361 = vmul.f32 1.0, %v5360
    %v5362 = vrcp.pop %v5357
    %v5363 = vmul.f32 1.0, %v5362
    %v5364 = vrcp.pop %v5358
    %v5365 = vmul.f32 1.0, %v5364
    %v5366 = vrcp.pop %v5359
    %v5367 = vmul.f32 1.0, %v5366
    %v5372 = vcombine.low %v5361, %v5363
    %v5373 = vcombine.low %v5365, %v5367
    %v5375 = vunpack.c.l.s4 1983009808
    %v5376 = vunpack.c.0.s8 %v5375
    %v5377 = vlaneseq
    %v5378 = vshrl.u32 %v5377, 7
    %v5379 = vsub.s32 %v5376, %v5378
    %v5380 = vrot.slane %v5372, %v5379
    %v5382 = vunpack.c.l.s4 1983009808
    %v5383 = vunpack.c.0.s8 %v5382
    %v5384 = vlaneseq
    %v5385 = vshrl.u32 %v5384, 7
    %v5386 = vsub.s32 %v5383, %v5385
    %v5387 = vrot.slane %v5373, %v5386
    %v5388 = vcombine.low %v5380, %v5387
    %5390 = vst [vmem:[#allocation16] sm:$0xff] %v5388
    // Predicated region
    $region58: #{tpu_custom_call.1} parent=1 // pred_check
      _
    $region59: #{tpu_custom_call.1} parent=1 // pred_check_branch
      %5392 = sbr.rel (0) target = $region61
    $region60: #{tpu_custom_call.1} parent=1 // pred_region
      %s5394 = ssub.s32 128, 128
      %5395 = vsyncadd [#allocation6], %s5394
      %s5397 = sshll.u32 [#allocation16], 4
      %s5398 = int_to_ptr.vmem [resolvable:$true] %s5397
      %5400 = dma.vmem_to_hbm [thread:$0]  %s5398, 128, %s13, [#allocation6]
    $region61: #{tpu_custom_call.1} parent=1 // pred_fallthru
      _
    // Predicated region
    $region62: #{tpu_custom_call.1} parent=1 // pred_check
      _
    $region63: #{tpu_custom_call.1} parent=1 // pred_check_branch
      %5402 = sbr.rel (0) target = $region65
    $region64: #{tpu_custom_call.1} parent=1 // pred_region
      %5403 = dma.done [#allocation6], 128
    $region65: #{tpu_custom_call.1} parent=1 // pred_fallthru
      _
    %5404 = vsyncpa [#allocation5], 1
    %5405 = vsyncpa [#allocation8], 1
    %5406 = vsyncpa [#allocation11], 1
    %5407 = vsyncpa [#allocation14], 1
    %5408 = vsyncpa [#allocation6], 1
  %5409 = vsyncmov [#allocation3]
  %s5410 = vpop.sfrf %5409
  %p5411 = scmp.eq.s32.totalorder %s5410, 0
  %p5412 = pneg %p5411
  %5414 = shalt.err (%p5412)
  %s5415 = scalar_lea.sflag [#allocation3], 1
  %5416 = vsyncmov %s5415
  %s5417 = vpop.sfrf %5416
  %p5418 = scmp.eq.s32.totalorder %s5417, 0
  %p5419 = pneg %p5418
  %5421 = shalt.err (%p5419)

</llo_original>
